<compile_context>
chip_gen: v5e
topology: v5e:2x2
jax: 0.10.0
libtpu: 0.0.40
codegen_flags: <defaults>
</compile_context>

<pallas_src>
import functools

import jax
import jax.numpy as jnp
from jax.experimental import pallas as pl
from jax.experimental.pallas import tpu as pltpu

LANES = 128   # padded lane width for conv1's packed K and the final output


def _round_up(x, m):
    return (x + m - 1) // m * m


# ----------------------------------------------------------------------------
# Fused per-image kernel: conv1+pool -> conv2+pool -> lin1 -> lin2 -> lin3
# ----------------------------------------------------------------------------
def _lenet5_kernel(x_ref, w1c_ref, b1c_ref, w2c_ref, b2c_ref,
                   w1l_ref, b1l_ref, w2l_ref, b2l_ref, w3l_ref, b3l_ref,
                   o_ref, c1_ref, p1_ref, c2_ref, *,
                   OW1, PH1, PW1, KH, KW, PH2, PW2, Q2):
    f32 = jnp.float32

    # ---- conv1: ONE K-packed MXU matmul (K = KH*KW*Cin packed densely, padded
    # to 128 lanes).  No per-tap accumulator RMW; result stored to scratch once.
    c1_ref[...] = jnp.dot(x_ref[0], w1c_ref[...], preferred_element_type=f32)

    # ---- bias + ReLU + 2x2/2 max-pool of conv1 (pool(relu(x+b)) == relu(max+b)
    # for a uniform bias + monotonic ReLU).  Pooled rows are written into a flat
    # (row = ph*PW1 + pw) buffer that directly doubles as conv2's input.
    b1 = b1c_ref[...]                                     # (1, 8)
    p1_ref[...] = jnp.zeros_like(p1_ref)                  # zero incl. tail pad rows
    for ph in range(PH1):
        r0 = (2 * ph) * OW1
        r1 = (2 * ph + 1) * OW1
        m = jnp.maximum(
            jnp.maximum(c1_ref[pl.ds(r0, PW1, 2), :],
                        c1_ref[pl.ds(r0 + 1, PW1, 2), :]),
            jnp.maximum(c1_ref[pl.ds(r1, PW1, 2), :],
                        c1_ref[pl.ds(r1 + 1, PW1, 2), :]))
        p1_ref[pl.ds(ph * PW1, PW1), :] = jnp.maximum(m + b1, 0.0)

    # ---- conv2: KH*KW row-shifted matmuls over 8 channel lanes (6 real),
    # accumulated in vregs (no scratch read-modify-write); stored once so the
    # pooling step can do strided VMEM reads.  Columns ow >= OW2 of each flat
    # conv row are garbage and are never read by the pooling below.
    acc2 = jnp.zeros(c2_ref.shape, f32)
    for kh in range(KH):
        for kw in range(KW):
            acc2 = acc2 + jnp.dot(p1_ref[pl.ds(kh * PW1 + kw, Q2), :],
                                  w2c_ref[kh * KW + kw, :, :],
                                  preferred_element_type=f32)
    c2_ref[...] = acc2

    # ---- bias + ReLU + 2x2/2 max-pool of conv2 fused straight into the lin1
    # contraction: h += pooled_row @ W1[row].  No flatten / lane shuffle and no
    # zero-padded lin1 K (weight rows were remapped once in the wrapper).
    b2 = b2c_ref[...]                                     # (1, 16)
    h = jnp.zeros((1, w1l_ref.shape[2]), f32)             # (1, 120)
    for ph in range(PH2):
        r0 = (2 * ph) * PW1
        r1 = (2 * ph + 1) * PW1
        m = jnp.maximum(
            jnp.maximum(c2_ref[pl.ds(r0, PW2, 2), :],
                        c2_ref[pl.ds(r0 + 1, PW2, 2), :]),
            jnp.maximum(c2_ref[pl.ds(r1, PW2, 2), :],
                        c2_ref[pl.ds(r1 + 1, PW2, 2), :]))
        blk = jnp.maximum(m + b2, 0.0)                    # (PW2, 16) pooled rows
        for pw in range(PW2):
            h = h + jnp.dot(blk[pw:pw + 1, :],
                            w1l_ref[ph * PW2 + pw, :, :],
                            preferred_element_type=f32)

    # ---- classifier tail: lin1 bias/ReLU -> lin2 + ReLU -> lin3 (padded to 128
    # lanes for a single lane-dense store).
    h = jnp.maximum(h + b1l_ref[...], 0.0)
    h = jnp.maximum(jnp.dot(h, w2l_ref[...], preferred_element_type=f32)
                    + b2l_ref[...], 0.0)
    out = jnp.dot(h, w3l_ref[...], preferred_element_type=f32) + b3l_ref[...]
    o_ref[0] = out.astype(o_ref.dtype)


# ----------------------------------------------------------------------------
# Wrapper: layout prep (all layout plumbing, no compute hoisting) + pallas_call
# ----------------------------------------------------------------------------
def lenet5_forward(params, x, n_classes=10):
    N, C, H, W = x.shape
    OC1, C1, KH, KW = params["conv1_w"].shape             # (6, 3, 5, 5)
    OC2, C2, KH2, KW2 = params["conv2_w"].shape           # (16, 6, 5, 5)
    assert (C1, C2, KH2, KW2) == (C, OC1, KH, KW)

    OH1, OW1 = H - KH + 1, W - KW + 1                     # 28, 28
    assert OH1 % 2 == 0 and OW1 % 2 == 0, "2x2/2 max-pool needs even conv1 output"
    PH1, PW1 = OH1 // 2, OW1 // 2                         # 14, 14
    OH2, OW2 = PH1 - KH + 1, PW1 - KW + 1                 # 10, 10
    assert OH2 % 2 == 0 and OW2 % 2 == 0, "2x2/2 max-pool needs even conv2 output"
    PH2, PW2 = OH2 // 2, OW2 // 2                         # 5, 5

    CH8 = 8                                               # conv1-out / conv2-in lanes
    OC2P = 16                                             # conv2 out-channel lanes

    # conv1 input: dense im2col pack so conv1 is a single (Q1,128)@(128,8) matmul.
    Q1 = OH1 * OW1                                        # 784
    Q1P = _round_up(Q1, 8)
    K1 = KH * KW * C                                      # 75
    x_nhwc = jnp.transpose(x, (0, 2, 3, 1)).astype(jnp.float32)
    taps = [x_nhwc[:, kh:kh + OH1, kw:kw + OW1, :]
            for kh in range(KH) for kw in range(KW)]
    xp = jnp.stack(taps, axis=3).reshape(N, Q1, K1)       # K order: (kh, kw, c)
    xp = jnp.pad(xp, ((0, 0), (0, Q1P - Q1), (0, LANES - K1)))

    # conv1 weight/bias, K rows in (kh, kw, c) order, out channels padded to 8.
    w1c = jnp.transpose(params["conv1_w"], (2, 3, 1, 0)).reshape(K1, OC1)
    w1c = jnp.pad(w1c, ((0, LANES - K1), (0, CH8 - OC1)))
    b1c = jnp.pad(params["conv1_b"], (0, CH8 - OC1)).reshape(1, CH8)

    # conv2 weight as (tap, in_ch(8), out_ch(16)): 6 real input channels, so the
    # contraction is 8 lanes deep instead of the old 95%-zero 128.
    w2c = jnp.transpose(params["conv2_w"], (2, 3, 1, 0)).reshape(KH * KW, OC1, OC2)
    w2c = jnp.pad(w2c, ((0, 0), (0, CH8 - OC1), (0, OC2P - OC2)))
    b2c = jnp.pad(params["conv2_b"], (0, OC2P - OC2)).reshape(1, OC2P)

    # lin1 weight remapped from PyTorch (c, h, w) flatten order into one (16,120)
    # block per pooled spatial position (h*PW2+w): no zero-row inflation.
    F1, H1 = params["lin1_w"].shape                       # (400, 120)
    assert F1 == OC2 * PH2 * PW2, "lin1 expects flattened conv2/pool features"
    w1l = params["lin1_w"].reshape(OC2, PH2 * PW2, H1).transpose(1, 0, 2)
    b1l = params["lin1_b"].reshape(1, H1)
    w2l = params["lin2_w"]
    b2l = params["lin2_b"].reshape(1, -1)
    w3l = jnp.pad(params["lin3_w"], ((0, 0), (0, LANES - n_classes)))
    b3l = jnp.pad(params["lin3_b"], (0, LANES - n_classes)).reshape(1, LANES)

    # scratch sizing for conv2's flat-row tap trick.
    Q2 = _round_up(OH2 * PW1, 8)                          # 144 conv2 flat rows
    L2 = _round_up((KH - 1) * PW1 + (KW - 1) + Q2, 8)     # 208 pooled1 flat rows

    kernel = functools.partial(
        _lenet5_kernel, OW1=OW1, PH1=PH1, PW1=PW1, KH=KH, KW=KW,
        PH2=PH2, PW2=PW2, Q2=Q2)

    def full(a):
        return pl.BlockSpec(a.shape, lambda n, nd=a.ndim: (0,) * nd)

    out = pl.pallas_call(
        kernel,
        out_shape=jax.ShapeDtypeStruct((N, 1, LANES), jnp.float32),
        grid=(N,),
        in_specs=[pl.BlockSpec((1, Q1P, LANES), lambda n: (n, 0, 0))]
                 + [full(a) for a in (w1c, b1c, w2c, b2c,
                                      w1l, b1l, w2l, b2l, w3l, b3l)],
        out_specs=pl.BlockSpec((1, 1, LANES), lambda n: (n, 0, 0)),
        scratch_shapes=[
            pltpu.VMEM((Q1P, CH8), jnp.float32),          # conv1 output (784, 8)
            pltpu.VMEM((L2, CH8), jnp.float32),           # pooled1 flat  (208, 8)
            pltpu.VMEM((Q2, OC2P), jnp.float32),          # conv2 output (144, 16)
        ],
        compiler_params=pltpu.CompilerParams(
            dimension_semantics=("parallel",)),
    )(xp, w1c, b1c, w2c, b2c, w1l, b1l, w2l, b2l, w3l, b3l)

    return out[:, 0, :n_classes]


# ----------------------------------------------------------------------------
# Parameters (PyTorch-style init, weights stored as (in, out) for x @ W + b)
# ----------------------------------------------------------------------------
def init_params(key, n_classes=10, lin1_in=400):
    ks = jax.random.split(key, 10)

    def u(k, shape, fan_in):
        bound = 1.0 / (fan_in ** 0.5)
        return jax.random.uniform(k, shape, jnp.float32, -bound, bound)

    return {
        "conv1_w": u(ks[0], (6, 3, 5, 5), 3 * 25),
        "conv1_b": u(ks[1], (6,), 3 * 25),
        "conv2_w": u(ks[2], (16, 6, 5, 5), 6 * 25),
        "conv2_b": u(ks[3], (16,), 6 * 25),
        "lin1_w": u(ks[4], (lin1_in, 120), lin1_in),
        "lin1_b": u(ks[5], (120,), lin1_in),
        "lin2_w": u(ks[6], (120, 84), 120),
        "lin2_b": u(ks[7], (84,), 120),
        "lin3_w": u(ks[8], (84, n_classes), 84),
        "lin3_b": u(ks[9], (n_classes,), 84),
    }


# ----------------------------------------------------------------------------
# Pure-JAX reference (loose numerical sanity check)
# ----------------------------------------------------------------------------
def _reference_forward(params, x):
    def conv(x, w, b):
        y = jax.lax.conv_general_dilated(
            x, w, (1, 1), "VALID", dimension_numbers=("NCHW", "OIHW", "NCHW"))
        return y + b.reshape(1, -1, 1, 1)

    def pool(x):
        return jnp.maximum(
            jnp.maximum(x[:, :, 0::2, 0::2], x[:, :, 0::2, 1::2]),
            jnp.maximum(x[:, :, 1::2, 0::2], x[:, :, 1::2, 1::2]))

    h = pool(jax.nn.relu(conv(x, params["conv1_w"], params["conv1_b"])))
    h = pool(jax.nn.relu(conv(h, params["conv2_w"], params["conv2_b"])))
    h = h.reshape(h.shape[0], -1)
    h = jax.nn.relu(h @ params["lin1_w"] + params["lin1_b"])
    h = jax.nn.relu(h @ params["lin2_w"] + params["lin2_b"])
    return h @ params["lin3_w"] + params["lin3_b"]


if __name__ == "__main__":
    key = jax.random.PRNGKey(0)
    k_param, k_input = jax.random.split(key)

    # 3x32x32 -> conv5 -> 28 -> pool -> 14 -> conv5 -> 10 -> pool -> 5
    # flatten: 16*5*5 = 400 features into lin1.
    n_classes = 10
    params = init_params(k_param, n_classes=n_classes, lin1_in=16 * 5 * 5)
    x = jax.random.normal(k_input, (2, 3, 32, 32), dtype=jnp.float32)

    fwd = jax.jit(lenet5_forward)
    out = jax.block_until_ready(fwd(params, x))

    assert out.shape == (2, n_classes), out.shape
    assert out.dtype == jnp.float32, out.dtype

    # Loose tolerance: the XLA reference conv/matmuls use default (bf16-rounded)
    # precision on TPU, while the Pallas path accumulates in f32.
    ref = jax.block_until_ready(jax.jit(_reference_forward)(params, x))
    max_err = float(jnp.max(jnp.abs(out - ref)))
    assert max_err < 5e-2, f"mismatch vs reference: max |diff| = {max_err}"

    print("KERNEL_OK")
</pallas_src>

<mosaic_0001>
module attributes {stable_mosaic.version = 11 : i64} {
  func.func @_lenet5_kernel(%arg0: i32, %arg1: memref<1x784x128xf32, #tpu.memory_space<vmem>>, %arg2: memref<128x8xf32, #tpu.memory_space<vmem>>, %arg3: memref<1x8xf32, #tpu.memory_space<vmem>>, %arg4: memref<25x8x16xf32, #tpu.memory_space<vmem>>, %arg5: memref<1x16xf32, #tpu.memory_space<vmem>>, %arg6: memref<25x16x120xf32, #tpu.memory_space<vmem>>, %arg7: memref<1x120xf32, #tpu.memory_space<vmem>>, %arg8: memref<120x84xf32, #tpu.memory_space<vmem>>, %arg9: memref<1x84xf32, #tpu.memory_space<vmem>>, %arg10: memref<84x128xf32, #tpu.memory_space<vmem>>, %arg11: memref<1x128xf32, #tpu.memory_space<vmem>>, %arg12: memref<1x1x128xf32, #tpu.memory_space<vmem>>, %arg13: memref<784x8xf32, #tpu.memory_space<vmem>>, %arg14: memref<208x8xf32, #tpu.memory_space<vmem>>, %arg15: memref<144x16xf32, #tpu.memory_space<vmem>>) attributes {dimension_semantics = [#tpu.dimension_semantics<parallel>], iteration_bounds = array<i64: 2>, scalar_prefetch = 0 : i64, scratch_operands = 3 : i64, tpu.core_type = #tpu.core_type<tc>, window_params = [{transform_indices = @transform_0, window_bounds = array<i64: 1, 784, 128>}, {pipeline_mode = #tpu.pipeline_mode<synchronous>, transform_indices = @transform_1, window_bounds = array<i64: 128, 8>}, {pipeline_mode = #tpu.pipeline_mode<synchronous>, transform_indices = @transform_2, window_bounds = array<i64: 1, 8>}, {pipeline_mode = #tpu.pipeline_mode<synchronous>, transform_indices = @transform_3, window_bounds = array<i64: 25, 8, 16>}, {pipeline_mode = #tpu.pipeline_mode<synchronous>, transform_indices = @transform_4, window_bounds = array<i64: 1, 16>}, {pipeline_mode = #tpu.pipeline_mode<synchronous>, transform_indices = @transform_5, window_bounds = array<i64: 25, 16, 120>}, {pipeline_mode = #tpu.pipeline_mode<synchronous>, transform_indices = @transform_6, window_bounds = array<i64: 1, 120>}, {pipeline_mode = #tpu.pipeline_mode<synchronous>, transform_indices = @transform_7, window_bounds = array<i64: 120, 84>}, {pipeline_mode = #tpu.pipeline_mode<synchronous>, transform_indices = @transform_8, window_bounds = array<i64: 1, 84>}, {pipeline_mode = #tpu.pipeline_mode<synchronous>, transform_indices = @transform_9, window_bounds = array<i64: 84, 128>}, {pipeline_mode = #tpu.pipeline_mode<synchronous>, transform_indices = @transform_10, window_bounds = array<i64: 1, 128>}, {transform_indices = @transform_11, window_bounds = array<i64: 1, 1, 128>}]} {
    %c0 = arith.constant 0 : index
    %c0_0 = arith.constant 0 : index
    %c0_1 = arith.constant 0 : index
    %0 = vector.load %arg1[%c0, %c0_0, %c0_1] : memref<1x784x128xf32, #tpu.memory_space<vmem>>, vector<1x784x128xf32>
    %1 = vector.shape_cast %0 : vector<1x784x128xf32> to vector<784x128xf32>
    %c0_2 = arith.constant 0 : index
    %c0_3 = arith.constant 0 : index
    %2 = vector.load %arg2[%c0_2, %c0_3] : memref<128x8xf32, #tpu.memory_space<vmem>>, vector<128x8xf32>
    %cst = arith.constant dense<0.000000e+00> : vector<784x8xf32>
    %3 = tpu.matmul %1, %2, %cst {dimension_numbers = #tpu.dot_dimension_numbers<[1], [0], [0], [1], [0, 0, 1, 1], [], []>} : vector<784x128xf32>, vector<128x8xf32>, vector<784x8xf32> -> vector<784x8xf32>
    %c0_4 = arith.constant 0 : index
    %c0_5 = arith.constant 0 : index
    %4 = vector.load %arg13[%c0_4, %c0_5] : memref<784x8xf32, #tpu.memory_space<vmem>>, vector<784x8xf32>
    tpu.vector_store %arg13[%c0_4, %c0_5], %3 {strides = array<i32>} : memref<784x8xf32, #tpu.memory_space<vmem>>, vector<784x8xf32>,
    %c0_6 = arith.constant 0 : index
    %c0_7 = arith.constant 0 : index
    %5 = vector.load %arg3[%c0_6, %c0_7] : memref<1x8xf32, #tpu.memory_space<vmem>>, vector<1x8xf32>
    %cst_8 = arith.constant 0.000000e+00 : f32
    %6 = vector.broadcast %cst_8 : f32 to vector<208x8xf32>
    %c0_9 = arith.constant 0 : index
    %c0_10 = arith.constant 0 : index
    %7 = vector.load %arg14[%c0_9, %c0_10] : memref<208x8xf32, #tpu.memory_space<vmem>>, vector<208x8xf32>
    tpu.vector_store %arg14[%c0_9, %c0_10], %6 {strides = array<i32>} : memref<208x8xf32, #tpu.memory_space<vmem>>, vector<208x8xf32>,
    %c0_11 = arith.constant 0 : index
    %c0_12 = arith.constant 0 : index
    %8 = tpu.strided_load %arg13[%c0_11, %c0_12] {strides = array<i32: 2, 1>} : memref<784x8xf32, #tpu.memory_space<vmem>>, vector<14x8xf32>
    %c1 = arith.constant 1 : index
    %c0_13 = arith.constant 0 : index
    %9 = tpu.strided_load %arg13[%c1, %c0_13] {strides = array<i32: 2, 1>} : memref<784x8xf32, #tpu.memory_space<vmem>>, vector<14x8xf32>
    %10 = arith.maximumf %8, %9 : vector<14x8xf32>
    %c28 = arith.constant 28 : index
    %c0_14 = arith.constant 0 : index
    %11 = tpu.strided_load %arg13[%c28, %c0_14] {strides = array<i32: 2, 1>} : memref<784x8xf32, #tpu.memory_space<vmem>>, vector<14x8xf32>
    %c29 = arith.constant 29 : index
    %c0_15 = arith.constant 0 : index
    %12 = tpu.strided_load %arg13[%c29, %c0_15] {strides = array<i32: 2, 1>} : memref<784x8xf32, #tpu.memory_space<vmem>>, vector<14x8xf32>
    %13 = arith.maximumf %11, %12 : vector<14x8xf32>
    %14 = arith.maximumf %10, %13 : vector<14x8xf32>
    %15 = vector.broadcast %5 : vector<1x8xf32> to vector<14x8xf32>
    %16 = arith.addf %14, %15 : vector<14x8xf32>
    %cst_16 = arith.constant 0.000000e+00 : f32
    %17 = vector.broadcast %cst_16 : f32 to vector<14x8xf32>
    %18 = arith.maximumf %16, %17 : vector<14x8xf32>
    %c0_17 = arith.constant 0 : index
    %c0_18 = arith.constant 0 : index
    %19 = vector.load %arg14[%c0_17, %c0_18] : memref<208x8xf32, #tpu.memory_space<vmem>>, vector<14x8xf32>
    tpu.vector_store %arg14[%c0_17, %c0_18], %18 {strides = array<i32>} : memref<208x8xf32, #tpu.memory_space<vmem>>, vector<14x8xf32>,
    %c56 = arith.constant 56 : index
    %c0_19 = arith.constant 0 : index
    %20 = tpu.strided_load %arg13[%c56, %c0_19] {strides = array<i32: 2, 1>} : memref<784x8xf32, #tpu.memory_space<vmem>>, vector<14x8xf32>
    %c57 = arith.constant 57 : index
    %c0_20 = arith.constant 0 : index
    %21 = tpu.strided_load %arg13[%c57, %c0_20] {strides = array<i32: 2, 1>} : memref<784x8xf32, #tpu.memory_space<vmem>>, vector<14x8xf32>
    %22 = arith.maximumf %20, %21 : vector<14x8xf32>
    %c84 = arith.constant 84 : index
    %c0_21 = arith.constant 0 : index
    %23 = tpu.strided_load %arg13[%c84, %c0_21] {strides = array<i32: 2, 1>} : memref<784x8xf32, #tpu.memory_space<vmem>>, vector<14x8xf32>
    %c85 = arith.constant 85 : index
    %c0_22 = arith.constant 0 : index
    %24 = tpu.strided_load %arg13[%c85, %c0_22] {strides = array<i32: 2, 1>} : memref<784x8xf32, #tpu.memory_space<vmem>>, vector<14x8xf32>
    %25 = arith.maximumf %23, %24 : vector<14x8xf32>
    %26 = arith.maximumf %22, %25 : vector<14x8xf32>
    %27 = vector.broadcast %5 : vector<1x8xf32> to vector<14x8xf32>
    %28 = arith.addf %26, %27 : vector<14x8xf32>
    %cst_23 = arith.constant 0.000000e+00 : f32
    %29 = vector.broadcast %cst_23 : f32 to vector<14x8xf32>
    %30 = arith.maximumf %28, %29 : vector<14x8xf32>
    %c14 = arith.constant 14 : index
    %c0_24 = arith.constant 0 : index
    %31 = vector.load %arg14[%c14, %c0_24] : memref<208x8xf32, #tpu.memory_space<vmem>>, vector<14x8xf32>
    tpu.vector_store %arg14[%c14, %c0_24], %30 {strides = array<i32>} : memref<208x8xf32, #tpu.memory_space<vmem>>, vector<14x8xf32>,
    %c112 = arith.constant 112 : index
    %c0_25 = arith.constant 0 : index
    %32 = tpu.strided_load %arg13[%c112, %c0_25] {strides = array<i32: 2, 1>} : memref<784x8xf32, #tpu.memory_space<vmem>>, vector<14x8xf32>
    %c113 = arith.constant 113 : index
    %c0_26 = arith.constant 0 : index
    %33 = tpu.strided_load %arg13[%c113, %c0_26] {strides = array<i32: 2, 1>} : memref<784x8xf32, #tpu.memory_space<vmem>>, vector<14x8xf32>
    %34 = arith.maximumf %32, %33 : vector<14x8xf32>
    %c140 = arith.constant 140 : index
    %c0_27 = arith.constant 0 : index
    %35 = tpu.strided_load %arg13[%c140, %c0_27] {strides = array<i32: 2, 1>} : memref<784x8xf32, #tpu.memory_space<vmem>>, vector<14x8xf32>
    %c141 = arith.constant 141 : index
    %c0_28 = arith.constant 0 : index
    %36 = tpu.strided_load %arg13[%c141, %c0_28] {strides = array<i32: 2, 1>} : memref<784x8xf32, #tpu.memory_space<vmem>>, vector<14x8xf32>
    %37 = arith.maximumf %35, %36 : vector<14x8xf32>
    %38 = arith.maximumf %34, %37 : vector<14x8xf32>
    %39 = vector.broadcast %5 : vector<1x8xf32> to vector<14x8xf32>
    %40 = arith.addf %38, %39 : vector<14x8xf32>
    %cst_29 = arith.constant 0.000000e+00 : f32
    %41 = vector.broadcast %cst_29 : f32 to vector<14x8xf32>
    %42 = arith.maximumf %40, %41 : vector<14x8xf32>
    %c28_30 = arith.constant 28 : index
    %c0_31 = arith.constant 0 : index
    %43 = vector.load %arg14[%c28_30, %c0_31] : memref<208x8xf32, #tpu.memory_space<vmem>>, vector<14x8xf32>
    tpu.vector_store %arg14[%c28_30, %c0_31], %42 {strides = array<i32>} : memref<208x8xf32, #tpu.memory_space<vmem>>, vector<14x8xf32>,
    %c168 = arith.constant 168 : index
    %c0_32 = arith.constant 0 : index
    %44 = tpu.strided_load %arg13[%c168, %c0_32] {strides = array<i32: 2, 1>} : memref<784x8xf32, #tpu.memory_space<vmem>>, vector<14x8xf32>
    %c169 = arith.constant 169 : index
    %c0_33 = arith.constant 0 : index
    %45 = tpu.strided_load %arg13[%c169, %c0_33] {strides = array<i32: 2, 1>} : memref<784x8xf32, #tpu.memory_space<vmem>>, vector<14x8xf32>
    %46 = arith.maximumf %44, %45 : vector<14x8xf32>
    %c196 = arith.constant 196 : index
    %c0_34 = arith.constant 0 : index
    %47 = tpu.strided_load %arg13[%c196, %c0_34] {strides = array<i32: 2, 1>} : memref<784x8xf32, #tpu.memory_space<vmem>>, vector<14x8xf32>
    %c197 = arith.constant 197 : index
    %c0_35 = arith.constant 0 : index
    %48 = tpu.strided_load %arg13[%c197, %c0_35] {strides = array<i32: 2, 1>} : memref<784x8xf32, #tpu.memory_space<vmem>>, vector<14x8xf32>
    %49 = arith.maximumf %47, %48 : vector<14x8xf32>
    %50 = arith.maximumf %46, %49 : vector<14x8xf32>
    %51 = vector.broadcast %5 : vector<1x8xf32> to vector<14x8xf32>
    %52 = arith.addf %50, %51 : vector<14x8xf32>
    %cst_36 = arith.constant 0.000000e+00 : f32
    %53 = vector.broadcast %cst_36 : f32 to vector<14x8xf32>
    %54 = arith.maximumf %52, %53 : vector<14x8xf32>
    %c42 = arith.constant 42 : index
    %c0_37 = arith.constant 0 : index
    %55 = vector.load %arg14[%c42, %c0_37] : memref<208x8xf32, #tpu.memory_space<vmem>>, vector<14x8xf32>
    tpu.vector_store %arg14[%c42, %c0_37], %54 {strides = array<i32>} : memref<208x8xf32, #tpu.memory_space<vmem>>, vector<14x8xf32>,
    %c224 = arith.constant 224 : index
    %c0_38 = arith.constant 0 : index
    %56 = tpu.strided_load %arg13[%c224, %c0_38] {strides = array<i32: 2, 1>} : memref<784x8xf32, #tpu.memory_space<vmem>>, vector<14x8xf32>
    %c225 = arith.constant 225 : index
    %c0_39 = arith.constant 0 : index
    %57 = tpu.strided_load %arg13[%c225, %c0_39] {strides = array<i32: 2, 1>} : memref<784x8xf32, #tpu.memory_space<vmem>>, vector<14x8xf32>
    %58 = arith.maximumf %56, %57 : vector<14x8xf32>
    %c252 = arith.constant 252 : index
    %c0_40 = arith.constant 0 : index
    %59 = tpu.strided_load %arg13[%c252, %c0_40] {strides = array<i32: 2, 1>} : memref<784x8xf32, #tpu.memory_space<vmem>>, vector<14x8xf32>
    %c253 = arith.constant 253 : index
    %c0_41 = arith.constant 0 : index
    %60 = tpu.strided_load %arg13[%c253, %c0_41] {strides = array<i32: 2, 1>} : memref<784x8xf32, #tpu.memory_space<vmem>>, vector<14x8xf32>
    %61 = arith.maximumf %59, %60 : vector<14x8xf32>
    %62 = arith.maximumf %58, %61 : vector<14x8xf32>
    %63 = vector.broadcast %5 : vector<1x8xf32> to vector<14x8xf32>
    %64 = arith.addf %62, %63 : vector<14x8xf32>
    %cst_42 = arith.constant 0.000000e+00 : f32
    %65 = vector.broadcast %cst_42 : f32 to vector<14x8xf32>
    %66 = arith.maximumf %64, %65 : vector<14x8xf32>
    %c56_43 = arith.constant 56 : index
    %c0_44 = arith.constant 0 : index
    %67 = vector.load %arg14[%c56_43, %c0_44] : memref<208x8xf32, #tpu.memory_space<vmem>>, vector<14x8xf32>
    tpu.vector_store %arg14[%c56_43, %c0_44], %66 {strides = array<i32>} : memref<208x8xf32, #tpu.memory_space<vmem>>, vector<14x8xf32>,
    %c280 = arith.constant 280 : index
    %c0_45 = arith.constant 0 : index
    %68 = tpu.strided_load %arg13[%c280, %c0_45] {strides = array<i32: 2, 1>} : memref<784x8xf32, #tpu.memory_space<vmem>>, vector<14x8xf32>
    %c281 = arith.constant 281 : index
    %c0_46 = arith.constant 0 : index
    %69 = tpu.strided_load %arg13[%c281, %c0_46] {strides = array<i32: 2, 1>} : memref<784x8xf32, #tpu.memory_space<vmem>>, vector<14x8xf32>
    %70 = arith.maximumf %68, %69 : vector<14x8xf32>
    %c308 = arith.constant 308 : index
    %c0_47 = arith.constant 0 : index
    %71 = tpu.strided_load %arg13[%c308, %c0_47] {strides = array<i32: 2, 1>} : memref<784x8xf32, #tpu.memory_space<vmem>>, vector<14x8xf32>
    %c309 = arith.constant 309 : index
    %c0_48 = arith.constant 0 : index
    %72 = tpu.strided_load %arg13[%c309, %c0_48] {strides = array<i32: 2, 1>} : memref<784x8xf32, #tpu.memory_space<vmem>>, vector<14x8xf32>
    %73 = arith.maximumf %71, %72 : vector<14x8xf32>
    %74 = arith.maximumf %70, %73 : vector<14x8xf32>
    %75 = vector.broadcast %5 : vector<1x8xf32> to vector<14x8xf32>
    %76 = arith.addf %74, %75 : vector<14x8xf32>
    %cst_49 = arith.constant 0.000000e+00 : f32
    %77 = vector.broadcast %cst_49 : f32 to vector<14x8xf32>
    %78 = arith.maximumf %76, %77 : vector<14x8xf32>
    %c70 = arith.constant 70 : index
    %c0_50 = arith.constant 0 : index
    %79 = vector.load %arg14[%c70, %c0_50] : memref<208x8xf32, #tpu.memory_space<vmem>>, vector<14x8xf32>
    tpu.vector_store %arg14[%c70, %c0_50], %78 {strides = array<i32>} : memref<208x8xf32, #tpu.memory_space<vmem>>, vector<14x8xf32>,
    %c336 = arith.constant 336 : index
    %c0_51 = arith.constant 0 : index
    %80 = tpu.strided_load %arg13[%c336, %c0_51] {strides = array<i32: 2, 1>} : memref<784x8xf32, #tpu.memory_space<vmem>>, vector<14x8xf32>
    %c337 = arith.constant 337 : index
    %c0_52 = arith.constant 0 : index
    %81 = tpu.strided_load %arg13[%c337, %c0_52] {strides = array<i32: 2, 1>} : memref<784x8xf32, #tpu.memory_space<vmem>>, vector<14x8xf32>
    %82 = arith.maximumf %80, %81 : vector<14x8xf32>
    %c364 = arith.constant 364 : index
    %c0_53 = arith.constant 0 : index
    %83 = tpu.strided_load %arg13[%c364, %c0_53] {strides = array<i32: 2, 1>} : memref<784x8xf32, #tpu.memory_space<vmem>>, vector<14x8xf32>
    %c365 = arith.constant 365 : index
    %c0_54 = arith.constant 0 : index
    %84 = tpu.strided_load %arg13[%c365, %c0_54] {strides = array<i32: 2, 1>} : memref<784x8xf32, #tpu.memory_space<vmem>>, vector<14x8xf32>
    %85 = arith.maximumf %83, %84 : vector<14x8xf32>
    %86 = arith.maximumf %82, %85 : vector<14x8xf32>
    %87 = vector.broadcast %5 : vector<1x8xf32> to vector<14x8xf32>
    %88 = arith.addf %86, %87 : vector<14x8xf32>
    %cst_55 = arith.constant 0.000000e+00 : f32
    %89 = vector.broadcast %cst_55 : f32 to vector<14x8xf32>
    %90 = arith.maximumf %88, %89 : vector<14x8xf32>
    %c84_56 = arith.constant 84 : index
    %c0_57 = arith.constant 0 : index
    %91 = vector.load %arg14[%c84_56, %c0_57] : memref<208x8xf32, #tpu.memory_space<vmem>>, vector<14x8xf32>
    tpu.vector_store %arg14[%c84_56, %c0_57], %90 {strides = array<i32>} : memref<208x8xf32, #tpu.memory_space<vmem>>, vector<14x8xf32>,
    %c392 = arith.constant 392 : index
    %c0_58 = arith.constant 0 : index
    %92 = tpu.strided_load %arg13[%c392, %c0_58] {strides = array<i32: 2, 1>} : memref<784x8xf32, #tpu.memory_space<vmem>>, vector<14x8xf32>
    %c393 = arith.constant 393 : index
    %c0_59 = arith.constant 0 : index
    %93 = tpu.strided_load %arg13[%c393, %c0_59] {strides = array<i32: 2, 1>} : memref<784x8xf32, #tpu.memory_space<vmem>>, vector<14x8xf32>
    %94 = arith.maximumf %92, %93 : vector<14x8xf32>
    %c420 = arith.constant 420 : index
    %c0_60 = arith.constant 0 : index
    %95 = tpu.strided_load %arg13[%c420, %c0_60] {strides = array<i32: 2, 1>} : memref<784x8xf32, #tpu.memory_space<vmem>>, vector<14x8xf32>
    %c421 = arith.constant 421 : index
    %c0_61 = arith.constant 0 : index
    %96 = tpu.strided_load %arg13[%c421, %c0_61] {strides = array<i32: 2, 1>} : memref<784x8xf32, #tpu.memory_space<vmem>>, vector<14x8xf32>
    %97 = arith.maximumf %95, %96 : vector<14x8xf32>
    %98 = arith.maximumf %94, %97 : vector<14x8xf32>
    %99 = vector.broadcast %5 : vector<1x8xf32> to vector<14x8xf32>
    %100 = arith.addf %98, %99 : vector<14x8xf32>
    %cst_62 = arith.constant 0.000000e+00 : f32
    %101 = vector.broadcast %cst_62 : f32 to vector<14x8xf32>
    %102 = arith.maximumf %100, %101 : vector<14x8xf32>
    %c98 = arith.constant 98 : index
    %c0_63 = arith.constant 0 : index
    %103 = vector.load %arg14[%c98, %c0_63] : memref<208x8xf32, #tpu.memory_space<vmem>>, vector<14x8xf32>
    tpu.vector_store %arg14[%c98, %c0_63], %102 {strides = array<i32>} : memref<208x8xf32, #tpu.memory_space<vmem>>, vector<14x8xf32>,
    %c448 = arith.constant 448 : index
    %c0_64 = arith.constant 0 : index
    %104 = tpu.strided_load %arg13[%c448, %c0_64] {strides = array<i32: 2, 1>} : memref<784x8xf32, #tpu.memory_space<vmem>>, vector<14x8xf32>
    %c449 = arith.constant 449 : index
    %c0_65 = arith.constant 0 : index
    %105 = tpu.strided_load %arg13[%c449, %c0_65] {strides = array<i32: 2, 1>} : memref<784x8xf32, #tpu.memory_space<vmem>>, vector<14x8xf32>
    %106 = arith.maximumf %104, %105 : vector<14x8xf32>
    %c476 = arith.constant 476 : index
    %c0_66 = arith.constant 0 : index
    %107 = tpu.strided_load %arg13[%c476, %c0_66] {strides = array<i32: 2, 1>} : memref<784x8xf32, #tpu.memory_space<vmem>>, vector<14x8xf32>
    %c477 = arith.constant 477 : index
    %c0_67 = arith.constant 0 : index
    %108 = tpu.strided_load %arg13[%c477, %c0_67] {strides = array<i32: 2, 1>} : memref<784x8xf32, #tpu.memory_space<vmem>>, vector<14x8xf32>
    %109 = arith.maximumf %107, %108 : vector<14x8xf32>
    %110 = arith.maximumf %106, %109 : vector<14x8xf32>
    %111 = vector.broadcast %5 : vector<1x8xf32> to vector<14x8xf32>
    %112 = arith.addf %110, %111 : vector<14x8xf32>
    %cst_68 = arith.constant 0.000000e+00 : f32
    %113 = vector.broadcast %cst_68 : f32 to vector<14x8xf32>
    %114 = arith.maximumf %112, %113 : vector<14x8xf32>
    %c112_69 = arith.constant 112 : index
    %c0_70 = arith.constant 0 : index
    %115 = vector.load %arg14[%c112_69, %c0_70] : memref<208x8xf32, #tpu.memory_space<vmem>>, vector<14x8xf32>
    tpu.vector_store %arg14[%c112_69, %c0_70], %114 {strides = array<i32>} : memref<208x8xf32, #tpu.memory_space<vmem>>, vector<14x8xf32>,
    %c504 = arith.constant 504 : index
    %c0_71 = arith.constant 0 : index
    %116 = tpu.strided_load %arg13[%c504, %c0_71] {strides = array<i32: 2, 1>} : memref<784x8xf32, #tpu.memory_space<vmem>>, vector<14x8xf32>
    %c505 = arith.constant 505 : index
    %c0_72 = arith.constant 0 : index
    %117 = tpu.strided_load %arg13[%c505, %c0_72] {strides = array<i32: 2, 1>} : memref<784x8xf32, #tpu.memory_space<vmem>>, vector<14x8xf32>
    %118 = arith.maximumf %116, %117 : vector<14x8xf32>
    %c532 = arith.constant 532 : index
    %c0_73 = arith.constant 0 : index
    %119 = tpu.strided_load %arg13[%c532, %c0_73] {strides = array<i32: 2, 1>} : memref<784x8xf32, #tpu.memory_space<vmem>>, vector<14x8xf32>
    %c533 = arith.constant 533 : index
    %c0_74 = arith.constant 0 : index
    %120 = tpu.strided_load %arg13[%c533, %c0_74] {strides = array<i32: 2, 1>} : memref<784x8xf32, #tpu.memory_space<vmem>>, vector<14x8xf32>
    %121 = arith.maximumf %119, %120 : vector<14x8xf32>
    %122 = arith.maximumf %118, %121 : vector<14x8xf32>
    %123 = vector.broadcast %5 : vector<1x8xf32> to vector<14x8xf32>
    %124 = arith.addf %122, %123 : vector<14x8xf32>
    %cst_75 = arith.constant 0.000000e+00 : f32
    %125 = vector.broadcast %cst_75 : f32 to vector<14x8xf32>
    %126 = arith.maximumf %124, %125 : vector<14x8xf32>
    %c126 = arith.constant 126 : index
    %c0_76 = arith.constant 0 : index
    %127 = vector.load %arg14[%c126, %c0_76] : memref<208x8xf32, #tpu.memory_space<vmem>>, vector<14x8xf32>
    tpu.vector_store %arg14[%c126, %c0_76], %126 {strides = array<i32>} : memref<208x8xf32, #tpu.memory_space<vmem>>, vector<14x8xf32>,
    %c560 = arith.constant 560 : index
    %c0_77 = arith.constant 0 : index
    %128 = tpu.strided_load %arg13[%c560, %c0_77] {strides = array<i32: 2, 1>} : memref<784x8xf32, #tpu.memory_space<vmem>>, vector<14x8xf32>
    %c561 = arith.constant 561 : index
    %c0_78 = arith.constant 0 : index
    %129 = tpu.strided_load %arg13[%c561, %c0_78] {strides = array<i32: 2, 1>} : memref<784x8xf32, #tpu.memory_space<vmem>>, vector<14x8xf32>
    %130 = arith.maximumf %128, %129 : vector<14x8xf32>
    %c588 = arith.constant 588 : index
    %c0_79 = arith.constant 0 : index
    %131 = tpu.strided_load %arg13[%c588, %c0_79] {strides = array<i32: 2, 1>} : memref<784x8xf32, #tpu.memory_space<vmem>>, vector<14x8xf32>
    %c589 = arith.constant 589 : index
    %c0_80 = arith.constant 0 : index
    %132 = tpu.strided_load %arg13[%c589, %c0_80] {strides = array<i32: 2, 1>} : memref<784x8xf32, #tpu.memory_space<vmem>>, vector<14x8xf32>
    %133 = arith.maximumf %131, %132 : vector<14x8xf32>
    %134 = arith.maximumf %130, %133 : vector<14x8xf32>
    %135 = vector.broadcast %5 : vector<1x8xf32> to vector<14x8xf32>
    %136 = arith.addf %134, %135 : vector<14x8xf32>
    %cst_81 = arith.constant 0.000000e+00 : f32
    %137 = vector.broadcast %cst_81 : f32 to vector<14x8xf32>
    %138 = arith.maximumf %136, %137 : vector<14x8xf32>
    %c140_82 = arith.constant 140 : index
    %c0_83 = arith.constant 0 : index
    %139 = vector.load %arg14[%c140_82, %c0_83] : memref<208x8xf32, #tpu.memory_space<vmem>>, vector<14x8xf32>
    tpu.vector_store %arg14[%c140_82, %c0_83], %138 {strides = array<i32>} : memref<208x8xf32, #tpu.memory_space<vmem>>, vector<14x8xf32>,
    %c616 = arith.constant 616 : index
    %c0_84 = arith.constant 0 : index
    %140 = tpu.strided_load %arg13[%c616, %c0_84] {strides = array<i32: 2, 1>} : memref<784x8xf32, #tpu.memory_space<vmem>>, vector<14x8xf32>
    %c617 = arith.constant 617 : index
    %c0_85 = arith.constant 0 : index
    %141 = tpu.strided_load %arg13[%c617, %c0_85] {strides = array<i32: 2, 1>} : memref<784x8xf32, #tpu.memory_space<vmem>>, vector<14x8xf32>
    %142 = arith.maximumf %140, %141 : vector<14x8xf32>
    %c644 = arith.constant 644 : index
    %c0_86 = arith.constant 0 : index
    %143 = tpu.strided_load %arg13[%c644, %c0_86] {strides = array<i32: 2, 1>} : memref<784x8xf32, #tpu.memory_space<vmem>>, vector<14x8xf32>
    %c645 = arith.constant 645 : index
    %c0_87 = arith.constant 0 : index
    %144 = tpu.strided_load %arg13[%c645, %c0_87] {strides = array<i32: 2, 1>} : memref<784x8xf32, #tpu.memory_space<vmem>>, vector<14x8xf32>
    %145 = arith.maximumf %143, %144 : vector<14x8xf32>
    %146 = arith.maximumf %142, %145 : vector<14x8xf32>
    %147 = vector.broadcast %5 : vector<1x8xf32> to vector<14x8xf32>
    %148 = arith.addf %146, %147 : vector<14x8xf32>
    %cst_88 = arith.constant 0.000000e+00 : f32
    %149 = vector.broadcast %cst_88 : f32 to vector<14x8xf32>
    %150 = arith.maximumf %148, %149 : vector<14x8xf32>
    %c154 = arith.constant 154 : index
    %c0_89 = arith.constant 0 : index
    %151 = vector.load %arg14[%c154, %c0_89] : memref<208x8xf32, #tpu.memory_space<vmem>>, vector<14x8xf32>
    tpu.vector_store %arg14[%c154, %c0_89], %150 {strides = array<i32>} : memref<208x8xf32, #tpu.memory_space<vmem>>, vector<14x8xf32>,
    %c672 = arith.constant 672 : index
    %c0_90 = arith.constant 0 : index
    %152 = tpu.strided_load %arg13[%c672, %c0_90] {strides = array<i32: 2, 1>} : memref<784x8xf32, #tpu.memory_space<vmem>>, vector<14x8xf32>
    %c673 = arith.constant 673 : index
    %c0_91 = arith.constant 0 : index
    %153 = tpu.strided_load %arg13[%c673, %c0_91] {strides = array<i32: 2, 1>} : memref<784x8xf32, #tpu.memory_space<vmem>>, vector<14x8xf32>
    %154 = arith.maximumf %152, %153 : vector<14x8xf32>
    %c700 = arith.constant 700 : index
    %c0_92 = arith.constant 0 : index
    %155 = tpu.strided_load %arg13[%c700, %c0_92] {strides = array<i32: 2, 1>} : memref<784x8xf32, #tpu.memory_space<vmem>>, vector<14x8xf32>
    %c701 = arith.constant 701 : index
    %c0_93 = arith.constant 0 : index
    %156 = tpu.strided_load %arg13[%c701, %c0_93] {strides = array<i32: 2, 1>} : memref<784x8xf32, #tpu.memory_space<vmem>>, vector<14x8xf32>
    %157 = arith.maximumf %155, %156 : vector<14x8xf32>
    %158 = arith.maximumf %154, %157 : vector<14x8xf32>
    %159 = vector.broadcast %5 : vector<1x8xf32> to vector<14x8xf32>
    %160 = arith.addf %158, %159 : vector<14x8xf32>
    %cst_94 = arith.constant 0.000000e+00 : f32
    %161 = vector.broadcast %cst_94 : f32 to vector<14x8xf32>
    %162 = arith.maximumf %160, %161 : vector<14x8xf32>
    %c168_95 = arith.constant 168 : index
    %c0_96 = arith.constant 0 : index
    %163 = vector.load %arg14[%c168_95, %c0_96] : memref<208x8xf32, #tpu.memory_space<vmem>>, vector<14x8xf32>
    tpu.vector_store %arg14[%c168_95, %c0_96], %162 {strides = array<i32>} : memref<208x8xf32, #tpu.memory_space<vmem>>, vector<14x8xf32>,
    %c728 = arith.constant 728 : index
    %c0_97 = arith.constant 0 : index
    %164 = tpu.strided_load %arg13[%c728, %c0_97] {strides = array<i32: 2, 1>} : memref<784x8xf32, #tpu.memory_space<vmem>>, vector<14x8xf32>
    %c729 = arith.constant 729 : index
    %c0_98 = arith.constant 0 : index
    %165 = tpu.strided_load %arg13[%c729, %c0_98] {strides = array<i32: 2, 1>} : memref<784x8xf32, #tpu.memory_space<vmem>>, vector<14x8xf32>
    %166 = arith.maximumf %164, %165 : vector<14x8xf32>
    %c756 = arith.constant 756 : index
    %c0_99 = arith.constant 0 : index
    %167 = tpu.strided_load %arg13[%c756, %c0_99] {strides = array<i32: 2, 1>} : memref<784x8xf32, #tpu.memory_space<vmem>>, vector<14x8xf32>
    %c757 = arith.constant 757 : index
    %c0_100 = arith.constant 0 : index
    %168 = tpu.strided_load %arg13[%c757, %c0_100] {strides = array<i32: 2, 1>} : memref<784x8xf32, #tpu.memory_space<vmem>>, vector<14x8xf32>
    %169 = arith.maximumf %167, %168 : vector<14x8xf32>
    %170 = arith.maximumf %166, %169 : vector<14x8xf32>
    %171 = vector.broadcast %5 : vector<1x8xf32> to vector<14x8xf32>
    %172 = arith.addf %170, %171 : vector<14x8xf32>
    %cst_101 = arith.constant 0.000000e+00 : f32
    %173 = vector.broadcast %cst_101 : f32 to vector<14x8xf32>
    %174 = arith.maximumf %172, %173 : vector<14x8xf32>
    %c182 = arith.constant 182 : index
    %c0_102 = arith.constant 0 : index
    %175 = vector.load %arg14[%c182, %c0_102] : memref<208x8xf32, #tpu.memory_space<vmem>>, vector<14x8xf32>
    tpu.vector_store %arg14[%c182, %c0_102], %174 {strides = array<i32>} : memref<208x8xf32, #tpu.memory_space<vmem>>, vector<14x8xf32>,
    %cst_103 = arith.constant 0.000000e+00 : f32
    %176 = vector.broadcast %cst_103 : f32 to vector<144x16xf32>
    %c0_104 = arith.constant 0 : index
    %c0_105 = arith.constant 0 : index
    %177 = vector.load %arg14[%c0_104, %c0_105] : memref<208x8xf32, #tpu.memory_space<vmem>>, vector<144x8xf32>
    %c0_106 = arith.constant 0 : index
    %c0_107 = arith.constant 0 : index
    %c0_108 = arith.constant 0 : index
    %178 = vector.load %arg4[%c0_106, %c0_107, %c0_108] : memref<25x8x16xf32, #tpu.memory_space<vmem>>, vector<1x8x16xf32>
    %179 = vector.shape_cast %178 : vector<1x8x16xf32> to vector<8x16xf32>
    %cst_109 = arith.constant dense<0.000000e+00> : vector<144x16xf32>
    %180 = tpu.matmul %177, %179, %cst_109 {dimension_numbers = #tpu.dot_dimension_numbers<[1], [0], [0], [1], [0, 0, 1, 1], [], []>} : vector<144x8xf32>, vector<8x16xf32>, vector<144x16xf32> -> vector<144x16xf32>
    %181 = arith.addf %176, %180 : vector<144x16xf32>
    %c1_110 = arith.constant 1 : index
    %c0_111 = arith.constant 0 : index
    %182 = vector.load %arg14[%c1_110, %c0_111] : memref<208x8xf32, #tpu.memory_space<vmem>>, vector<144x8xf32>
    %c1_112 = arith.constant 1 : index
    %c0_113 = arith.constant 0 : index
    %c0_114 = arith.constant 0 : index
    %183 = vector.load %arg4[%c1_112, %c0_113, %c0_114] : memref<25x8x16xf32, #tpu.memory_space<vmem>>, vector<1x8x16xf32>
    %184 = vector.shape_cast %183 : vector<1x8x16xf32> to vector<8x16xf32>
    %cst_115 = arith.constant dense<0.000000e+00> : vector<144x16xf32>
    %185 = tpu.matmul %182, %184, %cst_115 {dimension_numbers = #tpu.dot_dimension_numbers<[1], [0], [0], [1], [0, 0, 1, 1], [], []>} : vector<144x8xf32>, vector<8x16xf32>, vector<144x16xf32> -> vector<144x16xf32>
    %186 = arith.addf %181, %185 : vector<144x16xf32>
    %c2 = arith.constant 2 : index
    %c0_116 = arith.constant 0 : index
    %187 = vector.load %arg14[%c2, %c0_116] : memref<208x8xf32, #tpu.memory_space<vmem>>, vector<144x8xf32>
    %c2_117 = arith.constant 2 : index
    %c0_118 = arith.constant 0 : index
    %c0_119 = arith.constant 0 : index
    %188 = vector.load %arg4[%c2_117, %c0_118, %c0_119] : memref<25x8x16xf32, #tpu.memory_space<vmem>>, vector<1x8x16xf32>
    %189 = vector.shape_cast %188 : vector<1x8x16xf32> to vector<8x16xf32>
    %cst_120 = arith.constant dense<0.000000e+00> : vector<144x16xf32>
    %190 = tpu.matmul %187, %189, %cst_120 {dimension_numbers = #tpu.dot_dimension_numbers<[1], [0], [0], [1], [0, 0, 1, 1], [], []>} : vector<144x8xf32>, vector<8x16xf32>, vector<144x16xf32> -> vector<144x16xf32>
    %191 = arith.addf %186, %190 : vector<144x16xf32>
    %c3 = arith.constant 3 : index
    %c0_121 = arith.constant 0 : index
    %192 = vector.load %arg14[%c3, %c0_121] : memref<208x8xf32, #tpu.memory_space<vmem>>, vector<144x8xf32>
    %c3_122 = arith.constant 3 : index
    %c0_123 = arith.constant 0 : index
    %c0_124 = arith.constant 0 : index
    %193 = vector.load %arg4[%c3_122, %c0_123, %c0_124] : memref<25x8x16xf32, #tpu.memory_space<vmem>>, vector<1x8x16xf32>
    %194 = vector.shape_cast %193 : vector<1x8x16xf32> to vector<8x16xf32>
    %cst_125 = arith.constant dense<0.000000e+00> : vector<144x16xf32>
    %195 = tpu.matmul %192, %194, %cst_125 {dimension_numbers = #tpu.dot_dimension_numbers<[1], [0], [0], [1], [0, 0, 1, 1], [], []>} : vector<144x8xf32>, vector<8x16xf32>, vector<144x16xf32> -> vector<144x16xf32>
    %196 = arith.addf %191, %195 : vector<144x16xf32>
    %c4 = arith.constant 4 : index
    %c0_126 = arith.constant 0 : index
    %197 = vector.load %arg14[%c4, %c0_126] : memref<208x8xf32, #tpu.memory_space<vmem>>, vector<144x8xf32>
    %c4_127 = arith.constant 4 : index
    %c0_128 = arith.constant 0 : index
    %c0_129 = arith.constant 0 : index
    %198 = vector.load %arg4[%c4_127, %c0_128, %c0_129] : memref<25x8x16xf32, #tpu.memory_space<vmem>>, vector<1x8x16xf32>
    %199 = vector.shape_cast %198 : vector<1x8x16xf32> to vector<8x16xf32>
    %cst_130 = arith.constant dense<0.000000e+00> : vector<144x16xf32>
    %200 = tpu.matmul %197, %199, %cst_130 {dimension_numbers = #tpu.dot_dimension_numbers<[1], [0], [0], [1], [0, 0, 1, 1], [], []>} : vector<144x8xf32>, vector<8x16xf32>, vector<144x16xf32> -> vector<144x16xf32>
    %201 = arith.addf %196, %200 : vector<144x16xf32>
    %c14_131 = arith.constant 14 : index
    %c0_132 = arith.constant 0 : index
    %202 = vector.load %arg14[%c14_131, %c0_132] : memref<208x8xf32, #tpu.memory_space<vmem>>, vector<144x8xf32>
    %c5 = arith.constant 5 : index
    %c0_133 = arith.constant 0 : index
    %c0_134 = arith.constant 0 : index
    %203 = vector.load %arg4[%c5, %c0_133, %c0_134] : memref<25x8x16xf32, #tpu.memory_space<vmem>>, vector<1x8x16xf32>
    %204 = vector.shape_cast %203 : vector<1x8x16xf32> to vector<8x16xf32>
    %cst_135 = arith.constant dense<0.000000e+00> : vector<144x16xf32>
    %205 = tpu.matmul %202, %204, %cst_135 {dimension_numbers = #tpu.dot_dimension_numbers<[1], [0], [0], [1], [0, 0, 1, 1], [], []>} : vector<144x8xf32>, vector<8x16xf32>, vector<144x16xf32> -> vector<144x16xf32>
    %206 = arith.addf %201, %205 : vector<144x16xf32>
    %c15 = arith.constant 15 : index
    %c0_136 = arith.constant 0 : index
    %207 = vector.load %arg14[%c15, %c0_136] : memref<208x8xf32, #tpu.memory_space<vmem>>, vector<144x8xf32>
    %c6 = arith.constant 6 : index
    %c0_137 = arith.constant 0 : index
    %c0_138 = arith.constant 0 : index
    %208 = vector.load %arg4[%c6, %c0_137, %c0_138] : memref<25x8x16xf32, #tpu.memory_space<vmem>>, vector<1x8x16xf32>
    %209 = vector.shape_cast %208 : vector<1x8x16xf32> to vector<8x16xf32>
    %cst_139 = arith.constant dense<0.000000e+00> : vector<144x16xf32>
    %210 = tpu.matmul %207, %209, %cst_139 {dimension_numbers = #tpu.dot_dimension_numbers<[1], [0], [0], [1], [0, 0, 1, 1], [], []>} : vector<144x8xf32>, vector<8x16xf32>, vector<144x16xf32> -> vector<144x16xf32>
    %211 = arith.addf %206, %210 : vector<144x16xf32>
    %c16 = arith.constant 16 : index
    %c0_140 = arith.constant 0 : index
    %212 = vector.load %arg14[%c16, %c0_140] : memref<208x8xf32, #tpu.memory_space<vmem>>, vector<144x8xf32>
    %c7 = arith.constant 7 : index
    %c0_141 = arith.constant 0 : index
    %c0_142 = arith.constant 0 : index
    %213 = vector.load %arg4[%c7, %c0_141, %c0_142] : memref<25x8x16xf32, #tpu.memory_space<vmem>>, vector<1x8x16xf32>
    %214 = vector.shape_cast %213 : vector<1x8x16xf32> to vector<8x16xf32>
    %cst_143 = arith.constant dense<0.000000e+00> : vector<144x16xf32>
    %215 = tpu.matmul %212, %214, %cst_143 {dimension_numbers = #tpu.dot_dimension_numbers<[1], [0], [0], [1], [0, 0, 1, 1], [], []>} : vector<144x8xf32>, vector<8x16xf32>, vector<144x16xf32> -> vector<144x16xf32>
    %216 = arith.addf %211, %215 : vector<144x16xf32>
    %c17 = arith.constant 17 : index
    %c0_144 = arith.constant 0 : index
    %217 = vector.load %arg14[%c17, %c0_144] : memref<208x8xf32, #tpu.memory_space<vmem>>, vector<144x8xf32>
    %c8 = arith.constant 8 : index
    %c0_145 = arith.constant 0 : index
    %c0_146 = arith.constant 0 : index
    %218 = vector.load %arg4[%c8, %c0_145, %c0_146] : memref<25x8x16xf32, #tpu.memory_space<vmem>>, vector<1x8x16xf32>
    %219 = vector.shape_cast %218 : vector<1x8x16xf32> to vector<8x16xf32>
    %cst_147 = arith.constant dense<0.000000e+00> : vector<144x16xf32>
    %220 = tpu.matmul %217, %219, %cst_147 {dimension_numbers = #tpu.dot_dimension_numbers<[1], [0], [0], [1], [0, 0, 1, 1], [], []>} : vector<144x8xf32>, vector<8x16xf32>, vector<144x16xf32> -> vector<144x16xf32>
    %221 = arith.addf %216, %220 : vector<144x16xf32>
    %c18 = arith.constant 18 : index
    %c0_148 = arith.constant 0 : index
    %222 = vector.load %arg14[%c18, %c0_148] : memref<208x8xf32, #tpu.memory_space<vmem>>, vector<144x8xf32>
    %c9 = arith.constant 9 : index
    %c0_149 = arith.constant 0 : index
    %c0_150 = arith.constant 0 : index
    %223 = vector.load %arg4[%c9, %c0_149, %c0_150] : memref<25x8x16xf32, #tpu.memory_space<vmem>>, vector<1x8x16xf32>
    %224 = vector.shape_cast %223 : vector<1x8x16xf32> to vector<8x16xf32>
    %cst_151 = arith.constant dense<0.000000e+00> : vector<144x16xf32>
    %225 = tpu.matmul %222, %224, %cst_151 {dimension_numbers = #tpu.dot_dimension_numbers<[1], [0], [0], [1], [0, 0, 1, 1], [], []>} : vector<144x8xf32>, vector<8x16xf32>, vector<144x16xf32> -> vector<144x16xf32>
    %226 = arith.addf %221, %225 : vector<144x16xf32>
    %c28_152 = arith.constant 28 : index
    %c0_153 = arith.constant 0 : index
    %227 = vector.load %arg14[%c28_152, %c0_153] : memref<208x8xf32, #tpu.memory_space<vmem>>, vector<144x8xf32>
    %c10 = arith.constant 10 : index
    %c0_154 = arith.constant 0 : index
    %c0_155 = arith.constant 0 : index
    %228 = vector.load %arg4[%c10, %c0_154, %c0_155] : memref<25x8x16xf32, #tpu.memory_space<vmem>>, vector<1x8x16xf32>
    %229 = vector.shape_cast %228 : vector<1x8x16xf32> to vector<8x16xf32>
    %cst_156 = arith.constant dense<0.000000e+00> : vector<144x16xf32>
    %230 = tpu.matmul %227, %229, %cst_156 {dimension_numbers = #tpu.dot_dimension_numbers<[1], [0], [0], [1], [0, 0, 1, 1], [], []>} : vector<144x8xf32>, vector<8x16xf32>, vector<144x16xf32> -> vector<144x16xf32>
    %231 = arith.addf %226, %230 : vector<144x16xf32>
    %c29_157 = arith.constant 29 : index
    %c0_158 = arith.constant 0 : index
    %232 = vector.load %arg14[%c29_157, %c0_158] : memref<208x8xf32, #tpu.memory_space<vmem>>, vector<144x8xf32>
    %c11 = arith.constant 11 : index
    %c0_159 = arith.constant 0 : index
    %c0_160 = arith.constant 0 : index
    %233 = vector.load %arg4[%c11, %c0_159, %c0_160] : memref<25x8x16xf32, #tpu.memory_space<vmem>>, vector<1x8x16xf32>
    %234 = vector.shape_cast %233 : vector<1x8x16xf32> to vector<8x16xf32>
    %cst_161 = arith.constant dense<0.000000e+00> : vector<144x16xf32>
    %235 = tpu.matmul %232, %234, %cst_161 {dimension_numbers = #tpu.dot_dimension_numbers<[1], [0], [0], [1], [0, 0, 1, 1], [], []>} : vector<144x8xf32>, vector<8x16xf32>, vector<144x16xf32> -> vector<144x16xf32>
    %236 = arith.addf %231, %235 : vector<144x16xf32>
    %c30 = arith.constant 30 : index
    %c0_162 = arith.constant 0 : index
    %237 = vector.load %arg14[%c30, %c0_162] : memref<208x8xf32, #tpu.memory_space<vmem>>, vector<144x8xf32>
    %c12 = arith.constant 12 : index
    %c0_163 = arith.constant 0 : index
    %c0_164 = arith.constant 0 : index
    %238 = vector.load %arg4[%c12, %c0_163, %c0_164] : memref<25x8x16xf32, #tpu.memory_space<vmem>>, vector<1x8x16xf32>
    %239 = vector.shape_cast %238 : vector<1x8x16xf32> to vector<8x16xf32>
    %cst_165 = arith.constant dense<0.000000e+00> : vector<144x16xf32>
    %240 = tpu.matmul %237, %239, %cst_165 {dimension_numbers = #tpu.dot_dimension_numbers<[1], [0], [0], [1], [0, 0, 1, 1], [], []>} : vector<144x8xf32>, vector<8x16xf32>, vector<144x16xf32> -> vector<144x16xf32>
    %241 = arith.addf %236, %240 : vector<144x16xf32>
    %c31 = arith.constant 31 : index
    %c0_166 = arith.constant 0 : index
    %242 = vector.load %arg14[%c31, %c0_166] : memref<208x8xf32, #tpu.memory_space<vmem>>, vector<144x8xf32>
    %c13 = arith.constant 13 : index
    %c0_167 = arith.constant 0 : index
    %c0_168 = arith.constant 0 : index
    %243 = vector.load %arg4[%c13, %c0_167, %c0_168] : memref<25x8x16xf32, #tpu.memory_space<vmem>>, vector<1x8x16xf32>
    %244 = vector.shape_cast %243 : vector<1x8x16xf32> to vector<8x16xf32>
    %cst_169 = arith.constant dense<0.000000e+00> : vector<144x16xf32>
    %245 = tpu.matmul %242, %244, %cst_169 {dimension_numbers = #tpu.dot_dimension_numbers<[1], [0], [0], [1], [0, 0, 1, 1], [], []>} : vector<144x8xf32>, vector<8x16xf32>, vector<144x16xf32> -> vector<144x16xf32>
    %246 = arith.addf %241, %245 : vector<144x16xf32>
    %c32 = arith.constant 32 : index
    %c0_170 = arith.constant 0 : index
    %247 = vector.load %arg14[%c32, %c0_170] : memref<208x8xf32, #tpu.memory_space<vmem>>, vector<144x8xf32>
    %c14_171 = arith.constant 14 : index
    %c0_172 = arith.constant 0 : index
    %c0_173 = arith.constant 0 : index
    %248 = vector.load %arg4[%c14_171, %c0_172, %c0_173] : memref<25x8x16xf32, #tpu.memory_space<vmem>>, vector<1x8x16xf32>
    %249 = vector.shape_cast %248 : vector<1x8x16xf32> to vector<8x16xf32>
    %cst_174 = arith.constant dense<0.000000e+00> : vector<144x16xf32>
    %250 = tpu.matmul %247, %249, %cst_174 {dimension_numbers = #tpu.dot_dimension_numbers<[1], [0], [0], [1], [0, 0, 1, 1], [], []>} : vector<144x8xf32>, vector<8x16xf32>, vector<144x16xf32> -> vector<144x16xf32>
    %251 = arith.addf %246, %250 : vector<144x16xf32>
    %c42_175 = arith.constant 42 : index
    %c0_176 = arith.constant 0 : index
    %252 = vector.load %arg14[%c42_175, %c0_176] : memref<208x8xf32, #tpu.memory_space<vmem>>, vector<144x8xf32>
    %c15_177 = arith.constant 15 : index
    %c0_178 = arith.constant 0 : index
    %c0_179 = arith.constant 0 : index
    %253 = vector.load %arg4[%c15_177, %c0_178, %c0_179] : memref<25x8x16xf32, #tpu.memory_space<vmem>>, vector<1x8x16xf32>
    %254 = vector.shape_cast %253 : vector<1x8x16xf32> to vector<8x16xf32>
    %cst_180 = arith.constant dense<0.000000e+00> : vector<144x16xf32>
    %255 = tpu.matmul %252, %254, %cst_180 {dimension_numbers = #tpu.dot_dimension_numbers<[1], [0], [0], [1], [0, 0, 1, 1], [], []>} : vector<144x8xf32>, vector<8x16xf32>, vector<144x16xf32> -> vector<144x16xf32>
    %256 = arith.addf %251, %255 : vector<144x16xf32>
    %c43 = arith.constant 43 : index
    %c0_181 = arith.constant 0 : index
    %257 = vector.load %arg14[%c43, %c0_181] : memref<208x8xf32, #tpu.memory_space<vmem>>, vector<144x8xf32>
    %c16_182 = arith.constant 16 : index
    %c0_183 = arith.constant 0 : index
    %c0_184 = arith.constant 0 : index
    %258 = vector.load %arg4[%c16_182, %c0_183, %c0_184] : memref<25x8x16xf32, #tpu.memory_space<vmem>>, vector<1x8x16xf32>
    %259 = vector.shape_cast %258 : vector<1x8x16xf32> to vector<8x16xf32>
    %cst_185 = arith.constant dense<0.000000e+00> : vector<144x16xf32>
    %260 = tpu.matmul %257, %259, %cst_185 {dimension_numbers = #tpu.dot_dimension_numbers<[1], [0], [0], [1], [0, 0, 1, 1], [], []>} : vector<144x8xf32>, vector<8x16xf32>, vector<144x16xf32> -> vector<144x16xf32>
    %261 = arith.addf %256, %260 : vector<144x16xf32>
    %c44 = arith.constant 44 : index
    %c0_186 = arith.constant 0 : index
    %262 = vector.load %arg14[%c44, %c0_186] : memref<208x8xf32, #tpu.memory_space<vmem>>, vector<144x8xf32>
    %c17_187 = arith.constant 17 : index
    %c0_188 = arith.constant 0 : index
    %c0_189 = arith.constant 0 : index
    %263 = vector.load %arg4[%c17_187, %c0_188, %c0_189] : memref<25x8x16xf32, #tpu.memory_space<vmem>>, vector<1x8x16xf32>
    %264 = vector.shape_cast %263 : vector<1x8x16xf32> to vector<8x16xf32>
    %cst_190 = arith.constant dense<0.000000e+00> : vector<144x16xf32>
    %265 = tpu.matmul %262, %264, %cst_190 {dimension_numbers = #tpu.dot_dimension_numbers<[1], [0], [0], [1], [0, 0, 1, 1], [], []>} : vector<144x8xf32>, vector<8x16xf32>, vector<144x16xf32> -> vector<144x16xf32>
    %266 = arith.addf %261, %265 : vector<144x16xf32>
    %c45 = arith.constant 45 : index
    %c0_191 = arith.constant 0 : index
    %267 = vector.load %arg14[%c45, %c0_191] : memref<208x8xf32, #tpu.memory_space<vmem>>, vector<144x8xf32>
    %c18_192 = arith.constant 18 : index
    %c0_193 = arith.constant 0 : index
    %c0_194 = arith.constant 0 : index
    %268 = vector.load %arg4[%c18_192, %c0_193, %c0_194] : memref<25x8x16xf32, #tpu.memory_space<vmem>>, vector<1x8x16xf32>
    %269 = vector.shape_cast %268 : vector<1x8x16xf32> to vector<8x16xf32>
    %cst_195 = arith.constant dense<0.000000e+00> : vector<144x16xf32>
    %270 = tpu.matmul %267, %269, %cst_195 {dimension_numbers = #tpu.dot_dimension_numbers<[1], [0], [0], [1], [0, 0, 1, 1], [], []>} : vector<144x8xf32>, vector<8x16xf32>, vector<144x16xf32> -> vector<144x16xf32>
    %271 = arith.addf %266, %270 : vector<144x16xf32>
    %c46 = arith.constant 46 : index
    %c0_196 = arith.constant 0 : index
    %272 = vector.load %arg14[%c46, %c0_196] : memref<208x8xf32, #tpu.memory_space<vmem>>, vector<144x8xf32>
    %c19 = arith.constant 19 : index
    %c0_197 = arith.constant 0 : index
    %c0_198 = arith.constant 0 : index
    %273 = vector.load %arg4[%c19, %c0_197, %c0_198] : memref<25x8x16xf32, #tpu.memory_space<vmem>>, vector<1x8x16xf32>
    %274 = vector.shape_cast %273 : vector<1x8x16xf32> to vector<8x16xf32>
    %cst_199 = arith.constant dense<0.000000e+00> : vector<144x16xf32>
    %275 = tpu.matmul %272, %274, %cst_199 {dimension_numbers = #tpu.dot_dimension_numbers<[1], [0], [0], [1], [0, 0, 1, 1], [], []>} : vector<144x8xf32>, vector<8x16xf32>, vector<144x16xf32> -> vector<144x16xf32>
    %276 = arith.addf %271, %275 : vector<144x16xf32>
    %c56_200 = arith.constant 56 : index
    %c0_201 = arith.constant 0 : index
    %277 = vector.load %arg14[%c56_200, %c0_201] : memref<208x8xf32, #tpu.memory_space<vmem>>, vector<144x8xf32>
    %c20 = arith.constant 20 : index
    %c0_202 = arith.constant 0 : index
    %c0_203 = arith.constant 0 : index
    %278 = vector.load %arg4[%c20, %c0_202, %c0_203] : memref<25x8x16xf32, #tpu.memory_space<vmem>>, vector<1x8x16xf32>
    %279 = vector.shape_cast %278 : vector<1x8x16xf32> to vector<8x16xf32>
    %cst_204 = arith.constant dense<0.000000e+00> : vector<144x16xf32>
    %280 = tpu.matmul %277, %279, %cst_204 {dimension_numbers = #tpu.dot_dimension_numbers<[1], [0], [0], [1], [0, 0, 1, 1], [], []>} : vector<144x8xf32>, vector<8x16xf32>, vector<144x16xf32> -> vector<144x16xf32>
    %281 = arith.addf %276, %280 : vector<144x16xf32>
    %c57_205 = arith.constant 57 : index
    %c0_206 = arith.constant 0 : index
    %282 = vector.load %arg14[%c57_205, %c0_206] : memref<208x8xf32, #tpu.memory_space<vmem>>, vector<144x8xf32>
    %c21 = arith.constant 21 : index
    %c0_207 = arith.constant 0 : index
    %c0_208 = arith.constant 0 : index
    %283 = vector.load %arg4[%c21, %c0_207, %c0_208] : memref<25x8x16xf32, #tpu.memory_space<vmem>>, vector<1x8x16xf32>
    %284 = vector.shape_cast %283 : vector<1x8x16xf32> to vector<8x16xf32>
    %cst_209 = arith.constant dense<0.000000e+00> : vector<144x16xf32>
    %285 = tpu.matmul %282, %284, %cst_209 {dimension_numbers = #tpu.dot_dimension_numbers<[1], [0], [0], [1], [0, 0, 1, 1], [], []>} : vector<144x8xf32>, vector<8x16xf32>, vector<144x16xf32> -> vector<144x16xf32>
    %286 = arith.addf %281, %285 : vector<144x16xf32>
    %c58 = arith.constant 58 : index
    %c0_210 = arith.constant 0 : index
    %287 = vector.load %arg14[%c58, %c0_210] : memref<208x8xf32, #tpu.memory_space<vmem>>, vector<144x8xf32>
    %c22 = arith.constant 22 : index
    %c0_211 = arith.constant 0 : index
    %c0_212 = arith.constant 0 : index
    %288 = vector.load %arg4[%c22, %c0_211, %c0_212] : memref<25x8x16xf32, #tpu.memory_space<vmem>>, vector<1x8x16xf32>
    %289 = vector.shape_cast %288 : vector<1x8x16xf32> to vector<8x16xf32>
    %cst_213 = arith.constant dense<0.000000e+00> : vector<144x16xf32>
    %290 = tpu.matmul %287, %289, %cst_213 {dimension_numbers = #tpu.dot_dimension_numbers<[1], [0], [0], [1], [0, 0, 1, 1], [], []>} : vector<144x8xf32>, vector<8x16xf32>, vector<144x16xf32> -> vector<144x16xf32>
    %291 = arith.addf %286, %290 : vector<144x16xf32>
    %c59 = arith.constant 59 : index
    %c0_214 = arith.constant 0 : index
    %292 = vector.load %arg14[%c59, %c0_214] : memref<208x8xf32, #tpu.memory_space<vmem>>, vector<144x8xf32>
    %c23 = arith.constant 23 : index
    %c0_215 = arith.constant 0 : index
    %c0_216 = arith.constant 0 : index
    %293 = vector.load %arg4[%c23, %c0_215, %c0_216] : memref<25x8x16xf32, #tpu.memory_space<vmem>>, vector<1x8x16xf32>
    %294 = vector.shape_cast %293 : vector<1x8x16xf32> to vector<8x16xf32>
    %cst_217 = arith.constant dense<0.000000e+00> : vector<144x16xf32>
    %295 = tpu.matmul %292, %294, %cst_217 {dimension_numbers = #tpu.dot_dimension_numbers<[1], [0], [0], [1], [0, 0, 1, 1], [], []>} : vector<144x8xf32>, vector<8x16xf32>, vector<144x16xf32> -> vector<144x16xf32>
    %296 = arith.addf %291, %295 : vector<144x16xf32>
    %c60 = arith.constant 60 : index
    %c0_218 = arith.constant 0 : index
    %297 = vector.load %arg14[%c60, %c0_218] : memref<208x8xf32, #tpu.memory_space<vmem>>, vector<144x8xf32>
    %c24 = arith.constant 24 : index
    %c0_219 = arith.constant 0 : index
    %c0_220 = arith.constant 0 : index
    %298 = vector.load %arg4[%c24, %c0_219, %c0_220] : memref<25x8x16xf32, #tpu.memory_space<vmem>>, vector<1x8x16xf32>
    %299 = vector.shape_cast %298 : vector<1x8x16xf32> to vector<8x16xf32>
    %cst_221 = arith.constant dense<0.000000e+00> : vector<144x16xf32>
    %300 = tpu.matmul %297, %299, %cst_221 {dimension_numbers = #tpu.dot_dimension_numbers<[1], [0], [0], [1], [0, 0, 1, 1], [], []>} : vector<144x8xf32>, vector<8x16xf32>, vector<144x16xf32> -> vector<144x16xf32>
    %301 = arith.addf %296, %300 : vector<144x16xf32>
    %c0_222 = arith.constant 0 : index
    %c0_223 = arith.constant 0 : index
    %302 = vector.load %arg15[%c0_222, %c0_223] : memref<144x16xf32, #tpu.memory_space<vmem>>, vector<144x16xf32>
    tpu.vector_store %arg15[%c0_222, %c0_223], %301 {strides = array<i32>} : memref<144x16xf32, #tpu.memory_space<vmem>>, vector<144x16xf32>,
    %c0_224 = arith.constant 0 : index
    %c0_225 = arith.constant 0 : index
    %303 = vector.load %arg5[%c0_224, %c0_225] : memref<1x16xf32, #tpu.memory_space<vmem>>, vector<1x16xf32>
    %cst_226 = arith.constant 0.000000e+00 : f32
    %304 = vector.broadcast %cst_226 : f32 to vector<1x120xf32>
    %c0_227 = arith.constant 0 : index
    %c0_228 = arith.constant 0 : index
    %305 = tpu.strided_load %arg15[%c0_227, %c0_228] {strides = array<i32: 2, 1>} : memref<144x16xf32, #tpu.memory_space<vmem>>, vector<5x16xf32>
    %c1_229 = arith.constant 1 : index
    %c0_230 = arith.constant 0 : index
    %306 = tpu.strided_load %arg15[%c1_229, %c0_230] {strides = array<i32: 2, 1>} : memref<144x16xf32, #tpu.memory_space<vmem>>, vector<5x16xf32>
    %307 = arith.maximumf %305, %306 : vector<5x16xf32>
    %c14_231 = arith.constant 14 : index
    %c0_232 = arith.constant 0 : index
    %308 = tpu.strided_load %arg15[%c14_231, %c0_232] {strides = array<i32: 2, 1>} : memref<144x16xf32, #tpu.memory_space<vmem>>, vector<5x16xf32>
    %c15_233 = arith.constant 15 : index
    %c0_234 = arith.constant 0 : index
    %309 = tpu.strided_load %arg15[%c15_233, %c0_234] {strides = array<i32: 2, 1>} : memref<144x16xf32, #tpu.memory_space<vmem>>, vector<5x16xf32>
    %310 = arith.maximumf %308, %309 : vector<5x16xf32>
    %311 = arith.maximumf %307, %310 : vector<5x16xf32>
    %312 = vector.broadcast %303 : vector<1x16xf32> to vector<5x16xf32>
    %313 = arith.addf %311, %312 : vector<5x16xf32>
    %cst_235 = arith.constant 0.000000e+00 : f32
    %314 = vector.broadcast %cst_235 : f32 to vector<5x16xf32>
    %315 = arith.maximumf %313, %314 : vector<5x16xf32>
    %316 = vector.extract_strided_slice %315 {offsets = [0, 0], sizes = [1, 16], strides = [1, 1]} : vector<5x16xf32> to vector<1x16xf32>
    %c0_236 = arith.constant 0 : index
    %c0_237 = arith.constant 0 : index
    %c0_238 = arith.constant 0 : index
    %317 = vector.load %arg6[%c0_236, %c0_237, %c0_238] : memref<25x16x120xf32, #tpu.memory_space<vmem>>, vector<1x16x120xf32>
    %318 = vector.shape_cast %317 : vector<1x16x120xf32> to vector<16x120xf32>
    %cst_239 = arith.constant dense<0.000000e+00> : vector<1x120xf32>
    %319 = tpu.matmul %316, %318, %cst_239 {dimension_numbers = #tpu.dot_dimension_numbers<[1], [0], [0], [1], [0, 0, 1, 1], [], []>} : vector<1x16xf32>, vector<16x120xf32>, vector<1x120xf32> -> vector<1x120xf32>
    %320 = arith.addf %304, %319 : vector<1x120xf32>
    %321 = vector.extract_strided_slice %315 {offsets = [1, 0], sizes = [1, 16], strides = [1, 1]} : vector<5x16xf32> to vector<1x16xf32>
    %c1_240 = arith.constant 1 : index
    %c0_241 = arith.constant 0 : index
    %c0_242 = arith.constant 0 : index
    %322 = vector.load %arg6[%c1_240, %c0_241, %c0_242] : memref<25x16x120xf32, #tpu.memory_space<vmem>>, vector<1x16x120xf32>
    %323 = vector.shape_cast %322 : vector<1x16x120xf32> to vector<16x120xf32>
    %cst_243 = arith.constant dense<0.000000e+00> : vector<1x120xf32>
    %324 = tpu.matmul %321, %323, %cst_243 {dimension_numbers = #tpu.dot_dimension_numbers<[1], [0], [0], [1], [0, 0, 1, 1], [], []>} : vector<1x16xf32>, vector<16x120xf32>, vector<1x120xf32> -> vector<1x120xf32>
    %325 = arith.addf %320, %324 : vector<1x120xf32>
    %326 = vector.extract_strided_slice %315 {offsets = [2, 0], sizes = [1, 16], strides = [1, 1]} : vector<5x16xf32> to vector<1x16xf32>
    %c2_244 = arith.constant 2 : index
    %c0_245 = arith.constant 0 : index
    %c0_246 = arith.constant 0 : index
    %327 = vector.load %arg6[%c2_244, %c0_245, %c0_246] : memref<25x16x120xf32, #tpu.memory_space<vmem>>, vector<1x16x120xf32>
    %328 = vector.shape_cast %327 : vector<1x16x120xf32> to vector<16x120xf32>
    %cst_247 = arith.constant dense<0.000000e+00> : vector<1x120xf32>
    %329 = tpu.matmul %326, %328, %cst_247 {dimension_numbers = #tpu.dot_dimension_numbers<[1], [0], [0], [1], [0, 0, 1, 1], [], []>} : vector<1x16xf32>, vector<16x120xf32>, vector<1x120xf32> -> vector<1x120xf32>
    %330 = arith.addf %325, %329 : vector<1x120xf32>
    %331 = vector.extract_strided_slice %315 {offsets = [3, 0], sizes = [1, 16], strides = [1, 1]} : vector<5x16xf32> to vector<1x16xf32>
    %c3_248 = arith.constant 3 : index
    %c0_249 = arith.constant 0 : index
    %c0_250 = arith.constant 0 : index
    %332 = vector.load %arg6[%c3_248, %c0_249, %c0_250] : memref<25x16x120xf32, #tpu.memory_space<vmem>>, vector<1x16x120xf32>
    %333 = vector.shape_cast %332 : vector<1x16x120xf32> to vector<16x120xf32>
    %cst_251 = arith.constant dense<0.000000e+00> : vector<1x120xf32>
    %334 = tpu.matmul %331, %333, %cst_251 {dimension_numbers = #tpu.dot_dimension_numbers<[1], [0], [0], [1], [0, 0, 1, 1], [], []>} : vector<1x16xf32>, vector<16x120xf32>, vector<1x120xf32> -> vector<1x120xf32>
    %335 = arith.addf %330, %334 : vector<1x120xf32>
    %336 = vector.extract_strided_slice %315 {offsets = [4, 0], sizes = [1, 16], strides = [1, 1]} : vector<5x16xf32> to vector<1x16xf32>
    %c4_252 = arith.constant 4 : index
    %c0_253 = arith.constant 0 : index
    %c0_254 = arith.constant 0 : index
    %337 = vector.load %arg6[%c4_252, %c0_253, %c0_254] : memref<25x16x120xf32, #tpu.memory_space<vmem>>, vector<1x16x120xf32>
    %338 = vector.shape_cast %337 : vector<1x16x120xf32> to vector<16x120xf32>
    %cst_255 = arith.constant dense<0.000000e+00> : vector<1x120xf32>
    %339 = tpu.matmul %336, %338, %cst_255 {dimension_numbers = #tpu.dot_dimension_numbers<[1], [0], [0], [1], [0, 0, 1, 1], [], []>} : vector<1x16xf32>, vector<16x120xf32>, vector<1x120xf32> -> vector<1x120xf32>
    %340 = arith.addf %335, %339 : vector<1x120xf32>
    %c28_256 = arith.constant 28 : index
    %c0_257 = arith.constant 0 : index
    %341 = tpu.strided_load %arg15[%c28_256, %c0_257] {strides = array<i32: 2, 1>} : memref<144x16xf32, #tpu.memory_space<vmem>>, vector<5x16xf32>
    %c29_258 = arith.constant 29 : index
    %c0_259 = arith.constant 0 : index
    %342 = tpu.strided_load %arg15[%c29_258, %c0_259] {strides = array<i32: 2, 1>} : memref<144x16xf32, #tpu.memory_space<vmem>>, vector<5x16xf32>
    %343 = arith.maximumf %341, %342 : vector<5x16xf32>
    %c42_260 = arith.constant 42 : index
    %c0_261 = arith.constant 0 : index
    %344 = tpu.strided_load %arg15[%c42_260, %c0_261] {strides = array<i32: 2, 1>} : memref<144x16xf32, #tpu.memory_space<vmem>>, vector<5x16xf32>
    %c43_262 = arith.constant 43 : index
    %c0_263 = arith.constant 0 : index
    %345 = tpu.strided_load %arg15[%c43_262, %c0_263] {strides = array<i32: 2, 1>} : memref<144x16xf32, #tpu.memory_space<vmem>>, vector<5x16xf32>
    %346 = arith.maximumf %344, %345 : vector<5x16xf32>
    %347 = arith.maximumf %343, %346 : vector<5x16xf32>
    %348 = vector.broadcast %303 : vector<1x16xf32> to vector<5x16xf32>
    %349 = arith.addf %347, %348 : vector<5x16xf32>
    %cst_264 = arith.constant 0.000000e+00 : f32
    %350 = vector.broadcast %cst_264 : f32 to vector<5x16xf32>
    %351 = arith.maximumf %349, %350 : vector<5x16xf32>
    %352 = vector.extract_strided_slice %351 {offsets = [0, 0], sizes = [1, 16], strides = [1, 1]} : vector<5x16xf32> to vector<1x16xf32>
    %c5_265 = arith.constant 5 : index
    %c0_266 = arith.constant 0 : index
    %c0_267 = arith.constant 0 : index
    %353 = vector.load %arg6[%c5_265, %c0_266, %c0_267] : memref<25x16x120xf32, #tpu.memory_space<vmem>>, vector<1x16x120xf32>
    %354 = vector.shape_cast %353 : vector<1x16x120xf32> to vector<16x120xf32>
    %cst_268 = arith.constant dense<0.000000e+00> : vector<1x120xf32>
    %355 = tpu.matmul %352, %354, %cst_268 {dimension_numbers = #tpu.dot_dimension_numbers<[1], [0], [0], [1], [0, 0, 1, 1], [], []>} : vector<1x16xf32>, vector<16x120xf32>, vector<1x120xf32> -> vector<1x120xf32>
    %356 = arith.addf %340, %355 : vector<1x120xf32>
    %357 = vector.extract_strided_slice %351 {offsets = [1, 0], sizes = [1, 16], strides = [1, 1]} : vector<5x16xf32> to vector<1x16xf32>
    %c6_269 = arith.constant 6 : index
    %c0_270 = arith.constant 0 : index
    %c0_271 = arith.constant 0 : index
    %358 = vector.load %arg6[%c6_269, %c0_270, %c0_271] : memref<25x16x120xf32, #tpu.memory_space<vmem>>, vector<1x16x120xf32>
    %359 = vector.shape_cast %358 : vector<1x16x120xf32> to vector<16x120xf32>
    %cst_272 = arith.constant dense<0.000000e+00> : vector<1x120xf32>
    %360 = tpu.matmul %357, %359, %cst_272 {dimension_numbers = #tpu.dot_dimension_numbers<[1], [0], [0], [1], [0, 0, 1, 1], [], []>} : vector<1x16xf32>, vector<16x120xf32>, vector<1x120xf32> -> vector<1x120xf32>
    %361 = arith.addf %356, %360 : vector<1x120xf32>
    %362 = vector.extract_strided_slice %351 {offsets = [2, 0], sizes = [1, 16], strides = [1, 1]} : vector<5x16xf32> to vector<1x16xf32>
    %c7_273 = arith.constant 7 : index
    %c0_274 = arith.constant 0 : index
    %c0_275 = arith.constant 0 : index
    %363 = vector.load %arg6[%c7_273, %c0_274, %c0_275] : memref<25x16x120xf32, #tpu.memory_space<vmem>>, vector<1x16x120xf32>
    %364 = vector.shape_cast %363 : vector<1x16x120xf32> to vector<16x120xf32>
    %cst_276 = arith.constant dense<0.000000e+00> : vector<1x120xf32>
    %365 = tpu.matmul %362, %364, %cst_276 {dimension_numbers = #tpu.dot_dimension_numbers<[1], [0], [0], [1], [0, 0, 1, 1], [], []>} : vector<1x16xf32>, vector<16x120xf32>, vector<1x120xf32> -> vector<1x120xf32>
    %366 = arith.addf %361, %365 : vector<1x120xf32>
    %367 = vector.extract_strided_slice %351 {offsets = [3, 0], sizes = [1, 16], strides = [1, 1]} : vector<5x16xf32> to vector<1x16xf32>
    %c8_277 = arith.constant 8 : index
    %c0_278 = arith.constant 0 : index
    %c0_279 = arith.constant 0 : index
    %368 = vector.load %arg6[%c8_277, %c0_278, %c0_279] : memref<25x16x120xf32, #tpu.memory_space<vmem>>, vector<1x16x120xf32>
    %369 = vector.shape_cast %368 : vector<1x16x120xf32> to vector<16x120xf32>
    %cst_280 = arith.constant dense<0.000000e+00> : vector<1x120xf32>
    %370 = tpu.matmul %367, %369, %cst_280 {dimension_numbers = #tpu.dot_dimension_numbers<[1], [0], [0], [1], [0, 0, 1, 1], [], []>} : vector<1x16xf32>, vector<16x120xf32>, vector<1x120xf32> -> vector<1x120xf32>
    %371 = arith.addf %366, %370 : vector<1x120xf32>
    %372 = vector.extract_strided_slice %351 {offsets = [4, 0], sizes = [1, 16], strides = [1, 1]} : vector<5x16xf32> to vector<1x16xf32>
    %c9_281 = arith.constant 9 : index
    %c0_282 = arith.constant 0 : index
    %c0_283 = arith.constant 0 : index
    %373 = vector.load %arg6[%c9_281, %c0_282, %c0_283] : memref<25x16x120xf32, #tpu.memory_space<vmem>>, vector<1x16x120xf32>
    %374 = vector.shape_cast %373 : vector<1x16x120xf32> to vector<16x120xf32>
    %cst_284 = arith.constant dense<0.000000e+00> : vector<1x120xf32>
    %375 = tpu.matmul %372, %374, %cst_284 {dimension_numbers = #tpu.dot_dimension_numbers<[1], [0], [0], [1], [0, 0, 1, 1], [], []>} : vector<1x16xf32>, vector<16x120xf32>, vector<1x120xf32> -> vector<1x120xf32>
    %376 = arith.addf %371, %375 : vector<1x120xf32>
    %c56_285 = arith.constant 56 : index
    %c0_286 = arith.constant 0 : index
    %377 = tpu.strided_load %arg15[%c56_285, %c0_286] {strides = array<i32: 2, 1>} : memref<144x16xf32, #tpu.memory_space<vmem>>, vector<5x16xf32>
    %c57_287 = arith.constant 57 : index
    %c0_288 = arith.constant 0 : index
    %378 = tpu.strided_load %arg15[%c57_287, %c0_288] {strides = array<i32: 2, 1>} : memref<144x16xf32, #tpu.memory_space<vmem>>, vector<5x16xf32>
    %379 = arith.maximumf %377, %378 : vector<5x16xf32>
    %c70_289 = arith.constant 70 : index
    %c0_290 = arith.constant 0 : index
    %380 = tpu.strided_load %arg15[%c70_289, %c0_290] {strides = array<i32: 2, 1>} : memref<144x16xf32, #tpu.memory_space<vmem>>, vector<5x16xf32>
    %c71 = arith.constant 71 : index
    %c0_291 = arith.constant 0 : index
    %381 = tpu.strided_load %arg15[%c71, %c0_291] {strides = array<i32: 2, 1>} : memref<144x16xf32, #tpu.memory_space<vmem>>, vector<5x16xf32>
    %382 = arith.maximumf %380, %381 : vector<5x16xf32>
    %383 = arith.maximumf %379, %382 : vector<5x16xf32>
    %384 = vector.broadcast %303 : vector<1x16xf32> to vector<5x16xf32>
    %385 = arith.addf %383, %384 : vector<5x16xf32>
    %cst_292 = arith.constant 0.000000e+00 : f32
    %386 = vector.broadcast %cst_292 : f32 to vector<5x16xf32>
    %387 = arith.maximumf %385, %386 : vector<5x16xf32>
    %388 = vector.extract_strided_slice %387 {offsets = [0, 0], sizes = [1, 16], strides = [1, 1]} : vector<5x16xf32> to vector<1x16xf32>
    %c10_293 = arith.constant 10 : index
    %c0_294 = arith.constant 0 : index
    %c0_295 = arith.constant 0 : index
    %389 = vector.load %arg6[%c10_293, %c0_294, %c0_295] : memref<25x16x120xf32, #tpu.memory_space<vmem>>, vector<1x16x120xf32>
    %390 = vector.shape_cast %389 : vector<1x16x120xf32> to vector<16x120xf32>
    %cst_296 = arith.constant dense<0.000000e+00> : vector<1x120xf32>
    %391 = tpu.matmul %388, %390, %cst_296 {dimension_numbers = #tpu.dot_dimension_numbers<[1], [0], [0], [1], [0, 0, 1, 1], [], []>} : vector<1x16xf32>, vector<16x120xf32>, vector<1x120xf32> -> vector<1x120xf32>
    %392 = arith.addf %376, %391 : vector<1x120xf32>
    %393 = vector.extract_strided_slice %387 {offsets = [1, 0], sizes = [1, 16], strides = [1, 1]} : vector<5x16xf32> to vector<1x16xf32>
    %c11_297 = arith.constant 11 : index
    %c0_298 = arith.constant 0 : index
    %c0_299 = arith.constant 0 : index
    %394 = vector.load %arg6[%c11_297, %c0_298, %c0_299] : memref<25x16x120xf32, #tpu.memory_space<vmem>>, vector<1x16x120xf32>
    %395 = vector.shape_cast %394 : vector<1x16x120xf32> to vector<16x120xf32>
    %cst_300 = arith.constant dense<0.000000e+00> : vector<1x120xf32>
    %396 = tpu.matmul %393, %395, %cst_300 {dimension_numbers = #tpu.dot_dimension_numbers<[1], [0], [0], [1], [0, 0, 1, 1], [], []>} : vector<1x16xf32>, vector<16x120xf32>, vector<1x120xf32> -> vector<1x120xf32>
    %397 = arith.addf %392, %396 : vector<1x120xf32>
    %398 = vector.extract_strided_slice %387 {offsets = [2, 0], sizes = [1, 16], strides = [1, 1]} : vector<5x16xf32> to vector<1x16xf32>
    %c12_301 = arith.constant 12 : index
    %c0_302 = arith.constant 0 : index
    %c0_303 = arith.constant 0 : index
    %399 = vector.load %arg6[%c12_301, %c0_302, %c0_303] : memref<25x16x120xf32, #tpu.memory_space<vmem>>, vector<1x16x120xf32>
    %400 = vector.shape_cast %399 : vector<1x16x120xf32> to vector<16x120xf32>
    %cst_304 = arith.constant dense<0.000000e+00> : vector<1x120xf32>
    %401 = tpu.matmul %398, %400, %cst_304 {dimension_numbers = #tpu.dot_dimension_numbers<[1], [0], [0], [1], [0, 0, 1, 1], [], []>} : vector<1x16xf32>, vector<16x120xf32>, vector<1x120xf32> -> vector<1x120xf32>
    %402 = arith.addf %397, %401 : vector<1x120xf32>
    %403 = vector.extract_strided_slice %387 {offsets = [3, 0], sizes = [1, 16], strides = [1, 1]} : vector<5x16xf32> to vector<1x16xf32>
    %c13_305 = arith.constant 13 : index
    %c0_306 = arith.constant 0 : index
    %c0_307 = arith.constant 0 : index
    %404 = vector.load %arg6[%c13_305, %c0_306, %c0_307] : memref<25x16x120xf32, #tpu.memory_space<vmem>>, vector<1x16x120xf32>
    %405 = vector.shape_cast %404 : vector<1x16x120xf32> to vector<16x120xf32>
    %cst_308 = arith.constant dense<0.000000e+00> : vector<1x120xf32>
    %406 = tpu.matmul %403, %405, %cst_308 {dimension_numbers = #tpu.dot_dimension_numbers<[1], [0], [0], [1], [0, 0, 1, 1], [], []>} : vector<1x16xf32>, vector<16x120xf32>, vector<1x120xf32> -> vector<1x120xf32>
    %407 = arith.addf %402, %406 : vector<1x120xf32>
    %408 = vector.extract_strided_slice %387 {offsets = [4, 0], sizes = [1, 16], strides = [1, 1]} : vector<5x16xf32> to vector<1x16xf32>
    %c14_309 = arith.constant 14 : index
    %c0_310 = arith.constant 0 : index
    %c0_311 = arith.constant 0 : index
    %409 = vector.load %arg6[%c14_309, %c0_310, %c0_311] : memref<25x16x120xf32, #tpu.memory_space<vmem>>, vector<1x16x120xf32>
    %410 = vector.shape_cast %409 : vector<1x16x120xf32> to vector<16x120xf32>
    %cst_312 = arith.constant dense<0.000000e+00> : vector<1x120xf32>
    %411 = tpu.matmul %408, %410, %cst_312 {dimension_numbers = #tpu.dot_dimension_numbers<[1], [0], [0], [1], [0, 0, 1, 1], [], []>} : vector<1x16xf32>, vector<16x120xf32>, vector<1x120xf32> -> vector<1x120xf32>
    %412 = arith.addf %407, %411 : vector<1x120xf32>
    %c84_313 = arith.constant 84 : index
    %c0_314 = arith.constant 0 : index
    %413 = tpu.strided_load %arg15[%c84_313, %c0_314] {strides = array<i32: 2, 1>} : memref<144x16xf32, #tpu.memory_space<vmem>>, vector<5x16xf32>
    %c85_315 = arith.constant 85 : index
    %c0_316 = arith.constant 0 : index
    %414 = tpu.strided_load %arg15[%c85_315, %c0_316] {strides = array<i32: 2, 1>} : memref<144x16xf32, #tpu.memory_space<vmem>>, vector<5x16xf32>
    %415 = arith.maximumf %413, %414 : vector<5x16xf32>
    %c98_317 = arith.constant 98 : index
    %c0_318 = arith.constant 0 : index
    %416 = tpu.strided_load %arg15[%c98_317, %c0_318] {strides = array<i32: 2, 1>} : memref<144x16xf32, #tpu.memory_space<vmem>>, vector<5x16xf32>
    %c99 = arith.constant 99 : index
    %c0_319 = arith.constant 0 : index
    %417 = tpu.strided_load %arg15[%c99, %c0_319] {strides = array<i32: 2, 1>} : memref<144x16xf32, #tpu.memory_space<vmem>>, vector<5x16xf32>
    %418 = arith.maximumf %416, %417 : vector<5x16xf32>
    %419 = arith.maximumf %415, %418 : vector<5x16xf32>
    %420 = vector.broadcast %303 : vector<1x16xf32> to vector<5x16xf32>
    %421 = arith.addf %419, %420 : vector<5x16xf32>
    %cst_320 = arith.constant 0.000000e+00 : f32
    %422 = vector.broadcast %cst_320 : f32 to vector<5x16xf32>
    %423 = arith.maximumf %421, %422 : vector<5x16xf32>
    %424 = vector.extract_strided_slice %423 {offsets = [0, 0], sizes = [1, 16], strides = [1, 1]} : vector<5x16xf32> to vector<1x16xf32>
    %c15_321 = arith.constant 15 : index
    %c0_322 = arith.constant 0 : index
    %c0_323 = arith.constant 0 : index
    %425 = vector.load %arg6[%c15_321, %c0_322, %c0_323] : memref<25x16x120xf32, #tpu.memory_space<vmem>>, vector<1x16x120xf32>
    %426 = vector.shape_cast %425 : vector<1x16x120xf32> to vector<16x120xf32>
    %cst_324 = arith.constant dense<0.000000e+00> : vector<1x120xf32>
    %427 = tpu.matmul %424, %426, %cst_324 {dimension_numbers = #tpu.dot_dimension_numbers<[1], [0], [0], [1], [0, 0, 1, 1], [], []>} : vector<1x16xf32>, vector<16x120xf32>, vector<1x120xf32> -> vector<1x120xf32>
    %428 = arith.addf %412, %427 : vector<1x120xf32>
    %429 = vector.extract_strided_slice %423 {offsets = [1, 0], sizes = [1, 16], strides = [1, 1]} : vector<5x16xf32> to vector<1x16xf32>
    %c16_325 = arith.constant 16 : index
    %c0_326 = arith.constant 0 : index
    %c0_327 = arith.constant 0 : index
    %430 = vector.load %arg6[%c16_325, %c0_326, %c0_327] : memref<25x16x120xf32, #tpu.memory_space<vmem>>, vector<1x16x120xf32>
    %431 = vector.shape_cast %430 : vector<1x16x120xf32> to vector<16x120xf32>
    %cst_328 = arith.constant dense<0.000000e+00> : vector<1x120xf32>
    %432 = tpu.matmul %429, %431, %cst_328 {dimension_numbers = #tpu.dot_dimension_numbers<[1], [0], [0], [1], [0, 0, 1, 1], [], []>} : vector<1x16xf32>, vector<16x120xf32>, vector<1x120xf32> -> vector<1x120xf32>
    %433 = arith.addf %428, %432 : vector<1x120xf32>
    %434 = vector.extract_strided_slice %423 {offsets = [2, 0], sizes = [1, 16], strides = [1, 1]} : vector<5x16xf32> to vector<1x16xf32>
    %c17_329 = arith.constant 17 : index
    %c0_330 = arith.constant 0 : index
    %c0_331 = arith.constant 0 : index
    %435 = vector.load %arg6[%c17_329, %c0_330, %c0_331] : memref<25x16x120xf32, #tpu.memory_space<vmem>>, vector<1x16x120xf32>
    %436 = vector.shape_cast %435 : vector<1x16x120xf32> to vector<16x120xf32>
    %cst_332 = arith.constant dense<0.000000e+00> : vector<1x120xf32>
    %437 = tpu.matmul %434, %436, %cst_332 {dimension_numbers = #tpu.dot_dimension_numbers<[1], [0], [0], [1], [0, 0, 1, 1], [], []>} : vector<1x16xf32>, vector<16x120xf32>, vector<1x120xf32> -> vector<1x120xf32>
    %438 = arith.addf %433, %437 : vector<1x120xf32>
    %439 = vector.extract_strided_slice %423 {offsets = [3, 0], sizes = [1, 16], strides = [1, 1]} : vector<5x16xf32> to vector<1x16xf32>
    %c18_333 = arith.constant 18 : index
    %c0_334 = arith.constant 0 : index
    %c0_335 = arith.constant 0 : index
    %440 = vector.load %arg6[%c18_333, %c0_334, %c0_335] : memref<25x16x120xf32, #tpu.memory_space<vmem>>, vector<1x16x120xf32>
    %441 = vector.shape_cast %440 : vector<1x16x120xf32> to vector<16x120xf32>
    %cst_336 = arith.constant dense<0.000000e+00> : vector<1x120xf32>
    %442 = tpu.matmul %439, %441, %cst_336 {dimension_numbers = #tpu.dot_dimension_numbers<[1], [0], [0], [1], [0, 0, 1, 1], [], []>} : vector<1x16xf32>, vector<16x120xf32>, vector<1x120xf32> -> vector<1x120xf32>
    %443 = arith.addf %438, %442 : vector<1x120xf32>
    %444 = vector.extract_strided_slice %423 {offsets = [4, 0], sizes = [1, 16], strides = [1, 1]} : vector<5x16xf32> to vector<1x16xf32>
    %c19_337 = arith.constant 19 : index
    %c0_338 = arith.constant 0 : index
    %c0_339 = arith.constant 0 : index
    %445 = vector.load %arg6[%c19_337, %c0_338, %c0_339] : memref<25x16x120xf32, #tpu.memory_space<vmem>>, vector<1x16x120xf32>
    %446 = vector.shape_cast %445 : vector<1x16x120xf32> to vector<16x120xf32>
    %cst_340 = arith.constant dense<0.000000e+00> : vector<1x120xf32>
    %447 = tpu.matmul %444, %446, %cst_340 {dimension_numbers = #tpu.dot_dimension_numbers<[1], [0], [0], [1], [0, 0, 1, 1], [], []>} : vector<1x16xf32>, vector<16x120xf32>, vector<1x120xf32> -> vector<1x120xf32>
    %448 = arith.addf %443, %447 : vector<1x120xf32>
    %c112_341 = arith.constant 112 : index
    %c0_342 = arith.constant 0 : index
    %449 = tpu.strided_load %arg15[%c112_341, %c0_342] {strides = array<i32: 2, 1>} : memref<144x16xf32, #tpu.memory_space<vmem>>, vector<5x16xf32>
    %c113_343 = arith.constant 113 : index
    %c0_344 = arith.constant 0 : index
    %450 = tpu.strided_load %arg15[%c113_343, %c0_344] {strides = array<i32: 2, 1>} : memref<144x16xf32, #tpu.memory_space<vmem>>, vector<5x16xf32>
    %451 = arith.maximumf %449, %450 : vector<5x16xf32>
    %c126_345 = arith.constant 126 : index
    %c0_346 = arith.constant 0 : index
    %452 = tpu.strided_load %arg15[%c126_345, %c0_346] {strides = array<i32: 2, 1>} : memref<144x16xf32, #tpu.memory_space<vmem>>, vector<5x16xf32>
    %c127 = arith.constant 127 : index
    %c0_347 = arith.constant 0 : index
    %453 = tpu.strided_load %arg15[%c127, %c0_347] {strides = array<i32: 2, 1>} : memref<144x16xf32, #tpu.memory_space<vmem>>, vector<5x16xf32>
    %454 = arith.maximumf %452, %453 : vector<5x16xf32>
    %455 = arith.maximumf %451, %454 : vector<5x16xf32>
    %456 = vector.broadcast %303 : vector<1x16xf32> to vector<5x16xf32>
    %457 = arith.addf %455, %456 : vector<5x16xf32>
    %cst_348 = arith.constant 0.000000e+00 : f32
    %458 = vector.broadcast %cst_348 : f32 to vector<5x16xf32>
    %459 = arith.maximumf %457, %458 : vector<5x16xf32>
    %460 = vector.extract_strided_slice %459 {offsets = [0, 0], sizes = [1, 16], strides = [1, 1]} : vector<5x16xf32> to vector<1x16xf32>
    %c20_349 = arith.constant 20 : index
    %c0_350 = arith.constant 0 : index
    %c0_351 = arith.constant 0 : index
    %461 = vector.load %arg6[%c20_349, %c0_350, %c0_351] : memref<25x16x120xf32, #tpu.memory_space<vmem>>, vector<1x16x120xf32>
    %462 = vector.shape_cast %461 : vector<1x16x120xf32> to vector<16x120xf32>
    %cst_352 = arith.constant dense<0.000000e+00> : vector<1x120xf32>
    %463 = tpu.matmul %460, %462, %cst_352 {dimension_numbers = #tpu.dot_dimension_numbers<[1], [0], [0], [1], [0, 0, 1, 1], [], []>} : vector<1x16xf32>, vector<16x120xf32>, vector<1x120xf32> -> vector<1x120xf32>
    %464 = arith.addf %448, %463 : vector<1x120xf32>
    %465 = vector.extract_strided_slice %459 {offsets = [1, 0], sizes = [1, 16], strides = [1, 1]} : vector<5x16xf32> to vector<1x16xf32>
    %c21_353 = arith.constant 21 : index
    %c0_354 = arith.constant 0 : index
    %c0_355 = arith.constant 0 : index
    %466 = vector.load %arg6[%c21_353, %c0_354, %c0_355] : memref<25x16x120xf32, #tpu.memory_space<vmem>>, vector<1x16x120xf32>
    %467 = vector.shape_cast %466 : vector<1x16x120xf32> to vector<16x120xf32>
    %cst_356 = arith.constant dense<0.000000e+00> : vector<1x120xf32>
    %468 = tpu.matmul %465, %467, %cst_356 {dimension_numbers = #tpu.dot_dimension_numbers<[1], [0], [0], [1], [0, 0, 1, 1], [], []>} : vector<1x16xf32>, vector<16x120xf32>, vector<1x120xf32> -> vector<1x120xf32>
    %469 = arith.addf %464, %468 : vector<1x120xf32>
    %470 = vector.extract_strided_slice %459 {offsets = [2, 0], sizes = [1, 16], strides = [1, 1]} : vector<5x16xf32> to vector<1x16xf32>
    %c22_357 = arith.constant 22 : index
    %c0_358 = arith.constant 0 : index
    %c0_359 = arith.constant 0 : index
    %471 = vector.load %arg6[%c22_357, %c0_358, %c0_359] : memref<25x16x120xf32, #tpu.memory_space<vmem>>, vector<1x16x120xf32>
    %472 = vector.shape_cast %471 : vector<1x16x120xf32> to vector<16x120xf32>
    %cst_360 = arith.constant dense<0.000000e+00> : vector<1x120xf32>
    %473 = tpu.matmul %470, %472, %cst_360 {dimension_numbers = #tpu.dot_dimension_numbers<[1], [0], [0], [1], [0, 0, 1, 1], [], []>} : vector<1x16xf32>, vector<16x120xf32>, vector<1x120xf32> -> vector<1x120xf32>
    %474 = arith.addf %469, %473 : vector<1x120xf32>
    %475 = vector.extract_strided_slice %459 {offsets = [3, 0], sizes = [1, 16], strides = [1, 1]} : vector<5x16xf32> to vector<1x16xf32>
    %c23_361 = arith.constant 23 : index
    %c0_362 = arith.constant 0 : index
    %c0_363 = arith.constant 0 : index
    %476 = vector.load %arg6[%c23_361, %c0_362, %c0_363] : memref<25x16x120xf32, #tpu.memory_space<vmem>>, vector<1x16x120xf32>
    %477 = vector.shape_cast %476 : vector<1x16x120xf32> to vector<16x120xf32>
    %cst_364 = arith.constant dense<0.000000e+00> : vector<1x120xf32>
    %478 = tpu.matmul %475, %477, %cst_364 {dimension_numbers = #tpu.dot_dimension_numbers<[1], [0], [0], [1], [0, 0, 1, 1], [], []>} : vector<1x16xf32>, vector<16x120xf32>, vector<1x120xf32> -> vector<1x120xf32>
    %479 = arith.addf %474, %478 : vector<1x120xf32>
    %480 = vector.extract_strided_slice %459 {offsets = [4, 0], sizes = [1, 16], strides = [1, 1]} : vector<5x16xf32> to vector<1x16xf32>
    %c24_365 = arith.constant 24 : index
    %c0_366 = arith.constant 0 : index
    %c0_367 = arith.constant 0 : index
    %481 = vector.load %arg6[%c24_365, %c0_366, %c0_367] : memref<25x16x120xf32, #tpu.memory_space<vmem>>, vector<1x16x120xf32>
    %482 = vector.shape_cast %481 : vector<1x16x120xf32> to vector<16x120xf32>
    %cst_368 = arith.constant dense<0.000000e+00> : vector<1x120xf32>
    %483 = tpu.matmul %480, %482, %cst_368 {dimension_numbers = #tpu.dot_dimension_numbers<[1], [0], [0], [1], [0, 0, 1, 1], [], []>} : vector<1x16xf32>, vector<16x120xf32>, vector<1x120xf32> -> vector<1x120xf32>
    %484 = arith.addf %479, %483 : vector<1x120xf32>
    %c0_369 = arith.constant 0 : index
    %c0_370 = arith.constant 0 : index
    %485 = vector.load %arg7[%c0_369, %c0_370] : memref<1x120xf32, #tpu.memory_space<vmem>>, vector<1x120xf32>
    %486 = arith.addf %484, %485 : vector<1x120xf32>
    %cst_371 = arith.constant 0.000000e+00 : f32
    %487 = vector.broadcast %cst_371 : f32 to vector<1x120xf32>
    %488 = arith.maximumf %486, %487 : vector<1x120xf32>
    %c0_372 = arith.constant 0 : index
    %c0_373 = arith.constant 0 : index
    %489 = vector.load %arg8[%c0_372, %c0_373] : memref<120x84xf32, #tpu.memory_space<vmem>>, vector<120x84xf32>
    %cst_374 = arith.constant dense<0.000000e+00> : vector<1x84xf32>
    %490 = tpu.matmul %488, %489, %cst_374 {dimension_numbers = #tpu.dot_dimension_numbers<[1], [0], [0], [1], [0, 0, 1, 1], [], []>} : vector<1x120xf32>, vector<120x84xf32>, vector<1x84xf32> -> vector<1x84xf32>
    %c0_375 = arith.constant 0 : index
    %c0_376 = arith.constant 0 : index
    %491 = vector.load %arg9[%c0_375, %c0_376] : memref<1x84xf32, #tpu.memory_space<vmem>>, vector<1x84xf32>
    %492 = arith.addf %490, %491 : vector<1x84xf32>
    %cst_377 = arith.constant 0.000000e+00 : f32
    %493 = vector.broadcast %cst_377 : f32 to vector<1x84xf32>
    %494 = arith.maximumf %492, %493 : vector<1x84xf32>
    %c0_378 = arith.constant 0 : index
    %c0_379 = arith.constant 0 : index
    %495 = vector.load %arg10[%c0_378, %c0_379] : memref<84x128xf32, #tpu.memory_space<vmem>>, vector<84x128xf32>
    %cst_380 = arith.constant dense<0.000000e+00> : vector<1x128xf32>
    %496 = tpu.matmul %494, %495, %cst_380 {dimension_numbers = #tpu.dot_dimension_numbers<[1], [0], [0], [1], [0, 0, 1, 1], [], []>} : vector<1x84xf32>, vector<84x128xf32>, vector<1x128xf32> -> vector<1x128xf32>
    %c0_381 = arith.constant 0 : index
    %c0_382 = arith.constant 0 : index
    %497 = vector.load %arg11[%c0_381, %c0_382] : memref<1x128xf32, #tpu.memory_space<vmem>>, vector<1x128xf32>
    %498 = arith.addf %496, %497 : vector<1x128xf32>
    %c0_383 = arith.constant 0 : index
    %c0_384 = arith.constant 0 : index
    %c0_385 = arith.constant 0 : index
    %499 = vector.load %arg12[%c0_383, %c0_384, %c0_385] : memref<1x1x128xf32, #tpu.memory_space<vmem>>, vector<1x1x128xf32>
    %500 = vector.shape_cast %499 : vector<1x1x128xf32> to vector<1x128xf32>
    %501 = vector.shape_cast %498 : vector<1x128xf32> to vector<1x1x128xf32>
    tpu.vector_store %arg12[%c0_383, %c0_384, %c0_385], %501 {strides = array<i32>} : memref<1x1x128xf32, #tpu.memory_space<vmem>>, vector<1x1x128xf32>,
    return
  }
  func.func @transform_0(%arg0: i32) -> (i32, i32, i32) {
    %c0_i32 = arith.constant 0 : i32
    %c0_i32_0 = arith.constant 0 : i32
    %c0_i32_1 = arith.constant 0 : i32
    return %arg0, %c0_i32, %c0_i32_0 : i32, i32, i32
  }
  func.func @transform_1(%arg0: i32) -> (i32, i32) {
    %c0_i32 = arith.constant 0 : i32
    %c0_i32_0 = arith.constant 0 : i32
    %c0_i32_1 = arith.constant 0 : i32
    return %c0_i32, %c0_i32_0 : i32, i32
  }
  func.func @transform_2(%arg0: i32) -> (i32, i32) {
    %c0_i32 = arith.constant 0 : i32
    %c0_i32_0 = arith.constant 0 : i32
    %c0_i32_1 = arith.constant 0 : i32
    return %c0_i32, %c0_i32_0 : i32, i32
  }
  func.func @transform_3(%arg0: i32) -> (i32, i32, i32) {
    %c0_i32 = arith.constant 0 : i32
    %c0_i32_0 = arith.constant 0 : i32
    %c0_i32_1 = arith.constant 0 : i32
    %c0_i32_2 = arith.constant 0 : i32
    return %c0_i32, %c0_i32_0, %c0_i32_1 : i32, i32, i32
  }
  func.func @transform_4(%arg0: i32) -> (i32, i32) {
    %c0_i32 = arith.constant 0 : i32
    %c0_i32_0 = arith.constant 0 : i32
    %c0_i32_1 = arith.constant 0 : i32
    return %c0_i32, %c0_i32_0 : i32, i32
  }
  func.func @transform_5(%arg0: i32) -> (i32, i32, i32) {
    %c0_i32 = arith.constant 0 : i32
    %c0_i32_0 = arith.constant 0 : i32
    %c0_i32_1 = arith.constant 0 : i32
    %c0_i32_2 = arith.constant 0 : i32
    return %c0_i32, %c0_i32_0, %c0_i32_1 : i32, i32, i32
  }
  func.func @transform_6(%arg0: i32) -> (i32, i32) {
    %c0_i32 = arith.constant 0 : i32
    %c0_i32_0 = arith.constant 0 : i32
    %c0_i32_1 = arith.constant 0 : i32
    return %c0_i32, %c0_i32_0 : i32, i32
  }
  func.func @transform_7(%arg0: i32) -> (i32, i32) {
    %c0_i32 = arith.constant 0 : i32
    %c0_i32_0 = arith.constant 0 : i32
    %c0_i32_1 = arith.constant 0 : i32
    return %c0_i32, %c0_i32_0 : i32, i32
  }
  func.func @transform_8(%arg0: i32) -> (i32, i32) {
    %c0_i32 = arith.constant 0 : i32
    %c0_i32_0 = arith.constant 0 : i32
    %c0_i32_1 = arith.constant 0 : i32
    return %c0_i32, %c0_i32_0 : i32, i32
  }
  func.func @transform_9(%arg0: i32) -> (i32, i32) {
    %c0_i32 = arith.constant 0 : i32
    %c0_i32_0 = arith.constant 0 : i32
    %c0_i32_1 = arith.constant 0 : i32
    return %c0_i32, %c0_i32_0 : i32, i32
  }
  func.func @transform_10(%arg0: i32) -> (i32, i32) {
    %c0_i32 = arith.constant 0 : i32
    %c0_i32_0 = arith.constant 0 : i32
    %c0_i32_1 = arith.constant 0 : i32
    return %c0_i32, %c0_i32_0 : i32, i32
  }
  func.func @transform_11(%arg0: i32) -> (i32, i32, i32) {
    %c0_i32 = arith.constant 0 : i32
    %c0_i32_0 = arith.constant 0 : i32
    %c0_i32_1 = arith.constant 0 : i32
    return %arg0, %c0_i32, %c0_i32_0 : i32, i32, i32
  }
}

</mosaic_0001>

<llo_original>
// kernel: lenet5_forward.1
$region0: #{lenet5_forward.1}
  #allocation0 [shape = 'u32[]', space=smem, size = 0x4, offset = 0x4, fixed_abs, tag = 'smem constant byte address 0x4 - core index']
  #allocation1 [shape = 'u32[72,128]{1,0:T(1,128)}', space=vmem, size = 0x9000, scoped, tag = 'internal scratch']
  #allocation2 [shape = 'f32[784,8]{1,0:T(8,128)}', space=vmem, size = 0x62000, scoped, tag = 'scratch operand']
  #allocation3 [shape = 'f32[208,8]{1,0:T(8,128)}', space=vmem, size = 0x1a000, scoped, tag = 'scratch operand']
  #allocation4 [shape = 'f32[144,16]{1,0:T(8,128)}', space=vmem, size = 0x12000, scoped, tag = 'scratch operand']
  %s0 = inlined_call_operand.vmem [shape: f32[2,784,128], index: 0, kind: input, shape index: {}]
  %s1 = inlined_call_operand.vmem [shape: f32[128,8], index: 1, kind: input, shape index: {}]
  %s2 = inlined_call_operand.vmem [shape: f32[1,8], index: 2, kind: input, shape index: {}]
  %s3 = inlined_call_operand.vmem [shape: f32[25,8,16], index: 3, kind: input, shape index: {}]
  %s4 = inlined_call_operand.vmem [shape: f32[1,16], index: 4, kind: input, shape index: {}]
  %s5 = inlined_call_operand.vmem [shape: f32[25,16,120], index: 5, kind: input, shape index: {}]
  %s6 = inlined_call_operand.vmem [shape: f32[1,120], index: 6, kind: input, shape index: {}]
  %s7 = inlined_call_operand.vmem [shape: f32[120,84], index: 7, kind: input, shape index: {}]
  %s8 = inlined_call_operand.vmem [shape: f32[1,84], index: 8, kind: input, shape index: {}]
  %s9 = inlined_call_operand.vmem [shape: f32[84,128], index: 9, kind: input, shape index: {}]
  %s10 = inlined_call_operand.vmem [shape: f32[1,128], index: 10, kind: input, shape index: {}]
  %s11 = inlined_call_operand.hbm [shape: f32[2,1,128], index: 11, kind: output, shape index: {}]
  %s12 = sld [smem:[#allocation0]]
  $region77: #{lenet5_forward.1} parent=0
    _
  %s14 = ssub.s32 1, %s12
  %s15 = scalar_select 0, %s14, %s12
  $region1: #{lenet5_forward.1} parent=0
    #allocation5 [shape = 'u8[1024]{0}', space=vmem, size = 0x400, scoped, tag = 'output window, operand 0']
    #allocation6 [shape = 's32[2]{0}', space=sflag, size = 0x8, scoped, tag = 'scoped memory for lenet5_forward.1']
    %16 = vsyncpa [#allocation6], 0
    %s17 = scalar_lea.sflag [#allocation6], 1
    %18 = vsyncpa %s17, 0
    loop: start=0, step=1, limit=4
    $region2: #{lenet5_forward.1} parent=1 // loop_pre_header
      _
    $region3: #{lenet5_forward.1} parent=1 // loop_header
      %s20 = sphi 0, %s24
      %p21 = scmp.ge.s32.totalorder %s20, 4
      %s30 = sphi 0, %s32
      %s33 = sphi 0, %s30
      %s34 = sphi 0, %s33
      %s50 = sphi 0, %s34
      %s54 = sphi 0, %s54
      %s56 = sphi 0, %s54
      %s57 = sphi 0, %s56
      %s71 = sphi 0, %s57
      %s75 = sphi 0, %s75
      %s77 = sphi 0, %s75
      %s78 = sphi 0, %s77
      %s92 = sphi 0, %s78
      %s96 = sphi 0, %s96
      %s98 = sphi 0, %s96
      %s99 = sphi 0, %s98
      %s113 = sphi 0, %s99
      %s117 = sphi 0, %s117
      %s119 = sphi 0, %s117
      %s120 = sphi 0, %s119
      %s134 = sphi 0, %s120
      %s138 = sphi 0, %s138
      %s140 = sphi 0, %s138
      %s141 = sphi 0, %s140
      %s155 = sphi 0, %s141
      %s159 = sphi 0, %s159
      %s161 = sphi 0, %s159
      %s162 = sphi 0, %s161
      %s176 = sphi 0, %s162
      %s180 = sphi 0, %s180
      %s182 = sphi 0, %s180
      %s183 = sphi 0, %s182
      %s197 = sphi 0, %s183
      %s201 = sphi 0, %s201
      %s203 = sphi 0, %s201
      %s204 = sphi 0, %s203
      %s218 = sphi 0, %s204
      %s222 = sphi 0, %s222
      %s224 = sphi 0, %s222
      %s225 = sphi 0, %s224
      %s239 = sphi 0, %s225
      %s243 = sphi 0, %s243
      %s245 = sphi 0, %s243
      %s246 = sphi 0, %s245
      %s260 = sphi 0, %s246
      %s266 = sphi 0, %s268
      %s269 = sphi 0, %s266
      %s270 = sphi 0, %s269
      %s286 = sphi 0, %s270
    $region4: #{lenet5_forward.1} parent=1 // loop_header_branch
      %23 = sbr.rel (%p21) target = $region8
    $region5: #{lenet5_forward.1} parent=1 // loop_body
      %s25 = ssub.s32 %s20, 1
      %s26 = ssub.s32 %s20, 2
      %s27 = sadd.s32 %s20, 1
      %s28 = ssub.s32 %s20, %s27
      %p29 = scmp.eq.s32.totalorder %s28, 0
      %s31 = sadd.s32 %s30, 1
      %s32 = scalar_select %p29, %s30, %s31
      %p35 = pneg %p29
      %p36 = scmp.eq.s32.totalorder %s20, 1
      %p37 = por %p35, %p36
      %p38 = scmp.ne.s32.totalorder %s30, %s33
      %p39 = scmp.eq.s32.totalorder %s20, 0
      %p40 = por %p38, %p39
      %p41 = scmp.ne.s32.totalorder %s30, %s33
      %p42 = scmp.eq.s32.totalorder %s25, 1
      %p43 = por %p41, %p42
      %p44 = scmp.ne.s32.totalorder %s33, %s34
      %p45 = scmp.eq.s32.totalorder %s25, 0
      %p46 = por %p44, %p45
      %p47 = scmp.ne.s32.totalorder %s33, %s34
      %p48 = scmp.eq.s32.totalorder %s26, 1
      %p49 = por %p47, %p48
      %p51 = scmp.ne.s32.totalorder %s34, %s50
      %p52 = scmp.eq.s32.totalorder %s26, 0
      %p53 = por %p51, %p52
      %s55 = sadd.s32 %s54, 1
      %p58 = scmp.eq.s32.totalorder %s20, 1
      %p59 = scmp.ne.s32.totalorder %s54, %s56
      %p60 = scmp.eq.s32.totalorder %s20, 0
      %p61 = por %p59, %p60
      %p62 = scmp.ne.s32.totalorder %s54, %s56
      %p63 = scmp.eq.s32.totalorder %s25, 1
      %p64 = por %p62, %p63
      %p65 = scmp.ne.s32.totalorder %s56, %s57
      %p66 = scmp.eq.s32.totalorder %s25, 0
      %p67 = por %p65, %p66
      %p68 = scmp.ne.s32.totalorder %s56, %s57
      %p69 = scmp.eq.s32.totalorder %s26, 1
      %p70 = por %p68, %p69
      %p72 = scmp.ne.s32.totalorder %s57, %s71
      %p73 = scmp.eq.s32.totalorder %s26, 0
      %p74 = por %p72, %p73
      %s76 = sadd.s32 %s75, 1
      %p79 = scmp.eq.s32.totalorder %s20, 1
      %p80 = scmp.ne.s32.totalorder %s75, %s77
      %p81 = scmp.eq.s32.totalorder %s20, 0
      %p82 = por %p80, %p81
      %p83 = scmp.ne.s32.totalorder %s75, %s77
      %p84 = scmp.eq.s32.totalorder %s25, 1
      %p85 = por %p83, %p84
      %p86 = scmp.ne.s32.totalorder %s77, %s78
      %p87 = scmp.eq.s32.totalorder %s25, 0
      %p88 = por %p86, %p87
      %p89 = scmp.ne.s32.totalorder %s77, %s78
      %p90 = scmp.eq.s32.totalorder %s26, 1
      %p91 = por %p89, %p90
      %p93 = scmp.ne.s32.totalorder %s78, %s92
      %p94 = scmp.eq.s32.totalorder %s26, 0
      %p95 = por %p93, %p94
      %s97 = sadd.s32 %s96, 1
      %p100 = scmp.eq.s32.totalorder %s20, 1
      %p101 = scmp.ne.s32.totalorder %s96, %s98
      %p102 = scmp.eq.s32.totalorder %s20, 0
      %p103 = por %p101, %p102
      %p104 = scmp.ne.s32.totalorder %s96, %s98
      %p105 = scmp.eq.s32.totalorder %s25, 1
      %p106 = por %p104, %p105
      %p107 = scmp.ne.s32.totalorder %s98, %s99
      %p108 = scmp.eq.s32.totalorder %s25, 0
      %p109 = por %p107, %p108
      %p110 = scmp.ne.s32.totalorder %s98, %s99
      %p111 = scmp.eq.s32.totalorder %s26, 1
      %p112 = por %p110, %p111
      %p114 = scmp.ne.s32.totalorder %s99, %s113
      %p115 = scmp.eq.s32.totalorder %s26, 0
      %p116 = por %p114, %p115
      %s118 = sadd.s32 %s117, 1
      %p121 = scmp.eq.s32.totalorder %s20, 1
      %p122 = scmp.ne.s32.totalorder %s117, %s119
      %p123 = scmp.eq.s32.totalorder %s20, 0
      %p124 = por %p122, %p123
      %p125 = scmp.ne.s32.totalorder %s117, %s119
      %p126 = scmp.eq.s32.totalorder %s25, 1
      %p127 = por %p125, %p126
      %p128 = scmp.ne.s32.totalorder %s119, %s120
      %p129 = scmp.eq.s32.totalorder %s25, 0
      %p130 = por %p128, %p129
      %p131 = scmp.ne.s32.totalorder %s119, %s120
      %p132 = scmp.eq.s32.totalorder %s26, 1
      %p133 = por %p131, %p132
      %p135 = scmp.ne.s32.totalorder %s120, %s134
      %p136 = scmp.eq.s32.totalorder %s26, 0
      %p137 = por %p135, %p136
      %s139 = sadd.s32 %s138, 1
      %p142 = scmp.eq.s32.totalorder %s20, 1
      %p143 = scmp.ne.s32.totalorder %s138, %s140
      %p144 = scmp.eq.s32.totalorder %s20, 0
      %p145 = por %p143, %p144
      %p146 = scmp.ne.s32.totalorder %s138, %s140
      %p147 = scmp.eq.s32.totalorder %s25, 1
      %p148 = por %p146, %p147
      %p149 = scmp.ne.s32.totalorder %s140, %s141
      %p150 = scmp.eq.s32.totalorder %s25, 0
      %p151 = por %p149, %p150
      %p152 = scmp.ne.s32.totalorder %s140, %s141
      %p153 = scmp.eq.s32.totalorder %s26, 1
      %p154 = por %p152, %p153
      %p156 = scmp.ne.s32.totalorder %s141, %s155
      %p157 = scmp.eq.s32.totalorder %s26, 0
      %p158 = por %p156, %p157
      %s160 = sadd.s32 %s159, 1
      %p163 = scmp.eq.s32.totalorder %s20, 1
      %p164 = scmp.ne.s32.totalorder %s159, %s161
      %p165 = scmp.eq.s32.totalorder %s20, 0
      %p166 = por %p164, %p165
      %p167 = scmp.ne.s32.totalorder %s159, %s161
      %p168 = scmp.eq.s32.totalorder %s25, 1
      %p169 = por %p167, %p168
      %p170 = scmp.ne.s32.totalorder %s161, %s162
      %p171 = scmp.eq.s32.totalorder %s25, 0
      %p172 = por %p170, %p171
      %p173 = scmp.ne.s32.totalorder %s161, %s162
      %p174 = scmp.eq.s32.totalorder %s26, 1
      %p175 = por %p173, %p174
      %p177 = scmp.ne.s32.totalorder %s162, %s176
      %p178 = scmp.eq.s32.totalorder %s26, 0
      %p179 = por %p177, %p178
      %s181 = sadd.s32 %s180, 1
      %p184 = scmp.eq.s32.totalorder %s20, 1
      %p185 = scmp.ne.s32.totalorder %s180, %s182
      %p186 = scmp.eq.s32.totalorder %s20, 0
      %p187 = por %p185, %p186
      %p188 = scmp.ne.s32.totalorder %s180, %s182
      %p189 = scmp.eq.s32.totalorder %s25, 1
      %p190 = por %p188, %p189
      %p191 = scmp.ne.s32.totalorder %s182, %s183
      %p192 = scmp.eq.s32.totalorder %s25, 0
      %p193 = por %p191, %p192
      %p194 = scmp.ne.s32.totalorder %s182, %s183
      %p195 = scmp.eq.s32.totalorder %s26, 1
      %p196 = por %p194, %p195
      %p198 = scmp.ne.s32.totalorder %s183, %s197
      %p199 = scmp.eq.s32.totalorder %s26, 0
      %p200 = por %p198, %p199
      %s202 = sadd.s32 %s201, 1
      %p205 = scmp.eq.s32.totalorder %s20, 1
      %p206 = scmp.ne.s32.totalorder %s201, %s203
      %p207 = scmp.eq.s32.totalorder %s20, 0
      %p208 = por %p206, %p207
      %p209 = scmp.ne.s32.totalorder %s201, %s203
      %p210 = scmp.eq.s32.totalorder %s25, 1
      %p211 = por %p209, %p210
      %p212 = scmp.ne.s32.totalorder %s203, %s204
      %p213 = scmp.eq.s32.totalorder %s25, 0
      %p214 = por %p212, %p213
      %p215 = scmp.ne.s32.totalorder %s203, %s204
      %p216 = scmp.eq.s32.totalorder %s26, 1
      %p217 = por %p215, %p216
      %p219 = scmp.ne.s32.totalorder %s204, %s218
      %p220 = scmp.eq.s32.totalorder %s26, 0
      %p221 = por %p219, %p220
      %s223 = sadd.s32 %s222, 1
      %p226 = scmp.eq.s32.totalorder %s20, 1
      %p227 = scmp.ne.s32.totalorder %s222, %s224
      %p228 = scmp.eq.s32.totalorder %s20, 0
      %p229 = por %p227, %p228
      %p230 = scmp.ne.s32.totalorder %s222, %s224
      %p231 = scmp.eq.s32.totalorder %s25, 1
      %p232 = por %p230, %p231
      %p233 = scmp.ne.s32.totalorder %s224, %s225
      %p234 = scmp.eq.s32.totalorder %s25, 0
      %p235 = por %p233, %p234
      %p236 = scmp.ne.s32.totalorder %s224, %s225
      %p237 = scmp.eq.s32.totalorder %s26, 1
      %p238 = por %p236, %p237
      %p240 = scmp.ne.s32.totalorder %s225, %s239
      %p241 = scmp.eq.s32.totalorder %s26, 0
      %p242 = por %p240, %p241
      %s244 = sadd.s32 %s243, 1
      %p247 = scmp.eq.s32.totalorder %s20, 1
      %p248 = scmp.ne.s32.totalorder %s243, %s245
      %p249 = scmp.eq.s32.totalorder %s20, 0
      %p250 = por %p248, %p249
      %p251 = scmp.ne.s32.totalorder %s243, %s245
      %p252 = scmp.eq.s32.totalorder %s25, 1
      %p253 = por %p251, %p252
      %p254 = scmp.ne.s32.totalorder %s245, %s246
      %p255 = scmp.eq.s32.totalorder %s25, 0
      %p256 = por %p254, %p255
      %p257 = scmp.ne.s32.totalorder %s245, %s246
      %p258 = scmp.eq.s32.totalorder %s26, 1
      %p259 = por %p257, %p258
      %p261 = scmp.ne.s32.totalorder %s246, %s260
      %p262 = scmp.eq.s32.totalorder %s26, 0
      %p263 = por %p261, %p262
      %s264 = ssub.s32 %s20, %s27
      %p265 = scmp.eq.s32.totalorder %s264, 0
      %s267 = sadd.s32 %s266, 1
      %s268 = scalar_select %p265, %s266, %s267
      %p271 = pneg %p265
      %p272 = scmp.eq.s32.totalorder %s20, 1
      %p273 = por %p271, %p272
      %p274 = scmp.ne.s32.totalorder %s266, %s269
      %p275 = scmp.eq.s32.totalorder %s20, 0
      %p276 = por %p274, %p275
      %p277 = scmp.ne.s32.totalorder %s266, %s269
      %p278 = scmp.eq.s32.totalorder %s25, 1
      %p279 = por %p277, %p278
      %p280 = scmp.ne.s32.totalorder %s269, %s270
      %p281 = scmp.eq.s32.totalorder %s25, 0
      %p282 = por %p280, %p281
      %p283 = scmp.ne.s32.totalorder %s269, %s270
      %p284 = scmp.eq.s32.totalorder %s26, 1
      %p285 = por %p283, %p284
      %p287 = scmp.ne.s32.totalorder %s270, %s286
      %p288 = scmp.eq.s32.totalorder %s26, 0
      %p289 = por %p287, %p288
      %p290 = scmp.le.s32.totalorder 1, %s20
      %p291 = scmp.lt.s32.totalorder %s20, 3
      %p292 = pnand %p290, %p291
      %p293 = pneg %p292
      // Predicated region
      $region9: #{lenet5_forward.1} parent=5 // pred_check
        _
      $region10: #{lenet5_forward.1} parent=5 // pred_check_branch
        %295 = sbr.rel (%p292) target = $region12
      $region11: #{lenet5_forward.1} parent=5 // pred_region
        %s296 = ssub.s32 %s20, 1
        // Predicated region
        $region13: #{lenet5_forward.1} parent=11 // pred_check
          %p297 = pneg %p67
        $region14: #{lenet5_forward.1} parent=11 // pred_check_branch
          %299 = sbr.rel (%p297) target = $region16
        $region15: #{lenet5_forward.1} parent=11 // pred_region
          _
        $region16: #{lenet5_forward.1} parent=11 // pred_fallthru
          _
        // Predicated region
        $region17: #{lenet5_forward.1} parent=11 // pred_check
          %p300 = pneg %p88
        $region18: #{lenet5_forward.1} parent=11 // pred_check_branch
          %302 = sbr.rel (%p300) target = $region20
        $region19: #{lenet5_forward.1} parent=11 // pred_region
          _
        $region20: #{lenet5_forward.1} parent=11 // pred_fallthru
          _
        // Predicated region
        $region21: #{lenet5_forward.1} parent=11 // pred_check
          %p303 = pneg %p109
        $region22: #{lenet5_forward.1} parent=11 // pred_check_branch
          %305 = sbr.rel (%p303) target = $region24
        $region23: #{lenet5_forward.1} parent=11 // pred_region
          _
        $region24: #{lenet5_forward.1} parent=11 // pred_fallthru
          _
        // Predicated region
        $region25: #{lenet5_forward.1} parent=11 // pred_check
          %p306 = pneg %p130
        $region26: #{lenet5_forward.1} parent=11 // pred_check_branch
          %308 = sbr.rel (%p306) target = $region28
        $region27: #{lenet5_forward.1} parent=11 // pred_region
          _
        $region28: #{lenet5_forward.1} parent=11 // pred_fallthru
          _
        // Predicated region
        $region29: #{lenet5_forward.1} parent=11 // pred_check
          %p309 = pneg %p151
        $region30: #{lenet5_forward.1} parent=11 // pred_check_branch
          %311 = sbr.rel (%p309) target = $region32
        $region31: #{lenet5_forward.1} parent=11 // pred_region
          _
        $region32: #{lenet5_forward.1} parent=11 // pred_fallthru
          _
        // Predicated region
        $region33: #{lenet5_forward.1} parent=11 // pred_check
          %p312 = pneg %p172
        $region34: #{lenet5_forward.1} parent=11 // pred_check_branch
          %314 = sbr.rel (%p312) target = $region36
        $region35: #{lenet5_forward.1} parent=11 // pred_region
          _
        $region36: #{lenet5_forward.1} parent=11 // pred_fallthru
          _
        // Predicated region
        $region37: #{lenet5_forward.1} parent=11 // pred_check
          %p315 = pneg %p193
        $region38: #{lenet5_forward.1} parent=11 // pred_check_branch
          %317 = sbr.rel (%p315) target = $region40
        $region39: #{lenet5_forward.1} parent=11 // pred_region
          _
        $region40: #{lenet5_forward.1} parent=11 // pred_fallthru
          _
        // Predicated region
        $region41: #{lenet5_forward.1} parent=11 // pred_check
          %p318 = pneg %p214
        $region42: #{lenet5_forward.1} parent=11 // pred_check_branch
          %320 = sbr.rel (%p318) target = $region44
        $region43: #{lenet5_forward.1} parent=11 // pred_region
          _
        $region44: #{lenet5_forward.1} parent=11 // pred_fallthru
          _
        // Predicated region
        $region45: #{lenet5_forward.1} parent=11 // pred_check
          %p321 = pneg %p235
        $region46: #{lenet5_forward.1} parent=11 // pred_check_branch
          %323 = sbr.rel (%p321) target = $region48
        $region47: #{lenet5_forward.1} parent=11 // pred_region
          _
        $region48: #{lenet5_forward.1} parent=11 // pred_fallthru
          _
        // Predicated region
        $region49: #{lenet5_forward.1} parent=11 // pred_check
          %p324 = pneg %p256
        $region50: #{lenet5_forward.1} parent=11 // pred_check_branch
          %326 = sbr.rel (%p324) target = $region52
        $region51: #{lenet5_forward.1} parent=11 // pred_region
          _
        $region52: #{lenet5_forward.1} parent=11 // pred_fallthru
          _
      $region12: #{lenet5_forward.1} parent=5 // pred_fallthru
        _
      %p327 = scmp.lt.s32.totalorder %s20, 2
      // Predicated region
      $region53: #{lenet5_forward.1} parent=5 // pred_check
        %p328 = pneg %p327
      $region54: #{lenet5_forward.1} parent=5 // pred_check_branch
        %330 = sbr.rel (%p328) target = $region56
      $region55: #{lenet5_forward.1} parent=5 // pred_region
        // Predicated region
        $region57: #{lenet5_forward.1} parent=55 // pred_check
          %p331 = pneg %p40
        $region58: #{lenet5_forward.1} parent=55 // pred_check_branch
          %333 = sbr.rel (%p331) target = $region60
        $region59: #{lenet5_forward.1} parent=55 // pred_region
          %p334 = scmp.lt.s32.totalorder %s20, 1
          %s335 = scalar_select %p334, %s20, 1
          %s336 = smul.addr %s335, 98
          %s337 = smul.addr %s336, 8
          %s338 = scalar_lea.vmem %s0, %s337
        $region60: #{lenet5_forward.1} parent=55 // pred_fallthru
          _
      $region56: #{lenet5_forward.1} parent=5 // pred_fallthru
        _
      %p339 = scmp.le.s32.totalorder 1, %s20
      %p340 = scmp.lt.s32.totalorder %s20, 3
      %p341 = pnand %p339, %p340
      %p342 = pneg %p341
      // Predicated region
      $region61: #{lenet5_forward.1} parent=5 // pred_check
        _
      $region62: #{lenet5_forward.1} parent=5 // pred_check_branch
        %344 = sbr.rel (%p341) target = $region64
      $region63: #{lenet5_forward.1} parent=5 // pred_region
        %s345 = ssub.s32 %s20, 1
        %p346 = scmp.lt.s32.totalorder %s25, 1
        %s347 = scalar_select %p346, %s25, 1
        %s348 = smul.addr %s347, 98
        %s349 = smul.addr %s348, 8
        %s350 = scalar_lea.vmem %s0, %s349
        %p351 = pneg %p46
        %p352 = pneg %p43
        %p353 = pneg %p67
        %p354 = pneg %p64
        %p355 = pneg %p88
        %p356 = pneg %p85
        %p357 = pneg %p109
        %p358 = pneg %p106
        %p359 = pneg %p130
        %p360 = pneg %p127
        %p361 = pneg %p151
        %p362 = pneg %p148
        %p363 = pneg %p172
        %p364 = pneg %p169
        %p365 = pneg %p193
        %p366 = pneg %p190
        %p367 = pneg %p214
        %p368 = pneg %p211
        %p369 = pneg %p235
        %p370 = pneg %p232
        %p371 = pneg %p256
        %p372 = pneg %p253
        %p373 = pneg %p282
        %p374 = pneg %p279
        %s375 = sand.u32 %s269, 1
        %s376 = scalar_lea.sflag [#allocation6], %s375
        %s377 = sand.u32 %s269, 1
        %s378 = scalar_lea.vmem [#allocation5], %s377
        %p379 = scmp.lt.s32.totalorder %s25, 1
        %s380 = scalar_select %p379, %s25, 1
        %s381 = smul.addr %s380, 98
        %s382 = smul.addr %s381, 8
        %s383 = scalar_lea.vmem %s0, %s382
        %v384 = vld [vmem:[%s383] sm:$0xff]
        %v385 = vld [vmem:[%s383 + $0x8] sm:$0xff]
        %v386 = vld [vmem:[%s383 + $0x10] sm:$0xff]
        %v387 = vld [vmem:[%s383 + $0x18] sm:$0xff]
        %v388 = vld [vmem:[%s383 + $0x20] sm:$0xff]
        %v389 = vld [vmem:[%s383 + $0x28] sm:$0xff]
        %v390 = vld [vmem:[%s383 + $0x30] sm:$0xff]
        %v391 = vld [vmem:[%s383 + $0x38] sm:$0xff]
        %v392 = vld [vmem:[%s383 + $0x40] sm:$0xff]
        %v393 = vld [vmem:[%s383 + $0x48] sm:$0xff]
        %v394 = vld [vmem:[%s383 + $0x50] sm:$0xff]
        %v395 = vld [vmem:[%s383 + $0x58] sm:$0xff]
        %v396 = vld [vmem:[%s383 + $0x60] sm:$0xff]
        %v397 = vld [vmem:[%s383 + $0x68] sm:$0xff]
        %v398 = vld [vmem:[%s383 + $0x70] sm:$0xff]
        %v399 = vld [vmem:[%s383 + $0x78] sm:$0xff]
        %v400 = vld [vmem:[%s383 + $0x80] sm:$0xff]
        %v401 = vld [vmem:[%s383 + $0x88] sm:$0xff]
        %v402 = vld [vmem:[%s383 + $0x90] sm:$0xff]
        %v403 = vld [vmem:[%s383 + $0x98] sm:$0xff]
        %v404 = vld [vmem:[%s383 + $0xa0] sm:$0xff]
        %v405 = vld [vmem:[%s383 + $0xa8] sm:$0xff]
        %v406 = vld [vmem:[%s383 + $0xb0] sm:$0xff]
        %v407 = vld [vmem:[%s383 + $0xb8] sm:$0xff]
        %v408 = vld [vmem:[%s383 + $0xc0] sm:$0xff]
        %v409 = vld [vmem:[%s383 + $0xc8] sm:$0xff]
        %v410 = vld [vmem:[%s383 + $0xd0] sm:$0xff]
        %v411 = vld [vmem:[%s383 + $0xd8] sm:$0xff]
        %v412 = vld [vmem:[%s383 + $0xe0] sm:$0xff]
        %v413 = vld [vmem:[%s383 + $0xe8] sm:$0xff]
        %v414 = vld [vmem:[%s383 + $0xf0] sm:$0xff]
        %v415 = vld [vmem:[%s383 + $0xf8] sm:$0xff]
        %v416 = vld [vmem:[%s383 + $0x100] sm:$0xff]
        %v417 = vld [vmem:[%s383 + $0x108] sm:$0xff]
        %v418 = vld [vmem:[%s383 + $0x110] sm:$0xff]
        %v419 = vld [vmem:[%s383 + $0x118] sm:$0xff]
        %v420 = vld [vmem:[%s383 + $0x120] sm:$0xff]
        %v421 = vld [vmem:[%s383 + $0x128] sm:$0xff]
        %v422 = vld [vmem:[%s383 + $0x130] sm:$0xff]
        %v423 = vld [vmem:[%s383 + $0x138] sm:$0xff]
        %v424 = vld [vmem:[%s383 + $0x140] sm:$0xff]
        %v425 = vld [vmem:[%s383 + $0x148] sm:$0xff]
        %v426 = vld [vmem:[%s383 + $0x150] sm:$0xff]
        %v427 = vld [vmem:[%s383 + $0x158] sm:$0xff]
        %v428 = vld [vmem:[%s383 + $0x160] sm:$0xff]
        %v429 = vld [vmem:[%s383 + $0x168] sm:$0xff]
        %v430 = vld [vmem:[%s383 + $0x170] sm:$0xff]
        %v431 = vld [vmem:[%s383 + $0x178] sm:$0xff]
        %v432 = vld [vmem:[%s383 + $0x180] sm:$0xff]
        %v433 = vld [vmem:[%s383 + $0x188] sm:$0xff]
        %v434 = vld [vmem:[%s383 + $0x190] sm:$0xff]
        %v435 = vld [vmem:[%s383 + $0x198] sm:$0xff]
        %v436 = vld [vmem:[%s383 + $0x1a0] sm:$0xff]
        %v437 = vld [vmem:[%s383 + $0x1a8] sm:$0xff]
        %v438 = vld [vmem:[%s383 + $0x1b0] sm:$0xff]
        %v439 = vld [vmem:[%s383 + $0x1b8] sm:$0xff]
        %v440 = vld [vmem:[%s383 + $0x1c0] sm:$0xff]
        %v441 = vld [vmem:[%s383 + $0x1c8] sm:$0xff]
        %v442 = vld [vmem:[%s383 + $0x1d0] sm:$0xff]
        %v443 = vld [vmem:[%s383 + $0x1d8] sm:$0xff]
        %v444 = vld [vmem:[%s383 + $0x1e0] sm:$0xff]
        %v445 = vld [vmem:[%s383 + $0x1e8] sm:$0xff]
        %v446 = vld [vmem:[%s383 + $0x1f0] sm:$0xff]
        %v447 = vld [vmem:[%s383 + $0x1f8] sm:$0xff]
        %v448 = vld [vmem:[%s383 + $0x200] sm:$0xff]
        %v449 = vld [vmem:[%s383 + $0x208] sm:$0xff]
        %v450 = vld [vmem:[%s383 + $0x210] sm:$0xff]
        %v451 = vld [vmem:[%s383 + $0x218] sm:$0xff]
        %v452 = vld [vmem:[%s383 + $0x220] sm:$0xff]
        %v453 = vld [vmem:[%s383 + $0x228] sm:$0xff]
        %v454 = vld [vmem:[%s383 + $0x230] sm:$0xff]
        %v455 = vld [vmem:[%s383 + $0x238] sm:$0xff]
        %v456 = vld [vmem:[%s383 + $0x240] sm:$0xff]
        %v457 = vld [vmem:[%s383 + $0x248] sm:$0xff]
        %v458 = vld [vmem:[%s383 + $0x250] sm:$0xff]
        %v459 = vld [vmem:[%s383 + $0x258] sm:$0xff]
        %v460 = vld [vmem:[%s383 + $0x260] sm:$0xff]
        %v461 = vld [vmem:[%s383 + $0x268] sm:$0xff]
        %v462 = vld [vmem:[%s383 + $0x270] sm:$0xff]
        %v463 = vld [vmem:[%s383 + $0x278] sm:$0xff]
        %v464 = vld [vmem:[%s383 + $0x280] sm:$0xff]
        %v465 = vld [vmem:[%s383 + $0x288] sm:$0xff]
        %v466 = vld [vmem:[%s383 + $0x290] sm:$0xff]
        %v467 = vld [vmem:[%s383 + $0x298] sm:$0xff]
        %v468 = vld [vmem:[%s383 + $0x2a0] sm:$0xff]
        %v469 = vld [vmem:[%s383 + $0x2a8] sm:$0xff]
        %v470 = vld [vmem:[%s383 + $0x2b0] sm:$0xff]
        %v471 = vld [vmem:[%s383 + $0x2b8] sm:$0xff]
        %v472 = vld [vmem:[%s383 + $0x2c0] sm:$0xff]
        %v473 = vld [vmem:[%s383 + $0x2c8] sm:$0xff]
        %v474 = vld [vmem:[%s383 + $0x2d0] sm:$0xff]
        %v475 = vld [vmem:[%s383 + $0x2d8] sm:$0xff]
        %v476 = vld [vmem:[%s383 + $0x2e0] sm:$0xff]
        %v477 = vld [vmem:[%s383 + $0x2e8] sm:$0xff]
        %v478 = vld [vmem:[%s383 + $0x2f0] sm:$0xff]
        %v479 = vld [vmem:[%s383 + $0x2f8] sm:$0xff]
        %v480 = vld [vmem:[%s383 + $0x300] sm:$0xff]
        %v481 = vld [vmem:[%s383 + $0x308] sm:$0xff]
        %v482 = vld [vmem:[%s1] sm:$0xff]
        %v483 = vld [vmem:[%s1 + $0x8] sm:$0xff]
        %v484 = vld [vmem:[%s1 + $0x10] sm:$0xff]
        %v485 = vld [vmem:[%s1 + $0x18] sm:$0xff]
        %v486 = vld [vmem:[%s1 + $0x20] sm:$0xff]
        %v487 = vld [vmem:[%s1 + $0x28] sm:$0xff]
        %v488 = vld [vmem:[%s1 + $0x30] sm:$0xff]
        %v489 = vld [vmem:[%s1 + $0x38] sm:$0xff]
        %v490 = vld [vmem:[%s1 + $0x40] sm:$0xff]
        %v491 = vld [vmem:[%s1 + $0x48] sm:$0xff]
        %v492 = vld [vmem:[%s1 + $0x50] sm:$0xff]
        %v493 = vld [vmem:[%s1 + $0x58] sm:$0xff]
        %v494 = vld [vmem:[%s1 + $0x60] sm:$0xff]
        %v495 = vld [vmem:[%s1 + $0x68] sm:$0xff]
        %v496 = vld [vmem:[%s1 + $0x70] sm:$0xff]
        %v497 = vld [vmem:[%s1 + $0x78] sm:$0xff]
        %498 = vmatpush.msra.mxu0 %v497
        %499 = vmatpush.msra.mxu0 %v496
        %500 = vmatpush.msra.mxu0 %v495
        %501 = vmatpush.msra.mxu0 %v494
        %502 = vmatpush.msra.mxu0 %v493
        %503 = vmatpush.msra.mxu0 %v492
        %504 = vmatpush.msra.mxu0 %v491
        %505 = vmatpush.msra.mxu0 %v490
        %506 = vmatpush.msra.mxu0 %v489
        %507 = vmatpush.msra.mxu0 %v488
        %508 = vmatpush.msra.mxu0 %v487
        %509 = vmatpush.msra.mxu0 %v486
        %510 = vmatpush.msra.mxu0 %v485
        %511 = vmatpush.msra.mxu0 %v484
        %512 = vmatpush.msra.mxu0 %v483
        %513 = vmatpush.msra.mxu0 %v482
        %514 = vmatmul.f32.gmra.mxu0 %v384
        %v515 = vpop.f32.mrf.mxu0
        %v516 = vadd.f32 0.0, %v515
        %517 = vmatmul.f32.gmra.mxu0 %v385
        %v518 = vpop.f32.mrf.mxu0
        %v519 = vadd.f32 0.0, %v518
        %520 = vmatmul.f32.gmra.mxu0 %v386
        %v521 = vpop.f32.mrf.mxu0
        %v522 = vadd.f32 0.0, %v521
        %523 = vmatmul.f32.gmra.mxu0 %v387
        %v524 = vpop.f32.mrf.mxu0
        %v525 = vadd.f32 0.0, %v524
        %526 = vmatmul.f32.gmra.mxu0 %v388
        %v527 = vpop.f32.mrf.mxu0
        %v528 = vadd.f32 0.0, %v527
        %529 = vmatmul.f32.gmra.mxu0 %v389
        %v530 = vpop.f32.mrf.mxu0
        %v531 = vadd.f32 0.0, %v530
        %532 = vmatmul.f32.gmra.mxu0 %v390
        %v533 = vpop.f32.mrf.mxu0
        %v534 = vadd.f32 0.0, %v533
        %535 = vmatmul.f32.gmra.mxu0 %v391
        %v536 = vpop.f32.mrf.mxu0
        %v537 = vadd.f32 0.0, %v536
        %538 = vmatmul.f32.gmra.mxu0 %v392
        %v539 = vpop.f32.mrf.mxu0
        %v540 = vadd.f32 0.0, %v539
        %541 = vmatmul.f32.gmra.mxu0 %v393
        %v542 = vpop.f32.mrf.mxu0
        %v543 = vadd.f32 0.0, %v542
        %544 = vmatmul.f32.gmra.mxu0 %v394
        %v545 = vpop.f32.mrf.mxu0
        %v546 = vadd.f32 0.0, %v545
        %547 = vmatmul.f32.gmra.mxu0 %v395
        %v548 = vpop.f32.mrf.mxu0
        %v549 = vadd.f32 0.0, %v548
        %550 = vmatmul.f32.gmra.mxu0 %v396
        %v551 = vpop.f32.mrf.mxu0
        %v552 = vadd.f32 0.0, %v551
        %553 = vmatmul.f32.gmra.mxu0 %v397
        %v554 = vpop.f32.mrf.mxu0
        %v555 = vadd.f32 0.0, %v554
        %556 = vmatmul.f32.gmra.mxu0 %v398
        %v557 = vpop.f32.mrf.mxu0
        %v558 = vadd.f32 0.0, %v557
        %559 = vmatmul.f32.gmra.mxu0 %v399
        %v560 = vpop.f32.mrf.mxu0
        %v561 = vadd.f32 0.0, %v560
        %562 = vmatmul.f32.gmra.mxu0 %v400
        %v563 = vpop.f32.mrf.mxu0
        %v564 = vadd.f32 0.0, %v563
        %565 = vmatmul.f32.gmra.mxu0 %v401
        %v566 = vpop.f32.mrf.mxu0
        %v567 = vadd.f32 0.0, %v566
        %568 = vmatmul.f32.gmra.mxu0 %v402
        %v569 = vpop.f32.mrf.mxu0
        %v570 = vadd.f32 0.0, %v569
        %571 = vmatmul.f32.gmra.mxu0 %v403
        %v572 = vpop.f32.mrf.mxu0
        %v573 = vadd.f32 0.0, %v572
        %574 = vmatmul.f32.gmra.mxu0 %v404
        %v575 = vpop.f32.mrf.mxu0
        %v576 = vadd.f32 0.0, %v575
        %577 = vmatmul.f32.gmra.mxu0 %v405
        %v578 = vpop.f32.mrf.mxu0
        %v579 = vadd.f32 0.0, %v578
        %580 = vmatmul.f32.gmra.mxu0 %v406
        %v581 = vpop.f32.mrf.mxu0
        %v582 = vadd.f32 0.0, %v581
        %583 = vmatmul.f32.gmra.mxu0 %v407
        %v584 = vpop.f32.mrf.mxu0
        %v585 = vadd.f32 0.0, %v584
        %586 = vmatmul.f32.gmra.mxu0 %v408
        %v587 = vpop.f32.mrf.mxu0
        %v588 = vadd.f32 0.0, %v587
        %589 = vmatmul.f32.gmra.mxu0 %v409
        %v590 = vpop.f32.mrf.mxu0
        %v591 = vadd.f32 0.0, %v590
        %592 = vmatmul.f32.gmra.mxu0 %v410
        %v593 = vpop.f32.mrf.mxu0
        %v594 = vadd.f32 0.0, %v593
        %595 = vmatmul.f32.gmra.mxu0 %v411
        %v596 = vpop.f32.mrf.mxu0
        %v597 = vadd.f32 0.0, %v596
        %598 = vmatmul.f32.gmra.mxu0 %v412
        %v599 = vpop.f32.mrf.mxu0
        %v600 = vadd.f32 0.0, %v599
        %601 = vmatmul.f32.gmra.mxu0 %v413
        %v602 = vpop.f32.mrf.mxu0
        %v603 = vadd.f32 0.0, %v602
        %604 = vmatmul.f32.gmra.mxu0 %v414
        %v605 = vpop.f32.mrf.mxu0
        %v606 = vadd.f32 0.0, %v605
        %607 = vmatmul.f32.gmra.mxu0 %v415
        %v608 = vpop.f32.mrf.mxu0
        %v609 = vadd.f32 0.0, %v608
        %610 = vmatmul.f32.gmra.mxu0 %v416
        %v611 = vpop.f32.mrf.mxu0
        %v612 = vadd.f32 0.0, %v611
        %613 = vmatmul.f32.gmra.mxu0 %v417
        %v614 = vpop.f32.mrf.mxu0
        %v615 = vadd.f32 0.0, %v614
        %616 = vmatmul.f32.gmra.mxu0 %v418
        %v617 = vpop.f32.mrf.mxu0
        %v618 = vadd.f32 0.0, %v617
        %619 = vmatmul.f32.gmra.mxu0 %v419
        %v620 = vpop.f32.mrf.mxu0
        %v621 = vadd.f32 0.0, %v620
        %622 = vmatmul.f32.gmra.mxu0 %v420
        %v623 = vpop.f32.mrf.mxu0
        %v624 = vadd.f32 0.0, %v623
        %625 = vmatmul.f32.gmra.mxu0 %v421
        %v626 = vpop.f32.mrf.mxu0
        %v627 = vadd.f32 0.0, %v626
        %628 = vmatmul.f32.gmra.mxu0 %v422
        %v629 = vpop.f32.mrf.mxu0
        %v630 = vadd.f32 0.0, %v629
        %631 = vmatmul.f32.gmra.mxu0 %v423
        %v632 = vpop.f32.mrf.mxu0
        %v633 = vadd.f32 0.0, %v632
        %634 = vmatmul.f32.gmra.mxu0 %v424
        %v635 = vpop.f32.mrf.mxu0
        %v636 = vadd.f32 0.0, %v635
        %637 = vmatmul.f32.gmra.mxu0 %v425
        %v638 = vpop.f32.mrf.mxu0
        %v639 = vadd.f32 0.0, %v638
        %640 = vmatmul.f32.gmra.mxu0 %v426
        %v641 = vpop.f32.mrf.mxu0
        %v642 = vadd.f32 0.0, %v641
        %643 = vmatmul.f32.gmra.mxu0 %v427
        %v644 = vpop.f32.mrf.mxu0
        %v645 = vadd.f32 0.0, %v644
        %646 = vmatmul.f32.gmra.mxu0 %v428
        %v647 = vpop.f32.mrf.mxu0
        %v648 = vadd.f32 0.0, %v647
        %649 = vmatmul.f32.gmra.mxu0 %v429
        %v650 = vpop.f32.mrf.mxu0
        %v651 = vadd.f32 0.0, %v650
        %652 = vmatmul.f32.gmra.mxu0 %v430
        %v653 = vpop.f32.mrf.mxu0
        %v654 = vadd.f32 0.0, %v653
        %655 = vmatmul.f32.gmra.mxu0 %v431
        %v656 = vpop.f32.mrf.mxu0
        %v657 = vadd.f32 0.0, %v656
        %658 = vmatmul.f32.gmra.mxu0 %v432
        %v659 = vpop.f32.mrf.mxu0
        %v660 = vadd.f32 0.0, %v659
        %661 = vmatmul.f32.gmra.mxu0 %v433
        %v662 = vpop.f32.mrf.mxu0
        %v663 = vadd.f32 0.0, %v662
        %664 = vmatmul.f32.gmra.mxu0 %v434
        %v665 = vpop.f32.mrf.mxu0
        %v666 = vadd.f32 0.0, %v665
        %667 = vmatmul.f32.gmra.mxu0 %v435
        %v668 = vpop.f32.mrf.mxu0
        %v669 = vadd.f32 0.0, %v668
        %670 = vmatmul.f32.gmra.mxu0 %v436
        %v671 = vpop.f32.mrf.mxu0
        %v672 = vadd.f32 0.0, %v671
        %673 = vmatmul.f32.gmra.mxu0 %v437
        %v674 = vpop.f32.mrf.mxu0
        %v675 = vadd.f32 0.0, %v674
        %676 = vmatmul.f32.gmra.mxu0 %v438
        %v677 = vpop.f32.mrf.mxu0
        %v678 = vadd.f32 0.0, %v677
        %679 = vmatmul.f32.gmra.mxu0 %v439
        %v680 = vpop.f32.mrf.mxu0
        %v681 = vadd.f32 0.0, %v680
        %682 = vmatmul.f32.gmra.mxu0 %v440
        %v683 = vpop.f32.mrf.mxu0
        %v684 = vadd.f32 0.0, %v683
        %685 = vmatmul.f32.gmra.mxu0 %v441
        %v686 = vpop.f32.mrf.mxu0
        %v687 = vadd.f32 0.0, %v686
        %688 = vmatmul.f32.gmra.mxu0 %v442
        %v689 = vpop.f32.mrf.mxu0
        %v690 = vadd.f32 0.0, %v689
        %691 = vmatmul.f32.gmra.mxu0 %v443
        %v692 = vpop.f32.mrf.mxu0
        %v693 = vadd.f32 0.0, %v692
        %694 = vmatmul.f32.gmra.mxu0 %v444
        %v695 = vpop.f32.mrf.mxu0
        %v696 = vadd.f32 0.0, %v695
        %697 = vmatmul.f32.gmra.mxu0 %v445
        %v698 = vpop.f32.mrf.mxu0
        %v699 = vadd.f32 0.0, %v698
        %700 = vmatmul.f32.gmra.mxu0 %v446
        %v701 = vpop.f32.mrf.mxu0
        %v702 = vadd.f32 0.0, %v701
        %703 = vmatmul.f32.gmra.mxu0 %v447
        %v704 = vpop.f32.mrf.mxu0
        %v705 = vadd.f32 0.0, %v704
        %706 = vmatmul.f32.gmra.mxu0 %v448
        %v707 = vpop.f32.mrf.mxu0
        %v708 = vadd.f32 0.0, %v707
        %709 = vmatmul.f32.gmra.mxu0 %v449
        %v710 = vpop.f32.mrf.mxu0
        %v711 = vadd.f32 0.0, %v710
        %712 = vmatmul.f32.gmra.mxu0 %v450
        %v713 = vpop.f32.mrf.mxu0
        %v714 = vadd.f32 0.0, %v713
        %715 = vmatmul.f32.gmra.mxu0 %v451
        %v716 = vpop.f32.mrf.mxu0
        %v717 = vadd.f32 0.0, %v716
        %718 = vmatmul.f32.gmra.mxu0 %v452
        %v719 = vpop.f32.mrf.mxu0
        %v720 = vadd.f32 0.0, %v719
        %721 = vmatmul.f32.gmra.mxu0 %v453
        %v722 = vpop.f32.mrf.mxu0
        %v723 = vadd.f32 0.0, %v722
        %724 = vmatmul.f32.gmra.mxu0 %v454
        %v725 = vpop.f32.mrf.mxu0
        %v726 = vadd.f32 0.0, %v725
        %727 = vmatmul.f32.gmra.mxu0 %v455
        %v728 = vpop.f32.mrf.mxu0
        %v729 = vadd.f32 0.0, %v728
        %730 = vmatmul.f32.gmra.mxu0 %v456
        %v731 = vpop.f32.mrf.mxu0
        %v732 = vadd.f32 0.0, %v731
        %733 = vmatmul.f32.gmra.mxu0 %v457
        %v734 = vpop.f32.mrf.mxu0
        %v735 = vadd.f32 0.0, %v734
        %736 = vmatmul.f32.gmra.mxu0 %v458
        %v737 = vpop.f32.mrf.mxu0
        %v738 = vadd.f32 0.0, %v737
        %739 = vmatmul.f32.gmra.mxu0 %v459
        %v740 = vpop.f32.mrf.mxu0
        %v741 = vadd.f32 0.0, %v740
        %742 = vmatmul.f32.gmra.mxu0 %v460
        %v743 = vpop.f32.mrf.mxu0
        %v744 = vadd.f32 0.0, %v743
        %745 = vmatmul.f32.gmra.mxu0 %v461
        %v746 = vpop.f32.mrf.mxu0
        %v747 = vadd.f32 0.0, %v746
        %748 = vmatmul.f32.gmra.mxu0 %v462
        %v749 = vpop.f32.mrf.mxu0
        %v750 = vadd.f32 0.0, %v749
        %751 = vmatmul.f32.gmra.mxu0 %v463
        %v752 = vpop.f32.mrf.mxu0
        %v753 = vadd.f32 0.0, %v752
        %754 = vmatmul.f32.gmra.mxu0 %v464
        %v755 = vpop.f32.mrf.mxu0
        %v756 = vadd.f32 0.0, %v755
        %757 = vmatmul.f32.gmra.mxu0 %v465
        %v758 = vpop.f32.mrf.mxu0
        %v759 = vadd.f32 0.0, %v758
        %760 = vmatmul.f32.gmra.mxu0 %v466
        %v761 = vpop.f32.mrf.mxu0
        %v762 = vadd.f32 0.0, %v761
        %763 = vmatmul.f32.gmra.mxu0 %v467
        %v764 = vpop.f32.mrf.mxu0
        %v765 = vadd.f32 0.0, %v764
        %766 = vmatmul.f32.gmra.mxu0 %v468
        %v767 = vpop.f32.mrf.mxu0
        %v768 = vadd.f32 0.0, %v767
        %769 = vmatmul.f32.gmra.mxu0 %v469
        %v770 = vpop.f32.mrf.mxu0
        %v771 = vadd.f32 0.0, %v770
        %772 = vmatmul.f32.gmra.mxu0 %v470
        %v773 = vpop.f32.mrf.mxu0
        %v774 = vadd.f32 0.0, %v773
        %775 = vmatmul.f32.gmra.mxu0 %v471
        %v776 = vpop.f32.mrf.mxu0
        %v777 = vadd.f32 0.0, %v776
        %778 = vmatmul.f32.gmra.mxu0 %v472
        %v779 = vpop.f32.mrf.mxu0
        %v780 = vadd.f32 0.0, %v779
        %781 = vmatmul.f32.gmra.mxu0 %v473
        %v782 = vpop.f32.mrf.mxu0
        %v783 = vadd.f32 0.0, %v782
        %784 = vmatmul.f32.gmra.mxu0 %v474
        %v785 = vpop.f32.mrf.mxu0
        %v786 = vadd.f32 0.0, %v785
        %787 = vmatmul.f32.gmra.mxu0 %v475
        %v788 = vpop.f32.mrf.mxu0
        %v789 = vadd.f32 0.0, %v788
        %790 = vmatmul.f32.gmra.mxu0 %v476
        %v791 = vpop.f32.mrf.mxu0
        %v792 = vadd.f32 0.0, %v791
        %793 = vmatmul.f32.gmra.mxu0 %v477
        %v794 = vpop.f32.mrf.mxu0
        %v795 = vadd.f32 0.0, %v794
        %796 = vmatmul.f32.gmra.mxu0 %v478
        %v797 = vpop.f32.mrf.mxu0
        %v798 = vadd.f32 0.0, %v797
        %799 = vmatmul.f32.gmra.mxu0 %v479
        %v800 = vpop.f32.mrf.mxu0
        %v801 = vadd.f32 0.0, %v800
        %802 = vmatmul.f32.gmra.mxu0 %v480
        %v803 = vpop.f32.mrf.mxu0
        %v804 = vadd.f32 0.0, %v803
        %805 = vmatmul.f32.gmra.mxu0 %v481
        %v806 = vpop.f32.mrf.mxu0
        %v807 = vadd.f32 0.0, %v806
        %808 = vdwg.mxu0
        %vm809 = vcmask 64512
        %810 = vst.msk [vmem:[#allocation2] sm:$0xff] %vm809, %v516
        %811 = vst.msk [vmem:[#allocation2 + $0x8] sm:$0xff] %vm809, %v519
        %812 = vst.msk [vmem:[#allocation2 + $0x10] sm:$0xff] %vm809, %v522
        %813 = vst.msk [vmem:[#allocation2 + $0x18] sm:$0xff] %vm809, %v525
        %814 = vst.msk [vmem:[#allocation2 + $0x20] sm:$0xff] %vm809, %v528
        %815 = vst.msk [vmem:[#allocation2 + $0x28] sm:$0xff] %vm809, %v531
        %816 = vst.msk [vmem:[#allocation2 + $0x30] sm:$0xff] %vm809, %v534
        %817 = vst.msk [vmem:[#allocation2 + $0x38] sm:$0xff] %vm809, %v537
        %818 = vst.msk [vmem:[#allocation2 + $0x40] sm:$0xff] %vm809, %v540
        %819 = vst.msk [vmem:[#allocation2 + $0x48] sm:$0xff] %vm809, %v543
        %820 = vst.msk [vmem:[#allocation2 + $0x50] sm:$0xff] %vm809, %v546
        %821 = vst.msk [vmem:[#allocation2 + $0x58] sm:$0xff] %vm809, %v549
        %822 = vst.msk [vmem:[#allocation2 + $0x60] sm:$0xff] %vm809, %v552
        %823 = vst.msk [vmem:[#allocation2 + $0x68] sm:$0xff] %vm809, %v555
        %824 = vst.msk [vmem:[#allocation2 + $0x70] sm:$0xff] %vm809, %v558
        %825 = vst.msk [vmem:[#allocation2 + $0x78] sm:$0xff] %vm809, %v561
        %826 = vst.msk [vmem:[#allocation2 + $0x80] sm:$0xff] %vm809, %v564
        %827 = vst.msk [vmem:[#allocation2 + $0x88] sm:$0xff] %vm809, %v567
        %828 = vst.msk [vmem:[#allocation2 + $0x90] sm:$0xff] %vm809, %v570
        %829 = vst.msk [vmem:[#allocation2 + $0x98] sm:$0xff] %vm809, %v573
        %830 = vst.msk [vmem:[#allocation2 + $0xa0] sm:$0xff] %vm809, %v576
        %831 = vst.msk [vmem:[#allocation2 + $0xa8] sm:$0xff] %vm809, %v579
        %832 = vst.msk [vmem:[#allocation2 + $0xb0] sm:$0xff] %vm809, %v582
        %833 = vst.msk [vmem:[#allocation2 + $0xb8] sm:$0xff] %vm809, %v585
        %834 = vst.msk [vmem:[#allocation2 + $0xc0] sm:$0xff] %vm809, %v588
        %835 = vst.msk [vmem:[#allocation2 + $0xc8] sm:$0xff] %vm809, %v591
        %836 = vst.msk [vmem:[#allocation2 + $0xd0] sm:$0xff] %vm809, %v594
        %837 = vst.msk [vmem:[#allocation2 + $0xd8] sm:$0xff] %vm809, %v597
        %838 = vst.msk [vmem:[#allocation2 + $0xe0] sm:$0xff] %vm809, %v600
        %839 = vst.msk [vmem:[#allocation2 + $0xe8] sm:$0xff] %vm809, %v603
        %840 = vst.msk [vmem:[#allocation2 + $0xf0] sm:$0xff] %vm809, %v606
        %841 = vst.msk [vmem:[#allocation2 + $0xf8] sm:$0xff] %vm809, %v609
        %842 = vst.msk [vmem:[#allocation2 + $0x100] sm:$0xff] %vm809, %v612
        %843 = vst.msk [vmem:[#allocation2 + $0x108] sm:$0xff] %vm809, %v615
        %844 = vst.msk [vmem:[#allocation2 + $0x110] sm:$0xff] %vm809, %v618
        %845 = vst.msk [vmem:[#allocation2 + $0x118] sm:$0xff] %vm809, %v621
        %846 = vst.msk [vmem:[#allocation2 + $0x120] sm:$0xff] %vm809, %v624
        %847 = vst.msk [vmem:[#allocation2 + $0x128] sm:$0xff] %vm809, %v627
        %848 = vst.msk [vmem:[#allocation2 + $0x130] sm:$0xff] %vm809, %v630
        %849 = vst.msk [vmem:[#allocation2 + $0x138] sm:$0xff] %vm809, %v633
        %850 = vst.msk [vmem:[#allocation2 + $0x140] sm:$0xff] %vm809, %v636
        %851 = vst.msk [vmem:[#allocation2 + $0x148] sm:$0xff] %vm809, %v639
        %852 = vst.msk [vmem:[#allocation2 + $0x150] sm:$0xff] %vm809, %v642
        %853 = vst.msk [vmem:[#allocation2 + $0x158] sm:$0xff] %vm809, %v645
        %854 = vst.msk [vmem:[#allocation2 + $0x160] sm:$0xff] %vm809, %v648
        %855 = vst.msk [vmem:[#allocation2 + $0x168] sm:$0xff] %vm809, %v651
        %856 = vst.msk [vmem:[#allocation2 + $0x170] sm:$0xff] %vm809, %v654
        %857 = vst.msk [vmem:[#allocation2 + $0x178] sm:$0xff] %vm809, %v657
        %858 = vst.msk [vmem:[#allocation2 + $0x180] sm:$0xff] %vm809, %v660
        %859 = vst.msk [vmem:[#allocation2 + $0x188] sm:$0xff] %vm809, %v663
        %860 = vst.msk [vmem:[#allocation2 + $0x190] sm:$0xff] %vm809, %v666
        %861 = vst.msk [vmem:[#allocation2 + $0x198] sm:$0xff] %vm809, %v669
        %862 = vst.msk [vmem:[#allocation2 + $0x1a0] sm:$0xff] %vm809, %v672
        %863 = vst.msk [vmem:[#allocation2 + $0x1a8] sm:$0xff] %vm809, %v675
        %864 = vst.msk [vmem:[#allocation2 + $0x1b0] sm:$0xff] %vm809, %v678
        %865 = vst.msk [vmem:[#allocation2 + $0x1b8] sm:$0xff] %vm809, %v681
        %866 = vst.msk [vmem:[#allocation2 + $0x1c0] sm:$0xff] %vm809, %v684
        %867 = vst.msk [vmem:[#allocation2 + $0x1c8] sm:$0xff] %vm809, %v687
        %868 = vst.msk [vmem:[#allocation2 + $0x1d0] sm:$0xff] %vm809, %v690
        %869 = vst.msk [vmem:[#allocation2 + $0x1d8] sm:$0xff] %vm809, %v693
        %870 = vst.msk [vmem:[#allocation2 + $0x1e0] sm:$0xff] %vm809, %v696
        %871 = vst.msk [vmem:[#allocation2 + $0x1e8] sm:$0xff] %vm809, %v699
        %872 = vst.msk [vmem:[#allocation2 + $0x1f0] sm:$0xff] %vm809, %v702
        %873 = vst.msk [vmem:[#allocation2 + $0x1f8] sm:$0xff] %vm809, %v705
        %874 = vst.msk [vmem:[#allocation2 + $0x200] sm:$0xff] %vm809, %v708
        %875 = vst.msk [vmem:[#allocation2 + $0x208] sm:$0xff] %vm809, %v711
        %876 = vst.msk [vmem:[#allocation2 + $0x210] sm:$0xff] %vm809, %v714
        %877 = vst.msk [vmem:[#allocation2 + $0x218] sm:$0xff] %vm809, %v717
        %878 = vst.msk [vmem:[#allocation2 + $0x220] sm:$0xff] %vm809, %v720
        %879 = vst.msk [vmem:[#allocation2 + $0x228] sm:$0xff] %vm809, %v723
        %880 = vst.msk [vmem:[#allocation2 + $0x230] sm:$0xff] %vm809, %v726
        %881 = vst.msk [vmem:[#allocation2 + $0x238] sm:$0xff] %vm809, %v729
        %882 = vst.msk [vmem:[#allocation2 + $0x240] sm:$0xff] %vm809, %v732
        %883 = vst.msk [vmem:[#allocation2 + $0x248] sm:$0xff] %vm809, %v735
        %884 = vst.msk [vmem:[#allocation2 + $0x250] sm:$0xff] %vm809, %v738
        %885 = vst.msk [vmem:[#allocation2 + $0x258] sm:$0xff] %vm809, %v741
        %886 = vst.msk [vmem:[#allocation2 + $0x260] sm:$0xff] %vm809, %v744
        %887 = vst.msk [vmem:[#allocation2 + $0x268] sm:$0xff] %vm809, %v747
        %888 = vst.msk [vmem:[#allocation2 + $0x270] sm:$0xff] %vm809, %v750
        %889 = vst.msk [vmem:[#allocation2 + $0x278] sm:$0xff] %vm809, %v753
        %890 = vst.msk [vmem:[#allocation2 + $0x280] sm:$0xff] %vm809, %v756
        %891 = vst.msk [vmem:[#allocation2 + $0x288] sm:$0xff] %vm809, %v759
        %892 = vst.msk [vmem:[#allocation2 + $0x290] sm:$0xff] %vm809, %v762
        %893 = vst.msk [vmem:[#allocation2 + $0x298] sm:$0xff] %vm809, %v765
        %894 = vst.msk [vmem:[#allocation2 + $0x2a0] sm:$0xff] %vm809, %v768
        %895 = vst.msk [vmem:[#allocation2 + $0x2a8] sm:$0xff] %vm809, %v771
        %896 = vst.msk [vmem:[#allocation2 + $0x2b0] sm:$0xff] %vm809, %v774
        %897 = vst.msk [vmem:[#allocation2 + $0x2b8] sm:$0xff] %vm809, %v777
        %898 = vst.msk [vmem:[#allocation2 + $0x2c0] sm:$0xff] %vm809, %v780
        %899 = vst.msk [vmem:[#allocation2 + $0x2c8] sm:$0xff] %vm809, %v783
        %900 = vst.msk [vmem:[#allocation2 + $0x2d0] sm:$0xff] %vm809, %v786
        %901 = vst.msk [vmem:[#allocation2 + $0x2d8] sm:$0xff] %vm809, %v789
        %902 = vst.msk [vmem:[#allocation2 + $0x2e0] sm:$0xff] %vm809, %v792
        %903 = vst.msk [vmem:[#allocation2 + $0x2e8] sm:$0xff] %vm809, %v795
        %904 = vst.msk [vmem:[#allocation2 + $0x2f0] sm:$0xff] %vm809, %v798
        %905 = vst.msk [vmem:[#allocation2 + $0x2f8] sm:$0xff] %vm809, %v801
        %906 = vst.msk [vmem:[#allocation2 + $0x300] sm:$0xff] %vm809, %v804
        %907 = vst.msk [vmem:[#allocation2 + $0x308] sm:$0xff] %vm809, %v807
        %v908 = vld [vmem:[%s2] sm:$0x1]
        %909 = vst.msk [vmem:[#allocation3] sm:$0xff] %vm809, 0.0
        %910 = vst.msk [vmem:[#allocation3 + $0x8] sm:$0xff] %vm809, 0.0
        %911 = vst.msk [vmem:[#allocation3 + $0x10] sm:$0xff] %vm809, 0.0
        %912 = vst.msk [vmem:[#allocation3 + $0x18] sm:$0xff] %vm809, 0.0
        %913 = vst.msk [vmem:[#allocation3 + $0x20] sm:$0xff] %vm809, 0.0
        %914 = vst.msk [vmem:[#allocation3 + $0x28] sm:$0xff] %vm809, 0.0
        %915 = vst.msk [vmem:[#allocation3 + $0x30] sm:$0xff] %vm809, 0.0
        %916 = vst.msk [vmem:[#allocation3 + $0x38] sm:$0xff] %vm809, 0.0
        %917 = vst.msk [vmem:[#allocation3 + $0x40] sm:$0xff] %vm809, 0.0
        %918 = vst.msk [vmem:[#allocation3 + $0x48] sm:$0xff] %vm809, 0.0
        %919 = vst.msk [vmem:[#allocation3 + $0x50] sm:$0xff] %vm809, 0.0
        %920 = vst.msk [vmem:[#allocation3 + $0x58] sm:$0xff] %vm809, 0.0
        %921 = vst.msk [vmem:[#allocation3 + $0x60] sm:$0xff] %vm809, 0.0
        %922 = vst.msk [vmem:[#allocation3 + $0x68] sm:$0xff] %vm809, 0.0
        %923 = vst.msk [vmem:[#allocation3 + $0x70] sm:$0xff] %vm809, 0.0
        %924 = vst.msk [vmem:[#allocation3 + $0x78] sm:$0xff] %vm809, 0.0
        %925 = vst.msk [vmem:[#allocation3 + $0x80] sm:$0xff] %vm809, 0.0
        %926 = vst.msk [vmem:[#allocation3 + $0x88] sm:$0xff] %vm809, 0.0
        %927 = vst.msk [vmem:[#allocation3 + $0x90] sm:$0xff] %vm809, 0.0
        %928 = vst.msk [vmem:[#allocation3 + $0x98] sm:$0xff] %vm809, 0.0
        %929 = vst.msk [vmem:[#allocation3 + $0xa0] sm:$0xff] %vm809, 0.0
        %930 = vst.msk [vmem:[#allocation3 + $0xa8] sm:$0xff] %vm809, 0.0
        %931 = vst.msk [vmem:[#allocation3 + $0xb0] sm:$0xff] %vm809, 0.0
        %932 = vst.msk [vmem:[#allocation3 + $0xb8] sm:$0xff] %vm809, 0.0
        %933 = vst.msk [vmem:[#allocation3 + $0xc0] sm:$0xff] %vm809, 0.0
        %934 = vst.msk [vmem:[#allocation3 + $0xc8] sm:$0xff] %vm809, 0.0
        %v935 = vld [vmem:[#allocation2] ss:$2 sm:$0xff]
        %s936 = scalar_lea.vmem [#allocation2], 16
        %v937 = vld [vmem:[%s936] ss:$2 sm:$0x3f]
        %s938 = scalar_lea.vmem [#allocation2], 1
        %v939 = vld [vmem:[%s938] ss:$2 sm:$0xff]
        %s940 = scalar_lea.vmem [#allocation2], 17
        %v941 = vld [vmem:[%s940] ss:$2 sm:$0x3f]
        %v942 = vmax.f32 %v935, %v939
        %v943 = vmax.f32 %v937, %v941
        %s944 = scalar_lea.vmem [#allocation2], 28
        %v945 = vld [vmem:[%s944] ss:$2 sm:$0xff]
        %s946 = scalar_lea.vmem [#allocation2], 44
        %v947 = vld [vmem:[%s946] ss:$2 sm:$0x3f]
        %s948 = scalar_lea.vmem [#allocation2], 29
        %v949 = vld [vmem:[%s948] ss:$2 sm:$0xff]
        %s950 = scalar_lea.vmem [#allocation2], 45
        %v951 = vld [vmem:[%s950] ss:$2 sm:$0x3f]
        %v952 = vmax.f32 %v945, %v949
        %v953 = vmax.f32 %v947, %v951
        %v954 = vmax.f32 %v942, %v952
        %v955 = vmax.f32 %v943, %v953
        %v957 = vperm.slane %v908, 0
        %v959 = vadd.f32 %v954, %v957
        %v960 = vadd.f32 %v955, %v957
        %v961 = vmax.f32 %v959, 0.0
        %v962 = vmax.f32 %v960, 0.0
        %963 = vst.msk [vmem:[#allocation3] sm:$0xff] %vm809, %v961
        %vm964 = vcmask 62464
        %965 = vst.msk [vmem:[#allocation3 + $0x8] sm:$0x3f] %vm964, %v962
        %s966 = scalar_lea.vmem [#allocation2], 56
        %v967 = vld [vmem:[%s966] ss:$2 sm:$0xff]
        %s968 = scalar_lea.vmem [#allocation2], 72
        %v969 = vld [vmem:[%s968] ss:$2 sm:$0x3f]
        %s970 = scalar_lea.vmem [#allocation2], 57
        %v971 = vld [vmem:[%s970] ss:$2 sm:$0xff]
        %s972 = scalar_lea.vmem [#allocation2], 73
        %v973 = vld [vmem:[%s972] ss:$2 sm:$0x3f]
        %v974 = vmax.f32 %v967, %v971
        %v975 = vmax.f32 %v969, %v973
        %s976 = scalar_lea.vmem [#allocation2], 84
        %v977 = vld [vmem:[%s976] ss:$2 sm:$0xff]
        %s978 = scalar_lea.vmem [#allocation2], 100
        %v979 = vld [vmem:[%s978] ss:$2 sm:$0x3f]
        %s980 = scalar_lea.vmem [#allocation2], 85
        %v981 = vld [vmem:[%s980] ss:$2 sm:$0xff]
        %s982 = scalar_lea.vmem [#allocation2], 101
        %v983 = vld [vmem:[%s982] ss:$2 sm:$0x3f]
        %v984 = vmax.f32 %v977, %v981
        %v985 = vmax.f32 %v979, %v983
        %v986 = vmax.f32 %v974, %v984
        %v987 = vmax.f32 %v975, %v985
        %v988 = vadd.f32 %v986, %v957
        %v989 = vadd.f32 %v987, %v957
        %v990 = vmax.f32 %v988, 0.0
        %v991 = vmax.f32 %v989, 0.0
        %992 = vst.msk [vmem:[#allocation3 + $0xe] sm:$0xff] %vm809, %v990
        %993 = vst.msk [vmem:[#allocation3 + $0x16] sm:$0x3f] %vm964, %v991
        %s994 = scalar_lea.vmem [#allocation2], 112
        %v995 = vld [vmem:[%s994] ss:$2 sm:$0xff]
        %s996 = scalar_lea.vmem [#allocation2], 128
        %v997 = vld [vmem:[%s996] ss:$2 sm:$0x3f]
        %s998 = scalar_lea.vmem [#allocation2], 113
        %v999 = vld [vmem:[%s998] ss:$2 sm:$0xff]
        %s1000 = scalar_lea.vmem [#allocation2], 129
        %v1001 = vld [vmem:[%s1000] ss:$2 sm:$0x3f]
        %v1002 = vmax.f32 %v995, %v999
        %v1003 = vmax.f32 %v997, %v1001
        %s1004 = scalar_lea.vmem [#allocation2], 140
        %v1005 = vld [vmem:[%s1004] ss:$2 sm:$0xff]
        %s1006 = scalar_lea.vmem [#allocation2], 156
        %v1007 = vld [vmem:[%s1006] ss:$2 sm:$0x3f]
        %s1008 = scalar_lea.vmem [#allocation2], 141
        %v1009 = vld [vmem:[%s1008] ss:$2 sm:$0xff]
        %s1010 = scalar_lea.vmem [#allocation2], 157
        %v1011 = vld [vmem:[%s1010] ss:$2 sm:$0x3f]
        %v1012 = vmax.f32 %v1005, %v1009
        %v1013 = vmax.f32 %v1007, %v1011
        %v1014 = vmax.f32 %v1002, %v1012
        %v1015 = vmax.f32 %v1003, %v1013
        %v1016 = vadd.f32 %v1014, %v957
        %v1017 = vadd.f32 %v1015, %v957
        %v1018 = vmax.f32 %v1016, 0.0
        %v1019 = vmax.f32 %v1017, 0.0
        %1020 = vst.msk [vmem:[#allocation3 + $0x1c] sm:$0xff] %vm809, %v1018
        %1021 = vst.msk [vmem:[#allocation3 + $0x24] sm:$0x3f] %vm964, %v1019
        %s1022 = scalar_lea.vmem [#allocation2], 168
        %v1023 = vld [vmem:[%s1022] ss:$2 sm:$0xff]
        %s1024 = scalar_lea.vmem [#allocation2], 184
        %v1025 = vld [vmem:[%s1024] ss:$2 sm:$0x3f]
        %s1026 = scalar_lea.vmem [#allocation2], 169
        %v1027 = vld [vmem:[%s1026] ss:$2 sm:$0xff]
        %s1028 = scalar_lea.vmem [#allocation2], 185
        %v1029 = vld [vmem:[%s1028] ss:$2 sm:$0x3f]
        %v1030 = vmax.f32 %v1023, %v1027
        %v1031 = vmax.f32 %v1025, %v1029
        %s1032 = scalar_lea.vmem [#allocation2], 196
        %v1033 = vld [vmem:[%s1032] ss:$2 sm:$0xff]
        %s1034 = scalar_lea.vmem [#allocation2], 212
        %v1035 = vld [vmem:[%s1034] ss:$2 sm:$0x3f]
        %s1036 = scalar_lea.vmem [#allocation2], 197
        %v1037 = vld [vmem:[%s1036] ss:$2 sm:$0xff]
        %s1038 = scalar_lea.vmem [#allocation2], 213
        %v1039 = vld [vmem:[%s1038] ss:$2 sm:$0x3f]
        %v1040 = vmax.f32 %v1033, %v1037
        %v1041 = vmax.f32 %v1035, %v1039
        %v1042 = vmax.f32 %v1030, %v1040
        %v1043 = vmax.f32 %v1031, %v1041
        %v1044 = vadd.f32 %v1042, %v957
        %v1045 = vadd.f32 %v1043, %v957
        %v1046 = vmax.f32 %v1044, 0.0
        %v1047 = vmax.f32 %v1045, 0.0
        %1048 = vst.msk [vmem:[#allocation3 + $0x2a] sm:$0xff] %vm809, %v1046
        %1049 = vst.msk [vmem:[#allocation3 + $0x32] sm:$0x3f] %vm964, %v1047
        %s1050 = scalar_lea.vmem [#allocation2], 224
        %v1051 = vld [vmem:[%s1050] ss:$2 sm:$0xff]
        %s1052 = scalar_lea.vmem [#allocation2], 240
        %v1053 = vld [vmem:[%s1052] ss:$2 sm:$0x3f]
        %s1054 = scalar_lea.vmem [#allocation2], 225
        %v1055 = vld [vmem:[%s1054] ss:$2 sm:$0xff]
        %s1056 = scalar_lea.vmem [#allocation2], 241
        %v1057 = vld [vmem:[%s1056] ss:$2 sm:$0x3f]
        %v1058 = vmax.f32 %v1051, %v1055
        %v1059 = vmax.f32 %v1053, %v1057
        %s1060 = scalar_lea.vmem [#allocation2], 252
        %v1061 = vld [vmem:[%s1060] ss:$2 sm:$0xff]
        %s1062 = scalar_lea.vmem [#allocation2], 268
        %v1063 = vld [vmem:[%s1062] ss:$2 sm:$0x3f]
        %s1064 = scalar_lea.vmem [#allocation2], 253
        %v1065 = vld [vmem:[%s1064] ss:$2 sm:$0xff]
        %s1066 = scalar_lea.vmem [#allocation2], 269
        %v1067 = vld [vmem:[%s1066] ss:$2 sm:$0x3f]
        %v1068 = vmax.f32 %v1061, %v1065
        %v1069 = vmax.f32 %v1063, %v1067
        %v1070 = vmax.f32 %v1058, %v1068
        %v1071 = vmax.f32 %v1059, %v1069
        %v1072 = vadd.f32 %v1070, %v957
        %v1073 = vadd.f32 %v1071, %v957
        %v1074 = vmax.f32 %v1072, 0.0
        %v1075 = vmax.f32 %v1073, 0.0
        %1076 = vst.msk [vmem:[#allocation3 + $0x38] sm:$0xff] %vm809, %v1074
        %1077 = vst.msk [vmem:[#allocation3 + $0x40] sm:$0x3f] %vm964, %v1075
        %s1078 = scalar_lea.vmem [#allocation2], 280
        %v1079 = vld [vmem:[%s1078] ss:$2 sm:$0xff]
        %s1080 = scalar_lea.vmem [#allocation2], 296
        %v1081 = vld [vmem:[%s1080] ss:$2 sm:$0x3f]
        %s1082 = scalar_lea.vmem [#allocation2], 281
        %v1083 = vld [vmem:[%s1082] ss:$2 sm:$0xff]
        %s1084 = scalar_lea.vmem [#allocation2], 297
        %v1085 = vld [vmem:[%s1084] ss:$2 sm:$0x3f]
        %v1086 = vmax.f32 %v1079, %v1083
        %v1087 = vmax.f32 %v1081, %v1085
        %s1088 = scalar_lea.vmem [#allocation2], 308
        %v1089 = vld [vmem:[%s1088] ss:$2 sm:$0xff]
        %s1090 = scalar_lea.vmem [#allocation2], 324
        %v1091 = vld [vmem:[%s1090] ss:$2 sm:$0x3f]
        %s1092 = scalar_lea.vmem [#allocation2], 309
        %v1093 = vld [vmem:[%s1092] ss:$2 sm:$0xff]
        %s1094 = scalar_lea.vmem [#allocation2], 325
        %v1095 = vld [vmem:[%s1094] ss:$2 sm:$0x3f]
        %v1096 = vmax.f32 %v1089, %v1093
        %v1097 = vmax.f32 %v1091, %v1095
        %v1098 = vmax.f32 %v1086, %v1096
        %v1099 = vmax.f32 %v1087, %v1097
        %v1100 = vadd.f32 %v1098, %v957
        %v1101 = vadd.f32 %v1099, %v957
        %v1102 = vmax.f32 %v1100, 0.0
        %v1103 = vmax.f32 %v1101, 0.0
        %1104 = vst.msk [vmem:[#allocation3 + $0x46] sm:$0xff] %vm809, %v1102
        %1105 = vst.msk [vmem:[#allocation3 + $0x4e] sm:$0x3f] %vm964, %v1103
        %s1106 = scalar_lea.vmem [#allocation2], 336
        %v1107 = vld [vmem:[%s1106] ss:$2 sm:$0xff]
        %s1108 = scalar_lea.vmem [#allocation2], 352
        %v1109 = vld [vmem:[%s1108] ss:$2 sm:$0x3f]
        %s1110 = scalar_lea.vmem [#allocation2], 337
        %v1111 = vld [vmem:[%s1110] ss:$2 sm:$0xff]
        %s1112 = scalar_lea.vmem [#allocation2], 353
        %v1113 = vld [vmem:[%s1112] ss:$2 sm:$0x3f]
        %v1114 = vmax.f32 %v1107, %v1111
        %v1115 = vmax.f32 %v1109, %v1113
        %s1116 = scalar_lea.vmem [#allocation2], 364
        %v1117 = vld [vmem:[%s1116] ss:$2 sm:$0xff]
        %s1118 = scalar_lea.vmem [#allocation2], 380
        %v1119 = vld [vmem:[%s1118] ss:$2 sm:$0x3f]
        %s1120 = scalar_lea.vmem [#allocation2], 365
        %v1121 = vld [vmem:[%s1120] ss:$2 sm:$0xff]
        %s1122 = scalar_lea.vmem [#allocation2], 381
        %v1123 = vld [vmem:[%s1122] ss:$2 sm:$0x3f]
        %v1124 = vmax.f32 %v1117, %v1121
        %v1125 = vmax.f32 %v1119, %v1123
        %v1126 = vmax.f32 %v1114, %v1124
        %v1127 = vmax.f32 %v1115, %v1125
        %v1128 = vadd.f32 %v1126, %v957
        %v1129 = vadd.f32 %v1127, %v957
        %v1130 = vmax.f32 %v1128, 0.0
        %v1131 = vmax.f32 %v1129, 0.0
        %1132 = vst.msk [vmem:[#allocation3 + $0x54] sm:$0xff] %vm809, %v1130
        %1133 = vst.msk [vmem:[#allocation3 + $0x5c] sm:$0x3f] %vm964, %v1131
        %s1134 = scalar_lea.vmem [#allocation2], 392
        %v1135 = vld [vmem:[%s1134] ss:$2 sm:$0xff]
        %s1136 = scalar_lea.vmem [#allocation2], 408
        %v1137 = vld [vmem:[%s1136] ss:$2 sm:$0x3f]
        %s1138 = scalar_lea.vmem [#allocation2], 393
        %v1139 = vld [vmem:[%s1138] ss:$2 sm:$0xff]
        %s1140 = scalar_lea.vmem [#allocation2], 409
        %v1141 = vld [vmem:[%s1140] ss:$2 sm:$0x3f]
        %v1142 = vmax.f32 %v1135, %v1139
        %v1143 = vmax.f32 %v1137, %v1141
        %s1144 = scalar_lea.vmem [#allocation2], 420
        %v1145 = vld [vmem:[%s1144] ss:$2 sm:$0xff]
        %s1146 = scalar_lea.vmem [#allocation2], 436
        %v1147 = vld [vmem:[%s1146] ss:$2 sm:$0x3f]
        %s1148 = scalar_lea.vmem [#allocation2], 421
        %v1149 = vld [vmem:[%s1148] ss:$2 sm:$0xff]
        %s1150 = scalar_lea.vmem [#allocation2], 437
        %v1151 = vld [vmem:[%s1150] ss:$2 sm:$0x3f]
        %v1152 = vmax.f32 %v1145, %v1149
        %v1153 = vmax.f32 %v1147, %v1151
        %v1154 = vmax.f32 %v1142, %v1152
        %v1155 = vmax.f32 %v1143, %v1153
        %v1156 = vadd.f32 %v1154, %v957
        %v1157 = vadd.f32 %v1155, %v957
        %v1158 = vmax.f32 %v1156, 0.0
        %v1159 = vmax.f32 %v1157, 0.0
        %1160 = vst.msk [vmem:[#allocation3 + $0x62] sm:$0xff] %vm809, %v1158
        %1161 = vst.msk [vmem:[#allocation3 + $0x6a] sm:$0x3f] %vm964, %v1159
        %s1162 = scalar_lea.vmem [#allocation2], 448
        %v1163 = vld [vmem:[%s1162] ss:$2 sm:$0xff]
        %s1164 = scalar_lea.vmem [#allocation2], 464
        %v1165 = vld [vmem:[%s1164] ss:$2 sm:$0x3f]
        %s1166 = scalar_lea.vmem [#allocation2], 449
        %v1167 = vld [vmem:[%s1166] ss:$2 sm:$0xff]
        %s1168 = scalar_lea.vmem [#allocation2], 465
        %v1169 = vld [vmem:[%s1168] ss:$2 sm:$0x3f]
        %v1170 = vmax.f32 %v1163, %v1167
        %v1171 = vmax.f32 %v1165, %v1169
        %s1172 = scalar_lea.vmem [#allocation2], 476
        %v1173 = vld [vmem:[%s1172] ss:$2 sm:$0xff]
        %s1174 = scalar_lea.vmem [#allocation2], 492
        %v1175 = vld [vmem:[%s1174] ss:$2 sm:$0x3f]
        %s1176 = scalar_lea.vmem [#allocation2], 477
        %v1177 = vld [vmem:[%s1176] ss:$2 sm:$0xff]
        %s1178 = scalar_lea.vmem [#allocation2], 493
        %v1179 = vld [vmem:[%s1178] ss:$2 sm:$0x3f]
        %v1180 = vmax.f32 %v1173, %v1177
        %v1181 = vmax.f32 %v1175, %v1179
        %v1182 = vmax.f32 %v1170, %v1180
        %v1183 = vmax.f32 %v1171, %v1181
        %v1184 = vadd.f32 %v1182, %v957
        %v1185 = vadd.f32 %v1183, %v957
        %v1186 = vmax.f32 %v1184, 0.0
        %v1187 = vmax.f32 %v1185, 0.0
        %1188 = vst.msk [vmem:[#allocation3 + $0x70] sm:$0xff] %vm809, %v1186
        %1189 = vst.msk [vmem:[#allocation3 + $0x78] sm:$0x3f] %vm964, %v1187
        %s1190 = scalar_lea.vmem [#allocation2], 504
        %v1191 = vld [vmem:[%s1190] ss:$2 sm:$0xff]
        %s1192 = scalar_lea.vmem [#allocation2], 520
        %v1193 = vld [vmem:[%s1192] ss:$2 sm:$0x3f]
        %s1194 = scalar_lea.vmem [#allocation2], 505
        %v1195 = vld [vmem:[%s1194] ss:$2 sm:$0xff]
        %s1196 = scalar_lea.vmem [#allocation2], 521
        %v1197 = vld [vmem:[%s1196] ss:$2 sm:$0x3f]
        %v1198 = vmax.f32 %v1191, %v1195
        %v1199 = vmax.f32 %v1193, %v1197
        %s1200 = scalar_lea.vmem [#allocation2], 532
        %v1201 = vld [vmem:[%s1200] ss:$2 sm:$0xff]
        %s1202 = scalar_lea.vmem [#allocation2], 548
        %v1203 = vld [vmem:[%s1202] ss:$2 sm:$0x3f]
        %s1204 = scalar_lea.vmem [#allocation2], 533
        %v1205 = vld [vmem:[%s1204] ss:$2 sm:$0xff]
        %s1206 = scalar_lea.vmem [#allocation2], 549
        %v1207 = vld [vmem:[%s1206] ss:$2 sm:$0x3f]
        %v1208 = vmax.f32 %v1201, %v1205
        %v1209 = vmax.f32 %v1203, %v1207
        %v1210 = vmax.f32 %v1198, %v1208
        %v1211 = vmax.f32 %v1199, %v1209
        %v1212 = vadd.f32 %v1210, %v957
        %v1213 = vadd.f32 %v1211, %v957
        %v1214 = vmax.f32 %v1212, 0.0
        %v1215 = vmax.f32 %v1213, 0.0
        %1216 = vst.msk [vmem:[#allocation3 + $0x7e] sm:$0xff] %vm809, %v1214
        %1217 = vst.msk [vmem:[#allocation3 + $0x86] sm:$0x3f] %vm964, %v1215
        %s1218 = scalar_lea.vmem [#allocation2], 560
        %v1219 = vld [vmem:[%s1218] ss:$2 sm:$0xff]
        %s1220 = scalar_lea.vmem [#allocation2], 576
        %v1221 = vld [vmem:[%s1220] ss:$2 sm:$0x3f]
        %s1222 = scalar_lea.vmem [#allocation2], 561
        %v1223 = vld [vmem:[%s1222] ss:$2 sm:$0xff]
        %s1224 = scalar_lea.vmem [#allocation2], 577
        %v1225 = vld [vmem:[%s1224] ss:$2 sm:$0x3f]
        %v1226 = vmax.f32 %v1219, %v1223
        %v1227 = vmax.f32 %v1221, %v1225
        %s1228 = scalar_lea.vmem [#allocation2], 588
        %v1229 = vld [vmem:[%s1228] ss:$2 sm:$0xff]
        %s1230 = scalar_lea.vmem [#allocation2], 604
        %v1231 = vld [vmem:[%s1230] ss:$2 sm:$0x3f]
        %s1232 = scalar_lea.vmem [#allocation2], 589
        %v1233 = vld [vmem:[%s1232] ss:$2 sm:$0xff]
        %s1234 = scalar_lea.vmem [#allocation2], 605
        %v1235 = vld [vmem:[%s1234] ss:$2 sm:$0x3f]
        %v1236 = vmax.f32 %v1229, %v1233
        %v1237 = vmax.f32 %v1231, %v1235
        %v1238 = vmax.f32 %v1226, %v1236
        %v1239 = vmax.f32 %v1227, %v1237
        %v1240 = vadd.f32 %v1238, %v957
        %v1241 = vadd.f32 %v1239, %v957
        %v1242 = vmax.f32 %v1240, 0.0
        %v1243 = vmax.f32 %v1241, 0.0
        %1244 = vst.msk [vmem:[#allocation3 + $0x8c] sm:$0xff] %vm809, %v1242
        %1245 = vst.msk [vmem:[#allocation3 + $0x94] sm:$0x3f] %vm964, %v1243
        %s1246 = scalar_lea.vmem [#allocation2], 616
        %v1247 = vld [vmem:[%s1246] ss:$2 sm:$0xff]
        %s1248 = scalar_lea.vmem [#allocation2], 632
        %v1249 = vld [vmem:[%s1248] ss:$2 sm:$0x3f]
        %s1250 = scalar_lea.vmem [#allocation2], 617
        %v1251 = vld [vmem:[%s1250] ss:$2 sm:$0xff]
        %s1252 = scalar_lea.vmem [#allocation2], 633
        %v1253 = vld [vmem:[%s1252] ss:$2 sm:$0x3f]
        %v1254 = vmax.f32 %v1247, %v1251
        %v1255 = vmax.f32 %v1249, %v1253
        %s1256 = scalar_lea.vmem [#allocation2], 644
        %v1257 = vld [vmem:[%s1256] ss:$2 sm:$0xff]
        %s1258 = scalar_lea.vmem [#allocation2], 660
        %v1259 = vld [vmem:[%s1258] ss:$2 sm:$0x3f]
        %s1260 = scalar_lea.vmem [#allocation2], 645
        %v1261 = vld [vmem:[%s1260] ss:$2 sm:$0xff]
        %s1262 = scalar_lea.vmem [#allocation2], 661
        %v1263 = vld [vmem:[%s1262] ss:$2 sm:$0x3f]
        %v1264 = vmax.f32 %v1257, %v1261
        %v1265 = vmax.f32 %v1259, %v1263
        %v1266 = vmax.f32 %v1254, %v1264
        %v1267 = vmax.f32 %v1255, %v1265
        %v1268 = vadd.f32 %v1266, %v957
        %v1269 = vadd.f32 %v1267, %v957
        %v1270 = vmax.f32 %v1268, 0.0
        %v1271 = vmax.f32 %v1269, 0.0
        %1272 = vst.msk [vmem:[#allocation3 + $0x9a] sm:$0xff] %vm809, %v1270
        %1273 = vst.msk [vmem:[#allocation3 + $0xa2] sm:$0x3f] %vm964, %v1271
        %s1274 = scalar_lea.vmem [#allocation2], 672
        %v1275 = vld [vmem:[%s1274] ss:$2 sm:$0xff]
        %s1276 = scalar_lea.vmem [#allocation2], 688
        %v1277 = vld [vmem:[%s1276] ss:$2 sm:$0x3f]
        %s1278 = scalar_lea.vmem [#allocation2], 673
        %v1279 = vld [vmem:[%s1278] ss:$2 sm:$0xff]
        %s1280 = scalar_lea.vmem [#allocation2], 689
        %v1281 = vld [vmem:[%s1280] ss:$2 sm:$0x3f]
        %v1282 = vmax.f32 %v1275, %v1279
        %v1283 = vmax.f32 %v1277, %v1281
        %s1284 = scalar_lea.vmem [#allocation2], 700
        %v1285 = vld [vmem:[%s1284] ss:$2 sm:$0xff]
        %s1286 = scalar_lea.vmem [#allocation2], 716
        %v1287 = vld [vmem:[%s1286] ss:$2 sm:$0x3f]
        %s1288 = scalar_lea.vmem [#allocation2], 701
        %v1289 = vld [vmem:[%s1288] ss:$2 sm:$0xff]
        %s1290 = scalar_lea.vmem [#allocation2], 717
        %v1291 = vld [vmem:[%s1290] ss:$2 sm:$0x3f]
        %v1292 = vmax.f32 %v1285, %v1289
        %v1293 = vmax.f32 %v1287, %v1291
        %v1294 = vmax.f32 %v1282, %v1292
        %v1295 = vmax.f32 %v1283, %v1293
        %v1296 = vadd.f32 %v1294, %v957
        %v1297 = vadd.f32 %v1295, %v957
        %v1298 = vmax.f32 %v1296, 0.0
        %v1299 = vmax.f32 %v1297, 0.0
        %1300 = vst.msk [vmem:[#allocation3 + $0xa8] sm:$0xff] %vm809, %v1298
        %1301 = vst.msk [vmem:[#allocation3 + $0xb0] sm:$0x3f] %vm964, %v1299
        %s1302 = scalar_lea.vmem [#allocation2], 728
        %v1303 = vld [vmem:[%s1302] ss:$2 sm:$0xff]
        %s1304 = scalar_lea.vmem [#allocation2], 744
        %v1305 = vld [vmem:[%s1304] ss:$2 sm:$0x3f]
        %s1306 = scalar_lea.vmem [#allocation2], 729
        %v1307 = vld [vmem:[%s1306] ss:$2 sm:$0xff]
        %s1308 = scalar_lea.vmem [#allocation2], 745
        %v1309 = vld [vmem:[%s1308] ss:$2 sm:$0x3f]
        %v1310 = vmax.f32 %v1303, %v1307
        %v1311 = vmax.f32 %v1305, %v1309
        %s1312 = scalar_lea.vmem [#allocation2], 756
        %v1313 = vld [vmem:[%s1312] ss:$2 sm:$0xff]
        %s1314 = scalar_lea.vmem [#allocation2], 772
        %v1315 = vld [vmem:[%s1314] ss:$2 sm:$0x3f]
        %s1316 = scalar_lea.vmem [#allocation2], 757
        %v1317 = vld [vmem:[%s1316] ss:$2 sm:$0xff]
        %s1318 = scalar_lea.vmem [#allocation2], 773
        %v1319 = vld [vmem:[%s1318] ss:$2 sm:$0x3f]
        %v1320 = vmax.f32 %v1313, %v1317
        %v1321 = vmax.f32 %v1315, %v1319
        %v1322 = vmax.f32 %v1310, %v1320
        %v1323 = vmax.f32 %v1311, %v1321
        %v1324 = vadd.f32 %v1322, %v957
        %v1325 = vadd.f32 %v1323, %v957
        %v1326 = vmax.f32 %v1324, 0.0
        %v1327 = vmax.f32 %v1325, 0.0
        %1328 = vst.msk [vmem:[#allocation3 + $0xb6] sm:$0xff] %vm809, %v1326
        %1329 = vst.msk [vmem:[#allocation3 + $0xbe] sm:$0x3f] %vm964, %v1327
        %v1330 = vld [vmem:[#allocation3] sm:$0xff]
        %v1331 = vld [vmem:[#allocation3 + $0x8] sm:$0xff]
        %v1332 = vld [vmem:[#allocation3 + $0x10] sm:$0xff]
        %v1333 = vld [vmem:[#allocation3 + $0x18] sm:$0xff]
        %v1334 = vld [vmem:[#allocation3 + $0x20] sm:$0xff]
        %v1335 = vld [vmem:[#allocation3 + $0x28] sm:$0xff]
        %v1336 = vld [vmem:[#allocation3 + $0x30] sm:$0xff]
        %v1337 = vld [vmem:[#allocation3 + $0x38] sm:$0xff]
        %v1338 = vld [vmem:[#allocation3 + $0x40] sm:$0xff]
        %v1339 = vld [vmem:[#allocation3 + $0x48] sm:$0xff]
        %v1340 = vld [vmem:[#allocation3 + $0x50] sm:$0xff]
        %v1341 = vld [vmem:[#allocation3 + $0x58] sm:$0xff]
        %v1342 = vld [vmem:[#allocation3 + $0x60] sm:$0xff]
        %v1343 = vld [vmem:[#allocation3 + $0x68] sm:$0xff]
        %v1344 = vld [vmem:[#allocation3 + $0x70] sm:$0xff]
        %v1345 = vld [vmem:[#allocation3 + $0x78] sm:$0xff]
        %v1346 = vld [vmem:[#allocation3 + $0x80] sm:$0xff]
        %v1347 = vld [vmem:[#allocation3 + $0x88] sm:$0xff]
        %v1348 = vld [vmem:[%s3] sm:$0xff]
        %v1349 = vld [vmem:[#allocation3 + $0x1] sm:$0xff]
        %v1350 = vld [vmem:[#allocation3 + $0x9] sm:$0xff]
        %v1351 = vld [vmem:[#allocation3 + $0x11] sm:$0xff]
        %v1352 = vld [vmem:[#allocation3 + $0x19] sm:$0xff]
        %v1353 = vld [vmem:[#allocation3 + $0x21] sm:$0xff]
        %v1354 = vld [vmem:[#allocation3 + $0x29] sm:$0xff]
        %v1355 = vld [vmem:[#allocation3 + $0x31] sm:$0xff]
        %v1356 = vld [vmem:[#allocation3 + $0x39] sm:$0xff]
        %v1357 = vld [vmem:[#allocation3 + $0x41] sm:$0xff]
        %v1358 = vld [vmem:[#allocation3 + $0x49] sm:$0xff]
        %v1359 = vld [vmem:[#allocation3 + $0x51] sm:$0xff]
        %v1360 = vld [vmem:[#allocation3 + $0x59] sm:$0xff]
        %v1361 = vld [vmem:[#allocation3 + $0x61] sm:$0xff]
        %v1362 = vld [vmem:[#allocation3 + $0x69] sm:$0xff]
        %v1363 = vld [vmem:[#allocation3 + $0x71] sm:$0xff]
        %v1364 = vld [vmem:[#allocation3 + $0x79] sm:$0xff]
        %v1365 = vld [vmem:[#allocation3 + $0x81] sm:$0xff]
        %v1366 = vld [vmem:[#allocation3 + $0x89] sm:$0xff]
        %s1367 = scalar_lea.vmem %s3, 8
        %v1368 = vld [vmem:[%s1367] sm:$0xff]
        %v1370 = vsel %vm809, %v1349, 0
        %v1373 = vsel %vm809, %v1350, 0
        %v1376 = vsel %vm809, %v1351, 0
        %v1379 = vsel %vm809, %v1352, 0
        %v1382 = vsel %vm809, %v1353, 0
        %v1385 = vsel %vm809, %v1354, 0
        %v1388 = vsel %vm809, %v1355, 0
        %v1391 = vsel %vm809, %v1356, 0
        %v1394 = vsel %vm809, %v1357, 0
        %v1397 = vsel %vm809, %v1358, 0
        %v1400 = vsel %vm809, %v1359, 0
        %v1403 = vsel %vm809, %v1360, 0
        %v1406 = vsel %vm809, %v1361, 0
        %v1409 = vsel %vm809, %v1362, 0
        %v1412 = vsel %vm809, %v1363, 0
        %v1415 = vsel %vm809, %v1364, 0
        %v1418 = vsel %vm809, %v1365, 0
        %v1421 = vsel %vm809, %v1366, 0
        %1423 = vmatpush.msra.mxu0 0.0
        %1424 = vmatpush.msra.mxu0 0.0
        %1425 = vmatpush.msra.mxu0 0.0
        %1426 = vmatpush.msra.mxu0 0.0
        %1427 = vmatpush.msra.mxu0 0.0
        %1428 = vmatpush.msra.mxu0 0.0
        %1429 = vmatpush.msra.mxu0 0.0
        %1430 = vmatpush.msra.mxu0 0.0
        %1431 = vmatpush.msra.mxu0 0.0
        %1432 = vmatpush.msra.mxu0 0.0
        %1433 = vmatpush.msra.mxu0 0.0
        %1434 = vmatpush.msra.mxu0 0.0
        %1435 = vmatpush.msra.mxu0 0.0
        %1436 = vmatpush.msra.mxu0 0.0
        %1437 = vmatpush.msra.mxu0 0.0
        %1438 = vmatpush.msra.mxu0 %v1368
        %1439 = vmatmul.f32.gmra.mxu0 %v1370
        %v1440 = vpop.f32.mrf.mxu0
        %v1441 = vadd.f32 0.0, %v1440
        %1442 = vmatmul.f32.gmra.mxu0 %v1373
        %v1443 = vpop.f32.mrf.mxu0
        %v1444 = vadd.f32 0.0, %v1443
        %1445 = vmatmul.f32.gmra.mxu0 %v1376
        %v1446 = vpop.f32.mrf.mxu0
        %v1447 = vadd.f32 0.0, %v1446
        %1448 = vmatmul.f32.gmra.mxu0 %v1379
        %v1449 = vpop.f32.mrf.mxu0
        %v1450 = vadd.f32 0.0, %v1449
        %1451 = vmatmul.f32.gmra.mxu0 %v1382
        %v1452 = vpop.f32.mrf.mxu0
        %v1453 = vadd.f32 0.0, %v1452
        %1454 = vmatmul.f32.gmra.mxu0 %v1385
        %v1455 = vpop.f32.mrf.mxu0
        %v1456 = vadd.f32 0.0, %v1455
        %1457 = vmatmul.f32.gmra.mxu0 %v1388
        %v1458 = vpop.f32.mrf.mxu0
        %v1459 = vadd.f32 0.0, %v1458
        %1460 = vmatmul.f32.gmra.mxu0 %v1391
        %v1461 = vpop.f32.mrf.mxu0
        %v1462 = vadd.f32 0.0, %v1461
        %1463 = vmatmul.f32.gmra.mxu0 %v1394
        %v1464 = vpop.f32.mrf.mxu0
        %v1465 = vadd.f32 0.0, %v1464
        %1466 = vmatmul.f32.gmra.mxu0 %v1397
        %v1467 = vpop.f32.mrf.mxu0
        %v1468 = vadd.f32 0.0, %v1467
        %1469 = vmatmul.f32.gmra.mxu0 %v1400
        %v1470 = vpop.f32.mrf.mxu0
        %v1471 = vadd.f32 0.0, %v1470
        %1472 = vmatmul.f32.gmra.mxu0 %v1403
        %v1473 = vpop.f32.mrf.mxu0
        %v1474 = vadd.f32 0.0, %v1473
        %1475 = vmatmul.f32.gmra.mxu0 %v1406
        %v1476 = vpop.f32.mrf.mxu0
        %v1477 = vadd.f32 0.0, %v1476
        %1478 = vmatmul.f32.gmra.mxu0 %v1409
        %v1479 = vpop.f32.mrf.mxu0
        %v1480 = vadd.f32 0.0, %v1479
        %1481 = vmatmul.f32.gmra.mxu0 %v1412
        %v1482 = vpop.f32.mrf.mxu0
        %v1483 = vadd.f32 0.0, %v1482
        %1484 = vmatmul.f32.gmra.mxu0 %v1415
        %v1485 = vpop.f32.mrf.mxu0
        %v1486 = vadd.f32 0.0, %v1485
        %1487 = vmatmul.f32.gmra.mxu0 %v1418
        %v1488 = vpop.f32.mrf.mxu0
        %v1489 = vadd.f32 0.0, %v1488
        %1490 = vmatmul.f32.gmra.mxu0 %v1421
        %v1491 = vpop.f32.mrf.mxu0
        %v1492 = vadd.f32 0.0, %v1491
        %1493 = vdwg.mxu0
        %v1495 = vsel %vm809, %v1330, 0
        %v1498 = vsel %vm809, %v1331, 0
        %v1501 = vsel %vm809, %v1332, 0
        %v1504 = vsel %vm809, %v1333, 0
        %v1507 = vsel %vm809, %v1334, 0
        %v1510 = vsel %vm809, %v1335, 0
        %v1513 = vsel %vm809, %v1336, 0
        %v1516 = vsel %vm809, %v1337, 0
        %v1519 = vsel %vm809, %v1338, 0
        %v1522 = vsel %vm809, %v1339, 0
        %v1525 = vsel %vm809, %v1340, 0
        %v1528 = vsel %vm809, %v1341, 0
        %v1531 = vsel %vm809, %v1342, 0
        %v1534 = vsel %vm809, %v1343, 0
        %v1537 = vsel %vm809, %v1344, 0
        %v1540 = vsel %vm809, %v1345, 0
        %v1543 = vsel %vm809, %v1346, 0
        %v1546 = vsel %vm809, %v1347, 0
        %1548 = vmatpush.msra.mxu0 0.0
        %1549 = vmatpush.msra.mxu0 0.0
        %1550 = vmatpush.msra.mxu0 0.0
        %1551 = vmatpush.msra.mxu0 0.0
        %1552 = vmatpush.msra.mxu0 0.0
        %1553 = vmatpush.msra.mxu0 0.0
        %1554 = vmatpush.msra.mxu0 0.0
        %1555 = vmatpush.msra.mxu0 0.0
        %1556 = vmatpush.msra.mxu0 0.0
        %1557 = vmatpush.msra.mxu0 0.0
        %1558 = vmatpush.msra.mxu0 0.0
        %1559 = vmatpush.msra.mxu0 0.0
        %1560 = vmatpush.msra.mxu0 0.0
        %1561 = vmatpush.msra.mxu0 0.0
        %1562 = vmatpush.msra.mxu0 0.0
        %1563 = vmatpush.msra.mxu0 %v1348
        %1564 = vmatmul.f32.gmra.mxu0 %v1495
        %v1565 = vpop.f32.mrf.mxu0
        %v1566 = vadd.f32 %v1441, %v1565
        %1567 = vmatmul.f32.gmra.mxu0 %v1498
        %v1568 = vpop.f32.mrf.mxu0
        %v1569 = vadd.f32 %v1444, %v1568
        %1570 = vmatmul.f32.gmra.mxu0 %v1501
        %v1571 = vpop.f32.mrf.mxu0
        %v1572 = vadd.f32 %v1447, %v1571
        %1573 = vmatmul.f32.gmra.mxu0 %v1504
        %v1574 = vpop.f32.mrf.mxu0
        %v1575 = vadd.f32 %v1450, %v1574
        %1576 = vmatmul.f32.gmra.mxu0 %v1507
        %v1577 = vpop.f32.mrf.mxu0
        %v1578 = vadd.f32 %v1453, %v1577
        %1579 = vmatmul.f32.gmra.mxu0 %v1510
        %v1580 = vpop.f32.mrf.mxu0
        %v1581 = vadd.f32 %v1456, %v1580
        %1582 = vmatmul.f32.gmra.mxu0 %v1513
        %v1583 = vpop.f32.mrf.mxu0
        %v1584 = vadd.f32 %v1459, %v1583
        %1585 = vmatmul.f32.gmra.mxu0 %v1516
        %v1586 = vpop.f32.mrf.mxu0
        %v1587 = vadd.f32 %v1462, %v1586
        %1588 = vmatmul.f32.gmra.mxu0 %v1519
        %v1589 = vpop.f32.mrf.mxu0
        %v1590 = vadd.f32 %v1465, %v1589
        %1591 = vmatmul.f32.gmra.mxu0 %v1522
        %v1592 = vpop.f32.mrf.mxu0
        %v1593 = vadd.f32 %v1468, %v1592
        %1594 = vmatmul.f32.gmra.mxu0 %v1525
        %v1595 = vpop.f32.mrf.mxu0
        %v1596 = vadd.f32 %v1471, %v1595
        %1597 = vmatmul.f32.gmra.mxu0 %v1528
        %v1598 = vpop.f32.mrf.mxu0
        %v1599 = vadd.f32 %v1474, %v1598
        %1600 = vmatmul.f32.gmra.mxu0 %v1531
        %v1601 = vpop.f32.mrf.mxu0
        %v1602 = vadd.f32 %v1477, %v1601
        %1603 = vmatmul.f32.gmra.mxu0 %v1534
        %v1604 = vpop.f32.mrf.mxu0
        %v1605 = vadd.f32 %v1480, %v1604
        %1606 = vmatmul.f32.gmra.mxu0 %v1537
        %v1607 = vpop.f32.mrf.mxu0
        %v1608 = vadd.f32 %v1483, %v1607
        %1609 = vmatmul.f32.gmra.mxu0 %v1540
        %v1610 = vpop.f32.mrf.mxu0
        %v1611 = vadd.f32 %v1486, %v1610
        %1612 = vmatmul.f32.gmra.mxu0 %v1543
        %v1613 = vpop.f32.mrf.mxu0
        %v1614 = vadd.f32 %v1489, %v1613
        %1615 = vmatmul.f32.gmra.mxu0 %v1546
        %v1616 = vpop.f32.mrf.mxu0
        %v1617 = vadd.f32 %v1492, %v1616
        %1618 = vdwg.mxu0
        %v1619 = vld [vmem:[#allocation3 + $0x2] sm:$0xff]
        %v1620 = vld [vmem:[#allocation3 + $0xa] sm:$0xff]
        %v1621 = vld [vmem:[#allocation3 + $0x12] sm:$0xff]
        %v1622 = vld [vmem:[#allocation3 + $0x1a] sm:$0xff]
        %v1623 = vld [vmem:[#allocation3 + $0x22] sm:$0xff]
        %v1624 = vld [vmem:[#allocation3 + $0x2a] sm:$0xff]
        %v1625 = vld [vmem:[#allocation3 + $0x32] sm:$0xff]
        %v1626 = vld [vmem:[#allocation3 + $0x3a] sm:$0xff]
        %v1627 = vld [vmem:[#allocation3 + $0x42] sm:$0xff]
        %v1628 = vld [vmem:[#allocation3 + $0x4a] sm:$0xff]
        %v1629 = vld [vmem:[#allocation3 + $0x52] sm:$0xff]
        %v1630 = vld [vmem:[#allocation3 + $0x5a] sm:$0xff]
        %v1631 = vld [vmem:[#allocation3 + $0x62] sm:$0xff]
        %v1632 = vld [vmem:[#allocation3 + $0x6a] sm:$0xff]
        %v1633 = vld [vmem:[#allocation3 + $0x72] sm:$0xff]
        %v1634 = vld [vmem:[#allocation3 + $0x7a] sm:$0xff]
        %v1635 = vld [vmem:[#allocation3 + $0x82] sm:$0xff]
        %v1636 = vld [vmem:[#allocation3 + $0x8a] sm:$0xff]
        %s1637 = scalar_lea.vmem %s3, 16
        %v1638 = vld [vmem:[%s1637] sm:$0xff]
        %v1640 = vsel %vm809, %v1619, 0
        %v1643 = vsel %vm809, %v1620, 0
        %v1646 = vsel %vm809, %v1621, 0
        %v1649 = vsel %vm809, %v1622, 0
        %v1652 = vsel %vm809, %v1623, 0
        %v1655 = vsel %vm809, %v1624, 0
        %v1658 = vsel %vm809, %v1625, 0
        %v1661 = vsel %vm809, %v1626, 0
        %v1664 = vsel %vm809, %v1627, 0
        %v1667 = vsel %vm809, %v1628, 0
        %v1670 = vsel %vm809, %v1629, 0
        %v1673 = vsel %vm809, %v1630, 0
        %v1676 = vsel %vm809, %v1631, 0
        %v1679 = vsel %vm809, %v1632, 0
        %v1682 = vsel %vm809, %v1633, 0
        %v1685 = vsel %vm809, %v1634, 0
        %v1688 = vsel %vm809, %v1635, 0
        %v1691 = vsel %vm809, %v1636, 0
        %1693 = vmatpush.msra.mxu0 0.0
        %1694 = vmatpush.msra.mxu0 0.0
        %1695 = vmatpush.msra.mxu0 0.0
        %1696 = vmatpush.msra.mxu0 0.0
        %1697 = vmatpush.msra.mxu0 0.0
        %1698 = vmatpush.msra.mxu0 0.0
        %1699 = vmatpush.msra.mxu0 0.0
        %1700 = vmatpush.msra.mxu0 0.0
        %1701 = vmatpush.msra.mxu0 0.0
        %1702 = vmatpush.msra.mxu0 0.0
        %1703 = vmatpush.msra.mxu0 0.0
        %1704 = vmatpush.msra.mxu0 0.0
        %1705 = vmatpush.msra.mxu0 0.0
        %1706 = vmatpush.msra.mxu0 0.0
        %1707 = vmatpush.msra.mxu0 0.0
        %1708 = vmatpush.msra.mxu0 %v1638
        %1709 = vmatmul.f32.gmra.mxu0 %v1640
        %v1710 = vpop.f32.mrf.mxu0
        %v1711 = vadd.f32 0.0, %v1710
        %1712 = vmatmul.f32.gmra.mxu0 %v1643
        %v1713 = vpop.f32.mrf.mxu0
        %v1714 = vadd.f32 0.0, %v1713
        %1715 = vmatmul.f32.gmra.mxu0 %v1646
        %v1716 = vpop.f32.mrf.mxu0
        %v1717 = vadd.f32 0.0, %v1716
        %1718 = vmatmul.f32.gmra.mxu0 %v1649
        %v1719 = vpop.f32.mrf.mxu0
        %v1720 = vadd.f32 0.0, %v1719
        %1721 = vmatmul.f32.gmra.mxu0 %v1652
        %v1722 = vpop.f32.mrf.mxu0
        %v1723 = vadd.f32 0.0, %v1722
        %1724 = vmatmul.f32.gmra.mxu0 %v1655
        %v1725 = vpop.f32.mrf.mxu0
        %v1726 = vadd.f32 0.0, %v1725
        %1727 = vmatmul.f32.gmra.mxu0 %v1658
        %v1728 = vpop.f32.mrf.mxu0
        %v1729 = vadd.f32 0.0, %v1728
        %1730 = vmatmul.f32.gmra.mxu0 %v1661
        %v1731 = vpop.f32.mrf.mxu0
        %v1732 = vadd.f32 0.0, %v1731
        %1733 = vmatmul.f32.gmra.mxu0 %v1664
        %v1734 = vpop.f32.mrf.mxu0
        %v1735 = vadd.f32 0.0, %v1734
        %1736 = vmatmul.f32.gmra.mxu0 %v1667
        %v1737 = vpop.f32.mrf.mxu0
        %v1738 = vadd.f32 0.0, %v1737
        %1739 = vmatmul.f32.gmra.mxu0 %v1670
        %v1740 = vpop.f32.mrf.mxu0
        %v1741 = vadd.f32 0.0, %v1740
        %1742 = vmatmul.f32.gmra.mxu0 %v1673
        %v1743 = vpop.f32.mrf.mxu0
        %v1744 = vadd.f32 0.0, %v1743
        %1745 = vmatmul.f32.gmra.mxu0 %v1676
        %v1746 = vpop.f32.mrf.mxu0
        %v1747 = vadd.f32 0.0, %v1746
        %1748 = vmatmul.f32.gmra.mxu0 %v1679
        %v1749 = vpop.f32.mrf.mxu0
        %v1750 = vadd.f32 0.0, %v1749
        %1751 = vmatmul.f32.gmra.mxu0 %v1682
        %v1752 = vpop.f32.mrf.mxu0
        %v1753 = vadd.f32 0.0, %v1752
        %1754 = vmatmul.f32.gmra.mxu0 %v1685
        %v1755 = vpop.f32.mrf.mxu0
        %v1756 = vadd.f32 0.0, %v1755
        %1757 = vmatmul.f32.gmra.mxu0 %v1688
        %v1758 = vpop.f32.mrf.mxu0
        %v1759 = vadd.f32 0.0, %v1758
        %1760 = vmatmul.f32.gmra.mxu0 %v1691
        %v1761 = vpop.f32.mrf.mxu0
        %v1762 = vadd.f32 0.0, %v1761
        %1763 = vdwg.mxu0
        %v1764 = vadd.f32 %v1566, %v1711
        %v1765 = vadd.f32 %v1569, %v1714
        %v1766 = vadd.f32 %v1572, %v1717
        %v1767 = vadd.f32 %v1575, %v1720
        %v1768 = vadd.f32 %v1578, %v1723
        %v1769 = vadd.f32 %v1581, %v1726
        %v1770 = vadd.f32 %v1584, %v1729
        %v1771 = vadd.f32 %v1587, %v1732
        %v1772 = vadd.f32 %v1590, %v1735
        %v1773 = vadd.f32 %v1593, %v1738
        %v1774 = vadd.f32 %v1596, %v1741
        %v1775 = vadd.f32 %v1599, %v1744
        %v1776 = vadd.f32 %v1602, %v1747
        %v1777 = vadd.f32 %v1605, %v1750
        %v1778 = vadd.f32 %v1608, %v1753
        %v1779 = vadd.f32 %v1611, %v1756
        %v1780 = vadd.f32 %v1614, %v1759
        %v1781 = vadd.f32 %v1617, %v1762
        %v1782 = vld [vmem:[#allocation3 + $0x3] sm:$0xff]
        %v1783 = vld [vmem:[#allocation3 + $0xb] sm:$0xff]
        %v1784 = vld [vmem:[#allocation3 + $0x13] sm:$0xff]
        %v1785 = vld [vmem:[#allocation3 + $0x1b] sm:$0xff]
        %v1786 = vld [vmem:[#allocation3 + $0x23] sm:$0xff]
        %v1787 = vld [vmem:[#allocation3 + $0x2b] sm:$0xff]
        %v1788 = vld [vmem:[#allocation3 + $0x33] sm:$0xff]
        %v1789 = vld [vmem:[#allocation3 + $0x3b] sm:$0xff]
        %v1790 = vld [vmem:[#allocation3 + $0x43] sm:$0xff]
        %v1791 = vld [vmem:[#allocation3 + $0x4b] sm:$0xff]
        %v1792 = vld [vmem:[#allocation3 + $0x53] sm:$0xff]
        %v1793 = vld [vmem:[#allocation3 + $0x5b] sm:$0xff]
        %v1794 = vld [vmem:[#allocation3 + $0x63] sm:$0xff]
        %v1795 = vld [vmem:[#allocation3 + $0x6b] sm:$0xff]
        %v1796 = vld [vmem:[#allocation3 + $0x73] sm:$0xff]
        %v1797 = vld [vmem:[#allocation3 + $0x7b] sm:$0xff]
        %v1798 = vld [vmem:[#allocation3 + $0x83] sm:$0xff]
        %v1799 = vld [vmem:[#allocation3 + $0x8b] sm:$0xff]
        %s1800 = scalar_lea.vmem %s3, 24
        %v1801 = vld [vmem:[%s1800] sm:$0xff]
        %v1803 = vsel %vm809, %v1782, 0
        %v1806 = vsel %vm809, %v1783, 0
        %v1809 = vsel %vm809, %v1784, 0
        %v1812 = vsel %vm809, %v1785, 0
        %v1815 = vsel %vm809, %v1786, 0
        %v1818 = vsel %vm809, %v1787, 0
        %v1821 = vsel %vm809, %v1788, 0
        %v1824 = vsel %vm809, %v1789, 0
        %v1827 = vsel %vm809, %v1790, 0
        %v1830 = vsel %vm809, %v1791, 0
        %v1833 = vsel %vm809, %v1792, 0
        %v1836 = vsel %vm809, %v1793, 0
        %v1839 = vsel %vm809, %v1794, 0
        %v1842 = vsel %vm809, %v1795, 0
        %v1845 = vsel %vm809, %v1796, 0
        %v1848 = vsel %vm809, %v1797, 0
        %v1851 = vsel %vm809, %v1798, 0
        %v1854 = vsel %vm809, %v1799, 0
        %1856 = vmatpush.msra.mxu0 0.0
        %1857 = vmatpush.msra.mxu0 0.0
        %1858 = vmatpush.msra.mxu0 0.0
        %1859 = vmatpush.msra.mxu0 0.0
        %1860 = vmatpush.msra.mxu0 0.0
        %1861 = vmatpush.msra.mxu0 0.0
        %1862 = vmatpush.msra.mxu0 0.0
        %1863 = vmatpush.msra.mxu0 0.0
        %1864 = vmatpush.msra.mxu0 0.0
        %1865 = vmatpush.msra.mxu0 0.0
        %1866 = vmatpush.msra.mxu0 0.0
        %1867 = vmatpush.msra.mxu0 0.0
        %1868 = vmatpush.msra.mxu0 0.0
        %1869 = vmatpush.msra.mxu0 0.0
        %1870 = vmatpush.msra.mxu0 0.0
        %1871 = vmatpush.msra.mxu0 %v1801
        %1872 = vmatmul.f32.gmra.mxu0 %v1803
        %v1873 = vpop.f32.mrf.mxu0
        %v1874 = vadd.f32 0.0, %v1873
        %1875 = vmatmul.f32.gmra.mxu0 %v1806
        %v1876 = vpop.f32.mrf.mxu0
        %v1877 = vadd.f32 0.0, %v1876
        %1878 = vmatmul.f32.gmra.mxu0 %v1809
        %v1879 = vpop.f32.mrf.mxu0
        %v1880 = vadd.f32 0.0, %v1879
        %1881 = vmatmul.f32.gmra.mxu0 %v1812
        %v1882 = vpop.f32.mrf.mxu0
        %v1883 = vadd.f32 0.0, %v1882
        %1884 = vmatmul.f32.gmra.mxu0 %v1815
        %v1885 = vpop.f32.mrf.mxu0
        %v1886 = vadd.f32 0.0, %v1885
        %1887 = vmatmul.f32.gmra.mxu0 %v1818
        %v1888 = vpop.f32.mrf.mxu0
        %v1889 = vadd.f32 0.0, %v1888
        %1890 = vmatmul.f32.gmra.mxu0 %v1821
        %v1891 = vpop.f32.mrf.mxu0
        %v1892 = vadd.f32 0.0, %v1891
        %1893 = vmatmul.f32.gmra.mxu0 %v1824
        %v1894 = vpop.f32.mrf.mxu0
        %v1895 = vadd.f32 0.0, %v1894
        %1896 = vmatmul.f32.gmra.mxu0 %v1827
        %v1897 = vpop.f32.mrf.mxu0
        %v1898 = vadd.f32 0.0, %v1897
        %1899 = vmatmul.f32.gmra.mxu0 %v1830
        %v1900 = vpop.f32.mrf.mxu0
        %v1901 = vadd.f32 0.0, %v1900
        %1902 = vmatmul.f32.gmra.mxu0 %v1833
        %v1903 = vpop.f32.mrf.mxu0
        %v1904 = vadd.f32 0.0, %v1903
        %1905 = vmatmul.f32.gmra.mxu0 %v1836
        %v1906 = vpop.f32.mrf.mxu0
        %v1907 = vadd.f32 0.0, %v1906
        %1908 = vmatmul.f32.gmra.mxu0 %v1839
        %v1909 = vpop.f32.mrf.mxu0
        %v1910 = vadd.f32 0.0, %v1909
        %1911 = vmatmul.f32.gmra.mxu0 %v1842
        %v1912 = vpop.f32.mrf.mxu0
        %v1913 = vadd.f32 0.0, %v1912
        %1914 = vmatmul.f32.gmra.mxu0 %v1845
        %v1915 = vpop.f32.mrf.mxu0
        %v1916 = vadd.f32 0.0, %v1915
        %1917 = vmatmul.f32.gmra.mxu0 %v1848
        %v1918 = vpop.f32.mrf.mxu0
        %v1919 = vadd.f32 0.0, %v1918
        %1920 = vmatmul.f32.gmra.mxu0 %v1851
        %v1921 = vpop.f32.mrf.mxu0
        %v1922 = vadd.f32 0.0, %v1921
        %1923 = vmatmul.f32.gmra.mxu0 %v1854
        %v1924 = vpop.f32.mrf.mxu0
        %v1925 = vadd.f32 0.0, %v1924
        %1926 = vdwg.mxu0
        %v1927 = vadd.f32 %v1764, %v1874
        %v1928 = vadd.f32 %v1765, %v1877
        %v1929 = vadd.f32 %v1766, %v1880
        %v1930 = vadd.f32 %v1767, %v1883
        %v1931 = vadd.f32 %v1768, %v1886
        %v1932 = vadd.f32 %v1769, %v1889
        %v1933 = vadd.f32 %v1770, %v1892
        %v1934 = vadd.f32 %v1771, %v1895
        %v1935 = vadd.f32 %v1772, %v1898
        %v1936 = vadd.f32 %v1773, %v1901
        %v1937 = vadd.f32 %v1774, %v1904
        %v1938 = vadd.f32 %v1775, %v1907
        %v1939 = vadd.f32 %v1776, %v1910
        %v1940 = vadd.f32 %v1777, %v1913
        %v1941 = vadd.f32 %v1778, %v1916
        %v1942 = vadd.f32 %v1779, %v1919
        %v1943 = vadd.f32 %v1780, %v1922
        %v1944 = vadd.f32 %v1781, %v1925
        %v1945 = vld [vmem:[#allocation3 + $0x4] sm:$0xff]
        %v1946 = vld [vmem:[#allocation3 + $0xc] sm:$0xff]
        %v1947 = vld [vmem:[#allocation3 + $0x14] sm:$0xff]
        %v1948 = vld [vmem:[#allocation3 + $0x1c] sm:$0xff]
        %v1949 = vld [vmem:[#allocation3 + $0x24] sm:$0xff]
        %v1950 = vld [vmem:[#allocation3 + $0x2c] sm:$0xff]
        %v1951 = vld [vmem:[#allocation3 + $0x34] sm:$0xff]
        %v1952 = vld [vmem:[#allocation3 + $0x3c] sm:$0xff]
        %v1953 = vld [vmem:[#allocation3 + $0x44] sm:$0xff]
        %v1954 = vld [vmem:[#allocation3 + $0x4c] sm:$0xff]
        %v1955 = vld [vmem:[#allocation3 + $0x54] sm:$0xff]
        %v1956 = vld [vmem:[#allocation3 + $0x5c] sm:$0xff]
        %v1957 = vld [vmem:[#allocation3 + $0x64] sm:$0xff]
        %v1958 = vld [vmem:[#allocation3 + $0x6c] sm:$0xff]
        %v1959 = vld [vmem:[#allocation3 + $0x74] sm:$0xff]
        %v1960 = vld [vmem:[#allocation3 + $0x7c] sm:$0xff]
        %v1961 = vld [vmem:[#allocation3 + $0x84] sm:$0xff]
        %v1962 = vld [vmem:[#allocation3 + $0x8c] sm:$0xff]
        %s1963 = scalar_lea.vmem %s3, 32
        %v1964 = vld [vmem:[%s1963] sm:$0xff]
        %v1966 = vsel %vm809, %v1945, 0
        %v1969 = vsel %vm809, %v1946, 0
        %v1972 = vsel %vm809, %v1947, 0
        %v1975 = vsel %vm809, %v1948, 0
        %v1978 = vsel %vm809, %v1949, 0
        %v1981 = vsel %vm809, %v1950, 0
        %v1984 = vsel %vm809, %v1951, 0
        %v1987 = vsel %vm809, %v1952, 0
        %v1990 = vsel %vm809, %v1953, 0
        %v1993 = vsel %vm809, %v1954, 0
        %v1996 = vsel %vm809, %v1955, 0
        %v1999 = vsel %vm809, %v1956, 0
        %v2002 = vsel %vm809, %v1957, 0
        %v2005 = vsel %vm809, %v1958, 0
        %v2008 = vsel %vm809, %v1959, 0
        %v2011 = vsel %vm809, %v1960, 0
        %v2014 = vsel %vm809, %v1961, 0
        %v2017 = vsel %vm809, %v1962, 0
        %2019 = vmatpush.msra.mxu0 0.0
        %2020 = vmatpush.msra.mxu0 0.0
        %2021 = vmatpush.msra.mxu0 0.0
        %2022 = vmatpush.msra.mxu0 0.0
        %2023 = vmatpush.msra.mxu0 0.0
        %2024 = vmatpush.msra.mxu0 0.0
        %2025 = vmatpush.msra.mxu0 0.0
        %2026 = vmatpush.msra.mxu0 0.0
        %2027 = vmatpush.msra.mxu0 0.0
        %2028 = vmatpush.msra.mxu0 0.0
        %2029 = vmatpush.msra.mxu0 0.0
        %2030 = vmatpush.msra.mxu0 0.0
        %2031 = vmatpush.msra.mxu0 0.0
        %2032 = vmatpush.msra.mxu0 0.0
        %2033 = vmatpush.msra.mxu0 0.0
        %2034 = vmatpush.msra.mxu0 %v1964
        %2035 = vmatmul.f32.gmra.mxu0 %v1966
        %v2036 = vpop.f32.mrf.mxu0
        %v2037 = vadd.f32 0.0, %v2036
        %2038 = vmatmul.f32.gmra.mxu0 %v1969
        %v2039 = vpop.f32.mrf.mxu0
        %v2040 = vadd.f32 0.0, %v2039
        %2041 = vmatmul.f32.gmra.mxu0 %v1972
        %v2042 = vpop.f32.mrf.mxu0
        %v2043 = vadd.f32 0.0, %v2042
        %2044 = vmatmul.f32.gmra.mxu0 %v1975
        %v2045 = vpop.f32.mrf.mxu0
        %v2046 = vadd.f32 0.0, %v2045
        %2047 = vmatmul.f32.gmra.mxu0 %v1978
        %v2048 = vpop.f32.mrf.mxu0
        %v2049 = vadd.f32 0.0, %v2048
        %2050 = vmatmul.f32.gmra.mxu0 %v1981
        %v2051 = vpop.f32.mrf.mxu0
        %v2052 = vadd.f32 0.0, %v2051
        %2053 = vmatmul.f32.gmra.mxu0 %v1984
        %v2054 = vpop.f32.mrf.mxu0
        %v2055 = vadd.f32 0.0, %v2054
        %2056 = vmatmul.f32.gmra.mxu0 %v1987
        %v2057 = vpop.f32.mrf.mxu0
        %v2058 = vadd.f32 0.0, %v2057
        %2059 = vmatmul.f32.gmra.mxu0 %v1990
        %v2060 = vpop.f32.mrf.mxu0
        %v2061 = vadd.f32 0.0, %v2060
        %2062 = vmatmul.f32.gmra.mxu0 %v1993
        %v2063 = vpop.f32.mrf.mxu0
        %v2064 = vadd.f32 0.0, %v2063
        %2065 = vmatmul.f32.gmra.mxu0 %v1996
        %v2066 = vpop.f32.mrf.mxu0
        %v2067 = vadd.f32 0.0, %v2066
        %2068 = vmatmul.f32.gmra.mxu0 %v1999
        %v2069 = vpop.f32.mrf.mxu0
        %v2070 = vadd.f32 0.0, %v2069
        %2071 = vmatmul.f32.gmra.mxu0 %v2002
        %v2072 = vpop.f32.mrf.mxu0
        %v2073 = vadd.f32 0.0, %v2072
        %2074 = vmatmul.f32.gmra.mxu0 %v2005
        %v2075 = vpop.f32.mrf.mxu0
        %v2076 = vadd.f32 0.0, %v2075
        %2077 = vmatmul.f32.gmra.mxu0 %v2008
        %v2078 = vpop.f32.mrf.mxu0
        %v2079 = vadd.f32 0.0, %v2078
        %2080 = vmatmul.f32.gmra.mxu0 %v2011
        %v2081 = vpop.f32.mrf.mxu0
        %v2082 = vadd.f32 0.0, %v2081
        %2083 = vmatmul.f32.gmra.mxu0 %v2014
        %v2084 = vpop.f32.mrf.mxu0
        %v2085 = vadd.f32 0.0, %v2084
        %2086 = vmatmul.f32.gmra.mxu0 %v2017
        %v2087 = vpop.f32.mrf.mxu0
        %v2088 = vadd.f32 0.0, %v2087
        %2089 = vdwg.mxu0
        %v2090 = vadd.f32 %v1927, %v2037
        %v2091 = vadd.f32 %v1928, %v2040
        %v2092 = vadd.f32 %v1929, %v2043
        %v2093 = vadd.f32 %v1930, %v2046
        %v2094 = vadd.f32 %v1931, %v2049
        %v2095 = vadd.f32 %v1932, %v2052
        %v2096 = vadd.f32 %v1933, %v2055
        %v2097 = vadd.f32 %v1934, %v2058
        %v2098 = vadd.f32 %v1935, %v2061
        %v2099 = vadd.f32 %v1936, %v2064
        %v2100 = vadd.f32 %v1937, %v2067
        %v2101 = vadd.f32 %v1938, %v2070
        %v2102 = vadd.f32 %v1939, %v2073
        %v2103 = vadd.f32 %v1940, %v2076
        %v2104 = vadd.f32 %v1941, %v2079
        %v2105 = vadd.f32 %v1942, %v2082
        %v2106 = vadd.f32 %v1943, %v2085
        %v2107 = vadd.f32 %v1944, %v2088
        %v2108 = vld [vmem:[#allocation3 + $0xe] sm:$0xff]
        %v2109 = vld [vmem:[#allocation3 + $0x16] sm:$0xff]
        %v2110 = vld [vmem:[#allocation3 + $0x1e] sm:$0xff]
        %v2111 = vld [vmem:[#allocation3 + $0x26] sm:$0xff]
        %v2112 = vld [vmem:[#allocation3 + $0x2e] sm:$0xff]
        %v2113 = vld [vmem:[#allocation3 + $0x36] sm:$0xff]
        %v2114 = vld [vmem:[#allocation3 + $0x3e] sm:$0xff]
        %v2115 = vld [vmem:[#allocation3 + $0x46] sm:$0xff]
        %v2116 = vld [vmem:[#allocation3 + $0x4e] sm:$0xff]
        %v2117 = vld [vmem:[#allocation3 + $0x56] sm:$0xff]
        %v2118 = vld [vmem:[#allocation3 + $0x5e] sm:$0xff]
        %v2119 = vld [vmem:[#allocation3 + $0x66] sm:$0xff]
        %v2120 = vld [vmem:[#allocation3 + $0x6e] sm:$0xff]
        %v2121 = vld [vmem:[#allocation3 + $0x76] sm:$0xff]
        %v2122 = vld [vmem:[#allocation3 + $0x7e] sm:$0xff]
        %v2123 = vld [vmem:[#allocation3 + $0x86] sm:$0xff]
        %v2124 = vld [vmem:[#allocation3 + $0x8e] sm:$0xff]
        %v2125 = vld [vmem:[#allocation3 + $0x96] sm:$0xff]
        %s2126 = scalar_lea.vmem %s3, 40
        %v2127 = vld [vmem:[%s2126] sm:$0xff]
        %v2129 = vsel %vm809, %v2108, 0
        %v2132 = vsel %vm809, %v2109, 0
        %v2135 = vsel %vm809, %v2110, 0
        %v2138 = vsel %vm809, %v2111, 0
        %v2141 = vsel %vm809, %v2112, 0
        %v2144 = vsel %vm809, %v2113, 0
        %v2147 = vsel %vm809, %v2114, 0
        %v2150 = vsel %vm809, %v2115, 0
        %v2153 = vsel %vm809, %v2116, 0
        %v2156 = vsel %vm809, %v2117, 0
        %v2159 = vsel %vm809, %v2118, 0
        %v2162 = vsel %vm809, %v2119, 0
        %v2165 = vsel %vm809, %v2120, 0
        %v2168 = vsel %vm809, %v2121, 0
        %v2171 = vsel %vm809, %v2122, 0
        %v2174 = vsel %vm809, %v2123, 0
        %v2177 = vsel %vm809, %v2124, 0
        %v2180 = vsel %vm809, %v2125, 0
        %2182 = vmatpush.msra.mxu0 0.0
        %2183 = vmatpush.msra.mxu0 0.0
        %2184 = vmatpush.msra.mxu0 0.0
        %2185 = vmatpush.msra.mxu0 0.0
        %2186 = vmatpush.msra.mxu0 0.0
        %2187 = vmatpush.msra.mxu0 0.0
        %2188 = vmatpush.msra.mxu0 0.0
        %2189 = vmatpush.msra.mxu0 0.0
        %2190 = vmatpush.msra.mxu0 0.0
        %2191 = vmatpush.msra.mxu0 0.0
        %2192 = vmatpush.msra.mxu0 0.0
        %2193 = vmatpush.msra.mxu0 0.0
        %2194 = vmatpush.msra.mxu0 0.0
        %2195 = vmatpush.msra.mxu0 0.0
        %2196 = vmatpush.msra.mxu0 0.0
        %2197 = vmatpush.msra.mxu0 %v2127
        %2198 = vmatmul.f32.gmra.mxu0 %v2129
        %v2199 = vpop.f32.mrf.mxu0
        %v2200 = vadd.f32 0.0, %v2199
        %2201 = vmatmul.f32.gmra.mxu0 %v2132
        %v2202 = vpop.f32.mrf.mxu0
        %v2203 = vadd.f32 0.0, %v2202
        %2204 = vmatmul.f32.gmra.mxu0 %v2135
        %v2205 = vpop.f32.mrf.mxu0
        %v2206 = vadd.f32 0.0, %v2205
        %2207 = vmatmul.f32.gmra.mxu0 %v2138
        %v2208 = vpop.f32.mrf.mxu0
        %v2209 = vadd.f32 0.0, %v2208
        %2210 = vmatmul.f32.gmra.mxu0 %v2141
        %v2211 = vpop.f32.mrf.mxu0
        %v2212 = vadd.f32 0.0, %v2211
        %2213 = vmatmul.f32.gmra.mxu0 %v2144
        %v2214 = vpop.f32.mrf.mxu0
        %v2215 = vadd.f32 0.0, %v2214
        %2216 = vmatmul.f32.gmra.mxu0 %v2147
        %v2217 = vpop.f32.mrf.mxu0
        %v2218 = vadd.f32 0.0, %v2217
        %2219 = vmatmul.f32.gmra.mxu0 %v2150
        %v2220 = vpop.f32.mrf.mxu0
        %v2221 = vadd.f32 0.0, %v2220
        %2222 = vmatmul.f32.gmra.mxu0 %v2153
        %v2223 = vpop.f32.mrf.mxu0
        %v2224 = vadd.f32 0.0, %v2223
        %2225 = vmatmul.f32.gmra.mxu0 %v2156
        %v2226 = vpop.f32.mrf.mxu0
        %v2227 = vadd.f32 0.0, %v2226
        %2228 = vmatmul.f32.gmra.mxu0 %v2159
        %v2229 = vpop.f32.mrf.mxu0
        %v2230 = vadd.f32 0.0, %v2229
        %2231 = vmatmul.f32.gmra.mxu0 %v2162
        %v2232 = vpop.f32.mrf.mxu0
        %v2233 = vadd.f32 0.0, %v2232
        %2234 = vmatmul.f32.gmra.mxu0 %v2165
        %v2235 = vpop.f32.mrf.mxu0
        %v2236 = vadd.f32 0.0, %v2235
        %2237 = vmatmul.f32.gmra.mxu0 %v2168
        %v2238 = vpop.f32.mrf.mxu0
        %v2239 = vadd.f32 0.0, %v2238
        %2240 = vmatmul.f32.gmra.mxu0 %v2171
        %v2241 = vpop.f32.mrf.mxu0
        %v2242 = vadd.f32 0.0, %v2241
        %2243 = vmatmul.f32.gmra.mxu0 %v2174
        %v2244 = vpop.f32.mrf.mxu0
        %v2245 = vadd.f32 0.0, %v2244
        %2246 = vmatmul.f32.gmra.mxu0 %v2177
        %v2247 = vpop.f32.mrf.mxu0
        %v2248 = vadd.f32 0.0, %v2247
        %2249 = vmatmul.f32.gmra.mxu0 %v2180
        %v2250 = vpop.f32.mrf.mxu0
        %v2251 = vadd.f32 0.0, %v2250
        %2252 = vdwg.mxu0
        %v2253 = vadd.f32 %v2090, %v2200
        %v2254 = vadd.f32 %v2091, %v2203
        %v2255 = vadd.f32 %v2092, %v2206
        %v2256 = vadd.f32 %v2093, %v2209
        %v2257 = vadd.f32 %v2094, %v2212
        %v2258 = vadd.f32 %v2095, %v2215
        %v2259 = vadd.f32 %v2096, %v2218
        %v2260 = vadd.f32 %v2097, %v2221
        %v2261 = vadd.f32 %v2098, %v2224
        %v2262 = vadd.f32 %v2099, %v2227
        %v2263 = vadd.f32 %v2100, %v2230
        %v2264 = vadd.f32 %v2101, %v2233
        %v2265 = vadd.f32 %v2102, %v2236
        %v2266 = vadd.f32 %v2103, %v2239
        %v2267 = vadd.f32 %v2104, %v2242
        %v2268 = vadd.f32 %v2105, %v2245
        %v2269 = vadd.f32 %v2106, %v2248
        %v2270 = vadd.f32 %v2107, %v2251
        %v2271 = vld [vmem:[#allocation3 + $0xf] sm:$0xff]
        %v2272 = vld [vmem:[#allocation3 + $0x17] sm:$0xff]
        %v2273 = vld [vmem:[#allocation3 + $0x1f] sm:$0xff]
        %v2274 = vld [vmem:[#allocation3 + $0x27] sm:$0xff]
        %v2275 = vld [vmem:[#allocation3 + $0x2f] sm:$0xff]
        %v2276 = vld [vmem:[#allocation3 + $0x37] sm:$0xff]
        %v2277 = vld [vmem:[#allocation3 + $0x3f] sm:$0xff]
        %v2278 = vld [vmem:[#allocation3 + $0x47] sm:$0xff]
        %v2279 = vld [vmem:[#allocation3 + $0x4f] sm:$0xff]
        %v2280 = vld [vmem:[#allocation3 + $0x57] sm:$0xff]
        %v2281 = vld [vmem:[#allocation3 + $0x5f] sm:$0xff]
        %v2282 = vld [vmem:[#allocation3 + $0x67] sm:$0xff]
        %v2283 = vld [vmem:[#allocation3 + $0x6f] sm:$0xff]
        %v2284 = vld [vmem:[#allocation3 + $0x77] sm:$0xff]
        %v2285 = vld [vmem:[#allocation3 + $0x7f] sm:$0xff]
        %v2286 = vld [vmem:[#allocation3 + $0x87] sm:$0xff]
        %v2287 = vld [vmem:[#allocation3 + $0x8f] sm:$0xff]
        %v2288 = vld [vmem:[#allocation3 + $0x97] sm:$0xff]
        %s2289 = scalar_lea.vmem %s3, 48
        %v2290 = vld [vmem:[%s2289] sm:$0xff]
        %v2292 = vsel %vm809, %v2271, 0
        %v2295 = vsel %vm809, %v2272, 0
        %v2298 = vsel %vm809, %v2273, 0
        %v2301 = vsel %vm809, %v2274, 0
        %v2304 = vsel %vm809, %v2275, 0
        %v2307 = vsel %vm809, %v2276, 0
        %v2310 = vsel %vm809, %v2277, 0
        %v2313 = vsel %vm809, %v2278, 0
        %v2316 = vsel %vm809, %v2279, 0
        %v2319 = vsel %vm809, %v2280, 0
        %v2322 = vsel %vm809, %v2281, 0
        %v2325 = vsel %vm809, %v2282, 0
        %v2328 = vsel %vm809, %v2283, 0
        %v2331 = vsel %vm809, %v2284, 0
        %v2334 = vsel %vm809, %v2285, 0
        %v2337 = vsel %vm809, %v2286, 0
        %v2340 = vsel %vm809, %v2287, 0
        %v2343 = vsel %vm809, %v2288, 0
        %2345 = vmatpush.msra.mxu0 0.0
        %2346 = vmatpush.msra.mxu0 0.0
        %2347 = vmatpush.msra.mxu0 0.0
        %2348 = vmatpush.msra.mxu0 0.0
        %2349 = vmatpush.msra.mxu0 0.0
        %2350 = vmatpush.msra.mxu0 0.0
        %2351 = vmatpush.msra.mxu0 0.0
        %2352 = vmatpush.msra.mxu0 0.0
        %2353 = vmatpush.msra.mxu0 0.0
        %2354 = vmatpush.msra.mxu0 0.0
        %2355 = vmatpush.msra.mxu0 0.0
        %2356 = vmatpush.msra.mxu0 0.0
        %2357 = vmatpush.msra.mxu0 0.0
        %2358 = vmatpush.msra.mxu0 0.0
        %2359 = vmatpush.msra.mxu0 0.0
        %2360 = vmatpush.msra.mxu0 %v2290
        %2361 = vmatmul.f32.gmra.mxu0 %v2292
        %v2362 = vpop.f32.mrf.mxu0
        %v2363 = vadd.f32 0.0, %v2362
        %2364 = vmatmul.f32.gmra.mxu0 %v2295
        %v2365 = vpop.f32.mrf.mxu0
        %v2366 = vadd.f32 0.0, %v2365
        %2367 = vmatmul.f32.gmra.mxu0 %v2298
        %v2368 = vpop.f32.mrf.mxu0
        %v2369 = vadd.f32 0.0, %v2368
        %2370 = vmatmul.f32.gmra.mxu0 %v2301
        %v2371 = vpop.f32.mrf.mxu0
        %v2372 = vadd.f32 0.0, %v2371
        %2373 = vmatmul.f32.gmra.mxu0 %v2304
        %v2374 = vpop.f32.mrf.mxu0
        %v2375 = vadd.f32 0.0, %v2374
        %2376 = vmatmul.f32.gmra.mxu0 %v2307
        %v2377 = vpop.f32.mrf.mxu0
        %v2378 = vadd.f32 0.0, %v2377
        %2379 = vmatmul.f32.gmra.mxu0 %v2310
        %v2380 = vpop.f32.mrf.mxu0
        %v2381 = vadd.f32 0.0, %v2380
        %2382 = vmatmul.f32.gmra.mxu0 %v2313
        %v2383 = vpop.f32.mrf.mxu0
        %v2384 = vadd.f32 0.0, %v2383
        %2385 = vmatmul.f32.gmra.mxu0 %v2316
        %v2386 = vpop.f32.mrf.mxu0
        %v2387 = vadd.f32 0.0, %v2386
        %2388 = vmatmul.f32.gmra.mxu0 %v2319
        %v2389 = vpop.f32.mrf.mxu0
        %v2390 = vadd.f32 0.0, %v2389
        %2391 = vmatmul.f32.gmra.mxu0 %v2322
        %v2392 = vpop.f32.mrf.mxu0
        %v2393 = vadd.f32 0.0, %v2392
        %2394 = vmatmul.f32.gmra.mxu0 %v2325
        %v2395 = vpop.f32.mrf.mxu0
        %v2396 = vadd.f32 0.0, %v2395
        %2397 = vmatmul.f32.gmra.mxu0 %v2328
        %v2398 = vpop.f32.mrf.mxu0
        %v2399 = vadd.f32 0.0, %v2398
        %2400 = vmatmul.f32.gmra.mxu0 %v2331
        %v2401 = vpop.f32.mrf.mxu0
        %v2402 = vadd.f32 0.0, %v2401
        %2403 = vmatmul.f32.gmra.mxu0 %v2334
        %v2404 = vpop.f32.mrf.mxu0
        %v2405 = vadd.f32 0.0, %v2404
        %2406 = vmatmul.f32.gmra.mxu0 %v2337
        %v2407 = vpop.f32.mrf.mxu0
        %v2408 = vadd.f32 0.0, %v2407
        %2409 = vmatmul.f32.gmra.mxu0 %v2340
        %v2410 = vpop.f32.mrf.mxu0
        %v2411 = vadd.f32 0.0, %v2410
        %2412 = vmatmul.f32.gmra.mxu0 %v2343
        %v2413 = vpop.f32.mrf.mxu0
        %v2414 = vadd.f32 0.0, %v2413
        %2415 = vdwg.mxu0
        %v2416 = vadd.f32 %v2253, %v2363
        %v2417 = vadd.f32 %v2254, %v2366
        %v2418 = vadd.f32 %v2255, %v2369
        %v2419 = vadd.f32 %v2256, %v2372
        %v2420 = vadd.f32 %v2257, %v2375
        %v2421 = vadd.f32 %v2258, %v2378
        %v2422 = vadd.f32 %v2259, %v2381
        %v2423 = vadd.f32 %v2260, %v2384
        %v2424 = vadd.f32 %v2261, %v2387
        %v2425 = vadd.f32 %v2262, %v2390
        %v2426 = vadd.f32 %v2263, %v2393
        %v2427 = vadd.f32 %v2264, %v2396
        %v2428 = vadd.f32 %v2265, %v2399
        %v2429 = vadd.f32 %v2266, %v2402
        %v2430 = vadd.f32 %v2267, %v2405
        %v2431 = vadd.f32 %v2268, %v2408
        %v2432 = vadd.f32 %v2269, %v2411
        %v2433 = vadd.f32 %v2270, %v2414
        %v2434 = vld [vmem:[#allocation3 + $0x10] sm:$0xff]
        %v2435 = vld [vmem:[#allocation3 + $0x18] sm:$0xff]
        %v2436 = vld [vmem:[#allocation3 + $0x20] sm:$0xff]
        %v2437 = vld [vmem:[#allocation3 + $0x28] sm:$0xff]
        %v2438 = vld [vmem:[#allocation3 + $0x30] sm:$0xff]
        %v2439 = vld [vmem:[#allocation3 + $0x38] sm:$0xff]
        %v2440 = vld [vmem:[#allocation3 + $0x40] sm:$0xff]
        %v2441 = vld [vmem:[#allocation3 + $0x48] sm:$0xff]
        %v2442 = vld [vmem:[#allocation3 + $0x50] sm:$0xff]
        %v2443 = vld [vmem:[#allocation3 + $0x58] sm:$0xff]
        %v2444 = vld [vmem:[#allocation3 + $0x60] sm:$0xff]
        %v2445 = vld [vmem:[#allocation3 + $0x68] sm:$0xff]
        %v2446 = vld [vmem:[#allocation3 + $0x70] sm:$0xff]
        %v2447 = vld [vmem:[#allocation3 + $0x78] sm:$0xff]
        %v2448 = vld [vmem:[#allocation3 + $0x80] sm:$0xff]
        %v2449 = vld [vmem:[#allocation3 + $0x88] sm:$0xff]
        %v2450 = vld [vmem:[#allocation3 + $0x90] sm:$0xff]
        %v2451 = vld [vmem:[#allocation3 + $0x98] sm:$0xff]
        %s2452 = scalar_lea.vmem %s3, 56
        %v2453 = vld [vmem:[%s2452] sm:$0xff]
        %v2455 = vsel %vm809, %v2434, 0
        %v2458 = vsel %vm809, %v2435, 0
        %v2461 = vsel %vm809, %v2436, 0
        %v2464 = vsel %vm809, %v2437, 0
        %v2467 = vsel %vm809, %v2438, 0
        %v2470 = vsel %vm809, %v2439, 0
        %v2473 = vsel %vm809, %v2440, 0
        %v2476 = vsel %vm809, %v2441, 0
        %v2479 = vsel %vm809, %v2442, 0
        %v2482 = vsel %vm809, %v2443, 0
        %v2485 = vsel %vm809, %v2444, 0
        %v2488 = vsel %vm809, %v2445, 0
        %v2491 = vsel %vm809, %v2446, 0
        %v2494 = vsel %vm809, %v2447, 0
        %v2497 = vsel %vm809, %v2448, 0
        %v2500 = vsel %vm809, %v2449, 0
        %v2503 = vsel %vm809, %v2450, 0
        %v2506 = vsel %vm809, %v2451, 0
        %2508 = vmatpush.msra.mxu0 0.0
        %2509 = vmatpush.msra.mxu0 0.0
        %2510 = vmatpush.msra.mxu0 0.0
        %2511 = vmatpush.msra.mxu0 0.0
        %2512 = vmatpush.msra.mxu0 0.0
        %2513 = vmatpush.msra.mxu0 0.0
        %2514 = vmatpush.msra.mxu0 0.0
        %2515 = vmatpush.msra.mxu0 0.0
        %2516 = vmatpush.msra.mxu0 0.0
        %2517 = vmatpush.msra.mxu0 0.0
        %2518 = vmatpush.msra.mxu0 0.0
        %2519 = vmatpush.msra.mxu0 0.0
        %2520 = vmatpush.msra.mxu0 0.0
        %2521 = vmatpush.msra.mxu0 0.0
        %2522 = vmatpush.msra.mxu0 0.0
        %2523 = vmatpush.msra.mxu0 %v2453
        %2524 = vmatmul.f32.gmra.mxu0 %v2455
        %v2525 = vpop.f32.mrf.mxu0
        %v2526 = vadd.f32 0.0, %v2525
        %2527 = vmatmul.f32.gmra.mxu0 %v2458
        %v2528 = vpop.f32.mrf.mxu0
        %v2529 = vadd.f32 0.0, %v2528
        %2530 = vmatmul.f32.gmra.mxu0 %v2461
        %v2531 = vpop.f32.mrf.mxu0
        %v2532 = vadd.f32 0.0, %v2531
        %2533 = vmatmul.f32.gmra.mxu0 %v2464
        %v2534 = vpop.f32.mrf.mxu0
        %v2535 = vadd.f32 0.0, %v2534
        %2536 = vmatmul.f32.gmra.mxu0 %v2467
        %v2537 = vpop.f32.mrf.mxu0
        %v2538 = vadd.f32 0.0, %v2537
        %2539 = vmatmul.f32.gmra.mxu0 %v2470
        %v2540 = vpop.f32.mrf.mxu0
        %v2541 = vadd.f32 0.0, %v2540
        %2542 = vmatmul.f32.gmra.mxu0 %v2473
        %v2543 = vpop.f32.mrf.mxu0
        %v2544 = vadd.f32 0.0, %v2543
        %2545 = vmatmul.f32.gmra.mxu0 %v2476
        %v2546 = vpop.f32.mrf.mxu0
        %v2547 = vadd.f32 0.0, %v2546
        %2548 = vmatmul.f32.gmra.mxu0 %v2479
        %v2549 = vpop.f32.mrf.mxu0
        %v2550 = vadd.f32 0.0, %v2549
        %2551 = vmatmul.f32.gmra.mxu0 %v2482
        %v2552 = vpop.f32.mrf.mxu0
        %v2553 = vadd.f32 0.0, %v2552
        %2554 = vmatmul.f32.gmra.mxu0 %v2485
        %v2555 = vpop.f32.mrf.mxu0
        %v2556 = vadd.f32 0.0, %v2555
        %2557 = vmatmul.f32.gmra.mxu0 %v2488
        %v2558 = vpop.f32.mrf.mxu0
        %v2559 = vadd.f32 0.0, %v2558
        %2560 = vmatmul.f32.gmra.mxu0 %v2491
        %v2561 = vpop.f32.mrf.mxu0
        %v2562 = vadd.f32 0.0, %v2561
        %2563 = vmatmul.f32.gmra.mxu0 %v2494
        %v2564 = vpop.f32.mrf.mxu0
        %v2565 = vadd.f32 0.0, %v2564
        %2566 = vmatmul.f32.gmra.mxu0 %v2497
        %v2567 = vpop.f32.mrf.mxu0
        %v2568 = vadd.f32 0.0, %v2567
        %2569 = vmatmul.f32.gmra.mxu0 %v2500
        %v2570 = vpop.f32.mrf.mxu0
        %v2571 = vadd.f32 0.0, %v2570
        %2572 = vmatmul.f32.gmra.mxu0 %v2503
        %v2573 = vpop.f32.mrf.mxu0
        %v2574 = vadd.f32 0.0, %v2573
        %2575 = vmatmul.f32.gmra.mxu0 %v2506
        %v2576 = vpop.f32.mrf.mxu0
        %v2577 = vadd.f32 0.0, %v2576
        %2578 = vdwg.mxu0
        %v2579 = vadd.f32 %v2416, %v2526
        %v2580 = vadd.f32 %v2417, %v2529
        %v2581 = vadd.f32 %v2418, %v2532
        %v2582 = vadd.f32 %v2419, %v2535
        %v2583 = vadd.f32 %v2420, %v2538
        %v2584 = vadd.f32 %v2421, %v2541
        %v2585 = vadd.f32 %v2422, %v2544
        %v2586 = vadd.f32 %v2423, %v2547
        %v2587 = vadd.f32 %v2424, %v2550
        %v2588 = vadd.f32 %v2425, %v2553
        %v2589 = vadd.f32 %v2426, %v2556
        %v2590 = vadd.f32 %v2427, %v2559
        %v2591 = vadd.f32 %v2428, %v2562
        %v2592 = vadd.f32 %v2429, %v2565
        %v2593 = vadd.f32 %v2430, %v2568
        %v2594 = vadd.f32 %v2431, %v2571
        %v2595 = vadd.f32 %v2432, %v2574
        %v2596 = vadd.f32 %v2433, %v2577
        %v2597 = vld [vmem:[#allocation3 + $0x11] sm:$0xff]
        %v2598 = vld [vmem:[#allocation3 + $0x19] sm:$0xff]
        %v2599 = vld [vmem:[#allocation3 + $0x21] sm:$0xff]
        %v2600 = vld [vmem:[#allocation3 + $0x29] sm:$0xff]
        %v2601 = vld [vmem:[#allocation3 + $0x31] sm:$0xff]
        %v2602 = vld [vmem:[#allocation3 + $0x39] sm:$0xff]
        %v2603 = vld [vmem:[#allocation3 + $0x41] sm:$0xff]
        %v2604 = vld [vmem:[#allocation3 + $0x49] sm:$0xff]
        %v2605 = vld [vmem:[#allocation3 + $0x51] sm:$0xff]
        %v2606 = vld [vmem:[#allocation3 + $0x59] sm:$0xff]
        %v2607 = vld [vmem:[#allocation3 + $0x61] sm:$0xff]
        %v2608 = vld [vmem:[#allocation3 + $0x69] sm:$0xff]
        %v2609 = vld [vmem:[#allocation3 + $0x71] sm:$0xff]
        %v2610 = vld [vmem:[#allocation3 + $0x79] sm:$0xff]
        %v2611 = vld [vmem:[#allocation3 + $0x81] sm:$0xff]
        %v2612 = vld [vmem:[#allocation3 + $0x89] sm:$0xff]
        %v2613 = vld [vmem:[#allocation3 + $0x91] sm:$0xff]
        %v2614 = vld [vmem:[#allocation3 + $0x99] sm:$0xff]
        %s2615 = scalar_lea.vmem %s3, 64
        %v2616 = vld [vmem:[%s2615] sm:$0xff]
        %v2618 = vsel %vm809, %v2597, 0
        %v2621 = vsel %vm809, %v2598, 0
        %v2624 = vsel %vm809, %v2599, 0
        %v2627 = vsel %vm809, %v2600, 0
        %v2630 = vsel %vm809, %v2601, 0
        %v2633 = vsel %vm809, %v2602, 0
        %v2636 = vsel %vm809, %v2603, 0
        %v2639 = vsel %vm809, %v2604, 0
        %v2642 = vsel %vm809, %v2605, 0
        %v2645 = vsel %vm809, %v2606, 0
        %v2648 = vsel %vm809, %v2607, 0
        %v2651 = vsel %vm809, %v2608, 0
        %v2654 = vsel %vm809, %v2609, 0
        %v2657 = vsel %vm809, %v2610, 0
        %v2660 = vsel %vm809, %v2611, 0
        %v2663 = vsel %vm809, %v2612, 0
        %v2666 = vsel %vm809, %v2613, 0
        %v2669 = vsel %vm809, %v2614, 0
        %2671 = vmatpush.msra.mxu0 0.0
        %2672 = vmatpush.msra.mxu0 0.0
        %2673 = vmatpush.msra.mxu0 0.0
        %2674 = vmatpush.msra.mxu0 0.0
        %2675 = vmatpush.msra.mxu0 0.0
        %2676 = vmatpush.msra.mxu0 0.0
        %2677 = vmatpush.msra.mxu0 0.0
        %2678 = vmatpush.msra.mxu0 0.0
        %2679 = vmatpush.msra.mxu0 0.0
        %2680 = vmatpush.msra.mxu0 0.0
        %2681 = vmatpush.msra.mxu0 0.0
        %2682 = vmatpush.msra.mxu0 0.0
        %2683 = vmatpush.msra.mxu0 0.0
        %2684 = vmatpush.msra.mxu0 0.0
        %2685 = vmatpush.msra.mxu0 0.0
        %2686 = vmatpush.msra.mxu0 %v2616
        %2687 = vmatmul.f32.gmra.mxu0 %v2618
        %v2688 = vpop.f32.mrf.mxu0
        %v2689 = vadd.f32 0.0, %v2688
        %2690 = vmatmul.f32.gmra.mxu0 %v2621
        %v2691 = vpop.f32.mrf.mxu0
        %v2692 = vadd.f32 0.0, %v2691
        %2693 = vmatmul.f32.gmra.mxu0 %v2624
        %v2694 = vpop.f32.mrf.mxu0
        %v2695 = vadd.f32 0.0, %v2694
        %2696 = vmatmul.f32.gmra.mxu0 %v2627
        %v2697 = vpop.f32.mrf.mxu0
        %v2698 = vadd.f32 0.0, %v2697
        %2699 = vmatmul.f32.gmra.mxu0 %v2630
        %v2700 = vpop.f32.mrf.mxu0
        %v2701 = vadd.f32 0.0, %v2700
        %2702 = vmatmul.f32.gmra.mxu0 %v2633
        %v2703 = vpop.f32.mrf.mxu0
        %v2704 = vadd.f32 0.0, %v2703
        %2705 = vmatmul.f32.gmra.mxu0 %v2636
        %v2706 = vpop.f32.mrf.mxu0
        %v2707 = vadd.f32 0.0, %v2706
        %2708 = vmatmul.f32.gmra.mxu0 %v2639
        %v2709 = vpop.f32.mrf.mxu0
        %v2710 = vadd.f32 0.0, %v2709
        %2711 = vmatmul.f32.gmra.mxu0 %v2642
        %v2712 = vpop.f32.mrf.mxu0
        %v2713 = vadd.f32 0.0, %v2712
        %2714 = vmatmul.f32.gmra.mxu0 %v2645
        %v2715 = vpop.f32.mrf.mxu0
        %v2716 = vadd.f32 0.0, %v2715
        %2717 = vmatmul.f32.gmra.mxu0 %v2648
        %v2718 = vpop.f32.mrf.mxu0
        %v2719 = vadd.f32 0.0, %v2718
        %2720 = vmatmul.f32.gmra.mxu0 %v2651
        %v2721 = vpop.f32.mrf.mxu0
        %v2722 = vadd.f32 0.0, %v2721
        %2723 = vmatmul.f32.gmra.mxu0 %v2654
        %v2724 = vpop.f32.mrf.mxu0
        %v2725 = vadd.f32 0.0, %v2724
        %2726 = vmatmul.f32.gmra.mxu0 %v2657
        %v2727 = vpop.f32.mrf.mxu0
        %v2728 = vadd.f32 0.0, %v2727
        %2729 = vmatmul.f32.gmra.mxu0 %v2660
        %v2730 = vpop.f32.mrf.mxu0
        %v2731 = vadd.f32 0.0, %v2730
        %2732 = vmatmul.f32.gmra.mxu0 %v2663
        %v2733 = vpop.f32.mrf.mxu0
        %v2734 = vadd.f32 0.0, %v2733
        %2735 = vmatmul.f32.gmra.mxu0 %v2666
        %v2736 = vpop.f32.mrf.mxu0
        %v2737 = vadd.f32 0.0, %v2736
        %2738 = vmatmul.f32.gmra.mxu0 %v2669
        %v2739 = vpop.f32.mrf.mxu0
        %v2740 = vadd.f32 0.0, %v2739
        %2741 = vdwg.mxu0
        %v2742 = vadd.f32 %v2579, %v2689
        %v2743 = vadd.f32 %v2580, %v2692
        %v2744 = vadd.f32 %v2581, %v2695
        %v2745 = vadd.f32 %v2582, %v2698
        %v2746 = vadd.f32 %v2583, %v2701
        %v2747 = vadd.f32 %v2584, %v2704
        %v2748 = vadd.f32 %v2585, %v2707
        %v2749 = vadd.f32 %v2586, %v2710
        %v2750 = vadd.f32 %v2587, %v2713
        %v2751 = vadd.f32 %v2588, %v2716
        %v2752 = vadd.f32 %v2589, %v2719
        %v2753 = vadd.f32 %v2590, %v2722
        %v2754 = vadd.f32 %v2591, %v2725
        %v2755 = vadd.f32 %v2592, %v2728
        %v2756 = vadd.f32 %v2593, %v2731
        %v2757 = vadd.f32 %v2594, %v2734
        %v2758 = vadd.f32 %v2595, %v2737
        %v2759 = vadd.f32 %v2596, %v2740
        %v2760 = vld [vmem:[#allocation3 + $0x12] sm:$0xff]
        %v2761 = vld [vmem:[#allocation3 + $0x1a] sm:$0xff]
        %v2762 = vld [vmem:[#allocation3 + $0x22] sm:$0xff]
        %v2763 = vld [vmem:[#allocation3 + $0x2a] sm:$0xff]
        %v2764 = vld [vmem:[#allocation3 + $0x32] sm:$0xff]
        %v2765 = vld [vmem:[#allocation3 + $0x3a] sm:$0xff]
        %v2766 = vld [vmem:[#allocation3 + $0x42] sm:$0xff]
        %v2767 = vld [vmem:[#allocation3 + $0x4a] sm:$0xff]
        %v2768 = vld [vmem:[#allocation3 + $0x52] sm:$0xff]
        %v2769 = vld [vmem:[#allocation3 + $0x5a] sm:$0xff]
        %v2770 = vld [vmem:[#allocation3 + $0x62] sm:$0xff]
        %v2771 = vld [vmem:[#allocation3 + $0x6a] sm:$0xff]
        %v2772 = vld [vmem:[#allocation3 + $0x72] sm:$0xff]
        %v2773 = vld [vmem:[#allocation3 + $0x7a] sm:$0xff]
        %v2774 = vld [vmem:[#allocation3 + $0x82] sm:$0xff]
        %v2775 = vld [vmem:[#allocation3 + $0x8a] sm:$0xff]
        %v2776 = vld [vmem:[#allocation3 + $0x92] sm:$0xff]
        %v2777 = vld [vmem:[#allocation3 + $0x9a] sm:$0xff]
        %s2778 = scalar_lea.vmem %s3, 72
        %v2779 = vld [vmem:[%s2778] sm:$0xff]
        %v2781 = vsel %vm809, %v2760, 0
        %v2784 = vsel %vm809, %v2761, 0
        %v2787 = vsel %vm809, %v2762, 0
        %v2790 = vsel %vm809, %v2763, 0
        %v2793 = vsel %vm809, %v2764, 0
        %v2796 = vsel %vm809, %v2765, 0
        %v2799 = vsel %vm809, %v2766, 0
        %v2802 = vsel %vm809, %v2767, 0
        %v2805 = vsel %vm809, %v2768, 0
        %v2808 = vsel %vm809, %v2769, 0
        %v2811 = vsel %vm809, %v2770, 0
        %v2814 = vsel %vm809, %v2771, 0
        %v2817 = vsel %vm809, %v2772, 0
        %v2820 = vsel %vm809, %v2773, 0
        %v2823 = vsel %vm809, %v2774, 0
        %v2826 = vsel %vm809, %v2775, 0
        %v2829 = vsel %vm809, %v2776, 0
        %v2832 = vsel %vm809, %v2777, 0
        %2834 = vmatpush.msra.mxu0 0.0
        %2835 = vmatpush.msra.mxu0 0.0
        %2836 = vmatpush.msra.mxu0 0.0
        %2837 = vmatpush.msra.mxu0 0.0
        %2838 = vmatpush.msra.mxu0 0.0
        %2839 = vmatpush.msra.mxu0 0.0
        %2840 = vmatpush.msra.mxu0 0.0
        %2841 = vmatpush.msra.mxu0 0.0
        %2842 = vmatpush.msra.mxu0 0.0
        %2843 = vmatpush.msra.mxu0 0.0
        %2844 = vmatpush.msra.mxu0 0.0
        %2845 = vmatpush.msra.mxu0 0.0
        %2846 = vmatpush.msra.mxu0 0.0
        %2847 = vmatpush.msra.mxu0 0.0
        %2848 = vmatpush.msra.mxu0 0.0
        %2849 = vmatpush.msra.mxu0 %v2779
        %2850 = vmatmul.f32.gmra.mxu0 %v2781
        %v2851 = vpop.f32.mrf.mxu0
        %v2852 = vadd.f32 0.0, %v2851
        %2853 = vmatmul.f32.gmra.mxu0 %v2784
        %v2854 = vpop.f32.mrf.mxu0
        %v2855 = vadd.f32 0.0, %v2854
        %2856 = vmatmul.f32.gmra.mxu0 %v2787
        %v2857 = vpop.f32.mrf.mxu0
        %v2858 = vadd.f32 0.0, %v2857
        %2859 = vmatmul.f32.gmra.mxu0 %v2790
        %v2860 = vpop.f32.mrf.mxu0
        %v2861 = vadd.f32 0.0, %v2860
        %2862 = vmatmul.f32.gmra.mxu0 %v2793
        %v2863 = vpop.f32.mrf.mxu0
        %v2864 = vadd.f32 0.0, %v2863
        %2865 = vmatmul.f32.gmra.mxu0 %v2796
        %v2866 = vpop.f32.mrf.mxu0
        %v2867 = vadd.f32 0.0, %v2866
        %2868 = vmatmul.f32.gmra.mxu0 %v2799
        %v2869 = vpop.f32.mrf.mxu0
        %v2870 = vadd.f32 0.0, %v2869
        %2871 = vmatmul.f32.gmra.mxu0 %v2802
        %v2872 = vpop.f32.mrf.mxu0
        %v2873 = vadd.f32 0.0, %v2872
        %2874 = vmatmul.f32.gmra.mxu0 %v2805
        %v2875 = vpop.f32.mrf.mxu0
        %v2876 = vadd.f32 0.0, %v2875
        %2877 = vmatmul.f32.gmra.mxu0 %v2808
        %v2878 = vpop.f32.mrf.mxu0
        %v2879 = vadd.f32 0.0, %v2878
        %2880 = vmatmul.f32.gmra.mxu0 %v2811
        %v2881 = vpop.f32.mrf.mxu0
        %v2882 = vadd.f32 0.0, %v2881
        %2883 = vmatmul.f32.gmra.mxu0 %v2814
        %v2884 = vpop.f32.mrf.mxu0
        %v2885 = vadd.f32 0.0, %v2884
        %2886 = vmatmul.f32.gmra.mxu0 %v2817
        %v2887 = vpop.f32.mrf.mxu0
        %v2888 = vadd.f32 0.0, %v2887
        %2889 = vmatmul.f32.gmra.mxu0 %v2820
        %v2890 = vpop.f32.mrf.mxu0
        %v2891 = vadd.f32 0.0, %v2890
        %2892 = vmatmul.f32.gmra.mxu0 %v2823
        %v2893 = vpop.f32.mrf.mxu0
        %v2894 = vadd.f32 0.0, %v2893
        %2895 = vmatmul.f32.gmra.mxu0 %v2826
        %v2896 = vpop.f32.mrf.mxu0
        %v2897 = vadd.f32 0.0, %v2896
        %2898 = vmatmul.f32.gmra.mxu0 %v2829
        %v2899 = vpop.f32.mrf.mxu0
        %v2900 = vadd.f32 0.0, %v2899
        %2901 = vmatmul.f32.gmra.mxu0 %v2832
        %v2902 = vpop.f32.mrf.mxu0
        %v2903 = vadd.f32 0.0, %v2902
        %2904 = vdwg.mxu0
        %v2905 = vadd.f32 %v2742, %v2852
        %v2906 = vadd.f32 %v2743, %v2855
        %v2907 = vadd.f32 %v2744, %v2858
        %v2908 = vadd.f32 %v2745, %v2861
        %v2909 = vadd.f32 %v2746, %v2864
        %v2910 = vadd.f32 %v2747, %v2867
        %v2911 = vadd.f32 %v2748, %v2870
        %v2912 = vadd.f32 %v2749, %v2873
        %v2913 = vadd.f32 %v2750, %v2876
        %v2914 = vadd.f32 %v2751, %v2879
        %v2915 = vadd.f32 %v2752, %v2882
        %v2916 = vadd.f32 %v2753, %v2885
        %v2917 = vadd.f32 %v2754, %v2888
        %v2918 = vadd.f32 %v2755, %v2891
        %v2919 = vadd.f32 %v2756, %v2894
        %v2920 = vadd.f32 %v2757, %v2897
        %v2921 = vadd.f32 %v2758, %v2900
        %v2922 = vadd.f32 %v2759, %v2903
        %v2923 = vld [vmem:[#allocation3 + $0x1c] sm:$0xff]
        %v2924 = vld [vmem:[#allocation3 + $0x24] sm:$0xff]
        %v2925 = vld [vmem:[#allocation3 + $0x2c] sm:$0xff]
        %v2926 = vld [vmem:[#allocation3 + $0x34] sm:$0xff]
        %v2927 = vld [vmem:[#allocation3 + $0x3c] sm:$0xff]
        %v2928 = vld [vmem:[#allocation3 + $0x44] sm:$0xff]
        %v2929 = vld [vmem:[#allocation3 + $0x4c] sm:$0xff]
        %v2930 = vld [vmem:[#allocation3 + $0x54] sm:$0xff]
        %v2931 = vld [vmem:[#allocation3 + $0x5c] sm:$0xff]
        %v2932 = vld [vmem:[#allocation3 + $0x64] sm:$0xff]
        %v2933 = vld [vmem:[#allocation3 + $0x6c] sm:$0xff]
        %v2934 = vld [vmem:[#allocation3 + $0x74] sm:$0xff]
        %v2935 = vld [vmem:[#allocation3 + $0x7c] sm:$0xff]
        %v2936 = vld [vmem:[#allocation3 + $0x84] sm:$0xff]
        %v2937 = vld [vmem:[#allocation3 + $0x8c] sm:$0xff]
        %v2938 = vld [vmem:[#allocation3 + $0x94] sm:$0xff]
        %v2939 = vld [vmem:[#allocation3 + $0x9c] sm:$0xff]
        %v2940 = vld [vmem:[#allocation3 + $0xa4] sm:$0xff]
        %s2941 = scalar_lea.vmem %s3, 80
        %v2942 = vld [vmem:[%s2941] sm:$0xff]
        %v2944 = vsel %vm809, %v2923, 0
        %v2947 = vsel %vm809, %v2924, 0
        %v2950 = vsel %vm809, %v2925, 0
        %v2953 = vsel %vm809, %v2926, 0
        %v2956 = vsel %vm809, %v2927, 0
        %v2959 = vsel %vm809, %v2928, 0
        %v2962 = vsel %vm809, %v2929, 0
        %v2965 = vsel %vm809, %v2930, 0
        %v2968 = vsel %vm809, %v2931, 0
        %v2971 = vsel %vm809, %v2932, 0
        %v2974 = vsel %vm809, %v2933, 0
        %v2977 = vsel %vm809, %v2934, 0
        %v2980 = vsel %vm809, %v2935, 0
        %v2983 = vsel %vm809, %v2936, 0
        %v2986 = vsel %vm809, %v2937, 0
        %v2989 = vsel %vm809, %v2938, 0
        %v2992 = vsel %vm809, %v2939, 0
        %v2995 = vsel %vm809, %v2940, 0
        %2997 = vmatpush.msra.mxu0 0.0
        %2998 = vmatpush.msra.mxu0 0.0
        %2999 = vmatpush.msra.mxu0 0.0
        %3000 = vmatpush.msra.mxu0 0.0
        %3001 = vmatpush.msra.mxu0 0.0
        %3002 = vmatpush.msra.mxu0 0.0
        %3003 = vmatpush.msra.mxu0 0.0
        %3004 = vmatpush.msra.mxu0 0.0
        %3005 = vmatpush.msra.mxu0 0.0
        %3006 = vmatpush.msra.mxu0 0.0
        %3007 = vmatpush.msra.mxu0 0.0
        %3008 = vmatpush.msra.mxu0 0.0
        %3009 = vmatpush.msra.mxu0 0.0
        %3010 = vmatpush.msra.mxu0 0.0
        %3011 = vmatpush.msra.mxu0 0.0
        %3012 = vmatpush.msra.mxu0 %v2942
        %3013 = vmatmul.f32.gmra.mxu0 %v2944
        %v3014 = vpop.f32.mrf.mxu0
        %v3015 = vadd.f32 0.0, %v3014
        %3016 = vmatmul.f32.gmra.mxu0 %v2947
        %v3017 = vpop.f32.mrf.mxu0
        %v3018 = vadd.f32 0.0, %v3017
        %3019 = vmatmul.f32.gmra.mxu0 %v2950
        %v3020 = vpop.f32.mrf.mxu0
        %v3021 = vadd.f32 0.0, %v3020
        %3022 = vmatmul.f32.gmra.mxu0 %v2953
        %v3023 = vpop.f32.mrf.mxu0
        %v3024 = vadd.f32 0.0, %v3023
        %3025 = vmatmul.f32.gmra.mxu0 %v2956
        %v3026 = vpop.f32.mrf.mxu0
        %v3027 = vadd.f32 0.0, %v3026
        %3028 = vmatmul.f32.gmra.mxu0 %v2959
        %v3029 = vpop.f32.mrf.mxu0
        %v3030 = vadd.f32 0.0, %v3029
        %3031 = vmatmul.f32.gmra.mxu0 %v2962
        %v3032 = vpop.f32.mrf.mxu0
        %v3033 = vadd.f32 0.0, %v3032
        %3034 = vmatmul.f32.gmra.mxu0 %v2965
        %v3035 = vpop.f32.mrf.mxu0
        %v3036 = vadd.f32 0.0, %v3035
        %3037 = vmatmul.f32.gmra.mxu0 %v2968
        %v3038 = vpop.f32.mrf.mxu0
        %v3039 = vadd.f32 0.0, %v3038
        %3040 = vmatmul.f32.gmra.mxu0 %v2971
        %v3041 = vpop.f32.mrf.mxu0
        %v3042 = vadd.f32 0.0, %v3041
        %3043 = vmatmul.f32.gmra.mxu0 %v2974
        %v3044 = vpop.f32.mrf.mxu0
        %v3045 = vadd.f32 0.0, %v3044
        %3046 = vmatmul.f32.gmra.mxu0 %v2977
        %v3047 = vpop.f32.mrf.mxu0
        %v3048 = vadd.f32 0.0, %v3047
        %3049 = vmatmul.f32.gmra.mxu0 %v2980
        %v3050 = vpop.f32.mrf.mxu0
        %v3051 = vadd.f32 0.0, %v3050
        %3052 = vmatmul.f32.gmra.mxu0 %v2983
        %v3053 = vpop.f32.mrf.mxu0
        %v3054 = vadd.f32 0.0, %v3053
        %3055 = vmatmul.f32.gmra.mxu0 %v2986
        %v3056 = vpop.f32.mrf.mxu0
        %v3057 = vadd.f32 0.0, %v3056
        %3058 = vmatmul.f32.gmra.mxu0 %v2989
        %v3059 = vpop.f32.mrf.mxu0
        %v3060 = vadd.f32 0.0, %v3059
        %3061 = vmatmul.f32.gmra.mxu0 %v2992
        %v3062 = vpop.f32.mrf.mxu0
        %v3063 = vadd.f32 0.0, %v3062
        %3064 = vmatmul.f32.gmra.mxu0 %v2995
        %v3065 = vpop.f32.mrf.mxu0
        %v3066 = vadd.f32 0.0, %v3065
        %3067 = vdwg.mxu0
        %v3068 = vadd.f32 %v2905, %v3015
        %v3069 = vadd.f32 %v2906, %v3018
        %v3070 = vadd.f32 %v2907, %v3021
        %v3071 = vadd.f32 %v2908, %v3024
        %v3072 = vadd.f32 %v2909, %v3027
        %v3073 = vadd.f32 %v2910, %v3030
        %v3074 = vadd.f32 %v2911, %v3033
        %v3075 = vadd.f32 %v2912, %v3036
        %v3076 = vadd.f32 %v2913, %v3039
        %v3077 = vadd.f32 %v2914, %v3042
        %v3078 = vadd.f32 %v2915, %v3045
        %v3079 = vadd.f32 %v2916, %v3048
        %v3080 = vadd.f32 %v2917, %v3051
        %v3081 = vadd.f32 %v2918, %v3054
        %v3082 = vadd.f32 %v2919, %v3057
        %v3083 = vadd.f32 %v2920, %v3060
        %v3084 = vadd.f32 %v2921, %v3063
        %v3085 = vadd.f32 %v2922, %v3066
        %v3086 = vld [vmem:[#allocation3 + $0x1d] sm:$0xff]
        %v3087 = vld [vmem:[#allocation3 + $0x25] sm:$0xff]
        %v3088 = vld [vmem:[#allocation3 + $0x2d] sm:$0xff]
        %v3089 = vld [vmem:[#allocation3 + $0x35] sm:$0xff]
        %v3090 = vld [vmem:[#allocation3 + $0x3d] sm:$0xff]
        %v3091 = vld [vmem:[#allocation3 + $0x45] sm:$0xff]
        %v3092 = vld [vmem:[#allocation3 + $0x4d] sm:$0xff]
        %v3093 = vld [vmem:[#allocation3 + $0x55] sm:$0xff]
        %v3094 = vld [vmem:[#allocation3 + $0x5d] sm:$0xff]
        %v3095 = vld [vmem:[#allocation3 + $0x65] sm:$0xff]
        %v3096 = vld [vmem:[#allocation3 + $0x6d] sm:$0xff]
        %v3097 = vld [vmem:[#allocation3 + $0x75] sm:$0xff]
        %v3098 = vld [vmem:[#allocation3 + $0x7d] sm:$0xff]
        %v3099 = vld [vmem:[#allocation3 + $0x85] sm:$0xff]
        %v3100 = vld [vmem:[#allocation3 + $0x8d] sm:$0xff]
        %v3101 = vld [vmem:[#allocation3 + $0x95] sm:$0xff]
        %v3102 = vld [vmem:[#allocation3 + $0x9d] sm:$0xff]
        %v3103 = vld [vmem:[#allocation3 + $0xa5] sm:$0xff]
        %s3104 = scalar_lea.vmem %s3, 88
        %v3105 = vld [vmem:[%s3104] sm:$0xff]
        %v3107 = vsel %vm809, %v3086, 0
        %v3110 = vsel %vm809, %v3087, 0
        %v3113 = vsel %vm809, %v3088, 0
        %v3116 = vsel %vm809, %v3089, 0
        %v3119 = vsel %vm809, %v3090, 0
        %v3122 = vsel %vm809, %v3091, 0
        %v3125 = vsel %vm809, %v3092, 0
        %v3128 = vsel %vm809, %v3093, 0
        %v3131 = vsel %vm809, %v3094, 0
        %v3134 = vsel %vm809, %v3095, 0
        %v3137 = vsel %vm809, %v3096, 0
        %v3140 = vsel %vm809, %v3097, 0
        %v3143 = vsel %vm809, %v3098, 0
        %v3146 = vsel %vm809, %v3099, 0
        %v3149 = vsel %vm809, %v3100, 0
        %v3152 = vsel %vm809, %v3101, 0
        %v3155 = vsel %vm809, %v3102, 0
        %v3158 = vsel %vm809, %v3103, 0
        %3160 = vmatpush.msra.mxu0 0.0
        %3161 = vmatpush.msra.mxu0 0.0
        %3162 = vmatpush.msra.mxu0 0.0
        %3163 = vmatpush.msra.mxu0 0.0
        %3164 = vmatpush.msra.mxu0 0.0
        %3165 = vmatpush.msra.mxu0 0.0
        %3166 = vmatpush.msra.mxu0 0.0
        %3167 = vmatpush.msra.mxu0 0.0
        %3168 = vmatpush.msra.mxu0 0.0
        %3169 = vmatpush.msra.mxu0 0.0
        %3170 = vmatpush.msra.mxu0 0.0
        %3171 = vmatpush.msra.mxu0 0.0
        %3172 = vmatpush.msra.mxu0 0.0
        %3173 = vmatpush.msra.mxu0 0.0
        %3174 = vmatpush.msra.mxu0 0.0
        %3175 = vmatpush.msra.mxu0 %v3105
        %3176 = vmatmul.f32.gmra.mxu0 %v3107
        %v3177 = vpop.f32.mrf.mxu0
        %v3178 = vadd.f32 0.0, %v3177
        %3179 = vmatmul.f32.gmra.mxu0 %v3110
        %v3180 = vpop.f32.mrf.mxu0
        %v3181 = vadd.f32 0.0, %v3180
        %3182 = vmatmul.f32.gmra.mxu0 %v3113
        %v3183 = vpop.f32.mrf.mxu0
        %v3184 = vadd.f32 0.0, %v3183
        %3185 = vmatmul.f32.gmra.mxu0 %v3116
        %v3186 = vpop.f32.mrf.mxu0
        %v3187 = vadd.f32 0.0, %v3186
        %3188 = vmatmul.f32.gmra.mxu0 %v3119
        %v3189 = vpop.f32.mrf.mxu0
        %v3190 = vadd.f32 0.0, %v3189
        %3191 = vmatmul.f32.gmra.mxu0 %v3122
        %v3192 = vpop.f32.mrf.mxu0
        %v3193 = vadd.f32 0.0, %v3192
        %3194 = vmatmul.f32.gmra.mxu0 %v3125
        %v3195 = vpop.f32.mrf.mxu0
        %v3196 = vadd.f32 0.0, %v3195
        %3197 = vmatmul.f32.gmra.mxu0 %v3128
        %v3198 = vpop.f32.mrf.mxu0
        %v3199 = vadd.f32 0.0, %v3198
        %3200 = vmatmul.f32.gmra.mxu0 %v3131
        %v3201 = vpop.f32.mrf.mxu0
        %v3202 = vadd.f32 0.0, %v3201
        %3203 = vmatmul.f32.gmra.mxu0 %v3134
        %v3204 = vpop.f32.mrf.mxu0
        %v3205 = vadd.f32 0.0, %v3204
        %3206 = vmatmul.f32.gmra.mxu0 %v3137
        %v3207 = vpop.f32.mrf.mxu0
        %v3208 = vadd.f32 0.0, %v3207
        %3209 = vmatmul.f32.gmra.mxu0 %v3140
        %v3210 = vpop.f32.mrf.mxu0
        %v3211 = vadd.f32 0.0, %v3210
        %3212 = vmatmul.f32.gmra.mxu0 %v3143
        %v3213 = vpop.f32.mrf.mxu0
        %v3214 = vadd.f32 0.0, %v3213
        %3215 = vmatmul.f32.gmra.mxu0 %v3146
        %v3216 = vpop.f32.mrf.mxu0
        %v3217 = vadd.f32 0.0, %v3216
        %3218 = vmatmul.f32.gmra.mxu0 %v3149
        %v3219 = vpop.f32.mrf.mxu0
        %v3220 = vadd.f32 0.0, %v3219
        %3221 = vmatmul.f32.gmra.mxu0 %v3152
        %v3222 = vpop.f32.mrf.mxu0
        %v3223 = vadd.f32 0.0, %v3222
        %3224 = vmatmul.f32.gmra.mxu0 %v3155
        %v3225 = vpop.f32.mrf.mxu0
        %v3226 = vadd.f32 0.0, %v3225
        %3227 = vmatmul.f32.gmra.mxu0 %v3158
        %v3228 = vpop.f32.mrf.mxu0
        %v3229 = vadd.f32 0.0, %v3228
        %3230 = vdwg.mxu0
        %v3231 = vadd.f32 %v3068, %v3178
        %v3232 = vadd.f32 %v3069, %v3181
        %v3233 = vadd.f32 %v3070, %v3184
        %v3234 = vadd.f32 %v3071, %v3187
        %v3235 = vadd.f32 %v3072, %v3190
        %v3236 = vadd.f32 %v3073, %v3193
        %v3237 = vadd.f32 %v3074, %v3196
        %v3238 = vadd.f32 %v3075, %v3199
        %v3239 = vadd.f32 %v3076, %v3202
        %v3240 = vadd.f32 %v3077, %v3205
        %v3241 = vadd.f32 %v3078, %v3208
        %v3242 = vadd.f32 %v3079, %v3211
        %v3243 = vadd.f32 %v3080, %v3214
        %v3244 = vadd.f32 %v3081, %v3217
        %v3245 = vadd.f32 %v3082, %v3220
        %v3246 = vadd.f32 %v3083, %v3223
        %v3247 = vadd.f32 %v3084, %v3226
        %v3248 = vadd.f32 %v3085, %v3229
        %v3249 = vld [vmem:[#allocation3 + $0x1e] sm:$0xff]
        %v3250 = vld [vmem:[#allocation3 + $0x26] sm:$0xff]
        %v3251 = vld [vmem:[#allocation3 + $0x2e] sm:$0xff]
        %v3252 = vld [vmem:[#allocation3 + $0x36] sm:$0xff]
        %v3253 = vld [vmem:[#allocation3 + $0x3e] sm:$0xff]
        %v3254 = vld [vmem:[#allocation3 + $0x46] sm:$0xff]
        %v3255 = vld [vmem:[#allocation3 + $0x4e] sm:$0xff]
        %v3256 = vld [vmem:[#allocation3 + $0x56] sm:$0xff]
        %v3257 = vld [vmem:[#allocation3 + $0x5e] sm:$0xff]
        %v3258 = vld [vmem:[#allocation3 + $0x66] sm:$0xff]
        %v3259 = vld [vmem:[#allocation3 + $0x6e] sm:$0xff]
        %v3260 = vld [vmem:[#allocation3 + $0x76] sm:$0xff]
        %v3261 = vld [vmem:[#allocation3 + $0x7e] sm:$0xff]
        %v3262 = vld [vmem:[#allocation3 + $0x86] sm:$0xff]
        %v3263 = vld [vmem:[#allocation3 + $0x8e] sm:$0xff]
        %v3264 = vld [vmem:[#allocation3 + $0x96] sm:$0xff]
        %v3265 = vld [vmem:[#allocation3 + $0x9e] sm:$0xff]
        %v3266 = vld [vmem:[#allocation3 + $0xa6] sm:$0xff]
        %s3267 = scalar_lea.vmem %s3, 96
        %v3268 = vld [vmem:[%s3267] sm:$0xff]
        %v3270 = vsel %vm809, %v3249, 0
        %v3273 = vsel %vm809, %v3250, 0
        %v3276 = vsel %vm809, %v3251, 0
        %v3279 = vsel %vm809, %v3252, 0
        %v3282 = vsel %vm809, %v3253, 0
        %v3285 = vsel %vm809, %v3254, 0
        %v3288 = vsel %vm809, %v3255, 0
        %v3291 = vsel %vm809, %v3256, 0
        %v3294 = vsel %vm809, %v3257, 0
        %v3297 = vsel %vm809, %v3258, 0
        %v3300 = vsel %vm809, %v3259, 0
        %v3303 = vsel %vm809, %v3260, 0
        %v3306 = vsel %vm809, %v3261, 0
        %v3309 = vsel %vm809, %v3262, 0
        %v3312 = vsel %vm809, %v3263, 0
        %v3315 = vsel %vm809, %v3264, 0
        %v3318 = vsel %vm809, %v3265, 0
        %v3321 = vsel %vm809, %v3266, 0
        %3323 = vmatpush.msra.mxu0 0.0
        %3324 = vmatpush.msra.mxu0 0.0
        %3325 = vmatpush.msra.mxu0 0.0
        %3326 = vmatpush.msra.mxu0 0.0
        %3327 = vmatpush.msra.mxu0 0.0
        %3328 = vmatpush.msra.mxu0 0.0
        %3329 = vmatpush.msra.mxu0 0.0
        %3330 = vmatpush.msra.mxu0 0.0
        %3331 = vmatpush.msra.mxu0 0.0
        %3332 = vmatpush.msra.mxu0 0.0
        %3333 = vmatpush.msra.mxu0 0.0
        %3334 = vmatpush.msra.mxu0 0.0
        %3335 = vmatpush.msra.mxu0 0.0
        %3336 = vmatpush.msra.mxu0 0.0
        %3337 = vmatpush.msra.mxu0 0.0
        %3338 = vmatpush.msra.mxu0 %v3268
        %3339 = vmatmul.f32.gmra.mxu0 %v3270
        %v3340 = vpop.f32.mrf.mxu0
        %v3341 = vadd.f32 0.0, %v3340
        %3342 = vmatmul.f32.gmra.mxu0 %v3273
        %v3343 = vpop.f32.mrf.mxu0
        %v3344 = vadd.f32 0.0, %v3343
        %3345 = vmatmul.f32.gmra.mxu0 %v3276
        %v3346 = vpop.f32.mrf.mxu0
        %v3347 = vadd.f32 0.0, %v3346
        %3348 = vmatmul.f32.gmra.mxu0 %v3279
        %v3349 = vpop.f32.mrf.mxu0
        %v3350 = vadd.f32 0.0, %v3349
        %3351 = vmatmul.f32.gmra.mxu0 %v3282
        %v3352 = vpop.f32.mrf.mxu0
        %v3353 = vadd.f32 0.0, %v3352
        %3354 = vmatmul.f32.gmra.mxu0 %v3285
        %v3355 = vpop.f32.mrf.mxu0
        %v3356 = vadd.f32 0.0, %v3355
        %3357 = vmatmul.f32.gmra.mxu0 %v3288
        %v3358 = vpop.f32.mrf.mxu0
        %v3359 = vadd.f32 0.0, %v3358
        %3360 = vmatmul.f32.gmra.mxu0 %v3291
        %v3361 = vpop.f32.mrf.mxu0
        %v3362 = vadd.f32 0.0, %v3361
        %3363 = vmatmul.f32.gmra.mxu0 %v3294
        %v3364 = vpop.f32.mrf.mxu0
        %v3365 = vadd.f32 0.0, %v3364
        %3366 = vmatmul.f32.gmra.mxu0 %v3297
        %v3367 = vpop.f32.mrf.mxu0
        %v3368 = vadd.f32 0.0, %v3367
        %3369 = vmatmul.f32.gmra.mxu0 %v3300
        %v3370 = vpop.f32.mrf.mxu0
        %v3371 = vadd.f32 0.0, %v3370
        %3372 = vmatmul.f32.gmra.mxu0 %v3303
        %v3373 = vpop.f32.mrf.mxu0
        %v3374 = vadd.f32 0.0, %v3373
        %3375 = vmatmul.f32.gmra.mxu0 %v3306
        %v3376 = vpop.f32.mrf.mxu0
        %v3377 = vadd.f32 0.0, %v3376
        %3378 = vmatmul.f32.gmra.mxu0 %v3309
        %v3379 = vpop.f32.mrf.mxu0
        %v3380 = vadd.f32 0.0, %v3379
        %3381 = vmatmul.f32.gmra.mxu0 %v3312
        %v3382 = vpop.f32.mrf.mxu0
        %v3383 = vadd.f32 0.0, %v3382
        %3384 = vmatmul.f32.gmra.mxu0 %v3315
        %v3385 = vpop.f32.mrf.mxu0
        %v3386 = vadd.f32 0.0, %v3385
        %3387 = vmatmul.f32.gmra.mxu0 %v3318
        %v3388 = vpop.f32.mrf.mxu0
        %v3389 = vadd.f32 0.0, %v3388
        %3390 = vmatmul.f32.gmra.mxu0 %v3321
        %v3391 = vpop.f32.mrf.mxu0
        %v3392 = vadd.f32 0.0, %v3391
        %3393 = vdwg.mxu0
        %v3394 = vadd.f32 %v3231, %v3341
        %v3395 = vadd.f32 %v3232, %v3344
        %v3396 = vadd.f32 %v3233, %v3347
        %v3397 = vadd.f32 %v3234, %v3350
        %v3398 = vadd.f32 %v3235, %v3353
        %v3399 = vadd.f32 %v3236, %v3356
        %v3400 = vadd.f32 %v3237, %v3359
        %v3401 = vadd.f32 %v3238, %v3362
        %v3402 = vadd.f32 %v3239, %v3365
        %v3403 = vadd.f32 %v3240, %v3368
        %v3404 = vadd.f32 %v3241, %v3371
        %v3405 = vadd.f32 %v3242, %v3374
        %v3406 = vadd.f32 %v3243, %v3377
        %v3407 = vadd.f32 %v3244, %v3380
        %v3408 = vadd.f32 %v3245, %v3383
        %v3409 = vadd.f32 %v3246, %v3386
        %v3410 = vadd.f32 %v3247, %v3389
        %v3411 = vadd.f32 %v3248, %v3392
        %v3412 = vld [vmem:[#allocation3 + $0x1f] sm:$0xff]
        %v3413 = vld [vmem:[#allocation3 + $0x27] sm:$0xff]
        %v3414 = vld [vmem:[#allocation3 + $0x2f] sm:$0xff]
        %v3415 = vld [vmem:[#allocation3 + $0x37] sm:$0xff]
        %v3416 = vld [vmem:[#allocation3 + $0x3f] sm:$0xff]
        %v3417 = vld [vmem:[#allocation3 + $0x47] sm:$0xff]
        %v3418 = vld [vmem:[#allocation3 + $0x4f] sm:$0xff]
        %v3419 = vld [vmem:[#allocation3 + $0x57] sm:$0xff]
        %v3420 = vld [vmem:[#allocation3 + $0x5f] sm:$0xff]
        %v3421 = vld [vmem:[#allocation3 + $0x67] sm:$0xff]
        %v3422 = vld [vmem:[#allocation3 + $0x6f] sm:$0xff]
        %v3423 = vld [vmem:[#allocation3 + $0x77] sm:$0xff]
        %v3424 = vld [vmem:[#allocation3 + $0x7f] sm:$0xff]
        %v3425 = vld [vmem:[#allocation3 + $0x87] sm:$0xff]
        %v3426 = vld [vmem:[#allocation3 + $0x8f] sm:$0xff]
        %v3427 = vld [vmem:[#allocation3 + $0x97] sm:$0xff]
        %v3428 = vld [vmem:[#allocation3 + $0x9f] sm:$0xff]
        %v3429 = vld [vmem:[#allocation3 + $0xa7] sm:$0xff]
        %s3430 = scalar_lea.vmem %s3, 104
        %v3431 = vld [vmem:[%s3430] sm:$0xff]
        %v3433 = vsel %vm809, %v3412, 0
        %v3436 = vsel %vm809, %v3413, 0
        %v3439 = vsel %vm809, %v3414, 0
        %v3442 = vsel %vm809, %v3415, 0
        %v3445 = vsel %vm809, %v3416, 0
        %v3448 = vsel %vm809, %v3417, 0
        %v3451 = vsel %vm809, %v3418, 0
        %v3454 = vsel %vm809, %v3419, 0
        %v3457 = vsel %vm809, %v3420, 0
        %v3460 = vsel %vm809, %v3421, 0
        %v3463 = vsel %vm809, %v3422, 0
        %v3466 = vsel %vm809, %v3423, 0
        %v3469 = vsel %vm809, %v3424, 0
        %v3472 = vsel %vm809, %v3425, 0
        %v3475 = vsel %vm809, %v3426, 0
        %v3478 = vsel %vm809, %v3427, 0
        %v3481 = vsel %vm809, %v3428, 0
        %v3484 = vsel %vm809, %v3429, 0
        %3486 = vmatpush.msra.mxu0 0.0
        %3487 = vmatpush.msra.mxu0 0.0
        %3488 = vmatpush.msra.mxu0 0.0
        %3489 = vmatpush.msra.mxu0 0.0
        %3490 = vmatpush.msra.mxu0 0.0
        %3491 = vmatpush.msra.mxu0 0.0
        %3492 = vmatpush.msra.mxu0 0.0
        %3493 = vmatpush.msra.mxu0 0.0
        %3494 = vmatpush.msra.mxu0 0.0
        %3495 = vmatpush.msra.mxu0 0.0
        %3496 = vmatpush.msra.mxu0 0.0
        %3497 = vmatpush.msra.mxu0 0.0
        %3498 = vmatpush.msra.mxu0 0.0
        %3499 = vmatpush.msra.mxu0 0.0
        %3500 = vmatpush.msra.mxu0 0.0
        %3501 = vmatpush.msra.mxu0 %v3431
        %3502 = vmatmul.f32.gmra.mxu0 %v3433
        %v3503 = vpop.f32.mrf.mxu0
        %v3504 = vadd.f32 0.0, %v3503
        %3505 = vmatmul.f32.gmra.mxu0 %v3436
        %v3506 = vpop.f32.mrf.mxu0
        %v3507 = vadd.f32 0.0, %v3506
        %3508 = vmatmul.f32.gmra.mxu0 %v3439
        %v3509 = vpop.f32.mrf.mxu0
        %v3510 = vadd.f32 0.0, %v3509
        %3511 = vmatmul.f32.gmra.mxu0 %v3442
        %v3512 = vpop.f32.mrf.mxu0
        %v3513 = vadd.f32 0.0, %v3512
        %3514 = vmatmul.f32.gmra.mxu0 %v3445
        %v3515 = vpop.f32.mrf.mxu0
        %v3516 = vadd.f32 0.0, %v3515
        %3517 = vmatmul.f32.gmra.mxu0 %v3448
        %v3518 = vpop.f32.mrf.mxu0
        %v3519 = vadd.f32 0.0, %v3518
        %3520 = vmatmul.f32.gmra.mxu0 %v3451
        %v3521 = vpop.f32.mrf.mxu0
        %v3522 = vadd.f32 0.0, %v3521
        %3523 = vmatmul.f32.gmra.mxu0 %v3454
        %v3524 = vpop.f32.mrf.mxu0
        %v3525 = vadd.f32 0.0, %v3524
        %3526 = vmatmul.f32.gmra.mxu0 %v3457
        %v3527 = vpop.f32.mrf.mxu0
        %v3528 = vadd.f32 0.0, %v3527
        %3529 = vmatmul.f32.gmra.mxu0 %v3460
        %v3530 = vpop.f32.mrf.mxu0
        %v3531 = vadd.f32 0.0, %v3530
        %3532 = vmatmul.f32.gmra.mxu0 %v3463
        %v3533 = vpop.f32.mrf.mxu0
        %v3534 = vadd.f32 0.0, %v3533
        %3535 = vmatmul.f32.gmra.mxu0 %v3466
        %v3536 = vpop.f32.mrf.mxu0
        %v3537 = vadd.f32 0.0, %v3536
        %3538 = vmatmul.f32.gmra.mxu0 %v3469
        %v3539 = vpop.f32.mrf.mxu0
        %v3540 = vadd.f32 0.0, %v3539
        %3541 = vmatmul.f32.gmra.mxu0 %v3472
        %v3542 = vpop.f32.mrf.mxu0
        %v3543 = vadd.f32 0.0, %v3542
        %3544 = vmatmul.f32.gmra.mxu0 %v3475
        %v3545 = vpop.f32.mrf.mxu0
        %v3546 = vadd.f32 0.0, %v3545
        %3547 = vmatmul.f32.gmra.mxu0 %v3478
        %v3548 = vpop.f32.mrf.mxu0
        %v3549 = vadd.f32 0.0, %v3548
        %3550 = vmatmul.f32.gmra.mxu0 %v3481
        %v3551 = vpop.f32.mrf.mxu0
        %v3552 = vadd.f32 0.0, %v3551
        %3553 = vmatmul.f32.gmra.mxu0 %v3484
        %v3554 = vpop.f32.mrf.mxu0
        %v3555 = vadd.f32 0.0, %v3554
        %3556 = vdwg.mxu0
        %v3557 = vadd.f32 %v3394, %v3504
        %v3558 = vadd.f32 %v3395, %v3507
        %v3559 = vadd.f32 %v3396, %v3510
        %v3560 = vadd.f32 %v3397, %v3513
        %v3561 = vadd.f32 %v3398, %v3516
        %v3562 = vadd.f32 %v3399, %v3519
        %v3563 = vadd.f32 %v3400, %v3522
        %v3564 = vadd.f32 %v3401, %v3525
        %v3565 = vadd.f32 %v3402, %v3528
        %v3566 = vadd.f32 %v3403, %v3531
        %v3567 = vadd.f32 %v3404, %v3534
        %v3568 = vadd.f32 %v3405, %v3537
        %v3569 = vadd.f32 %v3406, %v3540
        %v3570 = vadd.f32 %v3407, %v3543
        %v3571 = vadd.f32 %v3408, %v3546
        %v3572 = vadd.f32 %v3409, %v3549
        %v3573 = vadd.f32 %v3410, %v3552
        %v3574 = vadd.f32 %v3411, %v3555
        %v3575 = vld [vmem:[#allocation3 + $0x20] sm:$0xff]
        %v3576 = vld [vmem:[#allocation3 + $0x28] sm:$0xff]
        %v3577 = vld [vmem:[#allocation3 + $0x30] sm:$0xff]
        %v3578 = vld [vmem:[#allocation3 + $0x38] sm:$0xff]
        %v3579 = vld [vmem:[#allocation3 + $0x40] sm:$0xff]
        %v3580 = vld [vmem:[#allocation3 + $0x48] sm:$0xff]
        %v3581 = vld [vmem:[#allocation3 + $0x50] sm:$0xff]
        %v3582 = vld [vmem:[#allocation3 + $0x58] sm:$0xff]
        %v3583 = vld [vmem:[#allocation3 + $0x60] sm:$0xff]
        %v3584 = vld [vmem:[#allocation3 + $0x68] sm:$0xff]
        %v3585 = vld [vmem:[#allocation3 + $0x70] sm:$0xff]
        %v3586 = vld [vmem:[#allocation3 + $0x78] sm:$0xff]
        %v3587 = vld [vmem:[#allocation3 + $0x80] sm:$0xff]
        %v3588 = vld [vmem:[#allocation3 + $0x88] sm:$0xff]
        %v3589 = vld [vmem:[#allocation3 + $0x90] sm:$0xff]
        %v3590 = vld [vmem:[#allocation3 + $0x98] sm:$0xff]
        %v3591 = vld [vmem:[#allocation3 + $0xa0] sm:$0xff]
        %v3592 = vld [vmem:[#allocation3 + $0xa8] sm:$0xff]
        %s3593 = scalar_lea.vmem %s3, 112
        %v3594 = vld [vmem:[%s3593] sm:$0xff]
        %v3596 = vsel %vm809, %v3575, 0
        %v3599 = vsel %vm809, %v3576, 0
        %v3602 = vsel %vm809, %v3577, 0
        %v3605 = vsel %vm809, %v3578, 0
        %v3608 = vsel %vm809, %v3579, 0
        %v3611 = vsel %vm809, %v3580, 0
        %v3614 = vsel %vm809, %v3581, 0
        %v3617 = vsel %vm809, %v3582, 0
        %v3620 = vsel %vm809, %v3583, 0
        %v3623 = vsel %vm809, %v3584, 0
        %v3626 = vsel %vm809, %v3585, 0
        %v3629 = vsel %vm809, %v3586, 0
        %v3632 = vsel %vm809, %v3587, 0
        %v3635 = vsel %vm809, %v3588, 0
        %v3638 = vsel %vm809, %v3589, 0
        %v3641 = vsel %vm809, %v3590, 0
        %v3644 = vsel %vm809, %v3591, 0
        %v3647 = vsel %vm809, %v3592, 0
        %3649 = vmatpush.msra.mxu0 0.0
        %3650 = vmatpush.msra.mxu0 0.0
        %3651 = vmatpush.msra.mxu0 0.0
        %3652 = vmatpush.msra.mxu0 0.0
        %3653 = vmatpush.msra.mxu0 0.0
        %3654 = vmatpush.msra.mxu0 0.0
        %3655 = vmatpush.msra.mxu0 0.0
        %3656 = vmatpush.msra.mxu0 0.0
        %3657 = vmatpush.msra.mxu0 0.0
        %3658 = vmatpush.msra.mxu0 0.0
        %3659 = vmatpush.msra.mxu0 0.0
        %3660 = vmatpush.msra.mxu0 0.0
        %3661 = vmatpush.msra.mxu0 0.0
        %3662 = vmatpush.msra.mxu0 0.0
        %3663 = vmatpush.msra.mxu0 0.0
        %3664 = vmatpush.msra.mxu0 %v3594
        %3665 = vmatmul.f32.gmra.mxu0 %v3596
        %v3666 = vpop.f32.mrf.mxu0
        %v3667 = vadd.f32 0.0, %v3666
        %3668 = vmatmul.f32.gmra.mxu0 %v3599
        %v3669 = vpop.f32.mrf.mxu0
        %v3670 = vadd.f32 0.0, %v3669
        %3671 = vmatmul.f32.gmra.mxu0 %v3602
        %v3672 = vpop.f32.mrf.mxu0
        %v3673 = vadd.f32 0.0, %v3672
        %3674 = vmatmul.f32.gmra.mxu0 %v3605
        %v3675 = vpop.f32.mrf.mxu0
        %v3676 = vadd.f32 0.0, %v3675
        %3677 = vmatmul.f32.gmra.mxu0 %v3608
        %v3678 = vpop.f32.mrf.mxu0
        %v3679 = vadd.f32 0.0, %v3678
        %3680 = vmatmul.f32.gmra.mxu0 %v3611
        %v3681 = vpop.f32.mrf.mxu0
        %v3682 = vadd.f32 0.0, %v3681
        %3683 = vmatmul.f32.gmra.mxu0 %v3614
        %v3684 = vpop.f32.mrf.mxu0
        %v3685 = vadd.f32 0.0, %v3684
        %3686 = vmatmul.f32.gmra.mxu0 %v3617
        %v3687 = vpop.f32.mrf.mxu0
        %v3688 = vadd.f32 0.0, %v3687
        %3689 = vmatmul.f32.gmra.mxu0 %v3620
        %v3690 = vpop.f32.mrf.mxu0
        %v3691 = vadd.f32 0.0, %v3690
        %3692 = vmatmul.f32.gmra.mxu0 %v3623
        %v3693 = vpop.f32.mrf.mxu0
        %v3694 = vadd.f32 0.0, %v3693
        %3695 = vmatmul.f32.gmra.mxu0 %v3626
        %v3696 = vpop.f32.mrf.mxu0
        %v3697 = vadd.f32 0.0, %v3696
        %3698 = vmatmul.f32.gmra.mxu0 %v3629
        %v3699 = vpop.f32.mrf.mxu0
        %v3700 = vadd.f32 0.0, %v3699
        %3701 = vmatmul.f32.gmra.mxu0 %v3632
        %v3702 = vpop.f32.mrf.mxu0
        %v3703 = vadd.f32 0.0, %v3702
        %3704 = vmatmul.f32.gmra.mxu0 %v3635
        %v3705 = vpop.f32.mrf.mxu0
        %v3706 = vadd.f32 0.0, %v3705
        %3707 = vmatmul.f32.gmra.mxu0 %v3638
        %v3708 = vpop.f32.mrf.mxu0
        %v3709 = vadd.f32 0.0, %v3708
        %3710 = vmatmul.f32.gmra.mxu0 %v3641
        %v3711 = vpop.f32.mrf.mxu0
        %v3712 = vadd.f32 0.0, %v3711
        %3713 = vmatmul.f32.gmra.mxu0 %v3644
        %v3714 = vpop.f32.mrf.mxu0
        %v3715 = vadd.f32 0.0, %v3714
        %3716 = vmatmul.f32.gmra.mxu0 %v3647
        %v3717 = vpop.f32.mrf.mxu0
        %v3718 = vadd.f32 0.0, %v3717
        %3719 = vdwg.mxu0
        %v3720 = vadd.f32 %v3557, %v3667
        %v3721 = vadd.f32 %v3558, %v3670
        %v3722 = vadd.f32 %v3559, %v3673
        %v3723 = vadd.f32 %v3560, %v3676
        %v3724 = vadd.f32 %v3561, %v3679
        %v3725 = vadd.f32 %v3562, %v3682
        %v3726 = vadd.f32 %v3563, %v3685
        %v3727 = vadd.f32 %v3564, %v3688
        %v3728 = vadd.f32 %v3565, %v3691
        %v3729 = vadd.f32 %v3566, %v3694
        %v3730 = vadd.f32 %v3567, %v3697
        %v3731 = vadd.f32 %v3568, %v3700
        %v3732 = vadd.f32 %v3569, %v3703
        %v3733 = vadd.f32 %v3570, %v3706
        %v3734 = vadd.f32 %v3571, %v3709
        %v3735 = vadd.f32 %v3572, %v3712
        %v3736 = vadd.f32 %v3573, %v3715
        %v3737 = vadd.f32 %v3574, %v3718
        %v3738 = vld [vmem:[#allocation3 + $0x2a] sm:$0xff]
        %v3739 = vld [vmem:[#allocation3 + $0x32] sm:$0xff]
        %v3740 = vld [vmem:[#allocation3 + $0x3a] sm:$0xff]
        %v3741 = vld [vmem:[#allocation3 + $0x42] sm:$0xff]
        %v3742 = vld [vmem:[#allocation3 + $0x4a] sm:$0xff]
        %v3743 = vld [vmem:[#allocation3 + $0x52] sm:$0xff]
        %v3744 = vld [vmem:[#allocation3 + $0x5a] sm:$0xff]
        %v3745 = vld [vmem:[#allocation3 + $0x62] sm:$0xff]
        %v3746 = vld [vmem:[#allocation3 + $0x6a] sm:$0xff]
        %v3747 = vld [vmem:[#allocation3 + $0x72] sm:$0xff]
        %v3748 = vld [vmem:[#allocation3 + $0x7a] sm:$0xff]
        %v3749 = vld [vmem:[#allocation3 + $0x82] sm:$0xff]
        %v3750 = vld [vmem:[#allocation3 + $0x8a] sm:$0xff]
        %v3751 = vld [vmem:[#allocation3 + $0x92] sm:$0xff]
        %v3752 = vld [vmem:[#allocation3 + $0x9a] sm:$0xff]
        %v3753 = vld [vmem:[#allocation3 + $0xa2] sm:$0xff]
        %v3754 = vld [vmem:[#allocation3 + $0xaa] sm:$0xff]
        %v3755 = vld [vmem:[#allocation3 + $0xb2] sm:$0xff]
        %s3756 = scalar_lea.vmem %s3, 120
        %v3757 = vld [vmem:[%s3756] sm:$0xff]
        %v3759 = vsel %vm809, %v3738, 0
        %v3762 = vsel %vm809, %v3739, 0
        %v3765 = vsel %vm809, %v3740, 0
        %v3768 = vsel %vm809, %v3741, 0
        %v3771 = vsel %vm809, %v3742, 0
        %v3774 = vsel %vm809, %v3743, 0
        %v3777 = vsel %vm809, %v3744, 0
        %v3780 = vsel %vm809, %v3745, 0
        %v3783 = vsel %vm809, %v3746, 0
        %v3786 = vsel %vm809, %v3747, 0
        %v3789 = vsel %vm809, %v3748, 0
        %v3792 = vsel %vm809, %v3749, 0
        %v3795 = vsel %vm809, %v3750, 0
        %v3798 = vsel %vm809, %v3751, 0
        %v3801 = vsel %vm809, %v3752, 0
        %v3804 = vsel %vm809, %v3753, 0
        %v3807 = vsel %vm809, %v3754, 0
        %v3810 = vsel %vm809, %v3755, 0
        %3812 = vmatpush.msra.mxu0 0.0
        %3813 = vmatpush.msra.mxu0 0.0
        %3814 = vmatpush.msra.mxu0 0.0
        %3815 = vmatpush.msra.mxu0 0.0
        %3816 = vmatpush.msra.mxu0 0.0
        %3817 = vmatpush.msra.mxu0 0.0
        %3818 = vmatpush.msra.mxu0 0.0
        %3819 = vmatpush.msra.mxu0 0.0
        %3820 = vmatpush.msra.mxu0 0.0
        %3821 = vmatpush.msra.mxu0 0.0
        %3822 = vmatpush.msra.mxu0 0.0
        %3823 = vmatpush.msra.mxu0 0.0
        %3824 = vmatpush.msra.mxu0 0.0
        %3825 = vmatpush.msra.mxu0 0.0
        %3826 = vmatpush.msra.mxu0 0.0
        %3827 = vmatpush.msra.mxu0 %v3757
        %3828 = vmatmul.f32.gmra.mxu0 %v3759
        %v3829 = vpop.f32.mrf.mxu0
        %v3830 = vadd.f32 0.0, %v3829
        %3831 = vmatmul.f32.gmra.mxu0 %v3762
        %v3832 = vpop.f32.mrf.mxu0
        %v3833 = vadd.f32 0.0, %v3832
        %3834 = vmatmul.f32.gmra.mxu0 %v3765
        %v3835 = vpop.f32.mrf.mxu0
        %v3836 = vadd.f32 0.0, %v3835
        %3837 = vmatmul.f32.gmra.mxu0 %v3768
        %v3838 = vpop.f32.mrf.mxu0
        %v3839 = vadd.f32 0.0, %v3838
        %3840 = vmatmul.f32.gmra.mxu0 %v3771
        %v3841 = vpop.f32.mrf.mxu0
        %v3842 = vadd.f32 0.0, %v3841
        %3843 = vmatmul.f32.gmra.mxu0 %v3774
        %v3844 = vpop.f32.mrf.mxu0
        %v3845 = vadd.f32 0.0, %v3844
        %3846 = vmatmul.f32.gmra.mxu0 %v3777
        %v3847 = vpop.f32.mrf.mxu0
        %v3848 = vadd.f32 0.0, %v3847
        %3849 = vmatmul.f32.gmra.mxu0 %v3780
        %v3850 = vpop.f32.mrf.mxu0
        %v3851 = vadd.f32 0.0, %v3850
        %3852 = vmatmul.f32.gmra.mxu0 %v3783
        %v3853 = vpop.f32.mrf.mxu0
        %v3854 = vadd.f32 0.0, %v3853
        %3855 = vmatmul.f32.gmra.mxu0 %v3786
        %v3856 = vpop.f32.mrf.mxu0
        %v3857 = vadd.f32 0.0, %v3856
        %3858 = vmatmul.f32.gmra.mxu0 %v3789
        %v3859 = vpop.f32.mrf.mxu0
        %v3860 = vadd.f32 0.0, %v3859
        %3861 = vmatmul.f32.gmra.mxu0 %v3792
        %v3862 = vpop.f32.mrf.mxu0
        %v3863 = vadd.f32 0.0, %v3862
        %3864 = vmatmul.f32.gmra.mxu0 %v3795
        %v3865 = vpop.f32.mrf.mxu0
        %v3866 = vadd.f32 0.0, %v3865
        %3867 = vmatmul.f32.gmra.mxu0 %v3798
        %v3868 = vpop.f32.mrf.mxu0
        %v3869 = vadd.f32 0.0, %v3868
        %3870 = vmatmul.f32.gmra.mxu0 %v3801
        %v3871 = vpop.f32.mrf.mxu0
        %v3872 = vadd.f32 0.0, %v3871
        %3873 = vmatmul.f32.gmra.mxu0 %v3804
        %v3874 = vpop.f32.mrf.mxu0
        %v3875 = vadd.f32 0.0, %v3874
        %3876 = vmatmul.f32.gmra.mxu0 %v3807
        %v3877 = vpop.f32.mrf.mxu0
        %v3878 = vadd.f32 0.0, %v3877
        %3879 = vmatmul.f32.gmra.mxu0 %v3810
        %v3880 = vpop.f32.mrf.mxu0
        %v3881 = vadd.f32 0.0, %v3880
        %3882 = vdwg.mxu0
        %v3883 = vadd.f32 %v3720, %v3830
        %v3884 = vadd.f32 %v3721, %v3833
        %v3885 = vadd.f32 %v3722, %v3836
        %v3886 = vadd.f32 %v3723, %v3839
        %v3887 = vadd.f32 %v3724, %v3842
        %v3888 = vadd.f32 %v3725, %v3845
        %v3889 = vadd.f32 %v3726, %v3848
        %v3890 = vadd.f32 %v3727, %v3851
        %v3891 = vadd.f32 %v3728, %v3854
        %v3892 = vadd.f32 %v3729, %v3857
        %v3893 = vadd.f32 %v3730, %v3860
        %v3894 = vadd.f32 %v3731, %v3863
        %v3895 = vadd.f32 %v3732, %v3866
        %v3896 = vadd.f32 %v3733, %v3869
        %v3897 = vadd.f32 %v3734, %v3872
        %v3898 = vadd.f32 %v3735, %v3875
        %v3899 = vadd.f32 %v3736, %v3878
        %v3900 = vadd.f32 %v3737, %v3881
        %v3901 = vld [vmem:[#allocation3 + $0x2b] sm:$0xff]
        %v3902 = vld [vmem:[#allocation3 + $0x33] sm:$0xff]
        %v3903 = vld [vmem:[#allocation3 + $0x3b] sm:$0xff]
        %v3904 = vld [vmem:[#allocation3 + $0x43] sm:$0xff]
        %v3905 = vld [vmem:[#allocation3 + $0x4b] sm:$0xff]
        %v3906 = vld [vmem:[#allocation3 + $0x53] sm:$0xff]
        %v3907 = vld [vmem:[#allocation3 + $0x5b] sm:$0xff]
        %v3908 = vld [vmem:[#allocation3 + $0x63] sm:$0xff]
        %v3909 = vld [vmem:[#allocation3 + $0x6b] sm:$0xff]
        %v3910 = vld [vmem:[#allocation3 + $0x73] sm:$0xff]
        %v3911 = vld [vmem:[#allocation3 + $0x7b] sm:$0xff]
        %v3912 = vld [vmem:[#allocation3 + $0x83] sm:$0xff]
        %v3913 = vld [vmem:[#allocation3 + $0x8b] sm:$0xff]
        %v3914 = vld [vmem:[#allocation3 + $0x93] sm:$0xff]
        %v3915 = vld [vmem:[#allocation3 + $0x9b] sm:$0xff]
        %v3916 = vld [vmem:[#allocation3 + $0xa3] sm:$0xff]
        %v3917 = vld [vmem:[#allocation3 + $0xab] sm:$0xff]
        %v3918 = vld [vmem:[#allocation3 + $0xb3] sm:$0xff]
        %s3919 = scalar_lea.vmem %s3, 128
        %v3920 = vld [vmem:[%s3919] sm:$0xff]
        %v3922 = vsel %vm809, %v3901, 0
        %v3925 = vsel %vm809, %v3902, 0
        %v3928 = vsel %vm809, %v3903, 0
        %v3931 = vsel %vm809, %v3904, 0
        %v3934 = vsel %vm809, %v3905, 0
        %v3937 = vsel %vm809, %v3906, 0
        %v3940 = vsel %vm809, %v3907, 0
        %v3943 = vsel %vm809, %v3908, 0
        %v3946 = vsel %vm809, %v3909, 0
        %v3949 = vsel %vm809, %v3910, 0
        %v3952 = vsel %vm809, %v3911, 0
        %v3955 = vsel %vm809, %v3912, 0
        %v3958 = vsel %vm809, %v3913, 0
        %v3961 = vsel %vm809, %v3914, 0
        %v3964 = vsel %vm809, %v3915, 0
        %v3967 = vsel %vm809, %v3916, 0
        %v3970 = vsel %vm809, %v3917, 0
        %v3973 = vsel %vm809, %v3918, 0
        %3975 = vmatpush.msra.mxu0 0.0
        %3976 = vmatpush.msra.mxu0 0.0
        %3977 = vmatpush.msra.mxu0 0.0
        %3978 = vmatpush.msra.mxu0 0.0
        %3979 = vmatpush.msra.mxu0 0.0
        %3980 = vmatpush.msra.mxu0 0.0
        %3981 = vmatpush.msra.mxu0 0.0
        %3982 = vmatpush.msra.mxu0 0.0
        %3983 = vmatpush.msra.mxu0 0.0
        %3984 = vmatpush.msra.mxu0 0.0
        %3985 = vmatpush.msra.mxu0 0.0
        %3986 = vmatpush.msra.mxu0 0.0
        %3987 = vmatpush.msra.mxu0 0.0
        %3988 = vmatpush.msra.mxu0 0.0
        %3989 = vmatpush.msra.mxu0 0.0
        %3990 = vmatpush.msra.mxu0 %v3920
        %3991 = vmatmul.f32.gmra.mxu0 %v3922
        %v3992 = vpop.f32.mrf.mxu0
        %v3993 = vadd.f32 0.0, %v3992
        %3994 = vmatmul.f32.gmra.mxu0 %v3925
        %v3995 = vpop.f32.mrf.mxu0
        %v3996 = vadd.f32 0.0, %v3995
        %3997 = vmatmul.f32.gmra.mxu0 %v3928
        %v3998 = vpop.f32.mrf.mxu0
        %v3999 = vadd.f32 0.0, %v3998
        %4000 = vmatmul.f32.gmra.mxu0 %v3931
        %v4001 = vpop.f32.mrf.mxu0
        %v4002 = vadd.f32 0.0, %v4001
        %4003 = vmatmul.f32.gmra.mxu0 %v3934
        %v4004 = vpop.f32.mrf.mxu0
        %v4005 = vadd.f32 0.0, %v4004
        %4006 = vmatmul.f32.gmra.mxu0 %v3937
        %v4007 = vpop.f32.mrf.mxu0
        %v4008 = vadd.f32 0.0, %v4007
        %4009 = vmatmul.f32.gmra.mxu0 %v3940
        %v4010 = vpop.f32.mrf.mxu0
        %v4011 = vadd.f32 0.0, %v4010
        %4012 = vmatmul.f32.gmra.mxu0 %v3943
        %v4013 = vpop.f32.mrf.mxu0
        %v4014 = vadd.f32 0.0, %v4013
        %4015 = vmatmul.f32.gmra.mxu0 %v3946
        %v4016 = vpop.f32.mrf.mxu0
        %v4017 = vadd.f32 0.0, %v4016
        %4018 = vmatmul.f32.gmra.mxu0 %v3949
        %v4019 = vpop.f32.mrf.mxu0
        %v4020 = vadd.f32 0.0, %v4019
        %4021 = vmatmul.f32.gmra.mxu0 %v3952
        %v4022 = vpop.f32.mrf.mxu0
        %v4023 = vadd.f32 0.0, %v4022
        %4024 = vmatmul.f32.gmra.mxu0 %v3955
        %v4025 = vpop.f32.mrf.mxu0
        %v4026 = vadd.f32 0.0, %v4025
        %4027 = vmatmul.f32.gmra.mxu0 %v3958
        %v4028 = vpop.f32.mrf.mxu0
        %v4029 = vadd.f32 0.0, %v4028
        %4030 = vmatmul.f32.gmra.mxu0 %v3961
        %v4031 = vpop.f32.mrf.mxu0
        %v4032 = vadd.f32 0.0, %v4031
        %4033 = vmatmul.f32.gmra.mxu0 %v3964
        %v4034 = vpop.f32.mrf.mxu0
        %v4035 = vadd.f32 0.0, %v4034
        %4036 = vmatmul.f32.gmra.mxu0 %v3967
        %v4037 = vpop.f32.mrf.mxu0
        %v4038 = vadd.f32 0.0, %v4037
        %4039 = vmatmul.f32.gmra.mxu0 %v3970
        %v4040 = vpop.f32.mrf.mxu0
        %v4041 = vadd.f32 0.0, %v4040
        %4042 = vmatmul.f32.gmra.mxu0 %v3973
        %v4043 = vpop.f32.mrf.mxu0
        %v4044 = vadd.f32 0.0, %v4043
        %4045 = vdwg.mxu0
        %v4046 = vadd.f32 %v3883, %v3993
        %v4047 = vadd.f32 %v3884, %v3996
        %v4048 = vadd.f32 %v3885, %v3999
        %v4049 = vadd.f32 %v3886, %v4002
        %v4050 = vadd.f32 %v3887, %v4005
        %v4051 = vadd.f32 %v3888, %v4008
        %v4052 = vadd.f32 %v3889, %v4011
        %v4053 = vadd.f32 %v3890, %v4014
        %v4054 = vadd.f32 %v3891, %v4017
        %v4055 = vadd.f32 %v3892, %v4020
        %v4056 = vadd.f32 %v3893, %v4023
        %v4057 = vadd.f32 %v3894, %v4026
        %v4058 = vadd.f32 %v3895, %v4029
        %v4059 = vadd.f32 %v3896, %v4032
        %v4060 = vadd.f32 %v3897, %v4035
        %v4061 = vadd.f32 %v3898, %v4038
        %v4062 = vadd.f32 %v3899, %v4041
        %v4063 = vadd.f32 %v3900, %v4044
        %v4064 = vld [vmem:[#allocation3 + $0x2c] sm:$0xff]
        %v4065 = vld [vmem:[#allocation3 + $0x34] sm:$0xff]
        %v4066 = vld [vmem:[#allocation3 + $0x3c] sm:$0xff]
        %v4067 = vld [vmem:[#allocation3 + $0x44] sm:$0xff]
        %v4068 = vld [vmem:[#allocation3 + $0x4c] sm:$0xff]
        %v4069 = vld [vmem:[#allocation3 + $0x54] sm:$0xff]
        %v4070 = vld [vmem:[#allocation3 + $0x5c] sm:$0xff]
        %v4071 = vld [vmem:[#allocation3 + $0x64] sm:$0xff]
        %v4072 = vld [vmem:[#allocation3 + $0x6c] sm:$0xff]
        %v4073 = vld [vmem:[#allocation3 + $0x74] sm:$0xff]
        %v4074 = vld [vmem:[#allocation3 + $0x7c] sm:$0xff]
        %v4075 = vld [vmem:[#allocation3 + $0x84] sm:$0xff]
        %v4076 = vld [vmem:[#allocation3 + $0x8c] sm:$0xff]
        %v4077 = vld [vmem:[#allocation3 + $0x94] sm:$0xff]
        %v4078 = vld [vmem:[#allocation3 + $0x9c] sm:$0xff]
        %v4079 = vld [vmem:[#allocation3 + $0xa4] sm:$0xff]
        %v4080 = vld [vmem:[#allocation3 + $0xac] sm:$0xff]
        %v4081 = vld [vmem:[#allocation3 + $0xb4] sm:$0xff]
        %s4082 = scalar_lea.vmem %s3, 136
        %v4083 = vld [vmem:[%s4082] sm:$0xff]
        %v4085 = vsel %vm809, %v4064, 0
        %v4088 = vsel %vm809, %v4065, 0
        %v4091 = vsel %vm809, %v4066, 0
        %v4094 = vsel %vm809, %v4067, 0
        %v4097 = vsel %vm809, %v4068, 0
        %v4100 = vsel %vm809, %v4069, 0
        %v4103 = vsel %vm809, %v4070, 0
        %v4106 = vsel %vm809, %v4071, 0
        %v4109 = vsel %vm809, %v4072, 0
        %v4112 = vsel %vm809, %v4073, 0
        %v4115 = vsel %vm809, %v4074, 0
        %v4118 = vsel %vm809, %v4075, 0
        %v4121 = vsel %vm809, %v4076, 0
        %v4124 = vsel %vm809, %v4077, 0
        %v4127 = vsel %vm809, %v4078, 0
        %v4130 = vsel %vm809, %v4079, 0
        %v4133 = vsel %vm809, %v4080, 0
        %v4136 = vsel %vm809, %v4081, 0
        %4138 = vmatpush.msra.mxu0 0.0
        %4139 = vmatpush.msra.mxu0 0.0
        %4140 = vmatpush.msra.mxu0 0.0
        %4141 = vmatpush.msra.mxu0 0.0
        %4142 = vmatpush.msra.mxu0 0.0
        %4143 = vmatpush.msra.mxu0 0.0
        %4144 = vmatpush.msra.mxu0 0.0
        %4145 = vmatpush.msra.mxu0 0.0
        %4146 = vmatpush.msra.mxu0 0.0
        %4147 = vmatpush.msra.mxu0 0.0
        %4148 = vmatpush.msra.mxu0 0.0
        %4149 = vmatpush.msra.mxu0 0.0
        %4150 = vmatpush.msra.mxu0 0.0
        %4151 = vmatpush.msra.mxu0 0.0
        %4152 = vmatpush.msra.mxu0 0.0
        %4153 = vmatpush.msra.mxu0 %v4083
        %4154 = vmatmul.f32.gmra.mxu0 %v4085
        %v4155 = vpop.f32.mrf.mxu0
        %v4156 = vadd.f32 0.0, %v4155
        %4157 = vmatmul.f32.gmra.mxu0 %v4088
        %v4158 = vpop.f32.mrf.mxu0
        %v4159 = vadd.f32 0.0, %v4158
        %4160 = vmatmul.f32.gmra.mxu0 %v4091
        %v4161 = vpop.f32.mrf.mxu0
        %v4162 = vadd.f32 0.0, %v4161
        %4163 = vmatmul.f32.gmra.mxu0 %v4094
        %v4164 = vpop.f32.mrf.mxu0
        %v4165 = vadd.f32 0.0, %v4164
        %4166 = vmatmul.f32.gmra.mxu0 %v4097
        %v4167 = vpop.f32.mrf.mxu0
        %v4168 = vadd.f32 0.0, %v4167
        %4169 = vmatmul.f32.gmra.mxu0 %v4100
        %v4170 = vpop.f32.mrf.mxu0
        %v4171 = vadd.f32 0.0, %v4170
        %4172 = vmatmul.f32.gmra.mxu0 %v4103
        %v4173 = vpop.f32.mrf.mxu0
        %v4174 = vadd.f32 0.0, %v4173
        %4175 = vmatmul.f32.gmra.mxu0 %v4106
        %v4176 = vpop.f32.mrf.mxu0
        %v4177 = vadd.f32 0.0, %v4176
        %4178 = vmatmul.f32.gmra.mxu0 %v4109
        %v4179 = vpop.f32.mrf.mxu0
        %v4180 = vadd.f32 0.0, %v4179
        %4181 = vmatmul.f32.gmra.mxu0 %v4112
        %v4182 = vpop.f32.mrf.mxu0
        %v4183 = vadd.f32 0.0, %v4182
        %4184 = vmatmul.f32.gmra.mxu0 %v4115
        %v4185 = vpop.f32.mrf.mxu0
        %v4186 = vadd.f32 0.0, %v4185
        %4187 = vmatmul.f32.gmra.mxu0 %v4118
        %v4188 = vpop.f32.mrf.mxu0
        %v4189 = vadd.f32 0.0, %v4188
        %4190 = vmatmul.f32.gmra.mxu0 %v4121
        %v4191 = vpop.f32.mrf.mxu0
        %v4192 = vadd.f32 0.0, %v4191
        %4193 = vmatmul.f32.gmra.mxu0 %v4124
        %v4194 = vpop.f32.mrf.mxu0
        %v4195 = vadd.f32 0.0, %v4194
        %4196 = vmatmul.f32.gmra.mxu0 %v4127
        %v4197 = vpop.f32.mrf.mxu0
        %v4198 = vadd.f32 0.0, %v4197
        %4199 = vmatmul.f32.gmra.mxu0 %v4130
        %v4200 = vpop.f32.mrf.mxu0
        %v4201 = vadd.f32 0.0, %v4200
        %4202 = vmatmul.f32.gmra.mxu0 %v4133
        %v4203 = vpop.f32.mrf.mxu0
        %v4204 = vadd.f32 0.0, %v4203
        %4205 = vmatmul.f32.gmra.mxu0 %v4136
        %v4206 = vpop.f32.mrf.mxu0
        %v4207 = vadd.f32 0.0, %v4206
        %4208 = vdwg.mxu0
        %v4209 = vadd.f32 %v4046, %v4156
        %v4210 = vadd.f32 %v4047, %v4159
        %v4211 = vadd.f32 %v4048, %v4162
        %v4212 = vadd.f32 %v4049, %v4165
        %v4213 = vadd.f32 %v4050, %v4168
        %v4214 = vadd.f32 %v4051, %v4171
        %v4215 = vadd.f32 %v4052, %v4174
        %v4216 = vadd.f32 %v4053, %v4177
        %v4217 = vadd.f32 %v4054, %v4180
        %v4218 = vadd.f32 %v4055, %v4183
        %v4219 = vadd.f32 %v4056, %v4186
        %v4220 = vadd.f32 %v4057, %v4189
        %v4221 = vadd.f32 %v4058, %v4192
        %v4222 = vadd.f32 %v4059, %v4195
        %v4223 = vadd.f32 %v4060, %v4198
        %v4224 = vadd.f32 %v4061, %v4201
        %v4225 = vadd.f32 %v4062, %v4204
        %v4226 = vadd.f32 %v4063, %v4207
        %v4227 = vld [vmem:[#allocation3 + $0x2d] sm:$0xff]
        %v4228 = vld [vmem:[#allocation3 + $0x35] sm:$0xff]
        %v4229 = vld [vmem:[#allocation3 + $0x3d] sm:$0xff]
        %v4230 = vld [vmem:[#allocation3 + $0x45] sm:$0xff]
        %v4231 = vld [vmem:[#allocation3 + $0x4d] sm:$0xff]
        %v4232 = vld [vmem:[#allocation3 + $0x55] sm:$0xff]
        %v4233 = vld [vmem:[#allocation3 + $0x5d] sm:$0xff]
        %v4234 = vld [vmem:[#allocation3 + $0x65] sm:$0xff]
        %v4235 = vld [vmem:[#allocation3 + $0x6d] sm:$0xff]
        %v4236 = vld [vmem:[#allocation3 + $0x75] sm:$0xff]
        %v4237 = vld [vmem:[#allocation3 + $0x7d] sm:$0xff]
        %v4238 = vld [vmem:[#allocation3 + $0x85] sm:$0xff]
        %v4239 = vld [vmem:[#allocation3 + $0x8d] sm:$0xff]
        %v4240 = vld [vmem:[#allocation3 + $0x95] sm:$0xff]
        %v4241 = vld [vmem:[#allocation3 + $0x9d] sm:$0xff]
        %v4242 = vld [vmem:[#allocation3 + $0xa5] sm:$0xff]
        %v4243 = vld [vmem:[#allocation3 + $0xad] sm:$0xff]
        %v4244 = vld [vmem:[#allocation3 + $0xb5] sm:$0xff]
        %s4245 = scalar_lea.vmem %s3, 144
        %v4246 = vld [vmem:[%s4245] sm:$0xff]
        %v4248 = vsel %vm809, %v4227, 0
        %v4251 = vsel %vm809, %v4228, 0
        %v4254 = vsel %vm809, %v4229, 0
        %v4257 = vsel %vm809, %v4230, 0
        %v4260 = vsel %vm809, %v4231, 0
        %v4263 = vsel %vm809, %v4232, 0
        %v4266 = vsel %vm809, %v4233, 0
        %v4269 = vsel %vm809, %v4234, 0
        %v4272 = vsel %vm809, %v4235, 0
        %v4275 = vsel %vm809, %v4236, 0
        %v4278 = vsel %vm809, %v4237, 0
        %v4281 = vsel %vm809, %v4238, 0
        %v4284 = vsel %vm809, %v4239, 0
        %v4287 = vsel %vm809, %v4240, 0
        %v4290 = vsel %vm809, %v4241, 0
        %v4293 = vsel %vm809, %v4242, 0
        %v4296 = vsel %vm809, %v4243, 0
        %v4299 = vsel %vm809, %v4244, 0
        %4301 = vmatpush.msra.mxu0 0.0
        %4302 = vmatpush.msra.mxu0 0.0
        %4303 = vmatpush.msra.mxu0 0.0
        %4304 = vmatpush.msra.mxu0 0.0
        %4305 = vmatpush.msra.mxu0 0.0
        %4306 = vmatpush.msra.mxu0 0.0
        %4307 = vmatpush.msra.mxu0 0.0
        %4308 = vmatpush.msra.mxu0 0.0
        %4309 = vmatpush.msra.mxu0 0.0
        %4310 = vmatpush.msra.mxu0 0.0
        %4311 = vmatpush.msra.mxu0 0.0
        %4312 = vmatpush.msra.mxu0 0.0
        %4313 = vmatpush.msra.mxu0 0.0
        %4314 = vmatpush.msra.mxu0 0.0
        %4315 = vmatpush.msra.mxu0 0.0
        %4316 = vmatpush.msra.mxu0 %v4246
        %4317 = vmatmul.f32.gmra.mxu0 %v4248
        %v4318 = vpop.f32.mrf.mxu0
        %v4319 = vadd.f32 0.0, %v4318
        %4320 = vmatmul.f32.gmra.mxu0 %v4251
        %v4321 = vpop.f32.mrf.mxu0
        %v4322 = vadd.f32 0.0, %v4321
        %4323 = vmatmul.f32.gmra.mxu0 %v4254
        %v4324 = vpop.f32.mrf.mxu0
        %v4325 = vadd.f32 0.0, %v4324
        %4326 = vmatmul.f32.gmra.mxu0 %v4257
        %v4327 = vpop.f32.mrf.mxu0
        %v4328 = vadd.f32 0.0, %v4327
        %4329 = vmatmul.f32.gmra.mxu0 %v4260
        %v4330 = vpop.f32.mrf.mxu0
        %v4331 = vadd.f32 0.0, %v4330
        %4332 = vmatmul.f32.gmra.mxu0 %v4263
        %v4333 = vpop.f32.mrf.mxu0
        %v4334 = vadd.f32 0.0, %v4333
        %4335 = vmatmul.f32.gmra.mxu0 %v4266
        %v4336 = vpop.f32.mrf.mxu0
        %v4337 = vadd.f32 0.0, %v4336
        %4338 = vmatmul.f32.gmra.mxu0 %v4269
        %v4339 = vpop.f32.mrf.mxu0
        %v4340 = vadd.f32 0.0, %v4339
        %4341 = vmatmul.f32.gmra.mxu0 %v4272
        %v4342 = vpop.f32.mrf.mxu0
        %v4343 = vadd.f32 0.0, %v4342
        %4344 = vmatmul.f32.gmra.mxu0 %v4275
        %v4345 = vpop.f32.mrf.mxu0
        %v4346 = vadd.f32 0.0, %v4345
        %4347 = vmatmul.f32.gmra.mxu0 %v4278
        %v4348 = vpop.f32.mrf.mxu0
        %v4349 = vadd.f32 0.0, %v4348
        %4350 = vmatmul.f32.gmra.mxu0 %v4281
        %v4351 = vpop.f32.mrf.mxu0
        %v4352 = vadd.f32 0.0, %v4351
        %4353 = vmatmul.f32.gmra.mxu0 %v4284
        %v4354 = vpop.f32.mrf.mxu0
        %v4355 = vadd.f32 0.0, %v4354
        %4356 = vmatmul.f32.gmra.mxu0 %v4287
        %v4357 = vpop.f32.mrf.mxu0
        %v4358 = vadd.f32 0.0, %v4357
        %4359 = vmatmul.f32.gmra.mxu0 %v4290
        %v4360 = vpop.f32.mrf.mxu0
        %v4361 = vadd.f32 0.0, %v4360
        %4362 = vmatmul.f32.gmra.mxu0 %v4293
        %v4363 = vpop.f32.mrf.mxu0
        %v4364 = vadd.f32 0.0, %v4363
        %4365 = vmatmul.f32.gmra.mxu0 %v4296
        %v4366 = vpop.f32.mrf.mxu0
        %v4367 = vadd.f32 0.0, %v4366
        %4368 = vmatmul.f32.gmra.mxu0 %v4299
        %v4369 = vpop.f32.mrf.mxu0
        %v4370 = vadd.f32 0.0, %v4369
        %4371 = vdwg.mxu0
        %v4372 = vadd.f32 %v4209, %v4319
        %v4373 = vadd.f32 %v4210, %v4322
        %v4374 = vadd.f32 %v4211, %v4325
        %v4375 = vadd.f32 %v4212, %v4328
        %v4376 = vadd.f32 %v4213, %v4331
        %v4377 = vadd.f32 %v4214, %v4334
        %v4378 = vadd.f32 %v4215, %v4337
        %v4379 = vadd.f32 %v4216, %v4340
        %v4380 = vadd.f32 %v4217, %v4343
        %v4381 = vadd.f32 %v4218, %v4346
        %v4382 = vadd.f32 %v4219, %v4349
        %v4383 = vadd.f32 %v4220, %v4352
        %v4384 = vadd.f32 %v4221, %v4355
        %v4385 = vadd.f32 %v4222, %v4358
        %v4386 = vadd.f32 %v4223, %v4361
        %v4387 = vadd.f32 %v4224, %v4364
        %v4388 = vadd.f32 %v4225, %v4367
        %v4389 = vadd.f32 %v4226, %v4370
        %v4390 = vld [vmem:[#allocation3 + $0x2e] sm:$0xff]
        %v4391 = vld [vmem:[#allocation3 + $0x36] sm:$0xff]
        %v4392 = vld [vmem:[#allocation3 + $0x3e] sm:$0xff]
        %v4393 = vld [vmem:[#allocation3 + $0x46] sm:$0xff]
        %v4394 = vld [vmem:[#allocation3 + $0x4e] sm:$0xff]
        %v4395 = vld [vmem:[#allocation3 + $0x56] sm:$0xff]
        %v4396 = vld [vmem:[#allocation3 + $0x5e] sm:$0xff]
        %v4397 = vld [vmem:[#allocation3 + $0x66] sm:$0xff]
        %v4398 = vld [vmem:[#allocation3 + $0x6e] sm:$0xff]
        %v4399 = vld [vmem:[#allocation3 + $0x76] sm:$0xff]
        %v4400 = vld [vmem:[#allocation3 + $0x7e] sm:$0xff]
        %v4401 = vld [vmem:[#allocation3 + $0x86] sm:$0xff]
        %v4402 = vld [vmem:[#allocation3 + $0x8e] sm:$0xff]
        %v4403 = vld [vmem:[#allocation3 + $0x96] sm:$0xff]
        %v4404 = vld [vmem:[#allocation3 + $0x9e] sm:$0xff]
        %v4405 = vld [vmem:[#allocation3 + $0xa6] sm:$0xff]
        %v4406 = vld [vmem:[#allocation3 + $0xae] sm:$0xff]
        %v4407 = vld [vmem:[#allocation3 + $0xb6] sm:$0xff]
        %s4408 = scalar_lea.vmem %s3, 152
        %v4409 = vld [vmem:[%s4408] sm:$0xff]
        %v4411 = vsel %vm809, %v4390, 0
        %v4414 = vsel %vm809, %v4391, 0
        %v4417 = vsel %vm809, %v4392, 0
        %v4420 = vsel %vm809, %v4393, 0
        %v4423 = vsel %vm809, %v4394, 0
        %v4426 = vsel %vm809, %v4395, 0
        %v4429 = vsel %vm809, %v4396, 0
        %v4432 = vsel %vm809, %v4397, 0
        %v4435 = vsel %vm809, %v4398, 0
        %v4438 = vsel %vm809, %v4399, 0
        %v4441 = vsel %vm809, %v4400, 0
        %v4444 = vsel %vm809, %v4401, 0
        %v4447 = vsel %vm809, %v4402, 0
        %v4450 = vsel %vm809, %v4403, 0
        %v4453 = vsel %vm809, %v4404, 0
        %v4456 = vsel %vm809, %v4405, 0
        %v4459 = vsel %vm809, %v4406, 0
        %v4462 = vsel %vm809, %v4407, 0
        %4464 = vmatpush.msra.mxu0 0.0
        %4465 = vmatpush.msra.mxu0 0.0
        %4466 = vmatpush.msra.mxu0 0.0
        %4467 = vmatpush.msra.mxu0 0.0
        %4468 = vmatpush.msra.mxu0 0.0
        %4469 = vmatpush.msra.mxu0 0.0
        %4470 = vmatpush.msra.mxu0 0.0
        %4471 = vmatpush.msra.mxu0 0.0
        %4472 = vmatpush.msra.mxu0 0.0
        %4473 = vmatpush.msra.mxu0 0.0
        %4474 = vmatpush.msra.mxu0 0.0
        %4475 = vmatpush.msra.mxu0 0.0
        %4476 = vmatpush.msra.mxu0 0.0
        %4477 = vmatpush.msra.mxu0 0.0
        %4478 = vmatpush.msra.mxu0 0.0
        %4479 = vmatpush.msra.mxu0 %v4409
        %4480 = vmatmul.f32.gmra.mxu0 %v4411
        %v4481 = vpop.f32.mrf.mxu0
        %v4482 = vadd.f32 0.0, %v4481
        %4483 = vmatmul.f32.gmra.mxu0 %v4414
        %v4484 = vpop.f32.mrf.mxu0
        %v4485 = vadd.f32 0.0, %v4484
        %4486 = vmatmul.f32.gmra.mxu0 %v4417
        %v4487 = vpop.f32.mrf.mxu0
        %v4488 = vadd.f32 0.0, %v4487
        %4489 = vmatmul.f32.gmra.mxu0 %v4420
        %v4490 = vpop.f32.mrf.mxu0
        %v4491 = vadd.f32 0.0, %v4490
        %4492 = vmatmul.f32.gmra.mxu0 %v4423
        %v4493 = vpop.f32.mrf.mxu0
        %v4494 = vadd.f32 0.0, %v4493
        %4495 = vmatmul.f32.gmra.mxu0 %v4426
        %v4496 = vpop.f32.mrf.mxu0
        %v4497 = vadd.f32 0.0, %v4496
        %4498 = vmatmul.f32.gmra.mxu0 %v4429
        %v4499 = vpop.f32.mrf.mxu0
        %v4500 = vadd.f32 0.0, %v4499
        %4501 = vmatmul.f32.gmra.mxu0 %v4432
        %v4502 = vpop.f32.mrf.mxu0
        %v4503 = vadd.f32 0.0, %v4502
        %4504 = vmatmul.f32.gmra.mxu0 %v4435
        %v4505 = vpop.f32.mrf.mxu0
        %v4506 = vadd.f32 0.0, %v4505
        %4507 = vmatmul.f32.gmra.mxu0 %v4438
        %v4508 = vpop.f32.mrf.mxu0
        %v4509 = vadd.f32 0.0, %v4508
        %4510 = vmatmul.f32.gmra.mxu0 %v4441
        %v4511 = vpop.f32.mrf.mxu0
        %v4512 = vadd.f32 0.0, %v4511
        %4513 = vmatmul.f32.gmra.mxu0 %v4444
        %v4514 = vpop.f32.mrf.mxu0
        %v4515 = vadd.f32 0.0, %v4514
        %4516 = vmatmul.f32.gmra.mxu0 %v4447
        %v4517 = vpop.f32.mrf.mxu0
        %v4518 = vadd.f32 0.0, %v4517
        %4519 = vmatmul.f32.gmra.mxu0 %v4450
        %v4520 = vpop.f32.mrf.mxu0
        %v4521 = vadd.f32 0.0, %v4520
        %4522 = vmatmul.f32.gmra.mxu0 %v4453
        %v4523 = vpop.f32.mrf.mxu0
        %v4524 = vadd.f32 0.0, %v4523
        %4525 = vmatmul.f32.gmra.mxu0 %v4456
        %v4526 = vpop.f32.mrf.mxu0
        %v4527 = vadd.f32 0.0, %v4526
        %4528 = vmatmul.f32.gmra.mxu0 %v4459
        %v4529 = vpop.f32.mrf.mxu0
        %v4530 = vadd.f32 0.0, %v4529
        %4531 = vmatmul.f32.gmra.mxu0 %v4462
        %v4532 = vpop.f32.mrf.mxu0
        %v4533 = vadd.f32 0.0, %v4532
        %4534 = vdwg.mxu0
        %v4535 = vadd.f32 %v4372, %v4482
        %v4536 = vadd.f32 %v4373, %v4485
        %v4537 = vadd.f32 %v4374, %v4488
        %v4538 = vadd.f32 %v4375, %v4491
        %v4539 = vadd.f32 %v4376, %v4494
        %v4540 = vadd.f32 %v4377, %v4497
        %v4541 = vadd.f32 %v4378, %v4500
        %v4542 = vadd.f32 %v4379, %v4503
        %v4543 = vadd.f32 %v4380, %v4506
        %v4544 = vadd.f32 %v4381, %v4509
        %v4545 = vadd.f32 %v4382, %v4512
        %v4546 = vadd.f32 %v4383, %v4515
        %v4547 = vadd.f32 %v4384, %v4518
        %v4548 = vadd.f32 %v4385, %v4521
        %v4549 = vadd.f32 %v4386, %v4524
        %v4550 = vadd.f32 %v4387, %v4527
        %v4551 = vadd.f32 %v4388, %v4530
        %v4552 = vadd.f32 %v4389, %v4533
        %v4553 = vld [vmem:[#allocation3 + $0x38] sm:$0xff]
        %v4554 = vld [vmem:[#allocation3 + $0x40] sm:$0xff]
        %v4555 = vld [vmem:[#allocation3 + $0x48] sm:$0xff]
        %v4556 = vld [vmem:[#allocation3 + $0x50] sm:$0xff]
        %v4557 = vld [vmem:[#allocation3 + $0x58] sm:$0xff]
        %v4558 = vld [vmem:[#allocation3 + $0x60] sm:$0xff]
        %v4559 = vld [vmem:[#allocation3 + $0x68] sm:$0xff]
        %v4560 = vld [vmem:[#allocation3 + $0x70] sm:$0xff]
        %v4561 = vld [vmem:[#allocation3 + $0x78] sm:$0xff]
        %v4562 = vld [vmem:[#allocation3 + $0x80] sm:$0xff]
        %v4563 = vld [vmem:[#allocation3 + $0x88] sm:$0xff]
        %v4564 = vld [vmem:[#allocation3 + $0x90] sm:$0xff]
        %v4565 = vld [vmem:[#allocation3 + $0x98] sm:$0xff]
        %v4566 = vld [vmem:[#allocation3 + $0xa0] sm:$0xff]
        %v4567 = vld [vmem:[#allocation3 + $0xa8] sm:$0xff]
        %v4568 = vld [vmem:[#allocation3 + $0xb0] sm:$0xff]
        %v4569 = vld [vmem:[#allocation3 + $0xb8] sm:$0xff]
        %v4570 = vld [vmem:[#allocation3 + $0xc0] sm:$0xff]
        %s4571 = scalar_lea.vmem %s3, 160
        %v4572 = vld [vmem:[%s4571] sm:$0xff]
        %v4574 = vsel %vm809, %v4553, 0
        %v4577 = vsel %vm809, %v4554, 0
        %v4580 = vsel %vm809, %v4555, 0
        %v4583 = vsel %vm809, %v4556, 0
        %v4586 = vsel %vm809, %v4557, 0
        %v4589 = vsel %vm809, %v4558, 0
        %v4592 = vsel %vm809, %v4559, 0
        %v4595 = vsel %vm809, %v4560, 0
        %v4598 = vsel %vm809, %v4561, 0
        %v4601 = vsel %vm809, %v4562, 0
        %v4604 = vsel %vm809, %v4563, 0
        %v4607 = vsel %vm809, %v4564, 0
        %v4610 = vsel %vm809, %v4565, 0
        %v4613 = vsel %vm809, %v4566, 0
        %v4616 = vsel %vm809, %v4567, 0
        %v4619 = vsel %vm809, %v4568, 0
        %v4622 = vsel %vm809, %v4569, 0
        %v4625 = vsel %vm809, %v4570, 0
        %4627 = vmatpush.msra.mxu0 0.0
        %4628 = vmatpush.msra.mxu0 0.0
        %4629 = vmatpush.msra.mxu0 0.0
        %4630 = vmatpush.msra.mxu0 0.0
        %4631 = vmatpush.msra.mxu0 0.0
        %4632 = vmatpush.msra.mxu0 0.0
        %4633 = vmatpush.msra.mxu0 0.0
        %4634 = vmatpush.msra.mxu0 0.0
        %4635 = vmatpush.msra.mxu0 0.0
        %4636 = vmatpush.msra.mxu0 0.0
        %4637 = vmatpush.msra.mxu0 0.0
        %4638 = vmatpush.msra.mxu0 0.0
        %4639 = vmatpush.msra.mxu0 0.0
        %4640 = vmatpush.msra.mxu0 0.0
        %4641 = vmatpush.msra.mxu0 0.0
        %4642 = vmatpush.msra.mxu0 %v4572
        %4643 = vmatmul.f32.gmra.mxu0 %v4574
        %v4644 = vpop.f32.mrf.mxu0
        %v4645 = vadd.f32 0.0, %v4644
        %4646 = vmatmul.f32.gmra.mxu0 %v4577
        %v4647 = vpop.f32.mrf.mxu0
        %v4648 = vadd.f32 0.0, %v4647
        %4649 = vmatmul.f32.gmra.mxu0 %v4580
        %v4650 = vpop.f32.mrf.mxu0
        %v4651 = vadd.f32 0.0, %v4650
        %4652 = vmatmul.f32.gmra.mxu0 %v4583
        %v4653 = vpop.f32.mrf.mxu0
        %v4654 = vadd.f32 0.0, %v4653
        %4655 = vmatmul.f32.gmra.mxu0 %v4586
        %v4656 = vpop.f32.mrf.mxu0
        %v4657 = vadd.f32 0.0, %v4656
        %4658 = vmatmul.f32.gmra.mxu0 %v4589
        %v4659 = vpop.f32.mrf.mxu0
        %v4660 = vadd.f32 0.0, %v4659
        %4661 = vmatmul.f32.gmra.mxu0 %v4592
        %v4662 = vpop.f32.mrf.mxu0
        %v4663 = vadd.f32 0.0, %v4662
        %4664 = vmatmul.f32.gmra.mxu0 %v4595
        %v4665 = vpop.f32.mrf.mxu0
        %v4666 = vadd.f32 0.0, %v4665
        %4667 = vmatmul.f32.gmra.mxu0 %v4598
        %v4668 = vpop.f32.mrf.mxu0
        %v4669 = vadd.f32 0.0, %v4668
        %4670 = vmatmul.f32.gmra.mxu0 %v4601
        %v4671 = vpop.f32.mrf.mxu0
        %v4672 = vadd.f32 0.0, %v4671
        %4673 = vmatmul.f32.gmra.mxu0 %v4604
        %v4674 = vpop.f32.mrf.mxu0
        %v4675 = vadd.f32 0.0, %v4674
        %4676 = vmatmul.f32.gmra.mxu0 %v4607
        %v4677 = vpop.f32.mrf.mxu0
        %v4678 = vadd.f32 0.0, %v4677
        %4679 = vmatmul.f32.gmra.mxu0 %v4610
        %v4680 = vpop.f32.mrf.mxu0
        %v4681 = vadd.f32 0.0, %v4680
        %4682 = vmatmul.f32.gmra.mxu0 %v4613
        %v4683 = vpop.f32.mrf.mxu0
        %v4684 = vadd.f32 0.0, %v4683
        %4685 = vmatmul.f32.gmra.mxu0 %v4616
        %v4686 = vpop.f32.mrf.mxu0
        %v4687 = vadd.f32 0.0, %v4686
        %4688 = vmatmul.f32.gmra.mxu0 %v4619
        %v4689 = vpop.f32.mrf.mxu0
        %v4690 = vadd.f32 0.0, %v4689
        %4691 = vmatmul.f32.gmra.mxu0 %v4622
        %v4692 = vpop.f32.mrf.mxu0
        %v4693 = vadd.f32 0.0, %v4692
        %4694 = vmatmul.f32.gmra.mxu0 %v4625
        %v4695 = vpop.f32.mrf.mxu0
        %v4696 = vadd.f32 0.0, %v4695
        %4697 = vdwg.mxu0
        %v4698 = vadd.f32 %v4535, %v4645
        %v4699 = vadd.f32 %v4536, %v4648
        %v4700 = vadd.f32 %v4537, %v4651
        %v4701 = vadd.f32 %v4538, %v4654
        %v4702 = vadd.f32 %v4539, %v4657
        %v4703 = vadd.f32 %v4540, %v4660
        %v4704 = vadd.f32 %v4541, %v4663
        %v4705 = vadd.f32 %v4542, %v4666
        %v4706 = vadd.f32 %v4543, %v4669
        %v4707 = vadd.f32 %v4544, %v4672
        %v4708 = vadd.f32 %v4545, %v4675
        %v4709 = vadd.f32 %v4546, %v4678
        %v4710 = vadd.f32 %v4547, %v4681
        %v4711 = vadd.f32 %v4548, %v4684
        %v4712 = vadd.f32 %v4549, %v4687
        %v4713 = vadd.f32 %v4550, %v4690
        %v4714 = vadd.f32 %v4551, %v4693
        %v4715 = vadd.f32 %v4552, %v4696
        %v4716 = vld [vmem:[#allocation3 + $0x39] sm:$0xff]
        %v4717 = vld [vmem:[#allocation3 + $0x41] sm:$0xff]
        %v4718 = vld [vmem:[#allocation3 + $0x49] sm:$0xff]
        %v4719 = vld [vmem:[#allocation3 + $0x51] sm:$0xff]
        %v4720 = vld [vmem:[#allocation3 + $0x59] sm:$0xff]
        %v4721 = vld [vmem:[#allocation3 + $0x61] sm:$0xff]
        %v4722 = vld [vmem:[#allocation3 + $0x69] sm:$0xff]
        %v4723 = vld [vmem:[#allocation3 + $0x71] sm:$0xff]
        %v4724 = vld [vmem:[#allocation3 + $0x79] sm:$0xff]
        %v4725 = vld [vmem:[#allocation3 + $0x81] sm:$0xff]
        %v4726 = vld [vmem:[#allocation3 + $0x89] sm:$0xff]
        %v4727 = vld [vmem:[#allocation3 + $0x91] sm:$0xff]
        %v4728 = vld [vmem:[#allocation3 + $0x99] sm:$0xff]
        %v4729 = vld [vmem:[#allocation3 + $0xa1] sm:$0xff]
        %v4730 = vld [vmem:[#allocation3 + $0xa9] sm:$0xff]
        %v4731 = vld [vmem:[#allocation3 + $0xb1] sm:$0xff]
        %v4732 = vld [vmem:[#allocation3 + $0xb9] sm:$0xff]
        %v4733 = vld [vmem:[#allocation3 + $0xc1] sm:$0xff]
        %s4734 = scalar_lea.vmem %s3, 168
        %v4735 = vld [vmem:[%s4734] sm:$0xff]
        %v4737 = vsel %vm809, %v4716, 0
        %v4740 = vsel %vm809, %v4717, 0
        %v4743 = vsel %vm809, %v4718, 0
        %v4746 = vsel %vm809, %v4719, 0
        %v4749 = vsel %vm809, %v4720, 0
        %v4752 = vsel %vm809, %v4721, 0
        %v4755 = vsel %vm809, %v4722, 0
        %v4758 = vsel %vm809, %v4723, 0
        %v4761 = vsel %vm809, %v4724, 0
        %v4764 = vsel %vm809, %v4725, 0
        %v4767 = vsel %vm809, %v4726, 0
        %v4770 = vsel %vm809, %v4727, 0
        %v4773 = vsel %vm809, %v4728, 0
        %v4776 = vsel %vm809, %v4729, 0
        %v4779 = vsel %vm809, %v4730, 0
        %v4782 = vsel %vm809, %v4731, 0
        %v4785 = vsel %vm809, %v4732, 0
        %v4788 = vsel %vm809, %v4733, 0
        %4790 = vmatpush.msra.mxu0 0.0
        %4791 = vmatpush.msra.mxu0 0.0
        %4792 = vmatpush.msra.mxu0 0.0
        %4793 = vmatpush.msra.mxu0 0.0
        %4794 = vmatpush.msra.mxu0 0.0
        %4795 = vmatpush.msra.mxu0 0.0
        %4796 = vmatpush.msra.mxu0 0.0
        %4797 = vmatpush.msra.mxu0 0.0
        %4798 = vmatpush.msra.mxu0 0.0
        %4799 = vmatpush.msra.mxu0 0.0
        %4800 = vmatpush.msra.mxu0 0.0
        %4801 = vmatpush.msra.mxu0 0.0
        %4802 = vmatpush.msra.mxu0 0.0
        %4803 = vmatpush.msra.mxu0 0.0
        %4804 = vmatpush.msra.mxu0 0.0
        %4805 = vmatpush.msra.mxu0 %v4735
        %4806 = vmatmul.f32.gmra.mxu0 %v4737
        %v4807 = vpop.f32.mrf.mxu0
        %v4808 = vadd.f32 0.0, %v4807
        %4809 = vmatmul.f32.gmra.mxu0 %v4740
        %v4810 = vpop.f32.mrf.mxu0
        %v4811 = vadd.f32 0.0, %v4810
        %4812 = vmatmul.f32.gmra.mxu0 %v4743
        %v4813 = vpop.f32.mrf.mxu0
        %v4814 = vadd.f32 0.0, %v4813
        %4815 = vmatmul.f32.gmra.mxu0 %v4746
        %v4816 = vpop.f32.mrf.mxu0
        %v4817 = vadd.f32 0.0, %v4816
        %4818 = vmatmul.f32.gmra.mxu0 %v4749
        %v4819 = vpop.f32.mrf.mxu0
        %v4820 = vadd.f32 0.0, %v4819
        %4821 = vmatmul.f32.gmra.mxu0 %v4752
        %v4822 = vpop.f32.mrf.mxu0
        %v4823 = vadd.f32 0.0, %v4822
        %4824 = vmatmul.f32.gmra.mxu0 %v4755
        %v4825 = vpop.f32.mrf.mxu0
        %v4826 = vadd.f32 0.0, %v4825
        %4827 = vmatmul.f32.gmra.mxu0 %v4758
        %v4828 = vpop.f32.mrf.mxu0
        %v4829 = vadd.f32 0.0, %v4828
        %4830 = vmatmul.f32.gmra.mxu0 %v4761
        %v4831 = vpop.f32.mrf.mxu0
        %v4832 = vadd.f32 0.0, %v4831
        %4833 = vmatmul.f32.gmra.mxu0 %v4764
        %v4834 = vpop.f32.mrf.mxu0
        %v4835 = vadd.f32 0.0, %v4834
        %4836 = vmatmul.f32.gmra.mxu0 %v4767
        %v4837 = vpop.f32.mrf.mxu0
        %v4838 = vadd.f32 0.0, %v4837
        %4839 = vmatmul.f32.gmra.mxu0 %v4770
        %v4840 = vpop.f32.mrf.mxu0
        %v4841 = vadd.f32 0.0, %v4840
        %4842 = vmatmul.f32.gmra.mxu0 %v4773
        %v4843 = vpop.f32.mrf.mxu0
        %v4844 = vadd.f32 0.0, %v4843
        %4845 = vmatmul.f32.gmra.mxu0 %v4776
        %v4846 = vpop.f32.mrf.mxu0
        %v4847 = vadd.f32 0.0, %v4846
        %4848 = vmatmul.f32.gmra.mxu0 %v4779
        %v4849 = vpop.f32.mrf.mxu0
        %v4850 = vadd.f32 0.0, %v4849
        %4851 = vmatmul.f32.gmra.mxu0 %v4782
        %v4852 = vpop.f32.mrf.mxu0
        %v4853 = vadd.f32 0.0, %v4852
        %4854 = vmatmul.f32.gmra.mxu0 %v4785
        %v4855 = vpop.f32.mrf.mxu0
        %v4856 = vadd.f32 0.0, %v4855
        %4857 = vmatmul.f32.gmra.mxu0 %v4788
        %v4858 = vpop.f32.mrf.mxu0
        %v4859 = vadd.f32 0.0, %v4858
        %4860 = vdwg.mxu0
        %v4861 = vadd.f32 %v4698, %v4808
        %v4862 = vadd.f32 %v4699, %v4811
        %v4863 = vadd.f32 %v4700, %v4814
        %v4864 = vadd.f32 %v4701, %v4817
        %v4865 = vadd.f32 %v4702, %v4820
        %v4866 = vadd.f32 %v4703, %v4823
        %v4867 = vadd.f32 %v4704, %v4826
        %v4868 = vadd.f32 %v4705, %v4829
        %v4869 = vadd.f32 %v4706, %v4832
        %v4870 = vadd.f32 %v4707, %v4835
        %v4871 = vadd.f32 %v4708, %v4838
        %v4872 = vadd.f32 %v4709, %v4841
        %v4873 = vadd.f32 %v4710, %v4844
        %v4874 = vadd.f32 %v4711, %v4847
        %v4875 = vadd.f32 %v4712, %v4850
        %v4876 = vadd.f32 %v4713, %v4853
        %v4877 = vadd.f32 %v4714, %v4856
        %v4878 = vadd.f32 %v4715, %v4859
        %v4879 = vld [vmem:[#allocation3 + $0x3a] sm:$0xff]
        %v4880 = vld [vmem:[#allocation3 + $0x42] sm:$0xff]
        %v4881 = vld [vmem:[#allocation3 + $0x4a] sm:$0xff]
        %v4882 = vld [vmem:[#allocation3 + $0x52] sm:$0xff]
        %v4883 = vld [vmem:[#allocation3 + $0x5a] sm:$0xff]
        %v4884 = vld [vmem:[#allocation3 + $0x62] sm:$0xff]
        %v4885 = vld [vmem:[#allocation3 + $0x6a] sm:$0xff]
        %v4886 = vld [vmem:[#allocation3 + $0x72] sm:$0xff]
        %v4887 = vld [vmem:[#allocation3 + $0x7a] sm:$0xff]
        %v4888 = vld [vmem:[#allocation3 + $0x82] sm:$0xff]
        %v4889 = vld [vmem:[#allocation3 + $0x8a] sm:$0xff]
        %v4890 = vld [vmem:[#allocation3 + $0x92] sm:$0xff]
        %v4891 = vld [vmem:[#allocation3 + $0x9a] sm:$0xff]
        %v4892 = vld [vmem:[#allocation3 + $0xa2] sm:$0xff]
        %v4893 = vld [vmem:[#allocation3 + $0xaa] sm:$0xff]
        %v4894 = vld [vmem:[#allocation3 + $0xb2] sm:$0xff]
        %v4895 = vld [vmem:[#allocation3 + $0xba] sm:$0xff]
        %v4896 = vld [vmem:[#allocation3 + $0xc2] sm:$0xff]
        %s4897 = scalar_lea.vmem %s3, 176
        %v4898 = vld [vmem:[%s4897] sm:$0xff]
        %v4900 = vsel %vm809, %v4879, 0
        %v4903 = vsel %vm809, %v4880, 0
        %v4906 = vsel %vm809, %v4881, 0
        %v4909 = vsel %vm809, %v4882, 0
        %v4912 = vsel %vm809, %v4883, 0
        %v4915 = vsel %vm809, %v4884, 0
        %v4918 = vsel %vm809, %v4885, 0
        %v4921 = vsel %vm809, %v4886, 0
        %v4924 = vsel %vm809, %v4887, 0
        %v4927 = vsel %vm809, %v4888, 0
        %v4930 = vsel %vm809, %v4889, 0
        %v4933 = vsel %vm809, %v4890, 0
        %v4936 = vsel %vm809, %v4891, 0
        %v4939 = vsel %vm809, %v4892, 0
        %v4942 = vsel %vm809, %v4893, 0
        %v4945 = vsel %vm809, %v4894, 0
        %v4948 = vsel %vm809, %v4895, 0
        %v4951 = vsel %vm809, %v4896, 0
        %4953 = vmatpush.msra.mxu0 0.0
        %4954 = vmatpush.msra.mxu0 0.0
        %4955 = vmatpush.msra.mxu0 0.0
        %4956 = vmatpush.msra.mxu0 0.0
        %4957 = vmatpush.msra.mxu0 0.0
        %4958 = vmatpush.msra.mxu0 0.0
        %4959 = vmatpush.msra.mxu0 0.0
        %4960 = vmatpush.msra.mxu0 0.0
        %4961 = vmatpush.msra.mxu0 0.0
        %4962 = vmatpush.msra.mxu0 0.0
        %4963 = vmatpush.msra.mxu0 0.0
        %4964 = vmatpush.msra.mxu0 0.0
        %4965 = vmatpush.msra.mxu0 0.0
        %4966 = vmatpush.msra.mxu0 0.0
        %4967 = vmatpush.msra.mxu0 0.0
        %4968 = vmatpush.msra.mxu0 %v4898
        %4969 = vmatmul.f32.gmra.mxu0 %v4900
        %v4970 = vpop.f32.mrf.mxu0
        %v4971 = vadd.f32 0.0, %v4970
        %4972 = vmatmul.f32.gmra.mxu0 %v4903
        %v4973 = vpop.f32.mrf.mxu0
        %v4974 = vadd.f32 0.0, %v4973
        %4975 = vmatmul.f32.gmra.mxu0 %v4906
        %v4976 = vpop.f32.mrf.mxu0
        %v4977 = vadd.f32 0.0, %v4976
        %4978 = vmatmul.f32.gmra.mxu0 %v4909
        %v4979 = vpop.f32.mrf.mxu0
        %v4980 = vadd.f32 0.0, %v4979
        %4981 = vmatmul.f32.gmra.mxu0 %v4912
        %v4982 = vpop.f32.mrf.mxu0
        %v4983 = vadd.f32 0.0, %v4982
        %4984 = vmatmul.f32.gmra.mxu0 %v4915
        %v4985 = vpop.f32.mrf.mxu0
        %v4986 = vadd.f32 0.0, %v4985
        %4987 = vmatmul.f32.gmra.mxu0 %v4918
        %v4988 = vpop.f32.mrf.mxu0
        %v4989 = vadd.f32 0.0, %v4988
        %4990 = vmatmul.f32.gmra.mxu0 %v4921
        %v4991 = vpop.f32.mrf.mxu0
        %v4992 = vadd.f32 0.0, %v4991
        %4993 = vmatmul.f32.gmra.mxu0 %v4924
        %v4994 = vpop.f32.mrf.mxu0
        %v4995 = vadd.f32 0.0, %v4994
        %4996 = vmatmul.f32.gmra.mxu0 %v4927
        %v4997 = vpop.f32.mrf.mxu0
        %v4998 = vadd.f32 0.0, %v4997
        %4999 = vmatmul.f32.gmra.mxu0 %v4930
        %v5000 = vpop.f32.mrf.mxu0
        %v5001 = vadd.f32 0.0, %v5000
        %5002 = vmatmul.f32.gmra.mxu0 %v4933
        %v5003 = vpop.f32.mrf.mxu0
        %v5004 = vadd.f32 0.0, %v5003
        %5005 = vmatmul.f32.gmra.mxu0 %v4936
        %v5006 = vpop.f32.mrf.mxu0
        %v5007 = vadd.f32 0.0, %v5006
        %5008 = vmatmul.f32.gmra.mxu0 %v4939
        %v5009 = vpop.f32.mrf.mxu0
        %v5010 = vadd.f32 0.0, %v5009
        %5011 = vmatmul.f32.gmra.mxu0 %v4942
        %v5012 = vpop.f32.mrf.mxu0
        %v5013 = vadd.f32 0.0, %v5012
        %5014 = vmatmul.f32.gmra.mxu0 %v4945
        %v5015 = vpop.f32.mrf.mxu0
        %v5016 = vadd.f32 0.0, %v5015
        %5017 = vmatmul.f32.gmra.mxu0 %v4948
        %v5018 = vpop.f32.mrf.mxu0
        %v5019 = vadd.f32 0.0, %v5018
        %5020 = vmatmul.f32.gmra.mxu0 %v4951
        %v5021 = vpop.f32.mrf.mxu0
        %v5022 = vadd.f32 0.0, %v5021
        %5023 = vdwg.mxu0
        %v5024 = vadd.f32 %v4861, %v4971
        %v5025 = vadd.f32 %v4862, %v4974
        %v5026 = vadd.f32 %v4863, %v4977
        %v5027 = vadd.f32 %v4864, %v4980
        %v5028 = vadd.f32 %v4865, %v4983
        %v5029 = vadd.f32 %v4866, %v4986
        %v5030 = vadd.f32 %v4867, %v4989
        %v5031 = vadd.f32 %v4868, %v4992
        %v5032 = vadd.f32 %v4869, %v4995
        %v5033 = vadd.f32 %v4870, %v4998
        %v5034 = vadd.f32 %v4871, %v5001
        %v5035 = vadd.f32 %v4872, %v5004
        %v5036 = vadd.f32 %v4873, %v5007
        %v5037 = vadd.f32 %v4874, %v5010
        %v5038 = vadd.f32 %v4875, %v5013
        %v5039 = vadd.f32 %v4876, %v5016
        %v5040 = vadd.f32 %v4877, %v5019
        %v5041 = vadd.f32 %v4878, %v5022
        %v5042 = vld [vmem:[#allocation3 + $0x3b] sm:$0xff]
        %v5043 = vld [vmem:[#allocation3 + $0x43] sm:$0xff]
        %v5044 = vld [vmem:[#allocation3 + $0x4b] sm:$0xff]
        %v5045 = vld [vmem:[#allocation3 + $0x53] sm:$0xff]
        %v5046 = vld [vmem:[#allocation3 + $0x5b] sm:$0xff]
        %v5047 = vld [vmem:[#allocation3 + $0x63] sm:$0xff]
        %v5048 = vld [vmem:[#allocation3 + $0x6b] sm:$0xff]
        %v5049 = vld [vmem:[#allocation3 + $0x73] sm:$0xff]
        %v5050 = vld [vmem:[#allocation3 + $0x7b] sm:$0xff]
        %v5051 = vld [vmem:[#allocation3 + $0x83] sm:$0xff]
        %v5052 = vld [vmem:[#allocation3 + $0x8b] sm:$0xff]
        %v5053 = vld [vmem:[#allocation3 + $0x93] sm:$0xff]
        %v5054 = vld [vmem:[#allocation3 + $0x9b] sm:$0xff]
        %v5055 = vld [vmem:[#allocation3 + $0xa3] sm:$0xff]
        %v5056 = vld [vmem:[#allocation3 + $0xab] sm:$0xff]
        %v5057 = vld [vmem:[#allocation3 + $0xb3] sm:$0xff]
        %v5058 = vld [vmem:[#allocation3 + $0xbb] sm:$0xff]
        %v5059 = vld [vmem:[#allocation3 + $0xc3] sm:$0xff]
        %s5060 = scalar_lea.vmem %s3, 184
        %v5061 = vld [vmem:[%s5060] sm:$0xff]
        %v5063 = vsel %vm809, %v5042, 0
        %v5066 = vsel %vm809, %v5043, 0
        %v5069 = vsel %vm809, %v5044, 0
        %v5072 = vsel %vm809, %v5045, 0
        %v5075 = vsel %vm809, %v5046, 0
        %v5078 = vsel %vm809, %v5047, 0
        %v5081 = vsel %vm809, %v5048, 0
        %v5084 = vsel %vm809, %v5049, 0
        %v5087 = vsel %vm809, %v5050, 0
        %v5090 = vsel %vm809, %v5051, 0
        %v5093 = vsel %vm809, %v5052, 0
        %v5096 = vsel %vm809, %v5053, 0
        %v5099 = vsel %vm809, %v5054, 0
        %v5102 = vsel %vm809, %v5055, 0
        %v5105 = vsel %vm809, %v5056, 0
        %v5108 = vsel %vm809, %v5057, 0
        %v5111 = vsel %vm809, %v5058, 0
        %v5114 = vsel %vm809, %v5059, 0
        %5116 = vmatpush.msra.mxu0 0.0
        %5117 = vmatpush.msra.mxu0 0.0
        %5118 = vmatpush.msra.mxu0 0.0
        %5119 = vmatpush.msra.mxu0 0.0
        %5120 = vmatpush.msra.mxu0 0.0
        %5121 = vmatpush.msra.mxu0 0.0
        %5122 = vmatpush.msra.mxu0 0.0
        %5123 = vmatpush.msra.mxu0 0.0
        %5124 = vmatpush.msra.mxu0 0.0
        %5125 = vmatpush.msra.mxu0 0.0
        %5126 = vmatpush.msra.mxu0 0.0
        %5127 = vmatpush.msra.mxu0 0.0
        %5128 = vmatpush.msra.mxu0 0.0
        %5129 = vmatpush.msra.mxu0 0.0
        %5130 = vmatpush.msra.mxu0 0.0
        %5131 = vmatpush.msra.mxu0 %v5061
        %5132 = vmatmul.f32.gmra.mxu0 %v5063
        %v5133 = vpop.f32.mrf.mxu0
        %v5134 = vadd.f32 0.0, %v5133
        %5135 = vmatmul.f32.gmra.mxu0 %v5066
        %v5136 = vpop.f32.mrf.mxu0
        %v5137 = vadd.f32 0.0, %v5136
        %5138 = vmatmul.f32.gmra.mxu0 %v5069
        %v5139 = vpop.f32.mrf.mxu0
        %v5140 = vadd.f32 0.0, %v5139
        %5141 = vmatmul.f32.gmra.mxu0 %v5072
        %v5142 = vpop.f32.mrf.mxu0
        %v5143 = vadd.f32 0.0, %v5142
        %5144 = vmatmul.f32.gmra.mxu0 %v5075
        %v5145 = vpop.f32.mrf.mxu0
        %v5146 = vadd.f32 0.0, %v5145
        %5147 = vmatmul.f32.gmra.mxu0 %v5078
        %v5148 = vpop.f32.mrf.mxu0
        %v5149 = vadd.f32 0.0, %v5148
        %5150 = vmatmul.f32.gmra.mxu0 %v5081
        %v5151 = vpop.f32.mrf.mxu0
        %v5152 = vadd.f32 0.0, %v5151
        %5153 = vmatmul.f32.gmra.mxu0 %v5084
        %v5154 = vpop.f32.mrf.mxu0
        %v5155 = vadd.f32 0.0, %v5154
        %5156 = vmatmul.f32.gmra.mxu0 %v5087
        %v5157 = vpop.f32.mrf.mxu0
        %v5158 = vadd.f32 0.0, %v5157
        %5159 = vmatmul.f32.gmra.mxu0 %v5090
        %v5160 = vpop.f32.mrf.mxu0
        %v5161 = vadd.f32 0.0, %v5160
        %5162 = vmatmul.f32.gmra.mxu0 %v5093
        %v5163 = vpop.f32.mrf.mxu0
        %v5164 = vadd.f32 0.0, %v5163
        %5165 = vmatmul.f32.gmra.mxu0 %v5096
        %v5166 = vpop.f32.mrf.mxu0
        %v5167 = vadd.f32 0.0, %v5166
        %5168 = vmatmul.f32.gmra.mxu0 %v5099
        %v5169 = vpop.f32.mrf.mxu0
        %v5170 = vadd.f32 0.0, %v5169
        %5171 = vmatmul.f32.gmra.mxu0 %v5102
        %v5172 = vpop.f32.mrf.mxu0
        %v5173 = vadd.f32 0.0, %v5172
        %5174 = vmatmul.f32.gmra.mxu0 %v5105
        %v5175 = vpop.f32.mrf.mxu0
        %v5176 = vadd.f32 0.0, %v5175
        %5177 = vmatmul.f32.gmra.mxu0 %v5108
        %v5178 = vpop.f32.mrf.mxu0
        %v5179 = vadd.f32 0.0, %v5178
        %5180 = vmatmul.f32.gmra.mxu0 %v5111
        %v5181 = vpop.f32.mrf.mxu0
        %v5182 = vadd.f32 0.0, %v5181
        %5183 = vmatmul.f32.gmra.mxu0 %v5114
        %v5184 = vpop.f32.mrf.mxu0
        %v5185 = vadd.f32 0.0, %v5184
        %5186 = vdwg.mxu0
        %v5187 = vadd.f32 %v5024, %v5134
        %v5188 = vadd.f32 %v5025, %v5137
        %v5189 = vadd.f32 %v5026, %v5140
        %v5190 = vadd.f32 %v5027, %v5143
        %v5191 = vadd.f32 %v5028, %v5146
        %v5192 = vadd.f32 %v5029, %v5149
        %v5193 = vadd.f32 %v5030, %v5152
        %v5194 = vadd.f32 %v5031, %v5155
        %v5195 = vadd.f32 %v5032, %v5158
        %v5196 = vadd.f32 %v5033, %v5161
        %v5197 = vadd.f32 %v5034, %v5164
        %v5198 = vadd.f32 %v5035, %v5167
        %v5199 = vadd.f32 %v5036, %v5170
        %v5200 = vadd.f32 %v5037, %v5173
        %v5201 = vadd.f32 %v5038, %v5176
        %v5202 = vadd.f32 %v5039, %v5179
        %v5203 = vadd.f32 %v5040, %v5182
        %v5204 = vadd.f32 %v5041, %v5185
        %v5205 = vld [vmem:[#allocation3 + $0x3c] sm:$0xff]
        %v5206 = vld [vmem:[#allocation3 + $0x44] sm:$0xff]
        %v5207 = vld [vmem:[#allocation3 + $0x4c] sm:$0xff]
        %v5208 = vld [vmem:[#allocation3 + $0x54] sm:$0xff]
        %v5209 = vld [vmem:[#allocation3 + $0x5c] sm:$0xff]
        %v5210 = vld [vmem:[#allocation3 + $0x64] sm:$0xff]
        %v5211 = vld [vmem:[#allocation3 + $0x6c] sm:$0xff]
        %v5212 = vld [vmem:[#allocation3 + $0x74] sm:$0xff]
        %v5213 = vld [vmem:[#allocation3 + $0x7c] sm:$0xff]
        %v5214 = vld [vmem:[#allocation3 + $0x84] sm:$0xff]
        %v5215 = vld [vmem:[#allocation3 + $0x8c] sm:$0xff]
        %v5216 = vld [vmem:[#allocation3 + $0x94] sm:$0xff]
        %v5217 = vld [vmem:[#allocation3 + $0x9c] sm:$0xff]
        %v5218 = vld [vmem:[#allocation3 + $0xa4] sm:$0xff]
        %v5219 = vld [vmem:[#allocation3 + $0xac] sm:$0xff]
        %v5220 = vld [vmem:[#allocation3 + $0xb4] sm:$0xff]
        %v5221 = vld [vmem:[#allocation3 + $0xbc] sm:$0xff]
        %v5222 = vld [vmem:[#allocation3 + $0xc4] sm:$0xff]
        %s5223 = scalar_lea.vmem %s3, 192
        %v5224 = vld [vmem:[%s5223] sm:$0xff]
        %v5226 = vsel %vm809, %v5205, 0
        %v5229 = vsel %vm809, %v5206, 0
        %v5232 = vsel %vm809, %v5207, 0
        %v5235 = vsel %vm809, %v5208, 0
        %v5238 = vsel %vm809, %v5209, 0
        %v5241 = vsel %vm809, %v5210, 0
        %v5244 = vsel %vm809, %v5211, 0
        %v5247 = vsel %vm809, %v5212, 0
        %v5250 = vsel %vm809, %v5213, 0
        %v5253 = vsel %vm809, %v5214, 0
        %v5256 = vsel %vm809, %v5215, 0
        %v5259 = vsel %vm809, %v5216, 0
        %v5262 = vsel %vm809, %v5217, 0
        %v5265 = vsel %vm809, %v5218, 0
        %v5268 = vsel %vm809, %v5219, 0
        %v5271 = vsel %vm809, %v5220, 0
        %v5274 = vsel %vm809, %v5221, 0
        %v5277 = vsel %vm809, %v5222, 0
        %5279 = vmatpush.msra.mxu0 0.0
        %5280 = vmatpush.msra.mxu0 0.0
        %5281 = vmatpush.msra.mxu0 0.0
        %5282 = vmatpush.msra.mxu0 0.0
        %5283 = vmatpush.msra.mxu0 0.0
        %5284 = vmatpush.msra.mxu0 0.0
        %5285 = vmatpush.msra.mxu0 0.0
        %5286 = vmatpush.msra.mxu0 0.0
        %5287 = vmatpush.msra.mxu0 0.0
        %5288 = vmatpush.msra.mxu0 0.0
        %5289 = vmatpush.msra.mxu0 0.0
        %5290 = vmatpush.msra.mxu0 0.0
        %5291 = vmatpush.msra.mxu0 0.0
        %5292 = vmatpush.msra.mxu0 0.0
        %5293 = vmatpush.msra.mxu0 0.0
        %5294 = vmatpush.msra.mxu0 %v5224
        %5295 = vmatmul.f32.gmra.mxu0 %v5226
        %v5296 = vpop.f32.mrf.mxu0
        %v5297 = vadd.f32 0.0, %v5296
        %5298 = vmatmul.f32.gmra.mxu0 %v5229
        %v5299 = vpop.f32.mrf.mxu0
        %v5300 = vadd.f32 0.0, %v5299
        %5301 = vmatmul.f32.gmra.mxu0 %v5232
        %v5302 = vpop.f32.mrf.mxu0
        %v5303 = vadd.f32 0.0, %v5302
        %5304 = vmatmul.f32.gmra.mxu0 %v5235
        %v5305 = vpop.f32.mrf.mxu0
        %v5306 = vadd.f32 0.0, %v5305
        %5307 = vmatmul.f32.gmra.mxu0 %v5238
        %v5308 = vpop.f32.mrf.mxu0
        %v5309 = vadd.f32 0.0, %v5308
        %5310 = vmatmul.f32.gmra.mxu0 %v5241
        %v5311 = vpop.f32.mrf.mxu0
        %v5312 = vadd.f32 0.0, %v5311
        %5313 = vmatmul.f32.gmra.mxu0 %v5244
        %v5314 = vpop.f32.mrf.mxu0
        %v5315 = vadd.f32 0.0, %v5314
        %5316 = vmatmul.f32.gmra.mxu0 %v5247
        %v5317 = vpop.f32.mrf.mxu0
        %v5318 = vadd.f32 0.0, %v5317
        %5319 = vmatmul.f32.gmra.mxu0 %v5250
        %v5320 = vpop.f32.mrf.mxu0
        %v5321 = vadd.f32 0.0, %v5320
        %5322 = vmatmul.f32.gmra.mxu0 %v5253
        %v5323 = vpop.f32.mrf.mxu0
        %v5324 = vadd.f32 0.0, %v5323
        %5325 = vmatmul.f32.gmra.mxu0 %v5256
        %v5326 = vpop.f32.mrf.mxu0
        %v5327 = vadd.f32 0.0, %v5326
        %5328 = vmatmul.f32.gmra.mxu0 %v5259
        %v5329 = vpop.f32.mrf.mxu0
        %v5330 = vadd.f32 0.0, %v5329
        %5331 = vmatmul.f32.gmra.mxu0 %v5262
        %v5332 = vpop.f32.mrf.mxu0
        %v5333 = vadd.f32 0.0, %v5332
        %5334 = vmatmul.f32.gmra.mxu0 %v5265
        %v5335 = vpop.f32.mrf.mxu0
        %v5336 = vadd.f32 0.0, %v5335
        %5337 = vmatmul.f32.gmra.mxu0 %v5268
        %v5338 = vpop.f32.mrf.mxu0
        %v5339 = vadd.f32 0.0, %v5338
        %5340 = vmatmul.f32.gmra.mxu0 %v5271
        %v5341 = vpop.f32.mrf.mxu0
        %v5342 = vadd.f32 0.0, %v5341
        %5343 = vmatmul.f32.gmra.mxu0 %v5274
        %v5344 = vpop.f32.mrf.mxu0
        %v5345 = vadd.f32 0.0, %v5344
        %5346 = vmatmul.f32.gmra.mxu0 %v5277
        %v5347 = vpop.f32.mrf.mxu0
        %v5348 = vadd.f32 0.0, %v5347
        %5349 = vdwg.mxu0
        %v5350 = vadd.f32 %v5187, %v5297
        %v5351 = vadd.f32 %v5188, %v5300
        %v5352 = vadd.f32 %v5189, %v5303
        %v5353 = vadd.f32 %v5190, %v5306
        %v5354 = vadd.f32 %v5191, %v5309
        %v5355 = vadd.f32 %v5192, %v5312
        %v5356 = vadd.f32 %v5193, %v5315
        %v5357 = vadd.f32 %v5194, %v5318
        %v5358 = vadd.f32 %v5195, %v5321
        %v5359 = vadd.f32 %v5196, %v5324
        %v5360 = vadd.f32 %v5197, %v5327
        %v5361 = vadd.f32 %v5198, %v5330
        %v5362 = vadd.f32 %v5199, %v5333
        %v5363 = vadd.f32 %v5200, %v5336
        %v5364 = vadd.f32 %v5201, %v5339
        %v5365 = vadd.f32 %v5202, %v5342
        %v5366 = vadd.f32 %v5203, %v5345
        %v5367 = vadd.f32 %v5204, %v5348
        %vm5368 = vcmask 130048
        %5369 = vst.msk [vmem:[#allocation4] sm:$0xff] %vm5368, %v5350
        %5370 = vst.msk [vmem:[#allocation4 + $0x8] sm:$0xff] %vm5368, %v5351
        %5371 = vst.msk [vmem:[#allocation4 + $0x10] sm:$0xff] %vm5368, %v5352
        %5372 = vst.msk [vmem:[#allocation4 + $0x18] sm:$0xff] %vm5368, %v5353
        %5373 = vst.msk [vmem:[#allocation4 + $0x20] sm:$0xff] %vm5368, %v5354
        %5374 = vst.msk [vmem:[#allocation4 + $0x28] sm:$0xff] %vm5368, %v5355
        %5375 = vst.msk [vmem:[#allocation4 + $0x30] sm:$0xff] %vm5368, %v5356
        %5376 = vst.msk [vmem:[#allocation4 + $0x38] sm:$0xff] %vm5368, %v5357
        %5377 = vst.msk [vmem:[#allocation4 + $0x40] sm:$0xff] %vm5368, %v5358
        %5378 = vst.msk [vmem:[#allocation4 + $0x48] sm:$0xff] %vm5368, %v5359
        %5379 = vst.msk [vmem:[#allocation4 + $0x50] sm:$0xff] %vm5368, %v5360
        %5380 = vst.msk [vmem:[#allocation4 + $0x58] sm:$0xff] %vm5368, %v5361
        %5381 = vst.msk [vmem:[#allocation4 + $0x60] sm:$0xff] %vm5368, %v5362
        %5382 = vst.msk [vmem:[#allocation4 + $0x68] sm:$0xff] %vm5368, %v5363
        %5383 = vst.msk [vmem:[#allocation4 + $0x70] sm:$0xff] %vm5368, %v5364
        %5384 = vst.msk [vmem:[#allocation4 + $0x78] sm:$0xff] %vm5368, %v5365
        %5385 = vst.msk [vmem:[#allocation4 + $0x80] sm:$0xff] %vm5368, %v5366
        %5386 = vst.msk [vmem:[#allocation4 + $0x88] sm:$0xff] %vm5368, %v5367
        %v5387 = vld [vmem:[%s4] sm:$0x1]
        %v5388 = vld [vmem:[#allocation4] ss:$2 sm:$0x1f]
        %s5389 = scalar_lea.vmem [#allocation4], 1
        %v5390 = vld [vmem:[%s5389] ss:$2 sm:$0x1f]
        %v5391 = vmax.f32 %v5388, %v5390
        %s5392 = scalar_lea.vmem [#allocation4], 14
        %v5393 = vld [vmem:[%s5392] ss:$2 sm:$0x1f]
        %s5394 = scalar_lea.vmem [#allocation4], 15
        %v5395 = vld [vmem:[%s5394] ss:$2 sm:$0x1f]
        %v5396 = vmax.f32 %v5393, %v5395
        %v5397 = vmax.f32 %v5391, %v5396
        %v5399 = vperm.slane %v5387, 0
        %v5401 = vadd.f32 %v5397, %v5399
        %v5402 = vmax.f32 %v5401, 0.0
        %v5403 = vld [vmem:[%s5] sm:$0xff]
        %v5404 = vld [vmem:[%s5 + $0x8] sm:$0xff]
        %s5405 = scalar_lea.vmem %s5, 16
        %v5406 = vld [vmem:[%s5405] sm:$0xff]
        %v5407 = vld [vmem:[%s5405 + $0x8] sm:$0xff]
        %v5409 = vrot.slane %v5402, 1
        %v5410 = vsel %vm5368, %v5409, 0
        %5412 = vmatpush.msra.mxu0 0.0
        %5413 = vmatpush.msra.mxu0 0.0
        %5414 = vmatpush.msra.mxu0 0.0
        %5415 = vmatpush.msra.mxu0 0.0
        %5416 = vmatpush.msra.mxu0 0.0
        %5417 = vmatpush.msra.mxu0 0.0
        %5418 = vmatpush.msra.mxu0 0.0
        %5419 = vmatpush.msra.mxu0 0.0
        %5420 = vmatpush.msra.mxu0 0.0
        %5421 = vmatpush.msra.mxu0 0.0
        %5422 = vmatpush.msra.mxu0 0.0
        %5423 = vmatpush.msra.mxu0 0.0
        %5424 = vmatpush.msra.mxu0 0.0
        %5425 = vmatpush.msra.mxu0 0.0
        %5426 = vmatpush.msra.mxu0 %v5407
        %5427 = vmatpush.msra.mxu0 %v5406
        %5428 = vmatmul.f32.gmra.mxu0 %v5410
        %v5429 = vpop.f32.mrf.mxu0
        %v5430 = vadd.f32 0.0, %v5429
        %5431 = vdwg.mxu0
        %v5432 = vsel %vm5368, %v5402, 0
        %5434 = vmatpush.msra.mxu0 0.0
        %5435 = vmatpush.msra.mxu0 0.0
        %5436 = vmatpush.msra.mxu0 0.0
        %5437 = vmatpush.msra.mxu0 0.0
        %5438 = vmatpush.msra.mxu0 0.0
        %5439 = vmatpush.msra.mxu0 0.0
        %5440 = vmatpush.msra.mxu0 0.0
        %5441 = vmatpush.msra.mxu0 0.0
        %5442 = vmatpush.msra.mxu0 0.0
        %5443 = vmatpush.msra.mxu0 0.0
        %5444 = vmatpush.msra.mxu0 0.0
        %5445 = vmatpush.msra.mxu0 0.0
        %5446 = vmatpush.msra.mxu0 0.0
        %5447 = vmatpush.msra.mxu0 0.0
        %5448 = vmatpush.msra.mxu0 %v5404
        %5449 = vmatpush.msra.mxu0 %v5403
        %5450 = vmatmul.f32.gmra.mxu0 %v5432
        %v5451 = vpop.f32.mrf.mxu0
        %v5452 = vadd.f32 %v5430, %v5451
        %5453 = vdwg.mxu0
        %s5454 = scalar_lea.vmem %s5, 32
        %v5455 = vld [vmem:[%s5454] sm:$0xff]
        %v5456 = vld [vmem:[%s5454 + $0x8] sm:$0xff]
        %v5457 = vrot.slane %v5402, 2
        %v5458 = vsel %vm5368, %v5457, 0
        %5460 = vmatpush.msra.mxu0 0.0
        %5461 = vmatpush.msra.mxu0 0.0
        %5462 = vmatpush.msra.mxu0 0.0
        %5463 = vmatpush.msra.mxu0 0.0
        %5464 = vmatpush.msra.mxu0 0.0
        %5465 = vmatpush.msra.mxu0 0.0
        %5466 = vmatpush.msra.mxu0 0.0
        %5467 = vmatpush.msra.mxu0 0.0
        %5468 = vmatpush.msra.mxu0 0.0
        %5469 = vmatpush.msra.mxu0 0.0
        %5470 = vmatpush.msra.mxu0 0.0
        %5471 = vmatpush.msra.mxu0 0.0
        %5472 = vmatpush.msra.mxu0 0.0
        %5473 = vmatpush.msra.mxu0 0.0
        %5474 = vmatpush.msra.mxu0 %v5456
        %5475 = vmatpush.msra.mxu0 %v5455
        %5476 = vmatmul.f32.gmra.mxu0 %v5458
        %v5477 = vpop.f32.mrf.mxu0
        %v5478 = vadd.f32 0.0, %v5477
        %5479 = vdwg.mxu0
        %v5480 = vadd.f32 %v5452, %v5478
        %s5481 = scalar_lea.vmem %s5, 48
        %v5482 = vld [vmem:[%s5481] sm:$0xff]
        %v5483 = vld [vmem:[%s5481 + $0x8] sm:$0xff]
        %v5484 = vrot.slane %v5402, 3
        %v5485 = vsel %vm5368, %v5484, 0
        %5487 = vmatpush.msra.mxu0 0.0
        %5488 = vmatpush.msra.mxu0 0.0
        %5489 = vmatpush.msra.mxu0 0.0
        %5490 = vmatpush.msra.mxu0 0.0
        %5491 = vmatpush.msra.mxu0 0.0
        %5492 = vmatpush.msra.mxu0 0.0
        %5493 = vmatpush.msra.mxu0 0.0
        %5494 = vmatpush.msra.mxu0 0.0
        %5495 = vmatpush.msra.mxu0 0.0
        %5496 = vmatpush.msra.mxu0 0.0
        %5497 = vmatpush.msra.mxu0 0.0
        %5498 = vmatpush.msra.mxu0 0.0
        %5499 = vmatpush.msra.mxu0 0.0
        %5500 = vmatpush.msra.mxu0 0.0
        %5501 = vmatpush.msra.mxu0 %v5483
        %5502 = vmatpush.msra.mxu0 %v5482
        %5503 = vmatmul.f32.gmra.mxu0 %v5485
        %v5504 = vpop.f32.mrf.mxu0
        %v5505 = vadd.f32 0.0, %v5504
        %5506 = vdwg.mxu0
        %v5507 = vadd.f32 %v5480, %v5505
        %s5508 = scalar_lea.vmem %s5, 64
        %v5509 = vld [vmem:[%s5508] sm:$0xff]
        %v5510 = vld [vmem:[%s5508 + $0x8] sm:$0xff]
        %v5511 = vrot.slane %v5402, 4
        %v5512 = vsel %vm5368, %v5511, 0
        %5514 = vmatpush.msra.mxu0 0.0
        %5515 = vmatpush.msra.mxu0 0.0
        %5516 = vmatpush.msra.mxu0 0.0
        %5517 = vmatpush.msra.mxu0 0.0
        %5518 = vmatpush.msra.mxu0 0.0
        %5519 = vmatpush.msra.mxu0 0.0
        %5520 = vmatpush.msra.mxu0 0.0
        %5521 = vmatpush.msra.mxu0 0.0
        %5522 = vmatpush.msra.mxu0 0.0
        %5523 = vmatpush.msra.mxu0 0.0
        %5524 = vmatpush.msra.mxu0 0.0
        %5525 = vmatpush.msra.mxu0 0.0
        %5526 = vmatpush.msra.mxu0 0.0
        %5527 = vmatpush.msra.mxu0 0.0
        %5528 = vmatpush.msra.mxu0 %v5510
        %5529 = vmatpush.msra.mxu0 %v5509
        %5530 = vmatmul.f32.gmra.mxu0 %v5512
        %v5531 = vpop.f32.mrf.mxu0
        %v5532 = vadd.f32 0.0, %v5531
        %5533 = vdwg.mxu0
        %v5534 = vadd.f32 %v5507, %v5532
        %s5535 = scalar_lea.vmem [#allocation4], 28
        %v5536 = vld [vmem:[%s5535] ss:$2 sm:$0x1f]
        %s5537 = scalar_lea.vmem [#allocation4], 29
        %v5538 = vld [vmem:[%s5537] ss:$2 sm:$0x1f]
        %v5539 = vmax.f32 %v5536, %v5538
        %s5540 = scalar_lea.vmem [#allocation4], 42
        %v5541 = vld [vmem:[%s5540] ss:$2 sm:$0x1f]
        %s5542 = scalar_lea.vmem [#allocation4], 43
        %v5543 = vld [vmem:[%s5542] ss:$2 sm:$0x1f]
        %v5544 = vmax.f32 %v5541, %v5543
        %v5545 = vmax.f32 %v5539, %v5544
        %v5546 = vadd.f32 %v5545, %v5399
        %v5547 = vmax.f32 %v5546, 0.0
        %s5548 = scalar_lea.vmem %s5, 80
        %v5549 = vld [vmem:[%s5548] sm:$0xff]
        %v5550 = vld [vmem:[%s5548 + $0x8] sm:$0xff]
        %v5552 = vsel %vm5368, %v5547, 0
        %5554 = vmatpush.msra.mxu0 0.0
        %5555 = vmatpush.msra.mxu0 0.0
        %5556 = vmatpush.msra.mxu0 0.0
        %5557 = vmatpush.msra.mxu0 0.0
        %5558 = vmatpush.msra.mxu0 0.0
        %5559 = vmatpush.msra.mxu0 0.0
        %5560 = vmatpush.msra.mxu0 0.0
        %5561 = vmatpush.msra.mxu0 0.0
        %5562 = vmatpush.msra.mxu0 0.0
        %5563 = vmatpush.msra.mxu0 0.0
        %5564 = vmatpush.msra.mxu0 0.0
        %5565 = vmatpush.msra.mxu0 0.0
        %5566 = vmatpush.msra.mxu0 0.0
        %5567 = vmatpush.msra.mxu0 0.0
        %5568 = vmatpush.msra.mxu0 %v5550
        %5569 = vmatpush.msra.mxu0 %v5549
        %5570 = vmatmul.f32.gmra.mxu0 %v5552
        %v5571 = vpop.f32.mrf.mxu0
        %v5572 = vadd.f32 0.0, %v5571
        %5573 = vdwg.mxu0
        %v5574 = vadd.f32 %v5534, %v5572
        %s5575 = scalar_lea.vmem %s5, 96
        %v5576 = vld [vmem:[%s5575] sm:$0xff]
        %v5577 = vld [vmem:[%s5575 + $0x8] sm:$0xff]
        %v5578 = vrot.slane %v5547, 1
        %v5579 = vsel %vm5368, %v5578, 0
        %5581 = vmatpush.msra.mxu0 0.0
        %5582 = vmatpush.msra.mxu0 0.0
        %5583 = vmatpush.msra.mxu0 0.0
        %5584 = vmatpush.msra.mxu0 0.0
        %5585 = vmatpush.msra.mxu0 0.0
        %5586 = vmatpush.msra.mxu0 0.0
        %5587 = vmatpush.msra.mxu0 0.0
        %5588 = vmatpush.msra.mxu0 0.0
        %5589 = vmatpush.msra.mxu0 0.0
        %5590 = vmatpush.msra.mxu0 0.0
        %5591 = vmatpush.msra.mxu0 0.0
        %5592 = vmatpush.msra.mxu0 0.0
        %5593 = vmatpush.msra.mxu0 0.0
        %5594 = vmatpush.msra.mxu0 0.0
        %5595 = vmatpush.msra.mxu0 %v5577
        %5596 = vmatpush.msra.mxu0 %v5576
        %5597 = vmatmul.f32.gmra.mxu0 %v5579
        %v5598 = vpop.f32.mrf.mxu0
        %v5599 = vadd.f32 0.0, %v5598
        %5600 = vdwg.mxu0
        %v5601 = vadd.f32 %v5574, %v5599
        %s5602 = scalar_lea.vmem %s5, 112
        %v5603 = vld [vmem:[%s5602] sm:$0xff]
        %v5604 = vld [vmem:[%s5602 + $0x8] sm:$0xff]
        %v5605 = vrot.slane %v5547, 2
        %v5606 = vsel %vm5368, %v5605, 0
        %5608 = vmatpush.msra.mxu0 0.0
        %5609 = vmatpush.msra.mxu0 0.0
        %5610 = vmatpush.msra.mxu0 0.0
        %5611 = vmatpush.msra.mxu0 0.0
        %5612 = vmatpush.msra.mxu0 0.0
        %5613 = vmatpush.msra.mxu0 0.0
        %5614 = vmatpush.msra.mxu0 0.0
        %5615 = vmatpush.msra.mxu0 0.0
        %5616 = vmatpush.msra.mxu0 0.0
        %5617 = vmatpush.msra.mxu0 0.0
        %5618 = vmatpush.msra.mxu0 0.0
        %5619 = vmatpush.msra.mxu0 0.0
        %5620 = vmatpush.msra.mxu0 0.0
        %5621 = vmatpush.msra.mxu0 0.0
        %5622 = vmatpush.msra.mxu0 %v5604
        %5623 = vmatpush.msra.mxu0 %v5603
        %5624 = vmatmul.f32.gmra.mxu0 %v5606
        %v5625 = vpop.f32.mrf.mxu0
        %v5626 = vadd.f32 0.0, %v5625
        %5627 = vdwg.mxu0
        %v5628 = vadd.f32 %v5601, %v5626
        %s5629 = scalar_lea.vmem %s5, 128
        %v5630 = vld [vmem:[%s5629] sm:$0xff]
        %v5631 = vld [vmem:[%s5629 + $0x8] sm:$0xff]
        %v5632 = vrot.slane %v5547, 3
        %v5633 = vsel %vm5368, %v5632, 0
        %5635 = vmatpush.msra.mxu0 0.0
        %5636 = vmatpush.msra.mxu0 0.0
        %5637 = vmatpush.msra.mxu0 0.0
        %5638 = vmatpush.msra.mxu0 0.0
        %5639 = vmatpush.msra.mxu0 0.0
        %5640 = vmatpush.msra.mxu0 0.0
        %5641 = vmatpush.msra.mxu0 0.0
        %5642 = vmatpush.msra.mxu0 0.0
        %5643 = vmatpush.msra.mxu0 0.0
        %5644 = vmatpush.msra.mxu0 0.0
        %5645 = vmatpush.msra.mxu0 0.0
        %5646 = vmatpush.msra.mxu0 0.0
        %5647 = vmatpush.msra.mxu0 0.0
        %5648 = vmatpush.msra.mxu0 0.0
        %5649 = vmatpush.msra.mxu0 %v5631
        %5650 = vmatpush.msra.mxu0 %v5630
        %5651 = vmatmul.f32.gmra.mxu0 %v5633
        %v5652 = vpop.f32.mrf.mxu0
        %v5653 = vadd.f32 0.0, %v5652
        %5654 = vdwg.mxu0
        %v5655 = vadd.f32 %v5628, %v5653
        %s5656 = scalar_lea.vmem %s5, 144
        %v5657 = vld [vmem:[%s5656] sm:$0xff]
        %v5658 = vld [vmem:[%s5656 + $0x8] sm:$0xff]
        %v5659 = vrot.slane %v5547, 4
        %v5660 = vsel %vm5368, %v5659, 0
        %5662 = vmatpush.msra.mxu0 0.0
        %5663 = vmatpush.msra.mxu0 0.0
        %5664 = vmatpush.msra.mxu0 0.0
        %5665 = vmatpush.msra.mxu0 0.0
        %5666 = vmatpush.msra.mxu0 0.0
        %5667 = vmatpush.msra.mxu0 0.0
        %5668 = vmatpush.msra.mxu0 0.0
        %5669 = vmatpush.msra.mxu0 0.0
        %5670 = vmatpush.msra.mxu0 0.0
        %5671 = vmatpush.msra.mxu0 0.0
        %5672 = vmatpush.msra.mxu0 0.0
        %5673 = vmatpush.msra.mxu0 0.0
        %5674 = vmatpush.msra.mxu0 0.0
        %5675 = vmatpush.msra.mxu0 0.0
        %5676 = vmatpush.msra.mxu0 %v5658
        %5677 = vmatpush.msra.mxu0 %v5657
        %5678 = vmatmul.f32.gmra.mxu0 %v5660
        %v5679 = vpop.f32.mrf.mxu0
        %v5680 = vadd.f32 0.0, %v5679
        %5681 = vdwg.mxu0
        %v5682 = vadd.f32 %v5655, %v5680
        %s5683 = scalar_lea.vmem [#allocation4], 56
        %v5684 = vld [vmem:[%s5683] ss:$2 sm:$0x1f]
        %s5685 = scalar_lea.vmem [#allocation4], 57
        %v5686 = vld [vmem:[%s5685] ss:$2 sm:$0x1f]
        %v5687 = vmax.f32 %v5684, %v5686
        %s5688 = scalar_lea.vmem [#allocation4], 70
        %v5689 = vld [vmem:[%s5688] ss:$2 sm:$0x1f]
        %s5690 = scalar_lea.vmem [#allocation4], 71
        %v5691 = vld [vmem:[%s5690] ss:$2 sm:$0x1f]
        %v5692 = vmax.f32 %v5689, %v5691
        %v5693 = vmax.f32 %v5687, %v5692
        %v5694 = vadd.f32 %v5693, %v5399
        %v5695 = vmax.f32 %v5694, 0.0
        %s5696 = scalar_lea.vmem %s5, 160
        %v5697 = vld [vmem:[%s5696] sm:$0xff]
        %v5698 = vld [vmem:[%s5696 + $0x8] sm:$0xff]
        %v5700 = vsel %vm5368, %v5695, 0
        %5702 = vmatpush.msra.mxu0 0.0
        %5703 = vmatpush.msra.mxu0 0.0
        %5704 = vmatpush.msra.mxu0 0.0
        %5705 = vmatpush.msra.mxu0 0.0
        %5706 = vmatpush.msra.mxu0 0.0
        %5707 = vmatpush.msra.mxu0 0.0
        %5708 = vmatpush.msra.mxu0 0.0
        %5709 = vmatpush.msra.mxu0 0.0
        %5710 = vmatpush.msra.mxu0 0.0
        %5711 = vmatpush.msra.mxu0 0.0
        %5712 = vmatpush.msra.mxu0 0.0
        %5713 = vmatpush.msra.mxu0 0.0
        %5714 = vmatpush.msra.mxu0 0.0
        %5715 = vmatpush.msra.mxu0 0.0
        %5716 = vmatpush.msra.mxu0 %v5698
        %5717 = vmatpush.msra.mxu0 %v5697
        %5718 = vmatmul.f32.gmra.mxu0 %v5700
        %v5719 = vpop.f32.mrf.mxu0
        %v5720 = vadd.f32 0.0, %v5719
        %5721 = vdwg.mxu0
        %v5722 = vadd.f32 %v5682, %v5720
        %s5723 = scalar_lea.vmem %s5, 176
        %v5724 = vld [vmem:[%s5723] sm:$0xff]
        %v5725 = vld [vmem:[%s5723 + $0x8] sm:$0xff]
        %v5726 = vrot.slane %v5695, 1
        %v5727 = vsel %vm5368, %v5726, 0
        %5729 = vmatpush.msra.mxu0 0.0
        %5730 = vmatpush.msra.mxu0 0.0
        %5731 = vmatpush.msra.mxu0 0.0
        %5732 = vmatpush.msra.mxu0 0.0
        %5733 = vmatpush.msra.mxu0 0.0
        %5734 = vmatpush.msra.mxu0 0.0
        %5735 = vmatpush.msra.mxu0 0.0
        %5736 = vmatpush.msra.mxu0 0.0
        %5737 = vmatpush.msra.mxu0 0.0
        %5738 = vmatpush.msra.mxu0 0.0
        %5739 = vmatpush.msra.mxu0 0.0
        %5740 = vmatpush.msra.mxu0 0.0
        %5741 = vmatpush.msra.mxu0 0.0
        %5742 = vmatpush.msra.mxu0 0.0
        %5743 = vmatpush.msra.mxu0 %v5725
        %5744 = vmatpush.msra.mxu0 %v5724
        %5745 = vmatmul.f32.gmra.mxu0 %v5727
        %v5746 = vpop.f32.mrf.mxu0
        %v5747 = vadd.f32 0.0, %v5746
        %5748 = vdwg.mxu0
        %v5749 = vadd.f32 %v5722, %v5747
        %s5750 = scalar_lea.vmem %s5, 192
        %v5751 = vld [vmem:[%s5750] sm:$0xff]
        %v5752 = vld [vmem:[%s5750 + $0x8] sm:$0xff]
        %v5753 = vrot.slane %v5695, 2
        %v5754 = vsel %vm5368, %v5753, 0
        %5756 = vmatpush.msra.mxu0 0.0
        %5757 = vmatpush.msra.mxu0 0.0
        %5758 = vmatpush.msra.mxu0 0.0
        %5759 = vmatpush.msra.mxu0 0.0
        %5760 = vmatpush.msra.mxu0 0.0
        %5761 = vmatpush.msra.mxu0 0.0
        %5762 = vmatpush.msra.mxu0 0.0
        %5763 = vmatpush.msra.mxu0 0.0
        %5764 = vmatpush.msra.mxu0 0.0
        %5765 = vmatpush.msra.mxu0 0.0
        %5766 = vmatpush.msra.mxu0 0.0
        %5767 = vmatpush.msra.mxu0 0.0
        %5768 = vmatpush.msra.mxu0 0.0
        %5769 = vmatpush.msra.mxu0 0.0
        %5770 = vmatpush.msra.mxu0 %v5752
        %5771 = vmatpush.msra.mxu0 %v5751
        %5772 = vmatmul.f32.gmra.mxu0 %v5754
        %v5773 = vpop.f32.mrf.mxu0
        %v5774 = vadd.f32 0.0, %v5773
        %5775 = vdwg.mxu0
        %v5776 = vadd.f32 %v5749, %v5774
        %s5777 = scalar_lea.vmem %s5, 208
        %v5778 = vld [vmem:[%s5777] sm:$0xff]
        %v5779 = vld [vmem:[%s5777 + $0x8] sm:$0xff]
        %v5780 = vrot.slane %v5695, 3
        %v5781 = vsel %vm5368, %v5780, 0
        %5783 = vmatpush.msra.mxu0 0.0
        %5784 = vmatpush.msra.mxu0 0.0
        %5785 = vmatpush.msra.mxu0 0.0
        %5786 = vmatpush.msra.mxu0 0.0
        %5787 = vmatpush.msra.mxu0 0.0
        %5788 = vmatpush.msra.mxu0 0.0
        %5789 = vmatpush.msra.mxu0 0.0
        %5790 = vmatpush.msra.mxu0 0.0
        %5791 = vmatpush.msra.mxu0 0.0
        %5792 = vmatpush.msra.mxu0 0.0
        %5793 = vmatpush.msra.mxu0 0.0
        %5794 = vmatpush.msra.mxu0 0.0
        %5795 = vmatpush.msra.mxu0 0.0
        %5796 = vmatpush.msra.mxu0 0.0
        %5797 = vmatpush.msra.mxu0 %v5779
        %5798 = vmatpush.msra.mxu0 %v5778
        %5799 = vmatmul.f32.gmra.mxu0 %v5781
        %v5800 = vpop.f32.mrf.mxu0
        %v5801 = vadd.f32 0.0, %v5800
        %5802 = vdwg.mxu0
        %v5803 = vadd.f32 %v5776, %v5801
        %s5804 = scalar_lea.vmem %s5, 224
        %v5805 = vld [vmem:[%s5804] sm:$0xff]
        %v5806 = vld [vmem:[%s5804 + $0x8] sm:$0xff]
        %v5807 = vrot.slane %v5695, 4
        %v5808 = vsel %vm5368, %v5807, 0
        %5810 = vmatpush.msra.mxu0 0.0
        %5811 = vmatpush.msra.mxu0 0.0
        %5812 = vmatpush.msra.mxu0 0.0
        %5813 = vmatpush.msra.mxu0 0.0
        %5814 = vmatpush.msra.mxu0 0.0
        %5815 = vmatpush.msra.mxu0 0.0
        %5816 = vmatpush.msra.mxu0 0.0
        %5817 = vmatpush.msra.mxu0 0.0
        %5818 = vmatpush.msra.mxu0 0.0
        %5819 = vmatpush.msra.mxu0 0.0
        %5820 = vmatpush.msra.mxu0 0.0
        %5821 = vmatpush.msra.mxu0 0.0
        %5822 = vmatpush.msra.mxu0 0.0
        %5823 = vmatpush.msra.mxu0 0.0
        %5824 = vmatpush.msra.mxu0 %v5806
        %5825 = vmatpush.msra.mxu0 %v5805
        %5826 = vmatmul.f32.gmra.mxu0 %v5808
        %v5827 = vpop.f32.mrf.mxu0
        %v5828 = vadd.f32 0.0, %v5827
        %5829 = vdwg.mxu0
        %v5830 = vadd.f32 %v5803, %v5828
        %s5831 = scalar_lea.vmem [#allocation4], 84
        %v5832 = vld [vmem:[%s5831] ss:$2 sm:$0x1f]
        %s5833 = scalar_lea.vmem [#allocation4], 85
        %v5834 = vld [vmem:[%s5833] ss:$2 sm:$0x1f]
        %v5835 = vmax.f32 %v5832, %v5834
        %s5836 = scalar_lea.vmem [#allocation4], 98
        %v5837 = vld [vmem:[%s5836] ss:$2 sm:$0x1f]
        %s5838 = scalar_lea.vmem [#allocation4], 99
        %v5839 = vld [vmem:[%s5838] ss:$2 sm:$0x1f]
        %v5840 = vmax.f32 %v5837, %v5839
        %v5841 = vmax.f32 %v5835, %v5840
        %v5842 = vadd.f32 %v5841, %v5399
        %v5843 = vmax.f32 %v5842, 0.0
        %s5844 = scalar_lea.vmem %s5, 240
        %v5845 = vld [vmem:[%s5844] sm:$0xff]
        %v5846 = vld [vmem:[%s5844 + $0x8] sm:$0xff]
        %v5848 = vsel %vm5368, %v5843, 0
        %5850 = vmatpush.msra.mxu0 0.0
        %5851 = vmatpush.msra.mxu0 0.0
        %5852 = vmatpush.msra.mxu0 0.0
        %5853 = vmatpush.msra.mxu0 0.0
        %5854 = vmatpush.msra.mxu0 0.0
        %5855 = vmatpush.msra.mxu0 0.0
        %5856 = vmatpush.msra.mxu0 0.0
        %5857 = vmatpush.msra.mxu0 0.0
        %5858 = vmatpush.msra.mxu0 0.0
        %5859 = vmatpush.msra.mxu0 0.0
        %5860 = vmatpush.msra.mxu0 0.0
        %5861 = vmatpush.msra.mxu0 0.0
        %5862 = vmatpush.msra.mxu0 0.0
        %5863 = vmatpush.msra.mxu0 0.0
        %5864 = vmatpush.msra.mxu0 %v5846
        %5865 = vmatpush.msra.mxu0 %v5845
        %5866 = vmatmul.f32.gmra.mxu0 %v5848
        %v5867 = vpop.f32.mrf.mxu0
        %v5868 = vadd.f32 0.0, %v5867
        %5869 = vdwg.mxu0
        %v5870 = vadd.f32 %v5830, %v5868
        %s5871 = scalar_lea.vmem %s5, 256
        %v5872 = vld [vmem:[%s5871] sm:$0xff]
        %v5873 = vld [vmem:[%s5871 + $0x8] sm:$0xff]
        %v5874 = vrot.slane %v5843, 1
        %v5875 = vsel %vm5368, %v5874, 0
        %5877 = vmatpush.msra.mxu0 0.0
        %5878 = vmatpush.msra.mxu0 0.0
        %5879 = vmatpush.msra.mxu0 0.0
        %5880 = vmatpush.msra.mxu0 0.0
        %5881 = vmatpush.msra.mxu0 0.0
        %5882 = vmatpush.msra.mxu0 0.0
        %5883 = vmatpush.msra.mxu0 0.0
        %5884 = vmatpush.msra.mxu0 0.0
        %5885 = vmatpush.msra.mxu0 0.0
        %5886 = vmatpush.msra.mxu0 0.0
        %5887 = vmatpush.msra.mxu0 0.0
        %5888 = vmatpush.msra.mxu0 0.0
        %5889 = vmatpush.msra.mxu0 0.0
        %5890 = vmatpush.msra.mxu0 0.0
        %5891 = vmatpush.msra.mxu0 %v5873
        %5892 = vmatpush.msra.mxu0 %v5872
        %5893 = vmatmul.f32.gmra.mxu0 %v5875
        %v5894 = vpop.f32.mrf.mxu0
        %v5895 = vadd.f32 0.0, %v5894
        %5896 = vdwg.mxu0
        %v5897 = vadd.f32 %v5870, %v5895
        %s5898 = scalar_lea.vmem %s5, 272
        %v5899 = vld [vmem:[%s5898] sm:$0xff]
        %v5900 = vld [vmem:[%s5898 + $0x8] sm:$0xff]
        %v5901 = vrot.slane %v5843, 2
        %v5902 = vsel %vm5368, %v5901, 0
        %5904 = vmatpush.msra.mxu0 0.0
        %5905 = vmatpush.msra.mxu0 0.0
        %5906 = vmatpush.msra.mxu0 0.0
        %5907 = vmatpush.msra.mxu0 0.0
        %5908 = vmatpush.msra.mxu0 0.0
        %5909 = vmatpush.msra.mxu0 0.0
        %5910 = vmatpush.msra.mxu0 0.0
        %5911 = vmatpush.msra.mxu0 0.0
        %5912 = vmatpush.msra.mxu0 0.0
        %5913 = vmatpush.msra.mxu0 0.0
        %5914 = vmatpush.msra.mxu0 0.0
        %5915 = vmatpush.msra.mxu0 0.0
        %5916 = vmatpush.msra.mxu0 0.0
        %5917 = vmatpush.msra.mxu0 0.0
        %5918 = vmatpush.msra.mxu0 %v5900
        %5919 = vmatpush.msra.mxu0 %v5899
        %5920 = vmatmul.f32.gmra.mxu0 %v5902
        %v5921 = vpop.f32.mrf.mxu0
        %v5922 = vadd.f32 0.0, %v5921
        %5923 = vdwg.mxu0
        %v5924 = vadd.f32 %v5897, %v5922
        %s5925 = scalar_lea.vmem %s5, 288
        %v5926 = vld [vmem:[%s5925] sm:$0xff]
        %v5927 = vld [vmem:[%s5925 + $0x8] sm:$0xff]
        %v5928 = vrot.slane %v5843, 3
        %v5929 = vsel %vm5368, %v5928, 0
        %5931 = vmatpush.msra.mxu0 0.0
        %5932 = vmatpush.msra.mxu0 0.0
        %5933 = vmatpush.msra.mxu0 0.0
        %5934 = vmatpush.msra.mxu0 0.0
        %5935 = vmatpush.msra.mxu0 0.0
        %5936 = vmatpush.msra.mxu0 0.0
        %5937 = vmatpush.msra.mxu0 0.0
        %5938 = vmatpush.msra.mxu0 0.0
        %5939 = vmatpush.msra.mxu0 0.0
        %5940 = vmatpush.msra.mxu0 0.0
        %5941 = vmatpush.msra.mxu0 0.0
        %5942 = vmatpush.msra.mxu0 0.0
        %5943 = vmatpush.msra.mxu0 0.0
        %5944 = vmatpush.msra.mxu0 0.0
        %5945 = vmatpush.msra.mxu0 %v5927
        %5946 = vmatpush.msra.mxu0 %v5926
        %5947 = vmatmul.f32.gmra.mxu0 %v5929
        %v5948 = vpop.f32.mrf.mxu0
        %v5949 = vadd.f32 0.0, %v5948
        %5950 = vdwg.mxu0
        %v5951 = vadd.f32 %v5924, %v5949
        %s5952 = scalar_lea.vmem %s5, 304
        %v5953 = vld [vmem:[%s5952] sm:$0xff]
        %v5954 = vld [vmem:[%s5952 + $0x8] sm:$0xff]
        %v5955 = vrot.slane %v5843, 4
        %v5956 = vsel %vm5368, %v5955, 0
        %5958 = vmatpush.msra.mxu0 0.0
        %5959 = vmatpush.msra.mxu0 0.0
        %5960 = vmatpush.msra.mxu0 0.0
        %5961 = vmatpush.msra.mxu0 0.0
        %5962 = vmatpush.msra.mxu0 0.0
        %5963 = vmatpush.msra.mxu0 0.0
        %5964 = vmatpush.msra.mxu0 0.0
        %5965 = vmatpush.msra.mxu0 0.0
        %5966 = vmatpush.msra.mxu0 0.0
        %5967 = vmatpush.msra.mxu0 0.0
        %5968 = vmatpush.msra.mxu0 0.0
        %5969 = vmatpush.msra.mxu0 0.0
        %5970 = vmatpush.msra.mxu0 0.0
        %5971 = vmatpush.msra.mxu0 0.0
        %5972 = vmatpush.msra.mxu0 %v5954
        %5973 = vmatpush.msra.mxu0 %v5953
        %5974 = vmatmul.f32.gmra.mxu0 %v5956
        %v5975 = vpop.f32.mrf.mxu0
        %v5976 = vadd.f32 0.0, %v5975
        %5977 = vdwg.mxu0
        %v5978 = vadd.f32 %v5951, %v5976
        %s5979 = scalar_lea.vmem [#allocation4], 112
        %v5980 = vld [vmem:[%s5979] ss:$2 sm:$0x1f]
        %s5981 = scalar_lea.vmem [#allocation4], 113
        %v5982 = vld [vmem:[%s5981] ss:$2 sm:$0x1f]
        %v5983 = vmax.f32 %v5980, %v5982
        %s5984 = scalar_lea.vmem [#allocation4], 126
        %v5985 = vld [vmem:[%s5984] ss:$2 sm:$0x1f]
        %s5986 = scalar_lea.vmem [#allocation4], 127
        %v5987 = vld [vmem:[%s5986] ss:$2 sm:$0x1f]
        %v5988 = vmax.f32 %v5985, %v5987
        %v5989 = vmax.f32 %v5983, %v5988
        %v5990 = vadd.f32 %v5989, %v5399
        %v5991 = vmax.f32 %v5990, 0.0
        %s5992 = scalar_lea.vmem %s5, 320
        %v5993 = vld [vmem:[%s5992] sm:$0xff]
        %v5994 = vld [vmem:[%s5992 + $0x8] sm:$0xff]
        %v5996 = vsel %vm5368, %v5991, 0
        %5998 = vmatpush.msra.mxu0 0.0
        %5999 = vmatpush.msra.mxu0 0.0
        %6000 = vmatpush.msra.mxu0 0.0
        %6001 = vmatpush.msra.mxu0 0.0
        %6002 = vmatpush.msra.mxu0 0.0
        %6003 = vmatpush.msra.mxu0 0.0
        %6004 = vmatpush.msra.mxu0 0.0
        %6005 = vmatpush.msra.mxu0 0.0
        %6006 = vmatpush.msra.mxu0 0.0
        %6007 = vmatpush.msra.mxu0 0.0
        %6008 = vmatpush.msra.mxu0 0.0
        %6009 = vmatpush.msra.mxu0 0.0
        %6010 = vmatpush.msra.mxu0 0.0
        %6011 = vmatpush.msra.mxu0 0.0
        %6012 = vmatpush.msra.mxu0 %v5994
        %6013 = vmatpush.msra.mxu0 %v5993
        %6014 = vmatmul.f32.gmra.mxu0 %v5996
        %v6015 = vpop.f32.mrf.mxu0
        %v6016 = vadd.f32 0.0, %v6015
        %6017 = vdwg.mxu0
        %v6018 = vadd.f32 %v5978, %v6016
        %s6019 = scalar_lea.vmem %s5, 336
        %v6020 = vld [vmem:[%s6019] sm:$0xff]
        %v6021 = vld [vmem:[%s6019 + $0x8] sm:$0xff]
        %v6022 = vrot.slane %v5991, 1
        %v6023 = vsel %vm5368, %v6022, 0
        %6025 = vmatpush.msra.mxu0 0.0
        %6026 = vmatpush.msra.mxu0 0.0
        %6027 = vmatpush.msra.mxu0 0.0
        %6028 = vmatpush.msra.mxu0 0.0
        %6029 = vmatpush.msra.mxu0 0.0
        %6030 = vmatpush.msra.mxu0 0.0
        %6031 = vmatpush.msra.mxu0 0.0
        %6032 = vmatpush.msra.mxu0 0.0
        %6033 = vmatpush.msra.mxu0 0.0
        %6034 = vmatpush.msra.mxu0 0.0
        %6035 = vmatpush.msra.mxu0 0.0
        %6036 = vmatpush.msra.mxu0 0.0
        %6037 = vmatpush.msra.mxu0 0.0
        %6038 = vmatpush.msra.mxu0 0.0
        %6039 = vmatpush.msra.mxu0 %v6021
        %6040 = vmatpush.msra.mxu0 %v6020
        %6041 = vmatmul.f32.gmra.mxu0 %v6023
        %v6042 = vpop.f32.mrf.mxu0
        %v6043 = vadd.f32 0.0, %v6042
        %6044 = vdwg.mxu0
        %v6045 = vadd.f32 %v6018, %v6043
        %s6046 = scalar_lea.vmem %s5, 352
        %v6047 = vld [vmem:[%s6046] sm:$0xff]
        %v6048 = vld [vmem:[%s6046 + $0x8] sm:$0xff]
        %v6049 = vrot.slane %v5991, 2
        %v6050 = vsel %vm5368, %v6049, 0
        %6052 = vmatpush.msra.mxu0 0.0
        %6053 = vmatpush.msra.mxu0 0.0
        %6054 = vmatpush.msra.mxu0 0.0
        %6055 = vmatpush.msra.mxu0 0.0
        %6056 = vmatpush.msra.mxu0 0.0
        %6057 = vmatpush.msra.mxu0 0.0
        %6058 = vmatpush.msra.mxu0 0.0
        %6059 = vmatpush.msra.mxu0 0.0
        %6060 = vmatpush.msra.mxu0 0.0
        %6061 = vmatpush.msra.mxu0 0.0
        %6062 = vmatpush.msra.mxu0 0.0
        %6063 = vmatpush.msra.mxu0 0.0
        %6064 = vmatpush.msra.mxu0 0.0
        %6065 = vmatpush.msra.mxu0 0.0
        %6066 = vmatpush.msra.mxu0 %v6048
        %6067 = vmatpush.msra.mxu0 %v6047
        %6068 = vmatmul.f32.gmra.mxu0 %v6050
        %v6069 = vpop.f32.mrf.mxu0
        %v6070 = vadd.f32 0.0, %v6069
        %6071 = vdwg.mxu0
        %v6072 = vadd.f32 %v6045, %v6070
        %s6073 = scalar_lea.vmem %s5, 368
        %v6074 = vld [vmem:[%s6073] sm:$0xff]
        %v6075 = vld [vmem:[%s6073 + $0x8] sm:$0xff]
        %v6076 = vrot.slane %v5991, 3
        %v6077 = vsel %vm5368, %v6076, 0
        %6079 = vmatpush.msra.mxu0 0.0
        %6080 = vmatpush.msra.mxu0 0.0
        %6081 = vmatpush.msra.mxu0 0.0
        %6082 = vmatpush.msra.mxu0 0.0
        %6083 = vmatpush.msra.mxu0 0.0
        %6084 = vmatpush.msra.mxu0 0.0
        %6085 = vmatpush.msra.mxu0 0.0
        %6086 = vmatpush.msra.mxu0 0.0
        %6087 = vmatpush.msra.mxu0 0.0
        %6088 = vmatpush.msra.mxu0 0.0
        %6089 = vmatpush.msra.mxu0 0.0
        %6090 = vmatpush.msra.mxu0 0.0
        %6091 = vmatpush.msra.mxu0 0.0
        %6092 = vmatpush.msra.mxu0 0.0
        %6093 = vmatpush.msra.mxu0 %v6075
        %6094 = vmatpush.msra.mxu0 %v6074
        %6095 = vmatmul.f32.gmra.mxu0 %v6077
        %v6096 = vpop.f32.mrf.mxu0
        %v6097 = vadd.f32 0.0, %v6096
        %6098 = vdwg.mxu0
        %v6099 = vadd.f32 %v6072, %v6097
        %s6100 = scalar_lea.vmem %s5, 384
        %v6101 = vld [vmem:[%s6100] sm:$0xff]
        %v6102 = vld [vmem:[%s6100 + $0x8] sm:$0xff]
        %v6103 = vrot.slane %v5991, 4
        %v6104 = vsel %vm5368, %v6103, 0
        %6106 = vmatpush.msra.mxu0 0.0
        %6107 = vmatpush.msra.mxu0 0.0
        %6108 = vmatpush.msra.mxu0 0.0
        %6109 = vmatpush.msra.mxu0 0.0
        %6110 = vmatpush.msra.mxu0 0.0
        %6111 = vmatpush.msra.mxu0 0.0
        %6112 = vmatpush.msra.mxu0 0.0
        %6113 = vmatpush.msra.mxu0 0.0
        %6114 = vmatpush.msra.mxu0 0.0
        %6115 = vmatpush.msra.mxu0 0.0
        %6116 = vmatpush.msra.mxu0 0.0
        %6117 = vmatpush.msra.mxu0 0.0
        %6118 = vmatpush.msra.mxu0 0.0
        %6119 = vmatpush.msra.mxu0 0.0
        %6120 = vmatpush.msra.mxu0 %v6102
        %6121 = vmatpush.msra.mxu0 %v6101
        %6122 = vmatmul.f32.gmra.mxu0 %v6104
        %v6123 = vpop.f32.mrf.mxu0
        %v6124 = vadd.f32 0.0, %v6123
        %6125 = vdwg.mxu0
        %v6126 = vadd.f32 %v6099, %v6124
        %v6127 = vld [vmem:[%s6] sm:$0x1]
        %v6128 = vadd.f32 %v6126, %v6127
        %v6129 = vmax.f32 %v6128, 0.0
        %v6130 = vld [vmem:[%s7] sm:$0xff]
        %v6131 = vld [vmem:[%s7 + $0x8] sm:$0xff]
        %v6132 = vld [vmem:[%s7 + $0x10] sm:$0xff]
        %v6133 = vld [vmem:[%s7 + $0x18] sm:$0xff]
        %v6134 = vld [vmem:[%s7 + $0x20] sm:$0xff]
        %v6135 = vld [vmem:[%s7 + $0x28] sm:$0xff]
        %v6136 = vld [vmem:[%s7 + $0x30] sm:$0xff]
        %v6137 = vld [vmem:[%s7 + $0x38] sm:$0xff]
        %v6138 = vld [vmem:[%s7 + $0x40] sm:$0xff]
        %v6139 = vld [vmem:[%s7 + $0x48] sm:$0xff]
        %v6140 = vld [vmem:[%s7 + $0x50] sm:$0xff]
        %v6141 = vld [vmem:[%s7 + $0x58] sm:$0xff]
        %v6142 = vld [vmem:[%s7 + $0x60] sm:$0xff]
        %v6143 = vld [vmem:[%s7 + $0x68] sm:$0xff]
        %v6144 = vld [vmem:[%s7 + $0x70] sm:$0xff]
        %v6145 = vld [vmem:[%s8] sm:$0x1]
        %vm6146 = vcmask 982016
        %v6148 = vsel %vm6146, %v6129, 0
        %6150 = vmatpush.msra.mxu0 0.0
        %6151 = vmatpush.msra.mxu0 %v6144
        %6152 = vmatpush.msra.mxu0 %v6143
        %6153 = vmatpush.msra.mxu0 %v6142
        %6154 = vmatpush.msra.mxu0 %v6141
        %6155 = vmatpush.msra.mxu0 %v6140
        %6156 = vmatpush.msra.mxu0 %v6139
        %6157 = vmatpush.msra.mxu0 %v6138
        %6158 = vmatpush.msra.mxu0 %v6137
        %6159 = vmatpush.msra.mxu0 %v6136
        %6160 = vmatpush.msra.mxu0 %v6135
        %6161 = vmatpush.msra.mxu0 %v6134
        %6162 = vmatpush.msra.mxu0 %v6133
        %6163 = vmatpush.msra.mxu0 %v6132
        %6164 = vmatpush.msra.mxu0 %v6131
        %6165 = vmatpush.msra.mxu0 %v6130
        %6166 = vmatmul.f32.gmra.mxu0 %v6148
        %v6167 = vpop.f32.mrf.mxu0
        %v6168 = vadd.f32 %v6145, %v6167
        %6169 = vdwg.mxu0
        %v6170 = vmax.f32 %v6168, 0.0
        %v6171 = vld [vmem:[%s9] sm:$0xff]
        %v6172 = vld [vmem:[%s9 + $0x8] sm:$0xff]
        %v6173 = vld [vmem:[%s9 + $0x10] sm:$0xff]
        %v6174 = vld [vmem:[%s9 + $0x18] sm:$0xff]
        %v6175 = vld [vmem:[%s9 + $0x20] sm:$0xff]
        %v6176 = vld [vmem:[%s9 + $0x28] sm:$0xff]
        %v6177 = vld [vmem:[%s9 + $0x30] sm:$0xff]
        %v6178 = vld [vmem:[%s9 + $0x38] sm:$0xff]
        %v6179 = vld [vmem:[%s9 + $0x40] sm:$0xff]
        %v6180 = vld [vmem:[%s9 + $0x48] sm:$0xff]
        %v6181 = vld [vmem:[%s9 + $0x50] sm:$0xf]
        %v6182 = vld [vmem:[%s10] sm:$0x1]
        %vm6183 = vcmask 687104
        %v6185 = vsel %vm6183, %v6170, 0
        %vm6187 = vcmask 1043456
        %v6189 = vsel %vm6187, %v6181, 0
        %6191 = vmatpush.msra.mxu0 0.0
        %6192 = vmatpush.msra.mxu0 0.0
        %6193 = vmatpush.msra.mxu0 0.0
        %6194 = vmatpush.msra.mxu0 0.0
        %6195 = vmatpush.msra.mxu0 0.0
        %6196 = vmatpush.msra.mxu0 %v6189
        %6197 = vmatpush.msra.mxu0 %v6180
        %6198 = vmatpush.msra.mxu0 %v6179
        %6199 = vmatpush.msra.mxu0 %v6178
        %6200 = vmatpush.msra.mxu0 %v6177
        %6201 = vmatpush.msra.mxu0 %v6176
        %6202 = vmatpush.msra.mxu0 %v6175
        %6203 = vmatpush.msra.mxu0 %v6174
        %6204 = vmatpush.msra.mxu0 %v6173
        %6205 = vmatpush.msra.mxu0 %v6172
        %6206 = vmatpush.msra.mxu0 %v6171
        %6207 = vmatmul.f32.gmra.mxu0 %v6185
        %v6208 = vpop.f32.mrf.mxu0
        %v6209 = vadd.f32 %v6182, %v6208
        %6210 = vdwg.mxu0
        %6211 = vst [vmem:[%s378] sm:$0x1] %v6209
        %s6212 = sand.u32 %s269, 1
        %s6213 = scalar_lea.sflag [#allocation6], %s6212
        %s6214 = sand.u32 %s269, 1
        %s6215 = scalar_lea.vmem [#allocation5], %s6214
        // Predicated region
        $region65: #{lenet5_forward.1} parent=63 // pred_check
          %p6216 = pneg %p279
        $region66: #{lenet5_forward.1} parent=63 // pred_check_branch
          %6218 = sbr.rel (%p6216) target = $region68
        $region67: #{lenet5_forward.1} parent=63 // pred_region
          %6220 = vsyncadd %s6213, 0
          %s6221 = scalar_lea.hbm %s11, %s25
          %s6223 = sshll.u32 %s6215, 4
          %s6224 = int_to_ptr.vmem [resolvable:$true] %s6223
          %s6225 = sshll.u32 %s6221, 4
          %s6226 = int_to_ptr.hbm [resolvable:$true] %s6225
          %6228 = dma.vmem_to_hbm [thread:$0]  %s6224, 16, %s6226, %s6213
        $region68: #{lenet5_forward.1} parent=63 // pred_fallthru
          _
      $region64: #{lenet5_forward.1} parent=5 // pred_fallthru
        _
      %p6229 = scmp.le.s32.totalorder 2, %s20
      // Predicated region
      $region69: #{lenet5_forward.1} parent=5 // pred_check
        %p6230 = pneg %p6229
      $region70: #{lenet5_forward.1} parent=5 // pred_check_branch
        %6232 = sbr.rel (%p6230) target = $region72
      $region71: #{lenet5_forward.1} parent=5 // pred_region
        %s6233 = ssub.s32 %s20, 2
        // Predicated region
        $region73: #{lenet5_forward.1} parent=71 // pred_check
          %p6234 = pneg %p285
        $region74: #{lenet5_forward.1} parent=71 // pred_check_branch
          %6236 = sbr.rel (%p6234) target = $region76
        $region75: #{lenet5_forward.1} parent=71 // pred_region
          %s6237 = sand.u32 %s270, 1
          %s6238 = scalar_lea.sflag [#allocation6], %s6237
          %s6239 = sand.u32 %s270, 1
          %s6240 = scalar_lea.vmem [#allocation5], %s6239
          %6242 = dma.done %s6238, 16
        $region76: #{lenet5_forward.1} parent=71 // pred_fallthru
          _
      $region72: #{lenet5_forward.1} parent=5 // pred_fallthru
        _
    $region6: #{lenet5_forward.1} parent=1 // loop_footer
      %s24 = sadd.s32 1, %s20
    $region7: #{lenet5_forward.1} parent=1 // loop_footer_branch
      %19 = sbr.rel target = $region3
    $region8: #{lenet5_forward.1} parent=1 // loop_exit
      _
    %6243 = vsyncpa [#allocation6], 1
    %s6244 = scalar_lea.sflag [#allocation6], 1
    %6245 = vsyncpa %s6244, 1

</llo_original>
